<compile_context>
chip_gen: v7x
topology: tpu7x:2x2x1
jax: 0.10.0
libtpu: 0.0.40
codegen_flags: <defaults>
</compile_context>

<pallas_src>
import functools

import jax
import jax.numpy as jnp
from jax import lax
from jax.experimental import pallas as pl
from jax.experimental.pallas import tpu as pltpu

# Layer sizes of NetRelu4Fat: Linear(1,40) ReLU Linear(40,100) ReLU Linear(100,40) ReLU Linear(40,1)
DIMS = [1, 40, 100, 40, 1]


def _round_up(x, m):
    return ((x + m - 1) // m) * m


def mlp_kernel(x_ref,
               w1_ref, b1_ref,     # (41, 1),   (41, 1)   dummy unit appended (w=0, b=1)
               w2_ref,             # (101, 41)  [W2 | b2] + dummy row carrying the constant 1
               w3_ref,             # (40, 101)  [W3 | b3]
               w4t_ref, b4_ref,    # (40, 1),   (1, 1)    w4 pre-transposed
               o_ref,
               *, chunk):
    """Fused 4-layer MLP in (features, batch) lane-dense layout, strip-mined over lanes."""
    tile_n = x_ref.shape[1]
    n_chunks = tile_n // chunk      # static

    # Weights are small and VMEM-resident; load once per grid step.
    w1 = w1_ref[...]
    b1 = b1_ref[...]
    w2 = w2_ref[...]
    w3 = w3_ref[...]
    w4t = w4t_ref[...]
    b4 = b4_ref[...]

    def body(c, carry):
        start = pl.multiple_of(c * chunk, chunk)
        x = x_ref[:, pl.ds(start, chunk)]                         # (1, chunk)

        # Layer 1 (in_features = 1): K=1 matmul -> outer product on the VPU.
        # Row 40 is the dummy unit: relu(0*x + 1) = 1 (constant-one carrier).
        h = jnp.maximum(w1 * x + b1, 0.0)                          # (41, chunk)

        # Layer 2: (101, 41) @ (41, chunk) on the MXU, bias folded into last column.
        h = jnp.dot(w2, h.astype(w2.dtype),
                    preferred_element_type=jnp.float32)
        h = jnp.maximum(h, 0.0)                                    # (101, chunk), row 100 == 1

        # Layer 3: (40, 101) @ (101, chunk) on the MXU, bias folded into last column.
        h = jnp.dot(w3, h.astype(w3.dtype),
                    preferred_element_type=jnp.float32)
        h = jnp.maximum(h, 0.0)                                    # (40, chunk)

        # Layer 4 (out_features = 1): matvec -> VPU multiply + sublane reduce.
        out = jnp.sum(w4t * h, axis=0, keepdims=True) + b4         # (1, chunk)
        o_ref[:, pl.ds(start, chunk)] = out.astype(o_ref.dtype)
        return carry

    lax.fori_loop(0, n_chunks, body, 0, unroll=True)


def _pack_params(params, mxu_dtype):
    """Fold biases of layers 2/3 into the weights; transpose layer 4."""
    (w1, b1), (w2, b2), (w3, b3), (w4, b4) = params
    f32 = jnp.float32

    # Layer 1: append dummy unit (weight 0, bias 1) -> activation carries a constant-1 row.
    w1p = jnp.concatenate([w1.astype(f32), jnp.zeros((1, 1), f32)], axis=0)            # (41, 1)
    b1p = jnp.concatenate([b1.astype(f32), jnp.ones((1,), f32)]).reshape(-1, 1)        # (41, 1)

    # Layer 2: fold bias as extra column; dummy output row re-creates the constant-1 row.
    w2p = jnp.concatenate([w2.astype(f32), b2.reshape(-1, 1).astype(f32)], axis=1)     # (100, 41)
    ones_row = jnp.zeros((1, 41), f32).at[0, 40].set(1.0)
    w2p = jnp.concatenate([w2p, ones_row], axis=0)                                     # (101, 41)

    # Layer 3: fold bias as extra column.
    w3p = jnp.concatenate([w3.astype(f32), b3.reshape(-1, 1).astype(f32)], axis=1)     # (40, 101)

    # Layer 4: pre-transpose for the VPU sublane reduce; keep its bias explicit.
    w4t = w4.T.astype(f32)                                                             # (40, 1)
    b4p = b4.reshape(1, 1).astype(f32)                                                 # (1, 1)

    return [w1p, b1p, w2p.astype(mxu_dtype), w3p.astype(mxu_dtype), w4t, b4p]


def net_relu4_fat(x, params, *, chunk=512, num_steps=2, mxu_dtype=jnp.float32):
    """Run NetRelu4Fat.

    x: (N, 1) float32.
    params: list of (W, b) in PyTorch convention: W is (out_features, in_features),
            b is (out_features,).
    mxu_dtype: dtype fed to the two interior MXU matmuls (f32 accumulation either
               way). Use jnp.bfloat16 on v6e/v7x for the fast MXU path; keep
               float32 on v5e or when exact f32 results are required.
    """
    assert x.ndim == 2 and x.shape[1] == 1, "expected (N, 1) input"
    N = x.shape[0]

    # Fat, even grid: aim for `num_steps` grid steps (2 -> both v7x TCs busy),
    # rounded so tile_n is a multiple of the in-kernel lane chunk.
    tile_n = max(chunk, _round_up(pl.cdiv(N, num_steps), chunk))
    num_tiles = pl.cdiv(N, tile_n)
    n_pad = num_tiles * tile_n

    # Lane-dense relayout without a zero-init + scatter: (N,1) -> (1,N) view + pad.
    x_row = x.reshape(1, N)
    if n_pad > N:
        x_row = jnp.pad(x_row, ((0, 0), (0, n_pad - N)))

    flat_args = _pack_params(params, mxu_dtype)

    def const_spec(arr):
        # Constant index_map + single buffer: weights stay VMEM-resident across
        # grid steps with no per-step double-buffer DMA bookkeeping.
        return pl.BlockSpec(arr.shape, lambda i: (0, 0), pipeline_mode=pl.Buffered(1))

    in_specs = [pl.BlockSpec((1, tile_n), lambda i: (0, i))]
    in_specs += [const_spec(a) for a in flat_args]
    out_spec = pl.BlockSpec((1, tile_n), lambda i: (0, i))

    # Explicit VMEM budget (v7x only has 64 MiB physical / 32 MiB scoped default).
    weight_bytes = sum(int(a.size) * a.dtype.itemsize for a in flat_args)
    vmem_limit = int(
        weight_bytes                                  # resident weights (single-buffered)
        + 2 * 2 * tile_n * 4                          # double-buffered (1, tile_n) in/out rows
        + 16 * (41 + 101 + 40 + 2) * chunk * 4        # headroom for unrolled per-chunk intermediates
        + (2 << 20)                                   # compiler slack
    )

    out_row = pl.pallas_call(
        functools.partial(mlp_kernel, chunk=chunk),
        out_shape=jax.ShapeDtypeStruct((1, n_pad), jnp.float32),
        grid_spec=pltpu.PrefetchScalarGridSpec(
            num_scalar_prefetch=0,
            grid=(num_tiles,),
            in_specs=in_specs,
            out_specs=out_spec,
        ),
        compiler_params=pltpu.CompilerParams(
            dimension_semantics=("parallel",),   # shards grid steps across TCs on v7x
            vmem_limit_bytes=vmem_limit,
        ),
    )(x_row, *flat_args)

    return out_row[0, :N].reshape(N, 1)


def init_params(key):
    """Deterministic init mimicking PyTorch Linear default U(-1/sqrt(in), 1/sqrt(in)).

    Returns params in PyTorch convention: W (out, in), b (out,).
    """
    params = []
    for i in range(len(DIMS) - 1):
        fan_in, fan_out = DIMS[i], DIMS[i + 1]
        key, kw, kb = jax.random.split(key, 3)
        bound = 1.0 / jnp.sqrt(jnp.asarray(fan_in, jnp.float32))
        w = jax.random.uniform(kw, (fan_out, fan_in), jnp.float32, -bound, bound)
        b = jax.random.uniform(kb, (fan_out,), jnp.float32, -bound, bound)
        params.append((w, b))
    return params


def reference_forward(x, params):
    """Plain-JAX reference (PyTorch semantics: x @ W.T + b)."""
    h = x
    for i, (w, b) in enumerate(params):
        h = h @ w.T + b
        if i < len(params) - 1:
            h = jnp.maximum(h, 0.0)
    return h


if __name__ == "__main__":
    key = jax.random.PRNGKey(0)
    key, kx = jax.random.split(key)

    # Module forward implies (batch, 1) input. Batch chosen so the wrapper
    # produces exactly 2 fat grid steps (tile_n = 4096, 8 lane-chunks each).
    N = 8192
    x = jax.random.normal(kx, (N, 1), jnp.float32)
    params = init_params(key)

    ref = reference_forward(x, params)

    # f32 MXU path (exact; right choice on v5e).
    out = jax.block_until_ready(net_relu4_fat(x, params))
    assert out.shape == (N, 1)
    assert jnp.allclose(out, ref, atol=1e-5, rtol=1e-5), "f32 Pallas output mismatch vs reference"

    # bf16 MXU-input path (v6e/v7x fast path, f32 accumulation) — relaxed tolerance.
    out_bf16 = jax.block_until_ready(net_relu4_fat(x, params, mxu_dtype=jnp.bfloat16))
    assert out_bf16.shape == (N, 1)
    assert jnp.allclose(out_bf16, ref, atol=3e-2, rtol=3e-2), "bf16 Pallas output mismatch vs reference"

    print("KERNEL_OK")
</pallas_src>

<mosaic_0001>
module attributes {stable_mosaic.version = 11 : i64} {
  func.func @mlp_kernel(%arg0: i32, %arg1: memref<1x4096xf32, #tpu.memory_space<vmem>>, %arg2: memref<41x1xf32, #tpu.memory_space<vmem>>, %arg3: memref<41x1xf32, #tpu.memory_space<vmem>>, %arg4: memref<101x41xf32, #tpu.memory_space<vmem>>, %arg5: memref<40x101xf32, #tpu.memory_space<vmem>>, %arg6: memref<40x1xf32, #tpu.memory_space<vmem>>, %arg7: memref<1x1xf32, #tpu.memory_space<vmem>>, %arg8: memref<1x4096xf32, #tpu.memory_space<vmem>>) attributes {dimension_semantics = [#tpu.dimension_semantics<parallel>], iteration_bounds = array<i64: 2>, scalar_prefetch = 0 : i64, scratch_operands = 0 : i64, tpu.core_type = #tpu.core_type<tc>, window_params = [{transform_indices = @transform_0, window_bounds = array<i64: 1, 4096>}, {pipeline_mode = #tpu.pipeline_mode<synchronous>, transform_indices = @transform_1, window_bounds = array<i64: 41, 1>}, {pipeline_mode = #tpu.pipeline_mode<synchronous>, transform_indices = @transform_2, window_bounds = array<i64: 41, 1>}, {pipeline_mode = #tpu.pipeline_mode<synchronous>, transform_indices = @transform_3, window_bounds = array<i64: 101, 41>}, {pipeline_mode = #tpu.pipeline_mode<synchronous>, transform_indices = @transform_4, window_bounds = array<i64: 40, 101>}, {pipeline_mode = #tpu.pipeline_mode<synchronous>, transform_indices = @transform_5, window_bounds = array<i64: 40, 1>}, {pipeline_mode = #tpu.pipeline_mode<synchronous>, transform_indices = @transform_6, window_bounds = array<i64: 1, 1>}, {transform_indices = @transform_7, window_bounds = array<i64: 1, 4096>}]} {
    %c0 = arith.constant 0 : index
    %c0_0 = arith.constant 0 : index
    %0 = vector.load %arg2[%c0, %c0_0] : memref<41x1xf32, #tpu.memory_space<vmem>>, vector<41x1xf32>
    %c0_1 = arith.constant 0 : index
    %c0_2 = arith.constant 0 : index
    %1 = vector.load %arg3[%c0_1, %c0_2] : memref<41x1xf32, #tpu.memory_space<vmem>>, vector<41x1xf32>
    %c0_3 = arith.constant 0 : index
    %c0_4 = arith.constant 0 : index
    %2 = vector.load %arg4[%c0_3, %c0_4] : memref<101x41xf32, #tpu.memory_space<vmem>>, vector<101x41xf32>
    %c0_5 = arith.constant 0 : index
    %c0_6 = arith.constant 0 : index
    %3 = vector.load %arg5[%c0_5, %c0_6] : memref<40x101xf32, #tpu.memory_space<vmem>>, vector<40x101xf32>
    %c0_7 = arith.constant 0 : index
    %c0_8 = arith.constant 0 : index
    %4 = vector.load %arg6[%c0_7, %c0_8] : memref<40x1xf32, #tpu.memory_space<vmem>>, vector<40x1xf32>
    %c0_9 = arith.constant 0 : index
    %c0_10 = arith.constant 0 : index
    %5 = vector.load %arg7[%c0_9, %c0_10] : memref<1x1xf32, #tpu.memory_space<vmem>>, vector<1x1xf32>
    %c0_i32 = arith.constant 0 : i32
    %c512_i32 = arith.constant 512 : i32
    %6 = arith.muli %c0_i32, %c512_i32 : i32
    %7 = tpu.assume_multiple %6, 512 : i32
    %c0_11 = arith.constant 0 : index
    %8 = arith.index_cast %7 : i32 to index
    %9 = vector.load %arg1[%c0_11, %8] : memref<1x4096xf32, #tpu.memory_space<vmem>>, vector<1x512xf32>
    %10 = vector.broadcast %0 : vector<41x1xf32> to vector<41x512xf32>
    %11 = vector.broadcast %9 : vector<1x512xf32> to vector<41x512xf32>
    %12 = arith.mulf %10, %11 : vector<41x512xf32>
    %13 = vector.broadcast %1 : vector<41x1xf32> to vector<41x512xf32>
    %14 = arith.addf %12, %13 : vector<41x512xf32>
    %cst = arith.constant 0.000000e+00 : f32
    %15 = vector.broadcast %cst : f32 to vector<41x512xf32>
    %16 = arith.maximumf %14, %15 : vector<41x512xf32>
    %cst_12 = arith.constant dense<0.000000e+00> : vector<101x512xf32>
    %17 = tpu.matmul %2, %16, %cst_12 {dimension_numbers = #tpu.dot_dimension_numbers<[1], [0], [0], [1], [0, 0, 1, 1], [], []>} : vector<101x41xf32>, vector<41x512xf32>, vector<101x512xf32> -> vector<101x512xf32>
    %cst_13 = arith.constant 0.000000e+00 : f32
    %18 = vector.broadcast %cst_13 : f32 to vector<101x512xf32>
    %19 = arith.maximumf %17, %18 : vector<101x512xf32>
    %cst_14 = arith.constant dense<0.000000e+00> : vector<40x512xf32>
    %20 = tpu.matmul %3, %19, %cst_14 {dimension_numbers = #tpu.dot_dimension_numbers<[1], [0], [0], [1], [0, 0, 1, 1], [], []>} : vector<40x101xf32>, vector<101x512xf32>, vector<40x512xf32> -> vector<40x512xf32>
    %cst_15 = arith.constant 0.000000e+00 : f32
    %21 = vector.broadcast %cst_15 : f32 to vector<40x512xf32>
    %22 = arith.maximumf %20, %21 : vector<40x512xf32>
    %23 = vector.broadcast %4 : vector<40x1xf32> to vector<40x512xf32>
    %24 = arith.mulf %23, %22 : vector<40x512xf32>
    %cst_16 = arith.constant dense<0.000000e+00> : vector<512xf32>
    %25 = vector.multi_reduction <add>, %24, %cst_16 [0] : vector<40x512xf32> to vector<512xf32>
    %26 = vector.shape_cast %25 : vector<512xf32> to vector<1x512xf32>
    %27 = vector.broadcast %5 : vector<1x1xf32> to vector<1x512xf32>
    %28 = arith.addf %26, %27 : vector<1x512xf32>
    %c0_17 = arith.constant 0 : index
    %29 = arith.index_cast %7 : i32 to index
    %30 = vector.load %arg8[%c0_17, %29] : memref<1x4096xf32, #tpu.memory_space<vmem>>, vector<1x512xf32>
    tpu.vector_store %arg8[%c0_17, %29], %28 {strides = array<i32>} : memref<1x4096xf32, #tpu.memory_space<vmem>>, vector<1x512xf32>,
    %c1_i32 = arith.constant 1 : i32
    %c512_i32_18 = arith.constant 512 : i32
    %31 = arith.muli %c1_i32, %c512_i32_18 : i32
    %32 = tpu.assume_multiple %31, 512 : i32
    %c0_19 = arith.constant 0 : index
    %33 = arith.index_cast %32 : i32 to index
    %34 = vector.load %arg1[%c0_19, %33] : memref<1x4096xf32, #tpu.memory_space<vmem>>, vector<1x512xf32>
    %35 = vector.broadcast %0 : vector<41x1xf32> to vector<41x512xf32>
    %36 = vector.broadcast %34 : vector<1x512xf32> to vector<41x512xf32>
    %37 = arith.mulf %35, %36 : vector<41x512xf32>
    %38 = vector.broadcast %1 : vector<41x1xf32> to vector<41x512xf32>
    %39 = arith.addf %37, %38 : vector<41x512xf32>
    %cst_20 = arith.constant 0.000000e+00 : f32
    %40 = vector.broadcast %cst_20 : f32 to vector<41x512xf32>
    %41 = arith.maximumf %39, %40 : vector<41x512xf32>
    %cst_21 = arith.constant dense<0.000000e+00> : vector<101x512xf32>
    %42 = tpu.matmul %2, %41, %cst_21 {dimension_numbers = #tpu.dot_dimension_numbers<[1], [0], [0], [1], [0, 0, 1, 1], [], []>} : vector<101x41xf32>, vector<41x512xf32>, vector<101x512xf32> -> vector<101x512xf32>
    %cst_22 = arith.constant 0.000000e+00 : f32
    %43 = vector.broadcast %cst_22 : f32 to vector<101x512xf32>
    %44 = arith.maximumf %42, %43 : vector<101x512xf32>
    %cst_23 = arith.constant dense<0.000000e+00> : vector<40x512xf32>
    %45 = tpu.matmul %3, %44, %cst_23 {dimension_numbers = #tpu.dot_dimension_numbers<[1], [0], [0], [1], [0, 0, 1, 1], [], []>} : vector<40x101xf32>, vector<101x512xf32>, vector<40x512xf32> -> vector<40x512xf32>
    %cst_24 = arith.constant 0.000000e+00 : f32
    %46 = vector.broadcast %cst_24 : f32 to vector<40x512xf32>
    %47 = arith.maximumf %45, %46 : vector<40x512xf32>
    %48 = vector.broadcast %4 : vector<40x1xf32> to vector<40x512xf32>
    %49 = arith.mulf %48, %47 : vector<40x512xf32>
    %cst_25 = arith.constant dense<0.000000e+00> : vector<512xf32>
    %50 = vector.multi_reduction <add>, %49, %cst_25 [0] : vector<40x512xf32> to vector<512xf32>
    %51 = vector.shape_cast %50 : vector<512xf32> to vector<1x512xf32>
    %52 = vector.broadcast %5 : vector<1x1xf32> to vector<1x512xf32>
    %53 = arith.addf %51, %52 : vector<1x512xf32>
    %c0_26 = arith.constant 0 : index
    %54 = arith.index_cast %32 : i32 to index
    %55 = vector.load %arg8[%c0_26, %54] : memref<1x4096xf32, #tpu.memory_space<vmem>>, vector<1x512xf32>
    tpu.vector_store %arg8[%c0_26, %54], %53 {strides = array<i32>} : memref<1x4096xf32, #tpu.memory_space<vmem>>, vector<1x512xf32>,
    %c2_i32 = arith.constant 2 : i32
    %c512_i32_27 = arith.constant 512 : i32
    %56 = arith.muli %c2_i32, %c512_i32_27 : i32
    %57 = tpu.assume_multiple %56, 512 : i32
    %c0_28 = arith.constant 0 : index
    %58 = arith.index_cast %57 : i32 to index
    %59 = vector.load %arg1[%c0_28, %58] : memref<1x4096xf32, #tpu.memory_space<vmem>>, vector<1x512xf32>
    %60 = vector.broadcast %0 : vector<41x1xf32> to vector<41x512xf32>
    %61 = vector.broadcast %59 : vector<1x512xf32> to vector<41x512xf32>
    %62 = arith.mulf %60, %61 : vector<41x512xf32>
    %63 = vector.broadcast %1 : vector<41x1xf32> to vector<41x512xf32>
    %64 = arith.addf %62, %63 : vector<41x512xf32>
    %cst_29 = arith.constant 0.000000e+00 : f32
    %65 = vector.broadcast %cst_29 : f32 to vector<41x512xf32>
    %66 = arith.maximumf %64, %65 : vector<41x512xf32>
    %cst_30 = arith.constant dense<0.000000e+00> : vector<101x512xf32>
    %67 = tpu.matmul %2, %66, %cst_30 {dimension_numbers = #tpu.dot_dimension_numbers<[1], [0], [0], [1], [0, 0, 1, 1], [], []>} : vector<101x41xf32>, vector<41x512xf32>, vector<101x512xf32> -> vector<101x512xf32>
    %cst_31 = arith.constant 0.000000e+00 : f32
    %68 = vector.broadcast %cst_31 : f32 to vector<101x512xf32>
    %69 = arith.maximumf %67, %68 : vector<101x512xf32>
    %cst_32 = arith.constant dense<0.000000e+00> : vector<40x512xf32>
    %70 = tpu.matmul %3, %69, %cst_32 {dimension_numbers = #tpu.dot_dimension_numbers<[1], [0], [0], [1], [0, 0, 1, 1], [], []>} : vector<40x101xf32>, vector<101x512xf32>, vector<40x512xf32> -> vector<40x512xf32>
    %cst_33 = arith.constant 0.000000e+00 : f32
    %71 = vector.broadcast %cst_33 : f32 to vector<40x512xf32>
    %72 = arith.maximumf %70, %71 : vector<40x512xf32>
    %73 = vector.broadcast %4 : vector<40x1xf32> to vector<40x512xf32>
    %74 = arith.mulf %73, %72 : vector<40x512xf32>
    %cst_34 = arith.constant dense<0.000000e+00> : vector<512xf32>
    %75 = vector.multi_reduction <add>, %74, %cst_34 [0] : vector<40x512xf32> to vector<512xf32>
    %76 = vector.shape_cast %75 : vector<512xf32> to vector<1x512xf32>
    %77 = vector.broadcast %5 : vector<1x1xf32> to vector<1x512xf32>
    %78 = arith.addf %76, %77 : vector<1x512xf32>
    %c0_35 = arith.constant 0 : index
    %79 = arith.index_cast %57 : i32 to index
    %80 = vector.load %arg8[%c0_35, %79] : memref<1x4096xf32, #tpu.memory_space<vmem>>, vector<1x512xf32>
    tpu.vector_store %arg8[%c0_35, %79], %78 {strides = array<i32>} : memref<1x4096xf32, #tpu.memory_space<vmem>>, vector<1x512xf32>,
    %c3_i32 = arith.constant 3 : i32
    %c512_i32_36 = arith.constant 512 : i32
    %81 = arith.muli %c3_i32, %c512_i32_36 : i32
    %82 = tpu.assume_multiple %81, 512 : i32
    %c0_37 = arith.constant 0 : index
    %83 = arith.index_cast %82 : i32 to index
    %84 = vector.load %arg1[%c0_37, %83] : memref<1x4096xf32, #tpu.memory_space<vmem>>, vector<1x512xf32>
    %85 = vector.broadcast %0 : vector<41x1xf32> to vector<41x512xf32>
    %86 = vector.broadcast %84 : vector<1x512xf32> to vector<41x512xf32>
    %87 = arith.mulf %85, %86 : vector<41x512xf32>
    %88 = vector.broadcast %1 : vector<41x1xf32> to vector<41x512xf32>
    %89 = arith.addf %87, %88 : vector<41x512xf32>
    %cst_38 = arith.constant 0.000000e+00 : f32
    %90 = vector.broadcast %cst_38 : f32 to vector<41x512xf32>
    %91 = arith.maximumf %89, %90 : vector<41x512xf32>
    %cst_39 = arith.constant dense<0.000000e+00> : vector<101x512xf32>
    %92 = tpu.matmul %2, %91, %cst_39 {dimension_numbers = #tpu.dot_dimension_numbers<[1], [0], [0], [1], [0, 0, 1, 1], [], []>} : vector<101x41xf32>, vector<41x512xf32>, vector<101x512xf32> -> vector<101x512xf32>
    %cst_40 = arith.constant 0.000000e+00 : f32
    %93 = vector.broadcast %cst_40 : f32 to vector<101x512xf32>
    %94 = arith.maximumf %92, %93 : vector<101x512xf32>
    %cst_41 = arith.constant dense<0.000000e+00> : vector<40x512xf32>
    %95 = tpu.matmul %3, %94, %cst_41 {dimension_numbers = #tpu.dot_dimension_numbers<[1], [0], [0], [1], [0, 0, 1, 1], [], []>} : vector<40x101xf32>, vector<101x512xf32>, vector<40x512xf32> -> vector<40x512xf32>
    %cst_42 = arith.constant 0.000000e+00 : f32
    %96 = vector.broadcast %cst_42 : f32 to vector<40x512xf32>
    %97 = arith.maximumf %95, %96 : vector<40x512xf32>
    %98 = vector.broadcast %4 : vector<40x1xf32> to vector<40x512xf32>
    %99 = arith.mulf %98, %97 : vector<40x512xf32>
    %cst_43 = arith.constant dense<0.000000e+00> : vector<512xf32>
    %100 = vector.multi_reduction <add>, %99, %cst_43 [0] : vector<40x512xf32> to vector<512xf32>
    %101 = vector.shape_cast %100 : vector<512xf32> to vector<1x512xf32>
    %102 = vector.broadcast %5 : vector<1x1xf32> to vector<1x512xf32>
    %103 = arith.addf %101, %102 : vector<1x512xf32>
    %c0_44 = arith.constant 0 : index
    %104 = arith.index_cast %82 : i32 to index
    %105 = vector.load %arg8[%c0_44, %104] : memref<1x4096xf32, #tpu.memory_space<vmem>>, vector<1x512xf32>
    tpu.vector_store %arg8[%c0_44, %104], %103 {strides = array<i32>} : memref<1x4096xf32, #tpu.memory_space<vmem>>, vector<1x512xf32>,
    %c4_i32 = arith.constant 4 : i32
    %c512_i32_45 = arith.constant 512 : i32
    %106 = arith.muli %c4_i32, %c512_i32_45 : i32
    %107 = tpu.assume_multiple %106, 512 : i32
    %c0_46 = arith.constant 0 : index
    %108 = arith.index_cast %107 : i32 to index
    %109 = vector.load %arg1[%c0_46, %108] : memref<1x4096xf32, #tpu.memory_space<vmem>>, vector<1x512xf32>
    %110 = vector.broadcast %0 : vector<41x1xf32> to vector<41x512xf32>
    %111 = vector.broadcast %109 : vector<1x512xf32> to vector<41x512xf32>
    %112 = arith.mulf %110, %111 : vector<41x512xf32>
    %113 = vector.broadcast %1 : vector<41x1xf32> to vector<41x512xf32>
    %114 = arith.addf %112, %113 : vector<41x512xf32>
    %cst_47 = arith.constant 0.000000e+00 : f32
    %115 = vector.broadcast %cst_47 : f32 to vector<41x512xf32>
    %116 = arith.maximumf %114, %115 : vector<41x512xf32>
    %cst_48 = arith.constant dense<0.000000e+00> : vector<101x512xf32>
    %117 = tpu.matmul %2, %116, %cst_48 {dimension_numbers = #tpu.dot_dimension_numbers<[1], [0], [0], [1], [0, 0, 1, 1], [], []>} : vector<101x41xf32>, vector<41x512xf32>, vector<101x512xf32> -> vector<101x512xf32>
    %cst_49 = arith.constant 0.000000e+00 : f32
    %118 = vector.broadcast %cst_49 : f32 to vector<101x512xf32>
    %119 = arith.maximumf %117, %118 : vector<101x512xf32>
    %cst_50 = arith.constant dense<0.000000e+00> : vector<40x512xf32>
    %120 = tpu.matmul %3, %119, %cst_50 {dimension_numbers = #tpu.dot_dimension_numbers<[1], [0], [0], [1], [0, 0, 1, 1], [], []>} : vector<40x101xf32>, vector<101x512xf32>, vector<40x512xf32> -> vector<40x512xf32>
    %cst_51 = arith.constant 0.000000e+00 : f32
    %121 = vector.broadcast %cst_51 : f32 to vector<40x512xf32>
    %122 = arith.maximumf %120, %121 : vector<40x512xf32>
    %123 = vector.broadcast %4 : vector<40x1xf32> to vector<40x512xf32>
    %124 = arith.mulf %123, %122 : vector<40x512xf32>
    %cst_52 = arith.constant dense<0.000000e+00> : vector<512xf32>
    %125 = vector.multi_reduction <add>, %124, %cst_52 [0] : vector<40x512xf32> to vector<512xf32>
    %126 = vector.shape_cast %125 : vector<512xf32> to vector<1x512xf32>
    %127 = vector.broadcast %5 : vector<1x1xf32> to vector<1x512xf32>
    %128 = arith.addf %126, %127 : vector<1x512xf32>
    %c0_53 = arith.constant 0 : index
    %129 = arith.index_cast %107 : i32 to index
    %130 = vector.load %arg8[%c0_53, %129] : memref<1x4096xf32, #tpu.memory_space<vmem>>, vector<1x512xf32>
    tpu.vector_store %arg8[%c0_53, %129], %128 {strides = array<i32>} : memref<1x4096xf32, #tpu.memory_space<vmem>>, vector<1x512xf32>,
    %c5_i32 = arith.constant 5 : i32
    %c512_i32_54 = arith.constant 512 : i32
    %131 = arith.muli %c5_i32, %c512_i32_54 : i32
    %132 = tpu.assume_multiple %131, 512 : i32
    %c0_55 = arith.constant 0 : index
    %133 = arith.index_cast %132 : i32 to index
    %134 = vector.load %arg1[%c0_55, %133] : memref<1x4096xf32, #tpu.memory_space<vmem>>, vector<1x512xf32>
    %135 = vector.broadcast %0 : vector<41x1xf32> to vector<41x512xf32>
    %136 = vector.broadcast %134 : vector<1x512xf32> to vector<41x512xf32>
    %137 = arith.mulf %135, %136 : vector<41x512xf32>
    %138 = vector.broadcast %1 : vector<41x1xf32> to vector<41x512xf32>
    %139 = arith.addf %137, %138 : vector<41x512xf32>
    %cst_56 = arith.constant 0.000000e+00 : f32
    %140 = vector.broadcast %cst_56 : f32 to vector<41x512xf32>
    %141 = arith.maximumf %139, %140 : vector<41x512xf32>
    %cst_57 = arith.constant dense<0.000000e+00> : vector<101x512xf32>
    %142 = tpu.matmul %2, %141, %cst_57 {dimension_numbers = #tpu.dot_dimension_numbers<[1], [0], [0], [1], [0, 0, 1, 1], [], []>} : vector<101x41xf32>, vector<41x512xf32>, vector<101x512xf32> -> vector<101x512xf32>
    %cst_58 = arith.constant 0.000000e+00 : f32
    %143 = vector.broadcast %cst_58 : f32 to vector<101x512xf32>
    %144 = arith.maximumf %142, %143 : vector<101x512xf32>
    %cst_59 = arith.constant dense<0.000000e+00> : vector<40x512xf32>
    %145 = tpu.matmul %3, %144, %cst_59 {dimension_numbers = #tpu.dot_dimension_numbers<[1], [0], [0], [1], [0, 0, 1, 1], [], []>} : vector<40x101xf32>, vector<101x512xf32>, vector<40x512xf32> -> vector<40x512xf32>
    %cst_60 = arith.constant 0.000000e+00 : f32
    %146 = vector.broadcast %cst_60 : f32 to vector<40x512xf32>
    %147 = arith.maximumf %145, %146 : vector<40x512xf32>
    %148 = vector.broadcast %4 : vector<40x1xf32> to vector<40x512xf32>
    %149 = arith.mulf %148, %147 : vector<40x512xf32>
    %cst_61 = arith.constant dense<0.000000e+00> : vector<512xf32>
    %150 = vector.multi_reduction <add>, %149, %cst_61 [0] : vector<40x512xf32> to vector<512xf32>
    %151 = vector.shape_cast %150 : vector<512xf32> to vector<1x512xf32>
    %152 = vector.broadcast %5 : vector<1x1xf32> to vector<1x512xf32>
    %153 = arith.addf %151, %152 : vector<1x512xf32>
    %c0_62 = arith.constant 0 : index
    %154 = arith.index_cast %132 : i32 to index
    %155 = vector.load %arg8[%c0_62, %154] : memref<1x4096xf32, #tpu.memory_space<vmem>>, vector<1x512xf32>
    tpu.vector_store %arg8[%c0_62, %154], %153 {strides = array<i32>} : memref<1x4096xf32, #tpu.memory_space<vmem>>, vector<1x512xf32>,
    %c6_i32 = arith.constant 6 : i32
    %c512_i32_63 = arith.constant 512 : i32
    %156 = arith.muli %c6_i32, %c512_i32_63 : i32
    %157 = tpu.assume_multiple %156, 512 : i32
    %c0_64 = arith.constant 0 : index
    %158 = arith.index_cast %157 : i32 to index
    %159 = vector.load %arg1[%c0_64, %158] : memref<1x4096xf32, #tpu.memory_space<vmem>>, vector<1x512xf32>
    %160 = vector.broadcast %0 : vector<41x1xf32> to vector<41x512xf32>
    %161 = vector.broadcast %159 : vector<1x512xf32> to vector<41x512xf32>
    %162 = arith.mulf %160, %161 : vector<41x512xf32>
    %163 = vector.broadcast %1 : vector<41x1xf32> to vector<41x512xf32>
    %164 = arith.addf %162, %163 : vector<41x512xf32>
    %cst_65 = arith.constant 0.000000e+00 : f32
    %165 = vector.broadcast %cst_65 : f32 to vector<41x512xf32>
    %166 = arith.maximumf %164, %165 : vector<41x512xf32>
    %cst_66 = arith.constant dense<0.000000e+00> : vector<101x512xf32>
    %167 = tpu.matmul %2, %166, %cst_66 {dimension_numbers = #tpu.dot_dimension_numbers<[1], [0], [0], [1], [0, 0, 1, 1], [], []>} : vector<101x41xf32>, vector<41x512xf32>, vector<101x512xf32> -> vector<101x512xf32>
    %cst_67 = arith.constant 0.000000e+00 : f32
    %168 = vector.broadcast %cst_67 : f32 to vector<101x512xf32>
    %169 = arith.maximumf %167, %168 : vector<101x512xf32>
    %cst_68 = arith.constant dense<0.000000e+00> : vector<40x512xf32>
    %170 = tpu.matmul %3, %169, %cst_68 {dimension_numbers = #tpu.dot_dimension_numbers<[1], [0], [0], [1], [0, 0, 1, 1], [], []>} : vector<40x101xf32>, vector<101x512xf32>, vector<40x512xf32> -> vector<40x512xf32>
    %cst_69 = arith.constant 0.000000e+00 : f32
    %171 = vector.broadcast %cst_69 : f32 to vector<40x512xf32>
    %172 = arith.maximumf %170, %171 : vector<40x512xf32>
    %173 = vector.broadcast %4 : vector<40x1xf32> to vector<40x512xf32>
    %174 = arith.mulf %173, %172 : vector<40x512xf32>
    %cst_70 = arith.constant dense<0.000000e+00> : vector<512xf32>
    %175 = vector.multi_reduction <add>, %174, %cst_70 [0] : vector<40x512xf32> to vector<512xf32>
    %176 = vector.shape_cast %175 : vector<512xf32> to vector<1x512xf32>
    %177 = vector.broadcast %5 : vector<1x1xf32> to vector<1x512xf32>
    %178 = arith.addf %176, %177 : vector<1x512xf32>
    %c0_71 = arith.constant 0 : index
    %179 = arith.index_cast %157 : i32 to index
    %180 = vector.load %arg8[%c0_71, %179] : memref<1x4096xf32, #tpu.memory_space<vmem>>, vector<1x512xf32>
    tpu.vector_store %arg8[%c0_71, %179], %178 {strides = array<i32>} : memref<1x4096xf32, #tpu.memory_space<vmem>>, vector<1x512xf32>,
    %c7_i32 = arith.constant 7 : i32
    %c512_i32_72 = arith.constant 512 : i32
    %181 = arith.muli %c7_i32, %c512_i32_72 : i32
    %182 = tpu.assume_multiple %181, 512 : i32
    %c0_73 = arith.constant 0 : index
    %183 = arith.index_cast %182 : i32 to index
    %184 = vector.load %arg1[%c0_73, %183] : memref<1x4096xf32, #tpu.memory_space<vmem>>, vector<1x512xf32>
    %185 = vector.broadcast %0 : vector<41x1xf32> to vector<41x512xf32>
    %186 = vector.broadcast %184 : vector<1x512xf32> to vector<41x512xf32>
    %187 = arith.mulf %185, %186 : vector<41x512xf32>
    %188 = vector.broadcast %1 : vector<41x1xf32> to vector<41x512xf32>
    %189 = arith.addf %187, %188 : vector<41x512xf32>
    %cst_74 = arith.constant 0.000000e+00 : f32
    %190 = vector.broadcast %cst_74 : f32 to vector<41x512xf32>
    %191 = arith.maximumf %189, %190 : vector<41x512xf32>
    %cst_75 = arith.constant dense<0.000000e+00> : vector<101x512xf32>
    %192 = tpu.matmul %2, %191, %cst_75 {dimension_numbers = #tpu.dot_dimension_numbers<[1], [0], [0], [1], [0, 0, 1, 1], [], []>} : vector<101x41xf32>, vector<41x512xf32>, vector<101x512xf32> -> vector<101x512xf32>
    %cst_76 = arith.constant 0.000000e+00 : f32
    %193 = vector.broadcast %cst_76 : f32 to vector<101x512xf32>
    %194 = arith.maximumf %192, %193 : vector<101x512xf32>
    %cst_77 = arith.constant dense<0.000000e+00> : vector<40x512xf32>
    %195 = tpu.matmul %3, %194, %cst_77 {dimension_numbers = #tpu.dot_dimension_numbers<[1], [0], [0], [1], [0, 0, 1, 1], [], []>} : vector<40x101xf32>, vector<101x512xf32>, vector<40x512xf32> -> vector<40x512xf32>
    %cst_78 = arith.constant 0.000000e+00 : f32
    %196 = vector.broadcast %cst_78 : f32 to vector<40x512xf32>
    %197 = arith.maximumf %195, %196 : vector<40x512xf32>
    %198 = vector.broadcast %4 : vector<40x1xf32> to vector<40x512xf32>
    %199 = arith.mulf %198, %197 : vector<40x512xf32>
    %cst_79 = arith.constant dense<0.000000e+00> : vector<512xf32>
    %200 = vector.multi_reduction <add>, %199, %cst_79 [0] : vector<40x512xf32> to vector<512xf32>
    %201 = vector.shape_cast %200 : vector<512xf32> to vector<1x512xf32>
    %202 = vector.broadcast %5 : vector<1x1xf32> to vector<1x512xf32>
    %203 = arith.addf %201, %202 : vector<1x512xf32>
    %c0_80 = arith.constant 0 : index
    %204 = arith.index_cast %182 : i32 to index
    %205 = vector.load %arg8[%c0_80, %204] : memref<1x4096xf32, #tpu.memory_space<vmem>>, vector<1x512xf32>
    tpu.vector_store %arg8[%c0_80, %204], %203 {strides = array<i32>} : memref<1x4096xf32, #tpu.memory_space<vmem>>, vector<1x512xf32>,
    %c8_i32 = arith.constant 8 : i32
    return
  }
  func.func @transform_0(%arg0: i32) -> (i32, i32) {
    %c0_i32 = arith.constant 0 : i32
    %c0_i32_0 = arith.constant 0 : i32
    return %c0_i32, %arg0 : i32, i32
  }
  func.func @transform_1(%arg0: i32) -> (i32, i32) {
    %c0_i32 = arith.constant 0 : i32
    %c0_i32_0 = arith.constant 0 : i32
    %c0_i32_1 = arith.constant 0 : i32
    return %c0_i32, %c0_i32_0 : i32, i32
  }
  func.func @transform_2(%arg0: i32) -> (i32, i32) {
    %c0_i32 = arith.constant 0 : i32
    %c0_i32_0 = arith.constant 0 : i32
    %c0_i32_1 = arith.constant 0 : i32
    return %c0_i32, %c0_i32_0 : i32, i32
  }
  func.func @transform_3(%arg0: i32) -> (i32, i32) {
    %c0_i32 = arith.constant 0 : i32
    %c0_i32_0 = arith.constant 0 : i32
    %c0_i32_1 = arith.constant 0 : i32
    return %c0_i32, %c0_i32_0 : i32, i32
  }
  func.func @transform_4(%arg0: i32) -> (i32, i32) {
    %c0_i32 = arith.constant 0 : i32
    %c0_i32_0 = arith.constant 0 : i32
    %c0_i32_1 = arith.constant 0 : i32
    return %c0_i32, %c0_i32_0 : i32, i32
  }
  func.func @transform_5(%arg0: i32) -> (i32, i32) {
    %c0_i32 = arith.constant 0 : i32
    %c0_i32_0 = arith.constant 0 : i32
    %c0_i32_1 = arith.constant 0 : i32
    return %c0_i32, %c0_i32_0 : i32, i32
  }
  func.func @transform_6(%arg0: i32) -> (i32, i32) {
    %c0_i32 = arith.constant 0 : i32
    %c0_i32_0 = arith.constant 0 : i32
    %c0_i32_1 = arith.constant 0 : i32
    return %c0_i32, %c0_i32_0 : i32, i32
  }
  func.func @transform_7(%arg0: i32) -> (i32, i32) {
    %c0_i32 = arith.constant 0 : i32
    %c0_i32_0 = arith.constant 0 : i32
    return %c0_i32, %arg0 : i32, i32
  }
}

</mosaic_0001>

<llo_original>
// kernel: tpu_custom_call.1
$region0: #{tpu_custom_call.1}
  #allocation0 [shape = 'u32[]', space=smem, size = 0x4, offset = 0x4, fixed_abs, tag = 'smem constant byte address 0x4 - core index']
  #allocation1 [shape = 'u32[144,128]{1,0:T(1,128)}', space=vmem, size = 0x12000, scoped, tag = 'internal scratch']
  #allocation2 [shape = 'f32[1,1]{1,0:T(1,128)S(1)}', space=vmem, size = 0x200, scoped, tag = 'scoped memory for tpu_custom_call.1']
  %s0 = inlined_call_operand.vmem [shape: f32[1,8192], index: 0, kind: input, shape index: {}]
  %s1 = inlined_call_operand.vmem [shape: f32[41,1], index: 1, kind: input, shape index: {}]
  %s2 = inlined_call_operand.vmem [shape: f32[41,1], index: 2, kind: input, shape index: {}]
  %s3 = inlined_call_operand.vmem [shape: f32[101,41], index: 3, kind: input, shape index: {}]
  %s4 = inlined_call_operand.vmem [shape: f32[40,101], index: 4, kind: input, shape index: {}]
  %s5 = inlined_call_operand.vmem [shape: f32[40,1], index: 5, kind: input, shape index: {}]
  %s6 = inlined_call_operand.<no memory space> [shape: f32[1,1], index: 6, kind: input, shape index: {}]
  %s7 = inlined_call_operand.hbm [shape: f32[1,8192], index: 7, kind: output, shape index: {}]
  %s8 = sld [smem:[#allocation0]]
  $region61: #{tpu_custom_call.1} parent=0
    _
  %s10 = ssub.s32 1, %s8
  %s11 = scalar_select 0, %s10, %s8
  %v12 = vstv %s6
  %13 = vst [vmem:[#allocation2] sm:$0x1] %v12
  $region1: #{tpu_custom_call.1} parent=0
    #allocation3 [shape = 'u8[32768]{0}', space=vmem, size = 0x8000, scoped, tag = 'output window, operand 0']
    #allocation4 [shape = 's32[2]{0}', space=sflag, size = 0x8, scoped, tag = 'scoped memory for tpu_custom_call.1']
    %14 = vsyncpa [#allocation4], 0
    %s15 = scalar_lea.sflag [#allocation4], 1
    %16 = vsyncpa %s15, 0
    loop: start=0, step=1, limit=4
    $region2: #{tpu_custom_call.1} parent=1 // loop_pre_header
      _
    $region3: #{tpu_custom_call.1} parent=1 // loop_header
      %s18 = sphi 0, %s22
      %p19 = scmp.ge.s32.totalorder %s18, 4
      %s28 = sphi 0, %s30
      %s31 = sphi 0, %s28
      %s32 = sphi 0, %s31
      %s48 = sphi 0, %s32
      %s52 = sphi 0, %s52
      %s54 = sphi 0, %s52
      %s55 = sphi 0, %s54
      %s69 = sphi 0, %s55
      %s73 = sphi 0, %s73
      %s75 = sphi 0, %s73
      %s76 = sphi 0, %s75
      %s90 = sphi 0, %s76
      %s94 = sphi 0, %s94
      %s96 = sphi 0, %s94
      %s97 = sphi 0, %s96
      %s111 = sphi 0, %s97
      %s115 = sphi 0, %s115
      %s117 = sphi 0, %s115
      %s118 = sphi 0, %s117
      %s132 = sphi 0, %s118
      %s136 = sphi 0, %s136
      %s138 = sphi 0, %s136
      %s139 = sphi 0, %s138
      %s153 = sphi 0, %s139
      %s157 = sphi 0, %s157
      %s159 = sphi 0, %s157
      %s160 = sphi 0, %s159
      %s174 = sphi 0, %s160
      %s180 = sphi 0, %s182
      %s183 = sphi 0, %s180
      %s184 = sphi 0, %s183
      %s200 = sphi 0, %s184
    $region4: #{tpu_custom_call.1} parent=1 // loop_header_branch
      %21 = sbr.rel (%p19) target = $region8
    $region5: #{tpu_custom_call.1} parent=1 // loop_body
      %s23 = ssub.s32 %s18, 1
      %s24 = ssub.s32 %s18, 2
      %s25 = sadd.s32 %s18, 1
      %s26 = ssub.s32 %s18, %s25
      %p27 = scmp.eq.s32.totalorder %s26, 0
      %s29 = sadd.s32 %s28, 1
      %s30 = scalar_select %p27, %s28, %s29
      %p33 = pneg %p27
      %p34 = scmp.eq.s32.totalorder %s18, 1
      %p35 = por %p33, %p34
      %p36 = scmp.ne.s32.totalorder %s28, %s31
      %p37 = scmp.eq.s32.totalorder %s18, 0
      %p38 = por %p36, %p37
      %p39 = scmp.ne.s32.totalorder %s28, %s31
      %p40 = scmp.eq.s32.totalorder %s23, 1
      %p41 = por %p39, %p40
      %p42 = scmp.ne.s32.totalorder %s31, %s32
      %p43 = scmp.eq.s32.totalorder %s23, 0
      %p44 = por %p42, %p43
      %p45 = scmp.ne.s32.totalorder %s31, %s32
      %p46 = scmp.eq.s32.totalorder %s24, 1
      %p47 = por %p45, %p46
      %p49 = scmp.ne.s32.totalorder %s32, %s48
      %p50 = scmp.eq.s32.totalorder %s24, 0
      %p51 = por %p49, %p50
      %s53 = sadd.s32 %s52, 1
      %p56 = scmp.eq.s32.totalorder %s18, 1
      %p57 = scmp.ne.s32.totalorder %s52, %s54
      %p58 = scmp.eq.s32.totalorder %s18, 0
      %p59 = por %p57, %p58
      %p60 = scmp.ne.s32.totalorder %s52, %s54
      %p61 = scmp.eq.s32.totalorder %s23, 1
      %p62 = por %p60, %p61
      %p63 = scmp.ne.s32.totalorder %s54, %s55
      %p64 = scmp.eq.s32.totalorder %s23, 0
      %p65 = por %p63, %p64
      %p66 = scmp.ne.s32.totalorder %s54, %s55
      %p67 = scmp.eq.s32.totalorder %s24, 1
      %p68 = por %p66, %p67
      %p70 = scmp.ne.s32.totalorder %s55, %s69
      %p71 = scmp.eq.s32.totalorder %s24, 0
      %p72 = por %p70, %p71
      %s74 = sadd.s32 %s73, 1
      %p77 = scmp.eq.s32.totalorder %s18, 1
      %p78 = scmp.ne.s32.totalorder %s73, %s75
      %p79 = scmp.eq.s32.totalorder %s18, 0
      %p80 = por %p78, %p79
      %p81 = scmp.ne.s32.totalorder %s73, %s75
      %p82 = scmp.eq.s32.totalorder %s23, 1
      %p83 = por %p81, %p82
      %p84 = scmp.ne.s32.totalorder %s75, %s76
      %p85 = scmp.eq.s32.totalorder %s23, 0
      %p86 = por %p84, %p85
      %p87 = scmp.ne.s32.totalorder %s75, %s76
      %p88 = scmp.eq.s32.totalorder %s24, 1
      %p89 = por %p87, %p88
      %p91 = scmp.ne.s32.totalorder %s76, %s90
      %p92 = scmp.eq.s32.totalorder %s24, 0
      %p93 = por %p91, %p92
      %s95 = sadd.s32 %s94, 1
      %p98 = scmp.eq.s32.totalorder %s18, 1
      %p99 = scmp.ne.s32.totalorder %s94, %s96
      %p100 = scmp.eq.s32.totalorder %s18, 0
      %p101 = por %p99, %p100
      %p102 = scmp.ne.s32.totalorder %s94, %s96
      %p103 = scmp.eq.s32.totalorder %s23, 1
      %p104 = por %p102, %p103
      %p105 = scmp.ne.s32.totalorder %s96, %s97
      %p106 = scmp.eq.s32.totalorder %s23, 0
      %p107 = por %p105, %p106
      %p108 = scmp.ne.s32.totalorder %s96, %s97
      %p109 = scmp.eq.s32.totalorder %s24, 1
      %p110 = por %p108, %p109
      %p112 = scmp.ne.s32.totalorder %s97, %s111
      %p113 = scmp.eq.s32.totalorder %s24, 0
      %p114 = por %p112, %p113
      %s116 = sadd.s32 %s115, 1
      %p119 = scmp.eq.s32.totalorder %s18, 1
      %p120 = scmp.ne.s32.totalorder %s115, %s117
      %p121 = scmp.eq.s32.totalorder %s18, 0
      %p122 = por %p120, %p121
      %p123 = scmp.ne.s32.totalorder %s115, %s117
      %p124 = scmp.eq.s32.totalorder %s23, 1
      %p125 = por %p123, %p124
      %p126 = scmp.ne.s32.totalorder %s117, %s118
      %p127 = scmp.eq.s32.totalorder %s23, 0
      %p128 = por %p126, %p127
      %p129 = scmp.ne.s32.totalorder %s117, %s118
      %p130 = scmp.eq.s32.totalorder %s24, 1
      %p131 = por %p129, %p130
      %p133 = scmp.ne.s32.totalorder %s118, %s132
      %p134 = scmp.eq.s32.totalorder %s24, 0
      %p135 = por %p133, %p134
      %s137 = sadd.s32 %s136, 1
      %p140 = scmp.eq.s32.totalorder %s18, 1
      %p141 = scmp.ne.s32.totalorder %s136, %s138
      %p142 = scmp.eq.s32.totalorder %s18, 0
      %p143 = por %p141, %p142
      %p144 = scmp.ne.s32.totalorder %s136, %s138
      %p145 = scmp.eq.s32.totalorder %s23, 1
      %p146 = por %p144, %p145
      %p147 = scmp.ne.s32.totalorder %s138, %s139
      %p148 = scmp.eq.s32.totalorder %s23, 0
      %p149 = por %p147, %p148
      %p150 = scmp.ne.s32.totalorder %s138, %s139
      %p151 = scmp.eq.s32.totalorder %s24, 1
      %p152 = por %p150, %p151
      %p154 = scmp.ne.s32.totalorder %s139, %s153
      %p155 = scmp.eq.s32.totalorder %s24, 0
      %p156 = por %p154, %p155
      %s158 = sadd.s32 %s157, 1
      %p161 = scmp.eq.s32.totalorder %s18, 1
      %p162 = scmp.ne.s32.totalorder %s157, %s159
      %p163 = scmp.eq.s32.totalorder %s18, 0
      %p164 = por %p162, %p163
      %p165 = scmp.ne.s32.totalorder %s157, %s159
      %p166 = scmp.eq.s32.totalorder %s23, 1
      %p167 = por %p165, %p166
      %p168 = scmp.ne.s32.totalorder %s159, %s160
      %p169 = scmp.eq.s32.totalorder %s23, 0
      %p170 = por %p168, %p169
      %p171 = scmp.ne.s32.totalorder %s159, %s160
      %p172 = scmp.eq.s32.totalorder %s24, 1
      %p173 = por %p171, %p172
      %p175 = scmp.ne.s32.totalorder %s160, %s174
      %p176 = scmp.eq.s32.totalorder %s24, 0
      %p177 = por %p175, %p176
      %s178 = ssub.s32 %s18, %s25
      %p179 = scmp.eq.s32.totalorder %s178, 0
      %s181 = sadd.s32 %s180, 1
      %s182 = scalar_select %p179, %s180, %s181
      %p185 = pneg %p179
      %p186 = scmp.eq.s32.totalorder %s18, 1
      %p187 = por %p185, %p186
      %p188 = scmp.ne.s32.totalorder %s180, %s183
      %p189 = scmp.eq.s32.totalorder %s18, 0
      %p190 = por %p188, %p189
      %p191 = scmp.ne.s32.totalorder %s180, %s183
      %p192 = scmp.eq.s32.totalorder %s23, 1
      %p193 = por %p191, %p192
      %p194 = scmp.ne.s32.totalorder %s183, %s184
      %p195 = scmp.eq.s32.totalorder %s23, 0
      %p196 = por %p194, %p195
      %p197 = scmp.ne.s32.totalorder %s183, %s184
      %p198 = scmp.eq.s32.totalorder %s24, 1
      %p199 = por %p197, %p198
      %p201 = scmp.ne.s32.totalorder %s184, %s200
      %p202 = scmp.eq.s32.totalorder %s24, 0
      %p203 = por %p201, %p202
      %p204 = scmp.le.s32.totalorder 1, %s18
      %p205 = scmp.lt.s32.totalorder %s18, 3
      %p206 = pnand %p204, %p205
      %p207 = pneg %p206
      // Predicated region
      $region9: #{tpu_custom_call.1} parent=5 // pred_check
        _
      $region10: #{tpu_custom_call.1} parent=5 // pred_check_branch
        %209 = sbr.rel (%p206) target = $region12
      $region11: #{tpu_custom_call.1} parent=5 // pred_region
        %s210 = ssub.s32 %s18, 1
        // Predicated region
        $region13: #{tpu_custom_call.1} parent=11 // pred_check
          %p211 = pneg %p65
        $region14: #{tpu_custom_call.1} parent=11 // pred_check_branch
          %213 = sbr.rel (%p211) target = $region16
        $region15: #{tpu_custom_call.1} parent=11 // pred_region
          _
        $region16: #{tpu_custom_call.1} parent=11 // pred_fallthru
          _
        // Predicated region
        $region17: #{tpu_custom_call.1} parent=11 // pred_check
          %p214 = pneg %p86
        $region18: #{tpu_custom_call.1} parent=11 // pred_check_branch
          %216 = sbr.rel (%p214) target = $region20
        $region19: #{tpu_custom_call.1} parent=11 // pred_region
          _
        $region20: #{tpu_custom_call.1} parent=11 // pred_fallthru
          _
        // Predicated region
        $region21: #{tpu_custom_call.1} parent=11 // pred_check
          %p217 = pneg %p107
        $region22: #{tpu_custom_call.1} parent=11 // pred_check_branch
          %219 = sbr.rel (%p217) target = $region24
        $region23: #{tpu_custom_call.1} parent=11 // pred_region
          _
        $region24: #{tpu_custom_call.1} parent=11 // pred_fallthru
          _
        // Predicated region
        $region25: #{tpu_custom_call.1} parent=11 // pred_check
          %p220 = pneg %p128
        $region26: #{tpu_custom_call.1} parent=11 // pred_check_branch
          %222 = sbr.rel (%p220) target = $region28
        $region27: #{tpu_custom_call.1} parent=11 // pred_region
          _
        $region28: #{tpu_custom_call.1} parent=11 // pred_fallthru
          _
        // Predicated region
        $region29: #{tpu_custom_call.1} parent=11 // pred_check
          %p223 = pneg %p149
        $region30: #{tpu_custom_call.1} parent=11 // pred_check_branch
          %225 = sbr.rel (%p223) target = $region32
        $region31: #{tpu_custom_call.1} parent=11 // pred_region
          _
        $region32: #{tpu_custom_call.1} parent=11 // pred_fallthru
          _
        // Predicated region
        $region33: #{tpu_custom_call.1} parent=11 // pred_check
          %p226 = pneg %p170
        $region34: #{tpu_custom_call.1} parent=11 // pred_check_branch
          %228 = sbr.rel (%p226) target = $region36
        $region35: #{tpu_custom_call.1} parent=11 // pred_region
          _
        $region36: #{tpu_custom_call.1} parent=11 // pred_fallthru
          _
      $region12: #{tpu_custom_call.1} parent=5 // pred_fallthru
        _
      %p229 = scmp.lt.s32.totalorder %s18, 2
      // Predicated region
      $region37: #{tpu_custom_call.1} parent=5 // pred_check
        %p230 = pneg %p229
      $region38: #{tpu_custom_call.1} parent=5 // pred_check_branch
        %232 = sbr.rel (%p230) target = $region40
      $region39: #{tpu_custom_call.1} parent=5 // pred_region
        // Predicated region
        $region41: #{tpu_custom_call.1} parent=39 // pred_check
          %p233 = pneg %p38
        $region42: #{tpu_custom_call.1} parent=39 // pred_check_branch
          %235 = sbr.rel (%p233) target = $region44
        $region43: #{tpu_custom_call.1} parent=39 // pred_region
          %s236 = smul.u32 32, %s18
          %p237 = scmp.lt.s32.totalorder %s236, 63
          %s238 = scalar_select %p237, %s236, 63
          %s239 = scalar_lea.vmem %s0, %s238
          %s240 = smul.u32 32, %s18
        $region44: #{tpu_custom_call.1} parent=39 // pred_fallthru
          _
      $region40: #{tpu_custom_call.1} parent=5 // pred_fallthru
        _
      %p241 = scmp.le.s32.totalorder 1, %s18
      %p242 = scmp.lt.s32.totalorder %s18, 3
      %p243 = pnand %p241, %p242
      %p244 = pneg %p243
      // Predicated region
      $region45: #{tpu_custom_call.1} parent=5 // pred_check
        _
      $region46: #{tpu_custom_call.1} parent=5 // pred_check_branch
        %246 = sbr.rel (%p243) target = $region48
      $region47: #{tpu_custom_call.1} parent=5 // pred_region
        %s247 = ssub.s32 %s18, 1
        %s248 = smul.u32 32, %s23
        %p249 = scmp.lt.s32.totalorder %s248, 63
        %s250 = scalar_select %p249, %s248, 63
        %s251 = scalar_lea.vmem %s0, %s250
        %p252 = pneg %p44
        %p253 = pneg %p41
        %p254 = pneg %p65
        %p255 = pneg %p62
        %p256 = pneg %p86
        %p257 = pneg %p83
        %p258 = pneg %p107
        %p259 = pneg %p104
        %p260 = pneg %p128
        %p261 = pneg %p125
        %p262 = pneg %p149
        %p263 = pneg %p146
        %p264 = pneg %p170
        %p265 = pneg %p167
        %p266 = pneg %p196
        %p267 = pneg %p193
        %s268 = sand.u32 %s183, 1
        %s269 = scalar_lea.sflag [#allocation4], %s268
        %s270 = sand.u32 %s183, 1
        %s271 = smul.addr %s270, 32
        %s272 = scalar_lea.vmem [#allocation3], %s271
        %s273 = smul.u32 32, %s23
        %p274 = scmp.lt.s32.totalorder %s273, 63
        %s275 = scalar_select %p274, %s273, 63
        %s276 = scalar_lea.vmem %s0, %s275
        %s277 = smul.u32 32, %s23
        %s278 = smul.u32 32, %s23
        %v279 = vld [vmem:[%s1] sm:$0xff]
        %v280 = vld [vmem:[%s1 + $0x8] sm:$0xff]
        %v281 = vld [vmem:[%s1 + $0x10] sm:$0xff]
        %v282 = vld [vmem:[%s1 + $0x18] sm:$0xff]
        %v283 = vld [vmem:[%s1 + $0x20] sm:$0xff]
        %v284 = vld [vmem:[%s1 + $0x28] sm:$0x1]
        %v285 = vld [vmem:[%s2] sm:$0xff]
        %v286 = vld [vmem:[%s2 + $0x8] sm:$0xff]
        %v287 = vld [vmem:[%s2 + $0x10] sm:$0xff]
        %v288 = vld [vmem:[%s2 + $0x18] sm:$0xff]
        %v289 = vld [vmem:[%s2 + $0x20] sm:$0xff]
        %v290 = vld [vmem:[%s2 + $0x28] sm:$0x1]
        %v291 = vld [vmem:[%s3] sm:$0xff]
        %v292 = vld [vmem:[%s3 + $0x8] sm:$0xff]
        %v293 = vld [vmem:[%s3 + $0x10] sm:$0xff]
        %v294 = vld [vmem:[%s3 + $0x18] sm:$0xff]
        %v295 = vld [vmem:[%s3 + $0x20] sm:$0xff]
        %v296 = vld [vmem:[%s3 + $0x28] sm:$0xff]
        %v297 = vld [vmem:[%s3 + $0x30] sm:$0xff]
        %v298 = vld [vmem:[%s3 + $0x38] sm:$0xff]
        %v299 = vld [vmem:[%s3 + $0x40] sm:$0xff]
        %v300 = vld [vmem:[%s3 + $0x48] sm:$0xff]
        %v301 = vld [vmem:[%s3 + $0x50] sm:$0xff]
        %v302 = vld [vmem:[%s3 + $0x58] sm:$0xff]
        %v303 = vld [vmem:[%s3 + $0x60] sm:$0x1f]
        %v304 = vld [vmem:[%s4] sm:$0xff]
        %v305 = vld [vmem:[%s4 + $0x8] sm:$0xff]
        %v306 = vld [vmem:[%s4 + $0x10] sm:$0xff]
        %v307 = vld [vmem:[%s4 + $0x18] sm:$0xff]
        %v308 = vld [vmem:[%s4 + $0x20] sm:$0xff]
        %v309 = vld [vmem:[%s5] sm:$0xff]
        %v310 = vld [vmem:[%s5 + $0x8] sm:$0xff]
        %v311 = vld [vmem:[%s5 + $0x10] sm:$0xff]
        %v312 = vld [vmem:[%s5 + $0x18] sm:$0xff]
        %v313 = vld [vmem:[%s5 + $0x20] sm:$0xff]
        %v314 = vld [vmem:[#allocation2] sm:$0x1]
        %v315 = vld [vmem:[%s276] sm:$0xf]
        %317 = vset.pattern.permute.xlu0 0
        %318 = vperm.xlu0 %317, %v279
        %v319 = vpop.permute.xlu0 %318
        %322 = vset.pattern.permute.xlu0 0
        %323 = vperm.xlu0 %322, %v280
        %v324 = vpop.permute.xlu0 %323
        %327 = vset.pattern.permute.xlu0 0
        %328 = vperm.xlu0 %327, %v281
        %v329 = vpop.permute.xlu0 %328
        %332 = vset.pattern.permute.xlu0 0
        %333 = vperm.xlu0 %332, %v282
        %v334 = vpop.permute.xlu0 %333
        %337 = vset.pattern.permute.xlu0 0
        %338 = vperm.xlu0 %337, %v283
        %v339 = vpop.permute.xlu0 %338
        %342 = vset.pattern.permute.xlu0 0
        %343 = vperm.xlu0 %342, %v284
        %v344 = vpop.permute.xlu0 %343
        %v347 = vlaneseq
        %v348 = vshrl.u32 %v347, 7
        %v349 = vsub.s32 0, %v348
        %v350 = vrot.slane %v315, %v349
        %v351 = vlaneseq
        %v352 = vshrl.u32 %v351, 7
        %v353 = vsub.s32 1, %v352
        %v354 = vrot.slane %v315, %v353
        %v355 = vlaneseq
        %v356 = vshrl.u32 %v355, 7
        %v357 = vsub.s32 2, %v356
        %v358 = vrot.slane %v315, %v357
        %v359 = vlaneseq
        %v360 = vshrl.u32 %v359, 7
        %v361 = vsub.s32 3, %v360
        %v362 = vrot.slane %v315, %v361
        %v367 = vmul.f32 %v319, %v350
        %v368 = vmul.f32 %v319, %v354
        %v369 = vmul.f32 %v319, %v358
        %v370 = vmul.f32 %v319, %v362
        %v371 = vmul.f32 %v324, %v350
        %v372 = vmul.f32 %v324, %v354
        %v373 = vmul.f32 %v324, %v358
        %v374 = vmul.f32 %v324, %v362
        %v375 = vmul.f32 %v329, %v350
        %v376 = vmul.f32 %v329, %v354
        %v377 = vmul.f32 %v329, %v358
        %v378 = vmul.f32 %v329, %v362
        %v379 = vmul.f32 %v334, %v350
        %v380 = vmul.f32 %v334, %v354
        %v381 = vmul.f32 %v334, %v358
        %v382 = vmul.f32 %v334, %v362
        %v383 = vmul.f32 %v339, %v350
        %v384 = vmul.f32 %v339, %v354
        %v385 = vmul.f32 %v339, %v358
        %v386 = vmul.f32 %v339, %v362
        %v387 = vmul.f32 %v344, %v350
        %v388 = vmul.f32 %v344, %v354
        %v389 = vmul.f32 %v344, %v358
        %v390 = vmul.f32 %v344, %v362
        %392 = vset.pattern.permute.xlu0 0
        %393 = vperm.xlu0 %392, %v285
        %v394 = vpop.permute.xlu0 %393
        %397 = vset.pattern.permute.xlu0 0
        %398 = vperm.xlu0 %397, %v286
        %v399 = vpop.permute.xlu0 %398
        %402 = vset.pattern.permute.xlu0 0
        %403 = vperm.xlu0 %402, %v287
        %v404 = vpop.permute.xlu0 %403
        %407 = vset.pattern.permute.xlu0 0
        %408 = vperm.xlu0 %407, %v288
        %v409 = vpop.permute.xlu0 %408
        %412 = vset.pattern.permute.xlu0 0
        %413 = vperm.xlu0 %412, %v289
        %v414 = vpop.permute.xlu0 %413
        %417 = vset.pattern.permute.xlu0 0
        %418 = vperm.xlu0 %417, %v290
        %v419 = vpop.permute.xlu0 %418
        %v421 = vadd.f32 %v367, %v394
        %v422 = vadd.f32 %v368, %v394
        %v423 = vadd.f32 %v369, %v394
        %v424 = vadd.f32 %v370, %v394
        %v425 = vadd.f32 %v371, %v399
        %v426 = vadd.f32 %v372, %v399
        %v427 = vadd.f32 %v373, %v399
        %v428 = vadd.f32 %v374, %v399
        %v429 = vadd.f32 %v375, %v404
        %v430 = vadd.f32 %v376, %v404
        %v431 = vadd.f32 %v377, %v404
        %v432 = vadd.f32 %v378, %v404
        %v433 = vadd.f32 %v379, %v409
        %v434 = vadd.f32 %v380, %v409
        %v435 = vadd.f32 %v381, %v409
        %v436 = vadd.f32 %v382, %v409
        %v437 = vadd.f32 %v383, %v414
        %v438 = vadd.f32 %v384, %v414
        %v439 = vadd.f32 %v385, %v414
        %v440 = vadd.f32 %v386, %v414
        %v441 = vadd.f32 %v387, %v419
        %v442 = vadd.f32 %v388, %v419
        %v443 = vadd.f32 %v389, %v419
        %v444 = vadd.f32 %v390, %v419
        %v445 = vmax.f32 %v421, 0.0
        %v446 = vmax.f32 %v422, 0.0
        %v447 = vmax.f32 %v423, 0.0
        %v448 = vmax.f32 %v424, 0.0
        %v449 = vmax.f32 %v425, 0.0
        %v450 = vmax.f32 %v426, 0.0
        %v451 = vmax.f32 %v427, 0.0
        %v452 = vmax.f32 %v428, 0.0
        %v453 = vmax.f32 %v429, 0.0
        %v454 = vmax.f32 %v430, 0.0
        %v455 = vmax.f32 %v431, 0.0
        %v456 = vmax.f32 %v432, 0.0
        %v457 = vmax.f32 %v433, 0.0
        %v458 = vmax.f32 %v434, 0.0
        %v459 = vmax.f32 %v435, 0.0
        %v460 = vmax.f32 %v436, 0.0
        %v461 = vmax.f32 %v437, 0.0
        %v462 = vmax.f32 %v438, 0.0
        %v463 = vmax.f32 %v439, 0.0
        %v464 = vmax.f32 %v440, 0.0
        %v465 = vmax.f32 %v441, 0.0
        %v466 = vmax.f32 %v442, 0.0
        %v467 = vmax.f32 %v443, 0.0
        %v468 = vmax.f32 %v444, 0.0
        %vm469 = vcmask 334848
        %v471 = vsel %vm469, %v291, 0
        %v474 = vsel %vm469, %v292, 0
        %v477 = vsel %vm469, %v293, 0
        %v480 = vsel %vm469, %v294, 0
        %v483 = vsel %vm469, %v295, 0
        %v486 = vsel %vm469, %v296, 0
        %v489 = vsel %vm469, %v297, 0
        %v492 = vsel %vm469, %v298, 0
        %v495 = vsel %vm469, %v299, 0
        %v498 = vsel %vm469, %v300, 0
        %v501 = vsel %vm469, %v301, 0
        %v504 = vsel %vm469, %v302, 0
        %v507 = vsel %vm469, %v303, 0
        %vm509 = vcmask 1040384
        %v511 = vsel %vm509, %v465, 0
        %v514 = vsel %vm509, %v466, 0
        %v517 = vsel %vm509, %v467, 0
        %v520 = vsel %vm509, %v468, 0
        %522 = vmatprep.subr.mxu0 %v446
        %523 = vmatpush1.msra.mxu0 %v445
        %524 = vmatprep.subr.mxu0 %v450
        %525 = vmatpush1.msra.mxu0 %v449
        %526 = vmatprep.subr.mxu0 %v454
        %527 = vmatpush1.msra.mxu0 %v453
        %528 = vmatprep.subr.mxu0 %v458
        %529 = vmatpush1.msra.mxu0 %v457
        %530 = vmatprep.subr.mxu0 %v462
        %531 = vmatpush1.msra.mxu0 %v461
        %532 = vmatprep.subr.mxu0 %v514
        %533 = vmatpush1.msra.mxu0 %v511
        %534 = vmatprep.subr.mxu0 0.0
        %535 = vmatpush1.msra.mxu0 0.0
        %536 = vmatprep.subr.mxu0 0.0
        %537 = vmatpush1.msra.mxu0 0.0
        %538 = vmatprep.subr.mxu0 0.0
        %539 = vmatpush1.msra.mxu0 0.0
        %540 = vmatprep.subr.mxu0 0.0
        %541 = vmatpush1.msra.mxu0 0.0
        %542 = vmatprep.subr.mxu0 0.0
        %543 = vmatpush1.msra.mxu0 0.0
        %544 = vmatprep.subr.mxu0 0.0
        %545 = vmatpush1.msra.mxu0 0.0
        %546 = vmatprep.subr.mxu0 0.0
        %547 = vmatpush1.msra.mxu0 0.0
        %548 = vmatprep.subr.mxu0 0.0
        %549 = vmatpush1.msra.mxu0 0.0
        %550 = vmatprep.subr.mxu0 0.0
        %551 = vmatpush1.msra.mxu0 0.0
        %552 = vmatprep.subr.mxu0 0.0
        %553 = vmatpush1.msra.mxu0 0.0
        %554 = vmatprep.subr.mxu0 0.0
        %555 = vmatpush1.msra.mxu0 0.0
        %556 = vmatprep.subr.mxu0 0.0
        %557 = vmatpush1.msra.mxu0 0.0
        %558 = vmatprep.subr.mxu0 0.0
        %559 = vmatpush1.msra.mxu0 0.0
        %560 = vmatprep.subr.mxu0 0.0
        %561 = vmatpush1.msra.mxu0 0.0
        %562 = vmatprep.subr.mxu0 0.0
        %563 = vmatpush1.msra.mxu0 0.0
        %564 = vmatprep.subr.mxu0 0.0
        %565 = vmatpush1.msra.mxu0 0.0
        %566 = vmatprep.subr.mxu0 0.0
        %567 = vmatpush1.msra.mxu0 0.0
        %568 = vmatprep.subr.mxu0 0.0
        %569 = vmatpush1.msra.mxu0 0.0
        %570 = vmatprep.subr.mxu0 0.0
        %571 = vmatpush1.msra.mxu0 0.0
        %572 = vmatprep.subr.mxu0 0.0
        %573 = vmatpush1.msra.mxu0 0.0
        %574 = vmatprep.subr.mxu0 0.0
        %575 = vmatpush1.msra.mxu0 0.0
        %576 = vmatprep.subr.mxu0 0.0
        %577 = vmatpush1.msra.mxu0 0.0
        %578 = vmatprep.subr.mxu0 0.0
        %579 = vmatpush1.msra.mxu0 0.0
        %580 = vmatprep.subr.mxu0 0.0
        %581 = vmatpush1.msra.mxu0 0.0
        %582 = vmatprep.subr.mxu0 0.0
        %583 = vmatpush1.msra.mxu0 0.0
        %584 = vmatprep.subr.mxu0 0.0
        %585 = vmatpush1.msra.mxu0 0.0
        %586 = vmatprep.mubr.f32.mxu0 0.0
        %587 = vmatmul.mubr.f32.gmra.mrb[0].mxu0 %v471
        %v588 = vpop.f32.mrb[0].mxu0
        %v589 = vadd.f32 0.0, %v588
        %v590 = vpop.f32.mrb[0].mxu0
        %v591 = vadd.f32 0.0, %v590
        %592 = vmatprep.mubr.f32.mxu0 0.0
        %593 = vmatmul.mubr.f32.gmra.mrb[0].mxu0 %v474
        %v594 = vpop.f32.mrb[0].mxu0
        %v595 = vadd.f32 0.0, %v594
        %v596 = vpop.f32.mrb[0].mxu0
        %v597 = vadd.f32 0.0, %v596
        %598 = vmatprep.mubr.f32.mxu0 0.0
        %599 = vmatmul.mubr.f32.gmra.mrb[0].mxu0 %v477
        %v600 = vpop.f32.mrb[0].mxu0
        %v601 = vadd.f32 0.0, %v600
        %v602 = vpop.f32.mrb[0].mxu0
        %v603 = vadd.f32 0.0, %v602
        %604 = vmatprep.mubr.f32.mxu0 0.0
        %605 = vmatmul.mubr.f32.gmra.mrb[0].mxu0 %v480
        %v606 = vpop.f32.mrb[0].mxu0
        %v607 = vadd.f32 0.0, %v606
        %v608 = vpop.f32.mrb[0].mxu0
        %v609 = vadd.f32 0.0, %v608
        %610 = vmatprep.mubr.f32.mxu0 0.0
        %611 = vmatmul.mubr.f32.gmra.mrb[0].mxu0 %v483
        %v612 = vpop.f32.mrb[0].mxu0
        %v613 = vadd.f32 0.0, %v612
        %v614 = vpop.f32.mrb[0].mxu0
        %v615 = vadd.f32 0.0, %v614
        %616 = vmatprep.mubr.f32.mxu0 0.0
        %617 = vmatmul.mubr.f32.gmra.mrb[0].mxu0 %v486
        %v618 = vpop.f32.mrb[0].mxu0
        %v619 = vadd.f32 0.0, %v618
        %v620 = vpop.f32.mrb[0].mxu0
        %v621 = vadd.f32 0.0, %v620
        %622 = vmatprep.mubr.f32.mxu0 0.0
        %623 = vmatmul.mubr.f32.gmra.mrb[0].mxu0 %v489
        %v624 = vpop.f32.mrb[0].mxu0
        %v625 = vadd.f32 0.0, %v624
        %v626 = vpop.f32.mrb[0].mxu0
        %v627 = vadd.f32 0.0, %v626
        %628 = vmatprep.mubr.f32.mxu0 0.0
        %629 = vmatmul.mubr.f32.gmra.mrb[0].mxu0 %v492
        %v630 = vpop.f32.mrb[0].mxu0
        %v631 = vadd.f32 0.0, %v630
        %v632 = vpop.f32.mrb[0].mxu0
        %v633 = vadd.f32 0.0, %v632
        %634 = vmatprep.mubr.f32.mxu0 0.0
        %635 = vmatmul.mubr.f32.gmra.mrb[0].mxu0 %v495
        %v636 = vpop.f32.mrb[0].mxu0
        %v637 = vadd.f32 0.0, %v636
        %v638 = vpop.f32.mrb[0].mxu0
        %v639 = vadd.f32 0.0, %v638
        %640 = vmatprep.mubr.f32.mxu0 0.0
        %641 = vmatmul.mubr.f32.gmra.mrb[0].mxu0 %v498
        %v642 = vpop.f32.mrb[0].mxu0
        %v643 = vadd.f32 0.0, %v642
        %v644 = vpop.f32.mrb[0].mxu0
        %v645 = vadd.f32 0.0, %v644
        %646 = vmatprep.mubr.f32.mxu0 0.0
        %647 = vmatmul.mubr.f32.gmra.mrb[0].mxu0 %v501
        %v648 = vpop.f32.mrb[0].mxu0
        %v649 = vadd.f32 0.0, %v648
        %v650 = vpop.f32.mrb[0].mxu0
        %v651 = vadd.f32 0.0, %v650
        %652 = vmatprep.mubr.f32.mxu0 0.0
        %653 = vmatmul.mubr.f32.gmra.mrb[0].mxu0 %v504
        %v654 = vpop.f32.mrb[0].mxu0
        %v655 = vadd.f32 0.0, %v654
        %v656 = vpop.f32.mrb[0].mxu0
        %v657 = vadd.f32 0.0, %v656
        %658 = vmatprep.mubr.f32.mxu0 0.0
        %659 = vmatmul.mubr.f32.gmra.mrb[0].mxu0 %v507
        %v660 = vpop.f32.mrb[0].mxu0
        %v661 = vadd.f32 0.0, %v660
        %v662 = vpop.f32.mrb[0].mxu0
        %v663 = vadd.f32 0.0, %v662
        %664 = vdwg.mxu0
        %665 = vmatprep.subr.mxu0 %v448
        %666 = vmatpush1.msra.mxu0 %v447
        %667 = vmatprep.subr.mxu0 %v452
        %668 = vmatpush1.msra.mxu0 %v451
        %669 = vmatprep.subr.mxu0 %v456
        %670 = vmatpush1.msra.mxu0 %v455
        %671 = vmatprep.subr.mxu0 %v460
        %672 = vmatpush1.msra.mxu0 %v459
        %673 = vmatprep.subr.mxu0 %v464
        %674 = vmatpush1.msra.mxu0 %v463
        %675 = vmatprep.subr.mxu0 %v520
        %676 = vmatpush1.msra.mxu0 %v517
        %677 = vmatprep.subr.mxu0 0.0
        %678 = vmatpush1.msra.mxu0 0.0
        %679 = vmatprep.subr.mxu0 0.0
        %680 = vmatpush1.msra.mxu0 0.0
        %681 = vmatprep.subr.mxu0 0.0
        %682 = vmatpush1.msra.mxu0 0.0
        %683 = vmatprep.subr.mxu0 0.0
        %684 = vmatpush1.msra.mxu0 0.0
        %685 = vmatprep.subr.mxu0 0.0
        %686 = vmatpush1.msra.mxu0 0.0
        %687 = vmatprep.subr.mxu0 0.0
        %688 = vmatpush1.msra.mxu0 0.0
        %689 = vmatprep.subr.mxu0 0.0
        %690 = vmatpush1.msra.mxu0 0.0
        %691 = vmatprep.subr.mxu0 0.0
        %692 = vmatpush1.msra.mxu0 0.0
        %693 = vmatprep.subr.mxu0 0.0
        %694 = vmatpush1.msra.mxu0 0.0
        %695 = vmatprep.subr.mxu0 0.0
        %696 = vmatpush1.msra.mxu0 0.0
        %697 = vmatprep.subr.mxu0 0.0
        %698 = vmatpush1.msra.mxu0 0.0
        %699 = vmatprep.subr.mxu0 0.0
        %700 = vmatpush1.msra.mxu0 0.0
        %701 = vmatprep.subr.mxu0 0.0
        %702 = vmatpush1.msra.mxu0 0.0
        %703 = vmatprep.subr.mxu0 0.0
        %704 = vmatpush1.msra.mxu0 0.0
        %705 = vmatprep.subr.mxu0 0.0
        %706 = vmatpush1.msra.mxu0 0.0
        %707 = vmatprep.subr.mxu0 0.0
        %708 = vmatpush1.msra.mxu0 0.0
        %709 = vmatprep.subr.mxu0 0.0
        %710 = vmatpush1.msra.mxu0 0.0
        %711 = vmatprep.subr.mxu0 0.0
        %712 = vmatpush1.msra.mxu0 0.0
        %713 = vmatprep.subr.mxu0 0.0
        %714 = vmatpush1.msra.mxu0 0.0
        %715 = vmatprep.subr.mxu0 0.0
        %716 = vmatpush1.msra.mxu0 0.0
        %717 = vmatprep.subr.mxu0 0.0
        %718 = vmatpush1.msra.mxu0 0.0
        %719 = vmatprep.subr.mxu0 0.0
        %720 = vmatpush1.msra.mxu0 0.0
        %721 = vmatprep.subr.mxu0 0.0
        %722 = vmatpush1.msra.mxu0 0.0
        %723 = vmatprep.subr.mxu0 0.0
        %724 = vmatpush1.msra.mxu0 0.0
        %725 = vmatprep.subr.mxu0 0.0
        %726 = vmatpush1.msra.mxu0 0.0
        %727 = vmatprep.subr.mxu0 0.0
        %728 = vmatpush1.msra.mxu0 0.0
        %729 = vmatprep.mubr.f32.mxu0 0.0
        %730 = vmatmul.mubr.f32.gmra.mrb[0].mxu0 %v471
        %v731 = vpop.f32.mrb[0].mxu0
        %v732 = vadd.f32 0.0, %v731
        %v733 = vpop.f32.mrb[0].mxu0
        %v734 = vadd.f32 0.0, %v733
        %735 = vmatprep.mubr.f32.mxu0 0.0
        %736 = vmatmul.mubr.f32.gmra.mrb[0].mxu0 %v474
        %v737 = vpop.f32.mrb[0].mxu0
        %v738 = vadd.f32 0.0, %v737
        %v739 = vpop.f32.mrb[0].mxu0
        %v740 = vadd.f32 0.0, %v739
        %741 = vmatprep.mubr.f32.mxu0 0.0
        %742 = vmatmul.mubr.f32.gmra.mrb[0].mxu0 %v477
        %v743 = vpop.f32.mrb[0].mxu0
        %v744 = vadd.f32 0.0, %v743
        %v745 = vpop.f32.mrb[0].mxu0
        %v746 = vadd.f32 0.0, %v745
        %747 = vmatprep.mubr.f32.mxu0 0.0
        %748 = vmatmul.mubr.f32.gmra.mrb[0].mxu0 %v480
        %v749 = vpop.f32.mrb[0].mxu0
        %v750 = vadd.f32 0.0, %v749
        %v751 = vpop.f32.mrb[0].mxu0
        %v752 = vadd.f32 0.0, %v751
        %753 = vmatprep.mubr.f32.mxu0 0.0
        %754 = vmatmul.mubr.f32.gmra.mrb[0].mxu0 %v483
        %v755 = vpop.f32.mrb[0].mxu0
        %v756 = vadd.f32 0.0, %v755
        %v757 = vpop.f32.mrb[0].mxu0
        %v758 = vadd.f32 0.0, %v757
        %759 = vmatprep.mubr.f32.mxu0 0.0
        %760 = vmatmul.mubr.f32.gmra.mrb[0].mxu0 %v486
        %v761 = vpop.f32.mrb[0].mxu0
        %v762 = vadd.f32 0.0, %v761
        %v763 = vpop.f32.mrb[0].mxu0
        %v764 = vadd.f32 0.0, %v763
        %765 = vmatprep.mubr.f32.mxu0 0.0
        %766 = vmatmul.mubr.f32.gmra.mrb[0].mxu0 %v489
        %v767 = vpop.f32.mrb[0].mxu0
        %v768 = vadd.f32 0.0, %v767
        %v769 = vpop.f32.mrb[0].mxu0
        %v770 = vadd.f32 0.0, %v769
        %771 = vmatprep.mubr.f32.mxu0 0.0
        %772 = vmatmul.mubr.f32.gmra.mrb[0].mxu0 %v492
        %v773 = vpop.f32.mrb[0].mxu0
        %v774 = vadd.f32 0.0, %v773
        %v775 = vpop.f32.mrb[0].mxu0
        %v776 = vadd.f32 0.0, %v775
        %777 = vmatprep.mubr.f32.mxu0 0.0
        %778 = vmatmul.mubr.f32.gmra.mrb[0].mxu0 %v495
        %v779 = vpop.f32.mrb[0].mxu0
        %v780 = vadd.f32 0.0, %v779
        %v781 = vpop.f32.mrb[0].mxu0
        %v782 = vadd.f32 0.0, %v781
        %783 = vmatprep.mubr.f32.mxu0 0.0
        %784 = vmatmul.mubr.f32.gmra.mrb[0].mxu0 %v498
        %v785 = vpop.f32.mrb[0].mxu0
        %v786 = vadd.f32 0.0, %v785
        %v787 = vpop.f32.mrb[0].mxu0
        %v788 = vadd.f32 0.0, %v787
        %789 = vmatprep.mubr.f32.mxu0 0.0
        %790 = vmatmul.mubr.f32.gmra.mrb[0].mxu0 %v501
        %v791 = vpop.f32.mrb[0].mxu0
        %v792 = vadd.f32 0.0, %v791
        %v793 = vpop.f32.mrb[0].mxu0
        %v794 = vadd.f32 0.0, %v793
        %795 = vmatprep.mubr.f32.mxu0 0.0
        %796 = vmatmul.mubr.f32.gmra.mrb[0].mxu0 %v504
        %v797 = vpop.f32.mrb[0].mxu0
        %v798 = vadd.f32 0.0, %v797
        %v799 = vpop.f32.mrb[0].mxu0
        %v800 = vadd.f32 0.0, %v799
        %801 = vmatprep.mubr.f32.mxu0 0.0
        %802 = vmatmul.mubr.f32.gmra.mrb[0].mxu0 %v507
        %v803 = vpop.f32.mrb[0].mxu0
        %v804 = vadd.f32 0.0, %v803
        %v805 = vpop.f32.mrb[0].mxu0
        %v806 = vadd.f32 0.0, %v805
        %807 = vdwg.mxu0
        %v808 = vmax.f32 %v589, 0.0
        %v809 = vmax.f32 %v591, 0.0
        %v810 = vmax.f32 %v732, 0.0
        %v811 = vmax.f32 %v734, 0.0
        %v812 = vmax.f32 %v595, 0.0
        %v813 = vmax.f32 %v597, 0.0
        %v814 = vmax.f32 %v738, 0.0
        %v815 = vmax.f32 %v740, 0.0
        %v816 = vmax.f32 %v601, 0.0
        %v817 = vmax.f32 %v603, 0.0
        %v818 = vmax.f32 %v744, 0.0
        %v819 = vmax.f32 %v746, 0.0
        %v820 = vmax.f32 %v607, 0.0
        %v821 = vmax.f32 %v609, 0.0
        %v822 = vmax.f32 %v750, 0.0
        %v823 = vmax.f32 %v752, 0.0
        %v824 = vmax.f32 %v613, 0.0
        %v825 = vmax.f32 %v615, 0.0
        %v826 = vmax.f32 %v756, 0.0
        %v827 = vmax.f32 %v758, 0.0
        %v828 = vmax.f32 %v619, 0.0
        %v829 = vmax.f32 %v621, 0.0
        %v830 = vmax.f32 %v762, 0.0
        %v831 = vmax.f32 %v764, 0.0
        %v832 = vmax.f32 %v625, 0.0
        %v833 = vmax.f32 %v627, 0.0
        %v834 = vmax.f32 %v768, 0.0
        %v835 = vmax.f32 %v770, 0.0
        %v836 = vmax.f32 %v631, 0.0
        %v837 = vmax.f32 %v633, 0.0
        %v838 = vmax.f32 %v774, 0.0
        %v839 = vmax.f32 %v776, 0.0
        %v840 = vmax.f32 %v637, 0.0
        %v841 = vmax.f32 %v639, 0.0
        %v842 = vmax.f32 %v780, 0.0
        %v843 = vmax.f32 %v782, 0.0
        %v844 = vmax.f32 %v643, 0.0
        %v845 = vmax.f32 %v645, 0.0
        %v846 = vmax.f32 %v786, 0.0
        %v847 = vmax.f32 %v788, 0.0
        %v848 = vmax.f32 %v649, 0.0
        %v849 = vmax.f32 %v651, 0.0
        %v850 = vmax.f32 %v792, 0.0
        %v851 = vmax.f32 %v794, 0.0
        %v852 = vmax.f32 %v655, 0.0
        %v853 = vmax.f32 %v657, 0.0
        %v854 = vmax.f32 %v798, 0.0
        %v855 = vmax.f32 %v800, 0.0
        %v856 = vmax.f32 %v661, 0.0
        %v857 = vmax.f32 %v663, 0.0
        %v858 = vmax.f32 %v804, 0.0
        %v859 = vmax.f32 %v806, 0.0
        %vm860 = vcmask 826368
        %v862 = vsel %vm860, %v304, 0
        %v865 = vsel %vm860, %v305, 0
        %v868 = vsel %vm860, %v306, 0
        %v871 = vsel %vm860, %v307, 0
        %v874 = vsel %vm860, %v308, 0
        %vm876 = vcmask 1044480
        %v878 = vsel %vm876, %v856, 0
        %v881 = vsel %vm876, %v857, 0
        %v884 = vsel %vm876, %v858, 0
        %v887 = vsel %vm876, %v859, 0
        %889 = vmatprep.subr.mxu0 %v809
        %890 = vmatpush1.msra.mxu0 %v808
        %891 = vmatprep.subr.mxu0 %v813
        %892 = vmatpush1.msra.mxu0 %v812
        %893 = vmatprep.subr.mxu0 %v817
        %894 = vmatpush1.msra.mxu0 %v816
        %895 = vmatprep.subr.mxu0 %v821
        %896 = vmatpush1.msra.mxu0 %v820
        %897 = vmatprep.subr.mxu0 %v825
        %898 = vmatpush1.msra.mxu0 %v824
        %899 = vmatprep.subr.mxu0 %v829
        %900 = vmatpush1.msra.mxu0 %v828
        %901 = vmatprep.subr.mxu0 %v833
        %902 = vmatpush1.msra.mxu0 %v832
        %903 = vmatprep.subr.mxu0 %v837
        %904 = vmatpush1.msra.mxu0 %v836
        %905 = vmatprep.subr.mxu0 %v841
        %906 = vmatpush1.msra.mxu0 %v840
        %907 = vmatprep.subr.mxu0 %v845
        %908 = vmatpush1.msra.mxu0 %v844
        %909 = vmatprep.subr.mxu0 %v849
        %910 = vmatpush1.msra.mxu0 %v848
        %911 = vmatprep.subr.mxu0 %v853
        %912 = vmatpush1.msra.mxu0 %v852
        %913 = vmatprep.subr.mxu0 %v881
        %914 = vmatpush1.msra.mxu0 %v878
        %915 = vmatprep.subr.mxu0 0.0
        %916 = vmatpush1.msra.mxu0 0.0
        %917 = vmatprep.subr.mxu0 0.0
        %918 = vmatpush1.msra.mxu0 0.0
        %919 = vmatprep.subr.mxu0 0.0
        %920 = vmatpush1.msra.mxu0 0.0
        %921 = vmatprep.subr.mxu0 0.0
        %922 = vmatpush1.msra.mxu0 0.0
        %923 = vmatprep.subr.mxu0 0.0
        %924 = vmatpush1.msra.mxu0 0.0
        %925 = vmatprep.subr.mxu0 0.0
        %926 = vmatpush1.msra.mxu0 0.0
        %927 = vmatprep.subr.mxu0 0.0
        %928 = vmatpush1.msra.mxu0 0.0
        %929 = vmatprep.subr.mxu0 0.0
        %930 = vmatpush1.msra.mxu0 0.0
        %931 = vmatprep.subr.mxu0 0.0
        %932 = vmatpush1.msra.mxu0 0.0
        %933 = vmatprep.subr.mxu0 0.0
        %934 = vmatpush1.msra.mxu0 0.0
        %935 = vmatprep.subr.mxu0 0.0
        %936 = vmatpush1.msra.mxu0 0.0
        %937 = vmatprep.subr.mxu0 0.0
        %938 = vmatpush1.msra.mxu0 0.0
        %939 = vmatprep.subr.mxu0 0.0
        %940 = vmatpush1.msra.mxu0 0.0
        %941 = vmatprep.subr.mxu0 0.0
        %942 = vmatpush1.msra.mxu0 0.0
        %943 = vmatprep.subr.mxu0 0.0
        %944 = vmatpush1.msra.mxu0 0.0
        %945 = vmatprep.subr.mxu0 0.0
        %946 = vmatpush1.msra.mxu0 0.0
        %947 = vmatprep.subr.mxu0 0.0
        %948 = vmatpush1.msra.mxu0 0.0
        %949 = vmatprep.subr.mxu0 0.0
        %950 = vmatpush1.msra.mxu0 0.0
        %951 = vmatprep.subr.mxu0 0.0
        %952 = vmatpush1.msra.mxu0 0.0
        %953 = vmatprep.mubr.f32.mxu0 0.0
        %954 = vmatmul.mubr.f32.gmra.mrb[0].mxu0 %v862
        %v955 = vpop.f32.mrb[0].mxu0
        %v956 = vadd.f32 0.0, %v955
        %v957 = vpop.f32.mrb[0].mxu0
        %v958 = vadd.f32 0.0, %v957
        %959 = vmatprep.mubr.f32.mxu0 0.0
        %960 = vmatmul.mubr.f32.gmra.mrb[0].mxu0 %v865
        %v961 = vpop.f32.mrb[0].mxu0
        %v962 = vadd.f32 0.0, %v961
        %v963 = vpop.f32.mrb[0].mxu0
        %v964 = vadd.f32 0.0, %v963
        %965 = vmatprep.mubr.f32.mxu0 0.0
        %966 = vmatmul.mubr.f32.gmra.mrb[0].mxu0 %v868
        %v967 = vpop.f32.mrb[0].mxu0
        %v968 = vadd.f32 0.0, %v967
        %v969 = vpop.f32.mrb[0].mxu0
        %v970 = vadd.f32 0.0, %v969
        %971 = vmatprep.mubr.f32.mxu0 0.0
        %972 = vmatmul.mubr.f32.gmra.mrb[0].mxu0 %v871
        %v973 = vpop.f32.mrb[0].mxu0
        %v974 = vadd.f32 0.0, %v973
        %v975 = vpop.f32.mrb[0].mxu0
        %v976 = vadd.f32 0.0, %v975
        %977 = vmatprep.mubr.f32.mxu0 0.0
        %978 = vmatmul.mubr.f32.gmra.mrb[0].mxu0 %v874
        %v979 = vpop.f32.mrb[0].mxu0
        %v980 = vadd.f32 0.0, %v979
        %v981 = vpop.f32.mrb[0].mxu0
        %v982 = vadd.f32 0.0, %v981
        %983 = vdwg.mxu0
        %984 = vmatprep.subr.mxu0 %v811
        %985 = vmatpush1.msra.mxu0 %v810
        %986 = vmatprep.subr.mxu0 %v815
        %987 = vmatpush1.msra.mxu0 %v814
        %988 = vmatprep.subr.mxu0 %v819
        %989 = vmatpush1.msra.mxu0 %v818
        %990 = vmatprep.subr.mxu0 %v823
        %991 = vmatpush1.msra.mxu0 %v822
        %992 = vmatprep.subr.mxu0 %v827
        %993 = vmatpush1.msra.mxu0 %v826
        %994 = vmatprep.subr.mxu0 %v831
        %995 = vmatpush1.msra.mxu0 %v830
        %996 = vmatprep.subr.mxu0 %v835
        %997 = vmatpush1.msra.mxu0 %v834
        %998 = vmatprep.subr.mxu0 %v839
        %999 = vmatpush1.msra.mxu0 %v838
        %1000 = vmatprep.subr.mxu0 %v843
        %1001 = vmatpush1.msra.mxu0 %v842
        %1002 = vmatprep.subr.mxu0 %v847
        %1003 = vmatpush1.msra.mxu0 %v846
        %1004 = vmatprep.subr.mxu0 %v851
        %1005 = vmatpush1.msra.mxu0 %v850
        %1006 = vmatprep.subr.mxu0 %v855
        %1007 = vmatpush1.msra.mxu0 %v854
        %1008 = vmatprep.subr.mxu0 %v887
        %1009 = vmatpush1.msra.mxu0 %v884
        %1010 = vmatprep.subr.mxu0 0.0
        %1011 = vmatpush1.msra.mxu0 0.0
        %1012 = vmatprep.subr.mxu0 0.0
        %1013 = vmatpush1.msra.mxu0 0.0
        %1014 = vmatprep.subr.mxu0 0.0
        %1015 = vmatpush1.msra.mxu0 0.0
        %1016 = vmatprep.subr.mxu0 0.0
        %1017 = vmatpush1.msra.mxu0 0.0
        %1018 = vmatprep.subr.mxu0 0.0
        %1019 = vmatpush1.msra.mxu0 0.0
        %1020 = vmatprep.subr.mxu0 0.0
        %1021 = vmatpush1.msra.mxu0 0.0
        %1022 = vmatprep.subr.mxu0 0.0
        %1023 = vmatpush1.msra.mxu0 0.0
        %1024 = vmatprep.subr.mxu0 0.0
        %1025 = vmatpush1.msra.mxu0 0.0
        %1026 = vmatprep.subr.mxu0 0.0
        %1027 = vmatpush1.msra.mxu0 0.0
        %1028 = vmatprep.subr.mxu0 0.0
        %1029 = vmatpush1.msra.mxu0 0.0
        %1030 = vmatprep.subr.mxu0 0.0
        %1031 = vmatpush1.msra.mxu0 0.0
        %1032 = vmatprep.subr.mxu0 0.0
        %1033 = vmatpush1.msra.mxu0 0.0
        %1034 = vmatprep.subr.mxu0 0.0
        %1035 = vmatpush1.msra.mxu0 0.0
        %1036 = vmatprep.subr.mxu0 0.0
        %1037 = vmatpush1.msra.mxu0 0.0
        %1038 = vmatprep.subr.mxu0 0.0
        %1039 = vmatpush1.msra.mxu0 0.0
        %1040 = vmatprep.subr.mxu0 0.0
        %1041 = vmatpush1.msra.mxu0 0.0
        %1042 = vmatprep.subr.mxu0 0.0
        %1043 = vmatpush1.msra.mxu0 0.0
        %1044 = vmatprep.subr.mxu0 0.0
        %1045 = vmatpush1.msra.mxu0 0.0
        %1046 = vmatprep.subr.mxu0 0.0
        %1047 = vmatpush1.msra.mxu0 0.0
        %1048 = vmatprep.mubr.f32.mxu0 0.0
        %1049 = vmatmul.mubr.f32.gmra.mrb[0].mxu0 %v862
        %v1050 = vpop.f32.mrb[0].mxu0
        %v1051 = vadd.f32 0.0, %v1050
        %v1052 = vpop.f32.mrb[0].mxu0
        %v1053 = vadd.f32 0.0, %v1052
        %1054 = vmatprep.mubr.f32.mxu0 0.0
        %1055 = vmatmul.mubr.f32.gmra.mrb[0].mxu0 %v865
        %v1056 = vpop.f32.mrb[0].mxu0
        %v1057 = vadd.f32 0.0, %v1056
        %v1058 = vpop.f32.mrb[0].mxu0
        %v1059 = vadd.f32 0.0, %v1058
        %1060 = vmatprep.mubr.f32.mxu0 0.0
        %1061 = vmatmul.mubr.f32.gmra.mrb[0].mxu0 %v868
        %v1062 = vpop.f32.mrb[0].mxu0
        %v1063 = vadd.f32 0.0, %v1062
        %v1064 = vpop.f32.mrb[0].mxu0
        %v1065 = vadd.f32 0.0, %v1064
        %1066 = vmatprep.mubr.f32.mxu0 0.0
        %1067 = vmatmul.mubr.f32.gmra.mrb[0].mxu0 %v871
        %v1068 = vpop.f32.mrb[0].mxu0
        %v1069 = vadd.f32 0.0, %v1068
        %v1070 = vpop.f32.mrb[0].mxu0
        %v1071 = vadd.f32 0.0, %v1070
        %1072 = vmatprep.mubr.f32.mxu0 0.0
        %1073 = vmatmul.mubr.f32.gmra.mrb[0].mxu0 %v874
        %v1074 = vpop.f32.mrb[0].mxu0
        %v1075 = vadd.f32 0.0, %v1074
        %v1076 = vpop.f32.mrb[0].mxu0
        %v1077 = vadd.f32 0.0, %v1076
        %1078 = vdwg.mxu0
        %v1079 = vmax.f32 %v956, 0.0
        %v1080 = vmax.f32 %v958, 0.0
        %v1081 = vmax.f32 %v1051, 0.0
        %v1082 = vmax.f32 %v1053, 0.0
        %v1083 = vmax.f32 %v962, 0.0
        %v1084 = vmax.f32 %v964, 0.0
        %v1085 = vmax.f32 %v1057, 0.0
        %v1086 = vmax.f32 %v1059, 0.0
        %v1087 = vmax.f32 %v968, 0.0
        %v1088 = vmax.f32 %v970, 0.0
        %v1089 = vmax.f32 %v1063, 0.0
        %v1090 = vmax.f32 %v1065, 0.0
        %v1091 = vmax.f32 %v974, 0.0
        %v1092 = vmax.f32 %v976, 0.0
        %v1093 = vmax.f32 %v1069, 0.0
        %v1094 = vmax.f32 %v1071, 0.0
        %v1095 = vmax.f32 %v980, 0.0
        %v1096 = vmax.f32 %v982, 0.0
        %v1097 = vmax.f32 %v1075, 0.0
        %v1098 = vmax.f32 %v1077, 0.0
        %1100 = vset.pattern.permute.xlu0 0
        %1101 = vperm.xlu0 %1100, %v309
        %v1102 = vpop.permute.xlu0 %1101
        %1105 = vset.pattern.permute.xlu0 0
        %1106 = vperm.xlu0 %1105, %v310
        %v1107 = vpop.permute.xlu0 %1106
        %1110 = vset.pattern.permute.xlu0 0
        %1111 = vperm.xlu0 %1110, %v311
        %v1112 = vpop.permute.xlu0 %1111
        %1115 = vset.pattern.permute.xlu0 0
        %1116 = vperm.xlu0 %1115, %v312
        %v1117 = vpop.permute.xlu0 %1116
        %1120 = vset.pattern.permute.xlu0 0
        %1121 = vperm.xlu0 %1120, %v313
        %v1122 = vpop.permute.xlu0 %1121
        %v1124 = vmul.f32 %v1102, %v1079
        %v1125 = vmul.f32 %v1102, %v1080
        %v1126 = vmul.f32 %v1102, %v1081
        %v1127 = vmul.f32 %v1102, %v1082
        %v1128 = vmul.f32 %v1107, %v1083
        %v1129 = vmul.f32 %v1107, %v1084
        %v1130 = vmul.f32 %v1107, %v1085
        %v1131 = vmul.f32 %v1107, %v1086
        %v1132 = vmul.f32 %v1112, %v1087
        %v1133 = vmul.f32 %v1112, %v1088
        %v1134 = vmul.f32 %v1112, %v1089
        %v1135 = vmul.f32 %v1112, %v1090
        %v1136 = vmul.f32 %v1117, %v1091
        %v1137 = vmul.f32 %v1117, %v1092
        %v1138 = vmul.f32 %v1117, %v1093
        %v1139 = vmul.f32 %v1117, %v1094
        %v1140 = vmul.f32 %v1122, %v1095
        %v1141 = vmul.f32 %v1122, %v1096
        %v1142 = vmul.f32 %v1122, %v1097
        %v1143 = vmul.f32 %v1122, %v1098
        %v1144 = vadd.f32 %v1124, %v1128
        %v1145 = vadd.f32 %v1144, %v1132
        %v1146 = vadd.f32 %v1145, %v1136
        %v1147 = vadd.f32 %v1146, %v1140
        %v1148 = vrot.slane %v1147, 4
        %v1149 = vadd.f32 %v1147, %v1148
        %v1150 = vrot.slane %v1149, 2
        %v1151 = vadd.f32 %v1149, %v1150
        %v1152 = vrot.slane %v1151, 1
        %v1153 = vadd.f32 %v1151, %v1152
        %v1154 = vadd.f32 %v1125, %v1129
        %v1155 = vadd.f32 %v1154, %v1133
        %v1156 = vadd.f32 %v1155, %v1137
        %v1157 = vadd.f32 %v1156, %v1141
        %v1158 = vrot.slane %v1157, 4
        %v1159 = vadd.f32 %v1157, %v1158
        %v1160 = vrot.slane %v1159, 2
        %v1161 = vadd.f32 %v1159, %v1160
        %v1162 = vrot.slane %v1161, 1
        %v1163 = vadd.f32 %v1161, %v1162
        %v1164 = vadd.f32 %v1126, %v1130
        %v1165 = vadd.f32 %v1164, %v1134
        %v1166 = vadd.f32 %v1165, %v1138
        %v1167 = vadd.f32 %v1166, %v1142
        %v1168 = vrot.slane %v1167, 4
        %v1169 = vadd.f32 %v1167, %v1168
        %v1170 = vrot.slane %v1169, 2
        %v1171 = vadd.f32 %v1169, %v1170
        %v1172 = vrot.slane %v1171, 1
        %v1173 = vadd.f32 %v1171, %v1172
        %v1174 = vadd.f32 %v1127, %v1131
        %v1175 = vadd.f32 %v1174, %v1135
        %v1176 = vadd.f32 %v1175, %v1139
        %v1177 = vadd.f32 %v1176, %v1143
        %v1178 = vrot.slane %v1177, 4
        %v1179 = vadd.f32 %v1177, %v1178
        %v1180 = vrot.slane %v1179, 2
        %v1181 = vadd.f32 %v1179, %v1180
        %v1182 = vrot.slane %v1181, 1
        %v1183 = vadd.f32 %v1181, %v1182
        %1185 = vset.pattern.permute.xlu0 0
        %1186 = vperm.xlu0 %1185, %v314
        %v1187 = vpop.permute.xlu0 %1186
        %v1189 = vlaneseq
        %v1190 = vshrl.u32 %v1189, 7
        %v1191 = vsub.s32 0, %v1190
        %v1192 = vrot.slane %v1187, %v1191
        %v1193 = vadd.f32 %v1153, %v1192
        %v1194 = vadd.f32 %v1163, %v1192
        %v1195 = vadd.f32 %v1173, %v1192
        %v1196 = vadd.f32 %v1183, %v1192
        %v1201 = vcombine.low %v1193, %v1194
        %v1202 = vcombine.low %v1195, %v1196
        %v1204 = vunpack.c.l.s4 1966171168
        %v1205 = vunpack.c.0.s8 %v1204
        %v1206 = vlaneseq
        %v1207 = vshrl.u32 %v1206, 7
        %v1208 = vsub.s32 %v1205, %v1207
        %v1209 = vrot.slane %v1201, %v1208
        %v1211 = vunpack.c.l.s4 1966171168
        %v1212 = vunpack.c.0.s8 %v1211
        %v1213 = vlaneseq
        %v1214 = vshrl.u32 %v1213, 7
        %v1215 = vsub.s32 %v1212, %v1214
        %v1216 = vrot.slane %v1202, %v1215
        %v1217 = vcombine.low %v1209, %v1216
        %v1219 = vunpack.c.l.s4 1966171168
        %v1220 = vunpack.c.0.s8 %v1219
        %v1221 = vlaneseq
        %v1222 = vshrl.u32 %v1221, 7
        %v1223 = vsub.s32 %v1220, %v1222
        %v1224 = vrot.slane %v1217, %v1223
        %v1226 = vlaneseq
        %vm1227 = vcmp.ge.s32.totalorder %v1226, 0
        %vm1228 = vcmp.lt.s32.totalorder %v1226, 512
        %vm1229 = vmand %vm1227, %vm1228
        %1230 = vst.msk [vmem:[%s272] sm:$0xf] %vm1229, %v1224
        %s1231 = scalar_lea.vmem %s276, 4
        %v1232 = vld [vmem:[%s1231] sm:$0xf]
        %v1234 = vlaneseq
        %v1235 = vshrl.u32 %v1234, 7
        %v1236 = vsub.s32 0, %v1235
        %v1237 = vrot.slane %v1232, %v1236
        %v1238 = vlaneseq
        %v1239 = vshrl.u32 %v1238, 7
        %v1240 = vsub.s32 1, %v1239
        %v1241 = vrot.slane %v1232, %v1240
        %v1242 = vlaneseq
        %v1243 = vshrl.u32 %v1242, 7
        %v1244 = vsub.s32 2, %v1243
        %v1245 = vrot.slane %v1232, %v1244
        %v1246 = vlaneseq
        %v1247 = vshrl.u32 %v1246, 7
        %v1248 = vsub.s32 3, %v1247
        %v1249 = vrot.slane %v1232, %v1248
        %v1254 = vmul.f32 %v319, %v1237
        %v1255 = vmul.f32 %v319, %v1241
        %v1256 = vmul.f32 %v319, %v1245
        %v1257 = vmul.f32 %v319, %v1249
        %v1258 = vmul.f32 %v324, %v1237
        %v1259 = vmul.f32 %v324, %v1241
        %v1260 = vmul.f32 %v324, %v1245
        %v1261 = vmul.f32 %v324, %v1249
        %v1262 = vmul.f32 %v329, %v1237
        %v1263 = vmul.f32 %v329, %v1241
        %v1264 = vmul.f32 %v329, %v1245
        %v1265 = vmul.f32 %v329, %v1249
        %v1266 = vmul.f32 %v334, %v1237
        %v1267 = vmul.f32 %v334, %v1241
        %v1268 = vmul.f32 %v334, %v1245
        %v1269 = vmul.f32 %v334, %v1249
        %v1270 = vmul.f32 %v339, %v1237
        %v1271 = vmul.f32 %v339, %v1241
        %v1272 = vmul.f32 %v339, %v1245
        %v1273 = vmul.f32 %v339, %v1249
        %v1274 = vmul.f32 %v344, %v1237
        %v1275 = vmul.f32 %v344, %v1241
        %v1276 = vmul.f32 %v344, %v1245
        %v1277 = vmul.f32 %v344, %v1249
        %v1278 = vadd.f32 %v1254, %v394
        %v1279 = vadd.f32 %v1255, %v394
        %v1280 = vadd.f32 %v1256, %v394
        %v1281 = vadd.f32 %v1257, %v394
        %v1282 = vadd.f32 %v1258, %v399
        %v1283 = vadd.f32 %v1259, %v399
        %v1284 = vadd.f32 %v1260, %v399
        %v1285 = vadd.f32 %v1261, %v399
        %v1286 = vadd.f32 %v1262, %v404
        %v1287 = vadd.f32 %v1263, %v404
        %v1288 = vadd.f32 %v1264, %v404
        %v1289 = vadd.f32 %v1265, %v404
        %v1290 = vadd.f32 %v1266, %v409
        %v1291 = vadd.f32 %v1267, %v409
        %v1292 = vadd.f32 %v1268, %v409
        %v1293 = vadd.f32 %v1269, %v409
        %v1294 = vadd.f32 %v1270, %v414
        %v1295 = vadd.f32 %v1271, %v414
        %v1296 = vadd.f32 %v1272, %v414
        %v1297 = vadd.f32 %v1273, %v414
        %v1298 = vadd.f32 %v1274, %v419
        %v1299 = vadd.f32 %v1275, %v419
        %v1300 = vadd.f32 %v1276, %v419
        %v1301 = vadd.f32 %v1277, %v419
        %v1302 = vmax.f32 %v1278, 0.0
        %v1303 = vmax.f32 %v1279, 0.0
        %v1304 = vmax.f32 %v1280, 0.0
        %v1305 = vmax.f32 %v1281, 0.0
        %v1306 = vmax.f32 %v1282, 0.0
        %v1307 = vmax.f32 %v1283, 0.0
        %v1308 = vmax.f32 %v1284, 0.0
        %v1309 = vmax.f32 %v1285, 0.0
        %v1310 = vmax.f32 %v1286, 0.0
        %v1311 = vmax.f32 %v1287, 0.0
        %v1312 = vmax.f32 %v1288, 0.0
        %v1313 = vmax.f32 %v1289, 0.0
        %v1314 = vmax.f32 %v1290, 0.0
        %v1315 = vmax.f32 %v1291, 0.0
        %v1316 = vmax.f32 %v1292, 0.0
        %v1317 = vmax.f32 %v1293, 0.0
        %v1318 = vmax.f32 %v1294, 0.0
        %v1319 = vmax.f32 %v1295, 0.0
        %v1320 = vmax.f32 %v1296, 0.0
        %v1321 = vmax.f32 %v1297, 0.0
        %v1322 = vmax.f32 %v1298, 0.0
        %v1323 = vmax.f32 %v1299, 0.0
        %v1324 = vmax.f32 %v1300, 0.0
        %v1325 = vmax.f32 %v1301, 0.0
        %v1327 = vsel %vm509, %v1322, 0
        %v1330 = vsel %vm509, %v1323, 0
        %v1333 = vsel %vm509, %v1324, 0
        %v1336 = vsel %vm509, %v1325, 0
        %1338 = vmatprep.subr.mxu0 %v1303
        %1339 = vmatpush1.msra.mxu0 %v1302
        %1340 = vmatprep.subr.mxu0 %v1307
        %1341 = vmatpush1.msra.mxu0 %v1306
        %1342 = vmatprep.subr.mxu0 %v1311
        %1343 = vmatpush1.msra.mxu0 %v1310
        %1344 = vmatprep.subr.mxu0 %v1315
        %1345 = vmatpush1.msra.mxu0 %v1314
        %1346 = vmatprep.subr.mxu0 %v1319
        %1347 = vmatpush1.msra.mxu0 %v1318
        %1348 = vmatprep.subr.mxu0 %v1330
        %1349 = vmatpush1.msra.mxu0 %v1327
        %1350 = vmatprep.subr.mxu0 0.0
        %1351 = vmatpush1.msra.mxu0 0.0
        %1352 = vmatprep.subr.mxu0 0.0
        %1353 = vmatpush1.msra.mxu0 0.0
        %1354 = vmatprep.subr.mxu0 0.0
        %1355 = vmatpush1.msra.mxu0 0.0
        %1356 = vmatprep.subr.mxu0 0.0
        %1357 = vmatpush1.msra.mxu0 0.0
        %1358 = vmatprep.subr.mxu0 0.0
        %1359 = vmatpush1.msra.mxu0 0.0
        %1360 = vmatprep.subr.mxu0 0.0
        %1361 = vmatpush1.msra.mxu0 0.0
        %1362 = vmatprep.subr.mxu0 0.0
        %1363 = vmatpush1.msra.mxu0 0.0
        %1364 = vmatprep.subr.mxu0 0.0
        %1365 = vmatpush1.msra.mxu0 0.0
        %1366 = vmatprep.subr.mxu0 0.0
        %1367 = vmatpush1.msra.mxu0 0.0
        %1368 = vmatprep.subr.mxu0 0.0
        %1369 = vmatpush1.msra.mxu0 0.0
        %1370 = vmatprep.subr.mxu0 0.0
        %1371 = vmatpush1.msra.mxu0 0.0
        %1372 = vmatprep.subr.mxu0 0.0
        %1373 = vmatpush1.msra.mxu0 0.0
        %1374 = vmatprep.subr.mxu0 0.0
        %1375 = vmatpush1.msra.mxu0 0.0
        %1376 = vmatprep.subr.mxu0 0.0
        %1377 = vmatpush1.msra.mxu0 0.0
        %1378 = vmatprep.subr.mxu0 0.0
        %1379 = vmatpush1.msra.mxu0 0.0
        %1380 = vmatprep.subr.mxu0 0.0
        %1381 = vmatpush1.msra.mxu0 0.0
        %1382 = vmatprep.subr.mxu0 0.0
        %1383 = vmatpush1.msra.mxu0 0.0
        %1384 = vmatprep.subr.mxu0 0.0
        %1385 = vmatpush1.msra.mxu0 0.0
        %1386 = vmatprep.subr.mxu0 0.0
        %1387 = vmatpush1.msra.mxu0 0.0
        %1388 = vmatprep.subr.mxu0 0.0
        %1389 = vmatpush1.msra.mxu0 0.0
        %1390 = vmatprep.subr.mxu0 0.0
        %1391 = vmatpush1.msra.mxu0 0.0
        %1392 = vmatprep.subr.mxu0 0.0
        %1393 = vmatpush1.msra.mxu0 0.0
        %1394 = vmatprep.subr.mxu0 0.0
        %1395 = vmatpush1.msra.mxu0 0.0
        %1396 = vmatprep.subr.mxu0 0.0
        %1397 = vmatpush1.msra.mxu0 0.0
        %1398 = vmatprep.subr.mxu0 0.0
        %1399 = vmatpush1.msra.mxu0 0.0
        %1400 = vmatprep.subr.mxu0 0.0
        %1401 = vmatpush1.msra.mxu0 0.0
        %1402 = vmatprep.mubr.f32.mxu0 0.0
        %1403 = vmatmul.mubr.f32.gmra.mrb[0].mxu0 %v471
        %v1404 = vpop.f32.mrb[0].mxu0
        %v1405 = vadd.f32 0.0, %v1404
        %v1406 = vpop.f32.mrb[0].mxu0
        %v1407 = vadd.f32 0.0, %v1406
        %1408 = vmatprep.mubr.f32.mxu0 0.0
        %1409 = vmatmul.mubr.f32.gmra.mrb[0].mxu0 %v474
        %v1410 = vpop.f32.mrb[0].mxu0
        %v1411 = vadd.f32 0.0, %v1410
        %v1412 = vpop.f32.mrb[0].mxu0
        %v1413 = vadd.f32 0.0, %v1412
        %1414 = vmatprep.mubr.f32.mxu0 0.0
        %1415 = vmatmul.mubr.f32.gmra.mrb[0].mxu0 %v477
        %v1416 = vpop.f32.mrb[0].mxu0
        %v1417 = vadd.f32 0.0, %v1416
        %v1418 = vpop.f32.mrb[0].mxu0
        %v1419 = vadd.f32 0.0, %v1418
        %1420 = vmatprep.mubr.f32.mxu0 0.0
        %1421 = vmatmul.mubr.f32.gmra.mrb[0].mxu0 %v480
        %v1422 = vpop.f32.mrb[0].mxu0
        %v1423 = vadd.f32 0.0, %v1422
        %v1424 = vpop.f32.mrb[0].mxu0
        %v1425 = vadd.f32 0.0, %v1424
        %1426 = vmatprep.mubr.f32.mxu0 0.0
        %1427 = vmatmul.mubr.f32.gmra.mrb[0].mxu0 %v483
        %v1428 = vpop.f32.mrb[0].mxu0
        %v1429 = vadd.f32 0.0, %v1428
        %v1430 = vpop.f32.mrb[0].mxu0
        %v1431 = vadd.f32 0.0, %v1430
        %1432 = vmatprep.mubr.f32.mxu0 0.0
        %1433 = vmatmul.mubr.f32.gmra.mrb[0].mxu0 %v486
        %v1434 = vpop.f32.mrb[0].mxu0
        %v1435 = vadd.f32 0.0, %v1434
        %v1436 = vpop.f32.mrb[0].mxu0
        %v1437 = vadd.f32 0.0, %v1436
        %1438 = vmatprep.mubr.f32.mxu0 0.0
        %1439 = vmatmul.mubr.f32.gmra.mrb[0].mxu0 %v489
        %v1440 = vpop.f32.mrb[0].mxu0
        %v1441 = vadd.f32 0.0, %v1440
        %v1442 = vpop.f32.mrb[0].mxu0
        %v1443 = vadd.f32 0.0, %v1442
        %1444 = vmatprep.mubr.f32.mxu0 0.0
        %1445 = vmatmul.mubr.f32.gmra.mrb[0].mxu0 %v492
        %v1446 = vpop.f32.mrb[0].mxu0
        %v1447 = vadd.f32 0.0, %v1446
        %v1448 = vpop.f32.mrb[0].mxu0
        %v1449 = vadd.f32 0.0, %v1448
        %1450 = vmatprep.mubr.f32.mxu0 0.0
        %1451 = vmatmul.mubr.f32.gmra.mrb[0].mxu0 %v495
        %v1452 = vpop.f32.mrb[0].mxu0
        %v1453 = vadd.f32 0.0, %v1452
        %v1454 = vpop.f32.mrb[0].mxu0
        %v1455 = vadd.f32 0.0, %v1454
        %1456 = vmatprep.mubr.f32.mxu0 0.0
        %1457 = vmatmul.mubr.f32.gmra.mrb[0].mxu0 %v498
        %v1458 = vpop.f32.mrb[0].mxu0
        %v1459 = vadd.f32 0.0, %v1458
        %v1460 = vpop.f32.mrb[0].mxu0
        %v1461 = vadd.f32 0.0, %v1460
        %1462 = vmatprep.mubr.f32.mxu0 0.0
        %1463 = vmatmul.mubr.f32.gmra.mrb[0].mxu0 %v501
        %v1464 = vpop.f32.mrb[0].mxu0
        %v1465 = vadd.f32 0.0, %v1464
        %v1466 = vpop.f32.mrb[0].mxu0
        %v1467 = vadd.f32 0.0, %v1466
        %1468 = vmatprep.mubr.f32.mxu0 0.0
        %1469 = vmatmul.mubr.f32.gmra.mrb[0].mxu0 %v504
        %v1470 = vpop.f32.mrb[0].mxu0
        %v1471 = vadd.f32 0.0, %v1470
        %v1472 = vpop.f32.mrb[0].mxu0
        %v1473 = vadd.f32 0.0, %v1472
        %1474 = vmatprep.mubr.f32.mxu0 0.0
        %1475 = vmatmul.mubr.f32.gmra.mrb[0].mxu0 %v507
        %v1476 = vpop.f32.mrb[0].mxu0
        %v1477 = vadd.f32 0.0, %v1476
        %v1478 = vpop.f32.mrb[0].mxu0
        %v1479 = vadd.f32 0.0, %v1478
        %1480 = vdwg.mxu0
        %1481 = vmatprep.subr.mxu0 %v1305
        %1482 = vmatpush1.msra.mxu0 %v1304
        %1483 = vmatprep.subr.mxu0 %v1309
        %1484 = vmatpush1.msra.mxu0 %v1308
        %1485 = vmatprep.subr.mxu0 %v1313
        %1486 = vmatpush1.msra.mxu0 %v1312
        %1487 = vmatprep.subr.mxu0 %v1317
        %1488 = vmatpush1.msra.mxu0 %v1316
        %1489 = vmatprep.subr.mxu0 %v1321
        %1490 = vmatpush1.msra.mxu0 %v1320
        %1491 = vmatprep.subr.mxu0 %v1336
        %1492 = vmatpush1.msra.mxu0 %v1333
        %1493 = vmatprep.subr.mxu0 0.0
        %1494 = vmatpush1.msra.mxu0 0.0
        %1495 = vmatprep.subr.mxu0 0.0
        %1496 = vmatpush1.msra.mxu0 0.0
        %1497 = vmatprep.subr.mxu0 0.0
        %1498 = vmatpush1.msra.mxu0 0.0
        %1499 = vmatprep.subr.mxu0 0.0
        %1500 = vmatpush1.msra.mxu0 0.0
        %1501 = vmatprep.subr.mxu0 0.0
        %1502 = vmatpush1.msra.mxu0 0.0
        %1503 = vmatprep.subr.mxu0 0.0
        %1504 = vmatpush1.msra.mxu0 0.0
        %1505 = vmatprep.subr.mxu0 0.0
        %1506 = vmatpush1.msra.mxu0 0.0
        %1507 = vmatprep.subr.mxu0 0.0
        %1508 = vmatpush1.msra.mxu0 0.0
        %1509 = vmatprep.subr.mxu0 0.0
        %1510 = vmatpush1.msra.mxu0 0.0
        %1511 = vmatprep.subr.mxu0 0.0
        %1512 = vmatpush1.msra.mxu0 0.0
        %1513 = vmatprep.subr.mxu0 0.0
        %1514 = vmatpush1.msra.mxu0 0.0
        %1515 = vmatprep.subr.mxu0 0.0
        %1516 = vmatpush1.msra.mxu0 0.0
        %1517 = vmatprep.subr.mxu0 0.0
        %1518 = vmatpush1.msra.mxu0 0.0
        %1519 = vmatprep.subr.mxu0 0.0
        %1520 = vmatpush1.msra.mxu0 0.0
        %1521 = vmatprep.subr.mxu0 0.0
        %1522 = vmatpush1.msra.mxu0 0.0
        %1523 = vmatprep.subr.mxu0 0.0
        %1524 = vmatpush1.msra.mxu0 0.0
        %1525 = vmatprep.subr.mxu0 0.0
        %1526 = vmatpush1.msra.mxu0 0.0
        %1527 = vmatprep.subr.mxu0 0.0
        %1528 = vmatpush1.msra.mxu0 0.0
        %1529 = vmatprep.subr.mxu0 0.0
        %1530 = vmatpush1.msra.mxu0 0.0
        %1531 = vmatprep.subr.mxu0 0.0
        %1532 = vmatpush1.msra.mxu0 0.0
        %1533 = vmatprep.subr.mxu0 0.0
        %1534 = vmatpush1.msra.mxu0 0.0
        %1535 = vmatprep.subr.mxu0 0.0
        %1536 = vmatpush1.msra.mxu0 0.0
        %1537 = vmatprep.subr.mxu0 0.0
        %1538 = vmatpush1.msra.mxu0 0.0
        %1539 = vmatprep.subr.mxu0 0.0
        %1540 = vmatpush1.msra.mxu0 0.0
        %1541 = vmatprep.subr.mxu0 0.0
        %1542 = vmatpush1.msra.mxu0 0.0
        %1543 = vmatprep.subr.mxu0 0.0
        %1544 = vmatpush1.msra.mxu0 0.0
        %1545 = vmatprep.mubr.f32.mxu0 0.0
        %1546 = vmatmul.mubr.f32.gmra.mrb[0].mxu0 %v471
        %v1547 = vpop.f32.mrb[0].mxu0
        %v1548 = vadd.f32 0.0, %v1547
        %v1549 = vpop.f32.mrb[0].mxu0
        %v1550 = vadd.f32 0.0, %v1549
        %1551 = vmatprep.mubr.f32.mxu0 0.0
        %1552 = vmatmul.mubr.f32.gmra.mrb[0].mxu0 %v474
        %v1553 = vpop.f32.mrb[0].mxu0
        %v1554 = vadd.f32 0.0, %v1553
        %v1555 = vpop.f32.mrb[0].mxu0
        %v1556 = vadd.f32 0.0, %v1555
        %1557 = vmatprep.mubr.f32.mxu0 0.0
        %1558 = vmatmul.mubr.f32.gmra.mrb[0].mxu0 %v477
        %v1559 = vpop.f32.mrb[0].mxu0
        %v1560 = vadd.f32 0.0, %v1559
        %v1561 = vpop.f32.mrb[0].mxu0
        %v1562 = vadd.f32 0.0, %v1561
        %1563 = vmatprep.mubr.f32.mxu0 0.0
        %1564 = vmatmul.mubr.f32.gmra.mrb[0].mxu0 %v480
        %v1565 = vpop.f32.mrb[0].mxu0
        %v1566 = vadd.f32 0.0, %v1565
        %v1567 = vpop.f32.mrb[0].mxu0
        %v1568 = vadd.f32 0.0, %v1567
        %1569 = vmatprep.mubr.f32.mxu0 0.0
        %1570 = vmatmul.mubr.f32.gmra.mrb[0].mxu0 %v483
        %v1571 = vpop.f32.mrb[0].mxu0
        %v1572 = vadd.f32 0.0, %v1571
        %v1573 = vpop.f32.mrb[0].mxu0
        %v1574 = vadd.f32 0.0, %v1573
        %1575 = vmatprep.mubr.f32.mxu0 0.0
        %1576 = vmatmul.mubr.f32.gmra.mrb[0].mxu0 %v486
        %v1577 = vpop.f32.mrb[0].mxu0
        %v1578 = vadd.f32 0.0, %v1577
        %v1579 = vpop.f32.mrb[0].mxu0
        %v1580 = vadd.f32 0.0, %v1579
        %1581 = vmatprep.mubr.f32.mxu0 0.0
        %1582 = vmatmul.mubr.f32.gmra.mrb[0].mxu0 %v489
        %v1583 = vpop.f32.mrb[0].mxu0
        %v1584 = vadd.f32 0.0, %v1583
        %v1585 = vpop.f32.mrb[0].mxu0
        %v1586 = vadd.f32 0.0, %v1585
        %1587 = vmatprep.mubr.f32.mxu0 0.0
        %1588 = vmatmul.mubr.f32.gmra.mrb[0].mxu0 %v492
        %v1589 = vpop.f32.mrb[0].mxu0
        %v1590 = vadd.f32 0.0, %v1589
        %v1591 = vpop.f32.mrb[0].mxu0
        %v1592 = vadd.f32 0.0, %v1591
        %1593 = vmatprep.mubr.f32.mxu0 0.0
        %1594 = vmatmul.mubr.f32.gmra.mrb[0].mxu0 %v495
        %v1595 = vpop.f32.mrb[0].mxu0
        %v1596 = vadd.f32 0.0, %v1595
        %v1597 = vpop.f32.mrb[0].mxu0
        %v1598 = vadd.f32 0.0, %v1597
        %1599 = vmatprep.mubr.f32.mxu0 0.0
        %1600 = vmatmul.mubr.f32.gmra.mrb[0].mxu0 %v498
        %v1601 = vpop.f32.mrb[0].mxu0
        %v1602 = vadd.f32 0.0, %v1601
        %v1603 = vpop.f32.mrb[0].mxu0
        %v1604 = vadd.f32 0.0, %v1603
        %1605 = vmatprep.mubr.f32.mxu0 0.0
        %1606 = vmatmul.mubr.f32.gmra.mrb[0].mxu0 %v501
        %v1607 = vpop.f32.mrb[0].mxu0
        %v1608 = vadd.f32 0.0, %v1607
        %v1609 = vpop.f32.mrb[0].mxu0
        %v1610 = vadd.f32 0.0, %v1609
        %1611 = vmatprep.mubr.f32.mxu0 0.0
        %1612 = vmatmul.mubr.f32.gmra.mrb[0].mxu0 %v504
        %v1613 = vpop.f32.mrb[0].mxu0
        %v1614 = vadd.f32 0.0, %v1613
        %v1615 = vpop.f32.mrb[0].mxu0
        %v1616 = vadd.f32 0.0, %v1615
        %1617 = vmatprep.mubr.f32.mxu0 0.0
        %1618 = vmatmul.mubr.f32.gmra.mrb[0].mxu0 %v507
        %v1619 = vpop.f32.mrb[0].mxu0
        %v1620 = vadd.f32 0.0, %v1619
        %v1621 = vpop.f32.mrb[0].mxu0
        %v1622 = vadd.f32 0.0, %v1621
        %1623 = vdwg.mxu0
        %v1624 = vmax.f32 %v1405, 0.0
        %v1625 = vmax.f32 %v1407, 0.0
        %v1626 = vmax.f32 %v1548, 0.0
        %v1627 = vmax.f32 %v1550, 0.0
        %v1628 = vmax.f32 %v1411, 0.0
        %v1629 = vmax.f32 %v1413, 0.0
        %v1630 = vmax.f32 %v1554, 0.0
        %v1631 = vmax.f32 %v1556, 0.0
        %v1632 = vmax.f32 %v1417, 0.0
        %v1633 = vmax.f32 %v1419, 0.0
        %v1634 = vmax.f32 %v1560, 0.0
        %v1635 = vmax.f32 %v1562, 0.0
        %v1636 = vmax.f32 %v1423, 0.0
        %v1637 = vmax.f32 %v1425, 0.0
        %v1638 = vmax.f32 %v1566, 0.0
        %v1639 = vmax.f32 %v1568, 0.0
        %v1640 = vmax.f32 %v1429, 0.0
        %v1641 = vmax.f32 %v1431, 0.0
        %v1642 = vmax.f32 %v1572, 0.0
        %v1643 = vmax.f32 %v1574, 0.0
        %v1644 = vmax.f32 %v1435, 0.0
        %v1645 = vmax.f32 %v1437, 0.0
        %v1646 = vmax.f32 %v1578, 0.0
        %v1647 = vmax.f32 %v1580, 0.0
        %v1648 = vmax.f32 %v1441, 0.0
        %v1649 = vmax.f32 %v1443, 0.0
        %v1650 = vmax.f32 %v1584, 0.0
        %v1651 = vmax.f32 %v1586, 0.0
        %v1652 = vmax.f32 %v1447, 0.0
        %v1653 = vmax.f32 %v1449, 0.0
        %v1654 = vmax.f32 %v1590, 0.0
        %v1655 = vmax.f32 %v1592, 0.0
        %v1656 = vmax.f32 %v1453, 0.0
        %v1657 = vmax.f32 %v1455, 0.0
        %v1658 = vmax.f32 %v1596, 0.0
        %v1659 = vmax.f32 %v1598, 0.0
        %v1660 = vmax.f32 %v1459, 0.0
        %v1661 = vmax.f32 %v1461, 0.0
        %v1662 = vmax.f32 %v1602, 0.0
        %v1663 = vmax.f32 %v1604, 0.0
        %v1664 = vmax.f32 %v1465, 0.0
        %v1665 = vmax.f32 %v1467, 0.0
        %v1666 = vmax.f32 %v1608, 0.0
        %v1667 = vmax.f32 %v1610, 0.0
        %v1668 = vmax.f32 %v1471, 0.0
        %v1669 = vmax.f32 %v1473, 0.0
        %v1670 = vmax.f32 %v1614, 0.0
        %v1671 = vmax.f32 %v1616, 0.0
        %v1672 = vmax.f32 %v1477, 0.0
        %v1673 = vmax.f32 %v1479, 0.0
        %v1674 = vmax.f32 %v1620, 0.0
        %v1675 = vmax.f32 %v1622, 0.0
        %v1677 = vsel %vm876, %v1672, 0
        %v1680 = vsel %vm876, %v1673, 0
        %v1683 = vsel %vm876, %v1674, 0
        %v1686 = vsel %vm876, %v1675, 0
        %1688 = vmatprep.subr.mxu0 %v1625
        %1689 = vmatpush1.msra.mxu0 %v1624
        %1690 = vmatprep.subr.mxu0 %v1629
        %1691 = vmatpush1.msra.mxu0 %v1628
        %1692 = vmatprep.subr.mxu0 %v1633
        %1693 = vmatpush1.msra.mxu0 %v1632
        %1694 = vmatprep.subr.mxu0 %v1637
        %1695 = vmatpush1.msra.mxu0 %v1636
        %1696 = vmatprep.subr.mxu0 %v1641
        %1697 = vmatpush1.msra.mxu0 %v1640
        %1698 = vmatprep.subr.mxu0 %v1645
        %1699 = vmatpush1.msra.mxu0 %v1644
        %1700 = vmatprep.subr.mxu0 %v1649
        %1701 = vmatpush1.msra.mxu0 %v1648
        %1702 = vmatprep.subr.mxu0 %v1653
        %1703 = vmatpush1.msra.mxu0 %v1652
        %1704 = vmatprep.subr.mxu0 %v1657
        %1705 = vmatpush1.msra.mxu0 %v1656
        %1706 = vmatprep.subr.mxu0 %v1661
        %1707 = vmatpush1.msra.mxu0 %v1660
        %1708 = vmatprep.subr.mxu0 %v1665
        %1709 = vmatpush1.msra.mxu0 %v1664
        %1710 = vmatprep.subr.mxu0 %v1669
        %1711 = vmatpush1.msra.mxu0 %v1668
        %1712 = vmatprep.subr.mxu0 %v1680
        %1713 = vmatpush1.msra.mxu0 %v1677
        %1714 = vmatprep.subr.mxu0 0.0
        %1715 = vmatpush1.msra.mxu0 0.0
        %1716 = vmatprep.subr.mxu0 0.0
        %1717 = vmatpush1.msra.mxu0 0.0
        %1718 = vmatprep.subr.mxu0 0.0
        %1719 = vmatpush1.msra.mxu0 0.0
        %1720 = vmatprep.subr.mxu0 0.0
        %1721 = vmatpush1.msra.mxu0 0.0
        %1722 = vmatprep.subr.mxu0 0.0
        %1723 = vmatpush1.msra.mxu0 0.0
        %1724 = vmatprep.subr.mxu0 0.0
        %1725 = vmatpush1.msra.mxu0 0.0
        %1726 = vmatprep.subr.mxu0 0.0
        %1727 = vmatpush1.msra.mxu0 0.0
        %1728 = vmatprep.subr.mxu0 0.0
        %1729 = vmatpush1.msra.mxu0 0.0
        %1730 = vmatprep.subr.mxu0 0.0
        %1731 = vmatpush1.msra.mxu0 0.0
        %1732 = vmatprep.subr.mxu0 0.0
        %1733 = vmatpush1.msra.mxu0 0.0
        %1734 = vmatprep.subr.mxu0 0.0
        %1735 = vmatpush1.msra.mxu0 0.0
        %1736 = vmatprep.subr.mxu0 0.0
        %1737 = vmatpush1.msra.mxu0 0.0
        %1738 = vmatprep.subr.mxu0 0.0
        %1739 = vmatpush1.msra.mxu0 0.0
        %1740 = vmatprep.subr.mxu0 0.0
        %1741 = vmatpush1.msra.mxu0 0.0
        %1742 = vmatprep.subr.mxu0 0.0
        %1743 = vmatpush1.msra.mxu0 0.0
        %1744 = vmatprep.subr.mxu0 0.0
        %1745 = vmatpush1.msra.mxu0 0.0
        %1746 = vmatprep.subr.mxu0 0.0
        %1747 = vmatpush1.msra.mxu0 0.0
        %1748 = vmatprep.subr.mxu0 0.0
        %1749 = vmatpush1.msra.mxu0 0.0
        %1750 = vmatprep.subr.mxu0 0.0
        %1751 = vmatpush1.msra.mxu0 0.0
        %1752 = vmatprep.mubr.f32.mxu0 0.0
        %1753 = vmatmul.mubr.f32.gmra.mrb[0].mxu0 %v862
        %v1754 = vpop.f32.mrb[0].mxu0
        %v1755 = vadd.f32 0.0, %v1754
        %v1756 = vpop.f32.mrb[0].mxu0
        %v1757 = vadd.f32 0.0, %v1756
        %1758 = vmatprep.mubr.f32.mxu0 0.0
        %1759 = vmatmul.mubr.f32.gmra.mrb[0].mxu0 %v865
        %v1760 = vpop.f32.mrb[0].mxu0
        %v1761 = vadd.f32 0.0, %v1760
        %v1762 = vpop.f32.mrb[0].mxu0
        %v1763 = vadd.f32 0.0, %v1762
        %1764 = vmatprep.mubr.f32.mxu0 0.0
        %1765 = vmatmul.mubr.f32.gmra.mrb[0].mxu0 %v868
        %v1766 = vpop.f32.mrb[0].mxu0
        %v1767 = vadd.f32 0.0, %v1766
        %v1768 = vpop.f32.mrb[0].mxu0
        %v1769 = vadd.f32 0.0, %v1768
        %1770 = vmatprep.mubr.f32.mxu0 0.0
        %1771 = vmatmul.mubr.f32.gmra.mrb[0].mxu0 %v871
        %v1772 = vpop.f32.mrb[0].mxu0
        %v1773 = vadd.f32 0.0, %v1772
        %v1774 = vpop.f32.mrb[0].mxu0
        %v1775 = vadd.f32 0.0, %v1774
        %1776 = vmatprep.mubr.f32.mxu0 0.0
        %1777 = vmatmul.mubr.f32.gmra.mrb[0].mxu0 %v874
        %v1778 = vpop.f32.mrb[0].mxu0
        %v1779 = vadd.f32 0.0, %v1778
        %v1780 = vpop.f32.mrb[0].mxu0
        %v1781 = vadd.f32 0.0, %v1780
        %1782 = vdwg.mxu0
        %1783 = vmatprep.subr.mxu0 %v1627
        %1784 = vmatpush1.msra.mxu0 %v1626
        %1785 = vmatprep.subr.mxu0 %v1631
        %1786 = vmatpush1.msra.mxu0 %v1630
        %1787 = vmatprep.subr.mxu0 %v1635
        %1788 = vmatpush1.msra.mxu0 %v1634
        %1789 = vmatprep.subr.mxu0 %v1639
        %1790 = vmatpush1.msra.mxu0 %v1638
        %1791 = vmatprep.subr.mxu0 %v1643
        %1792 = vmatpush1.msra.mxu0 %v1642
        %1793 = vmatprep.subr.mxu0 %v1647
        %1794 = vmatpush1.msra.mxu0 %v1646
        %1795 = vmatprep.subr.mxu0 %v1651
        %1796 = vmatpush1.msra.mxu0 %v1650
        %1797 = vmatprep.subr.mxu0 %v1655
        %1798 = vmatpush1.msra.mxu0 %v1654
        %1799 = vmatprep.subr.mxu0 %v1659
        %1800 = vmatpush1.msra.mxu0 %v1658
        %1801 = vmatprep.subr.mxu0 %v1663
        %1802 = vmatpush1.msra.mxu0 %v1662
        %1803 = vmatprep.subr.mxu0 %v1667
        %1804 = vmatpush1.msra.mxu0 %v1666
        %1805 = vmatprep.subr.mxu0 %v1671
        %1806 = vmatpush1.msra.mxu0 %v1670
        %1807 = vmatprep.subr.mxu0 %v1686
        %1808 = vmatpush1.msra.mxu0 %v1683
        %1809 = vmatprep.subr.mxu0 0.0
        %1810 = vmatpush1.msra.mxu0 0.0
        %1811 = vmatprep.subr.mxu0 0.0
        %1812 = vmatpush1.msra.mxu0 0.0
        %1813 = vmatprep.subr.mxu0 0.0
        %1814 = vmatpush1.msra.mxu0 0.0
        %1815 = vmatprep.subr.mxu0 0.0
        %1816 = vmatpush1.msra.mxu0 0.0
        %1817 = vmatprep.subr.mxu0 0.0
        %1818 = vmatpush1.msra.mxu0 0.0
        %1819 = vmatprep.subr.mxu0 0.0
        %1820 = vmatpush1.msra.mxu0 0.0
        %1821 = vmatprep.subr.mxu0 0.0
        %1822 = vmatpush1.msra.mxu0 0.0
        %1823 = vmatprep.subr.mxu0 0.0
        %1824 = vmatpush1.msra.mxu0 0.0
        %1825 = vmatprep.subr.mxu0 0.0
        %1826 = vmatpush1.msra.mxu0 0.0
        %1827 = vmatprep.subr.mxu0 0.0
        %1828 = vmatpush1.msra.mxu0 0.0
        %1829 = vmatprep.subr.mxu0 0.0
        %1830 = vmatpush1.msra.mxu0 0.0
        %1831 = vmatprep.subr.mxu0 0.0
        %1832 = vmatpush1.msra.mxu0 0.0
        %1833 = vmatprep.subr.mxu0 0.0
        %1834 = vmatpush1.msra.mxu0 0.0
        %1835 = vmatprep.subr.mxu0 0.0
        %1836 = vmatpush1.msra.mxu0 0.0
        %1837 = vmatprep.subr.mxu0 0.0
        %1838 = vmatpush1.msra.mxu0 0.0
        %1839 = vmatprep.subr.mxu0 0.0
        %1840 = vmatpush1.msra.mxu0 0.0
        %1841 = vmatprep.subr.mxu0 0.0
        %1842 = vmatpush1.msra.mxu0 0.0
        %1843 = vmatprep.subr.mxu0 0.0
        %1844 = vmatpush1.msra.mxu0 0.0
        %1845 = vmatprep.subr.mxu0 0.0
        %1846 = vmatpush1.msra.mxu0 0.0
        %1847 = vmatprep.mubr.f32.mxu0 0.0
        %1848 = vmatmul.mubr.f32.gmra.mrb[0].mxu0 %v862
        %v1849 = vpop.f32.mrb[0].mxu0
        %v1850 = vadd.f32 0.0, %v1849
        %v1851 = vpop.f32.mrb[0].mxu0
        %v1852 = vadd.f32 0.0, %v1851
        %1853 = vmatprep.mubr.f32.mxu0 0.0
        %1854 = vmatmul.mubr.f32.gmra.mrb[0].mxu0 %v865
        %v1855 = vpop.f32.mrb[0].mxu0
        %v1856 = vadd.f32 0.0, %v1855
        %v1857 = vpop.f32.mrb[0].mxu0
        %v1858 = vadd.f32 0.0, %v1857
        %1859 = vmatprep.mubr.f32.mxu0 0.0
        %1860 = vmatmul.mubr.f32.gmra.mrb[0].mxu0 %v868
        %v1861 = vpop.f32.mrb[0].mxu0
        %v1862 = vadd.f32 0.0, %v1861
        %v1863 = vpop.f32.mrb[0].mxu0
        %v1864 = vadd.f32 0.0, %v1863
        %1865 = vmatprep.mubr.f32.mxu0 0.0
        %1866 = vmatmul.mubr.f32.gmra.mrb[0].mxu0 %v871
        %v1867 = vpop.f32.mrb[0].mxu0
        %v1868 = vadd.f32 0.0, %v1867
        %v1869 = vpop.f32.mrb[0].mxu0
        %v1870 = vadd.f32 0.0, %v1869
        %1871 = vmatprep.mubr.f32.mxu0 0.0
        %1872 = vmatmul.mubr.f32.gmra.mrb[0].mxu0 %v874
        %v1873 = vpop.f32.mrb[0].mxu0
        %v1874 = vadd.f32 0.0, %v1873
        %v1875 = vpop.f32.mrb[0].mxu0
        %v1876 = vadd.f32 0.0, %v1875
        %1877 = vdwg.mxu0
        %v1878 = vmax.f32 %v1755, 0.0
        %v1879 = vmax.f32 %v1757, 0.0
        %v1880 = vmax.f32 %v1850, 0.0
        %v1881 = vmax.f32 %v1852, 0.0
        %v1882 = vmax.f32 %v1761, 0.0
        %v1883 = vmax.f32 %v1763, 0.0
        %v1884 = vmax.f32 %v1856, 0.0
        %v1885 = vmax.f32 %v1858, 0.0
        %v1886 = vmax.f32 %v1767, 0.0
        %v1887 = vmax.f32 %v1769, 0.0
        %v1888 = vmax.f32 %v1862, 0.0
        %v1889 = vmax.f32 %v1864, 0.0
        %v1890 = vmax.f32 %v1773, 0.0
        %v1891 = vmax.f32 %v1775, 0.0
        %v1892 = vmax.f32 %v1868, 0.0
        %v1893 = vmax.f32 %v1870, 0.0
        %v1894 = vmax.f32 %v1779, 0.0
        %v1895 = vmax.f32 %v1781, 0.0
        %v1896 = vmax.f32 %v1874, 0.0
        %v1897 = vmax.f32 %v1876, 0.0
        %v1898 = vmul.f32 %v1102, %v1878
        %v1899 = vmul.f32 %v1102, %v1879
        %v1900 = vmul.f32 %v1102, %v1880
        %v1901 = vmul.f32 %v1102, %v1881
        %v1902 = vmul.f32 %v1107, %v1882
        %v1903 = vmul.f32 %v1107, %v1883
        %v1904 = vmul.f32 %v1107, %v1884
        %v1905 = vmul.f32 %v1107, %v1885
        %v1906 = vmul.f32 %v1112, %v1886
        %v1907 = vmul.f32 %v1112, %v1887
        %v1908 = vmul.f32 %v1112, %v1888
        %v1909 = vmul.f32 %v1112, %v1889
        %v1910 = vmul.f32 %v1117, %v1890
        %v1911 = vmul.f32 %v1117, %v1891
        %v1912 = vmul.f32 %v1117, %v1892
        %v1913 = vmul.f32 %v1117, %v1893
        %v1914 = vmul.f32 %v1122, %v1894
        %v1915 = vmul.f32 %v1122, %v1895
        %v1916 = vmul.f32 %v1122, %v1896
        %v1917 = vmul.f32 %v1122, %v1897
        %v1918 = vadd.f32 %v1898, %v1902
        %v1919 = vadd.f32 %v1918, %v1906
        %v1920 = vadd.f32 %v1919, %v1910
        %v1921 = vadd.f32 %v1920, %v1914
        %v1922 = vrot.slane %v1921, 4
        %v1923 = vadd.f32 %v1921, %v1922
        %v1924 = vrot.slane %v1923, 2
        %v1925 = vadd.f32 %v1923, %v1924
        %v1926 = vrot.slane %v1925, 1
        %v1927 = vadd.f32 %v1925, %v1926
        %v1928 = vadd.f32 %v1899, %v1903
        %v1929 = vadd.f32 %v1928, %v1907
        %v1930 = vadd.f32 %v1929, %v1911
        %v1931 = vadd.f32 %v1930, %v1915
        %v1932 = vrot.slane %v1931, 4
        %v1933 = vadd.f32 %v1931, %v1932
        %v1934 = vrot.slane %v1933, 2
        %v1935 = vadd.f32 %v1933, %v1934
        %v1936 = vrot.slane %v1935, 1
        %v1937 = vadd.f32 %v1935, %v1936
        %v1938 = vadd.f32 %v1900, %v1904
        %v1939 = vadd.f32 %v1938, %v1908
        %v1940 = vadd.f32 %v1939, %v1912
        %v1941 = vadd.f32 %v1940, %v1916
        %v1942 = vrot.slane %v1941, 4
        %v1943 = vadd.f32 %v1941, %v1942
        %v1944 = vrot.slane %v1943, 2
        %v1945 = vadd.f32 %v1943, %v1944
        %v1946 = vrot.slane %v1945, 1
        %v1947 = vadd.f32 %v1945, %v1946
        %v1948 = vadd.f32 %v1901, %v1905
        %v1949 = vadd.f32 %v1948, %v1909
        %v1950 = vadd.f32 %v1949, %v1913
        %v1951 = vadd.f32 %v1950, %v1917
        %v1952 = vrot.slane %v1951, 4
        %v1953 = vadd.f32 %v1951, %v1952
        %v1954 = vrot.slane %v1953, 2
        %v1955 = vadd.f32 %v1953, %v1954
        %v1956 = vrot.slane %v1955, 1
        %v1957 = vadd.f32 %v1955, %v1956
        %v1958 = vadd.f32 %v1927, %v1192
        %v1959 = vadd.f32 %v1937, %v1192
        %v1960 = vadd.f32 %v1947, %v1192
        %v1961 = vadd.f32 %v1957, %v1192
        %v1966 = vcombine.low %v1958, %v1959
        %v1967 = vcombine.low %v1960, %v1961
        %v1969 = vunpack.c.l.s4 1966171168
        %v1970 = vunpack.c.0.s8 %v1969
        %v1971 = vlaneseq
        %v1972 = vshrl.u32 %v1971, 7
        %v1973 = vsub.s32 %v1970, %v1972
        %v1974 = vrot.slane %v1966, %v1973
        %v1976 = vunpack.c.l.s4 1966171168
        %v1977 = vunpack.c.0.s8 %v1976
        %v1978 = vlaneseq
        %v1979 = vshrl.u32 %v1978, 7
        %v1980 = vsub.s32 %v1977, %v1979
        %v1981 = vrot.slane %v1967, %v1980
        %v1982 = vcombine.low %v1974, %v1981
        %v1984 = vunpack.c.l.s4 1966171168
        %v1985 = vunpack.c.0.s8 %v1984
        %v1986 = vlaneseq
        %v1987 = vshrl.u32 %v1986, 7
        %v1988 = vsub.s32 %v1985, %v1987
        %v1989 = vrot.slane %v1982, %v1988
        %s1991 = scalar_lea.vmem %s272, 4 [#allocation3]
        %1992 = vst.msk [vmem:[%s1991] sm:$0xf] %vm1229, %v1989
        %s1993 = scalar_lea.vmem %s276, 8
        %v1994 = vld [vmem:[%s1993] sm:$0xf]
        %v1996 = vlaneseq
        %v1997 = vshrl.u32 %v1996, 7
        %v1998 = vsub.s32 0, %v1997
        %v1999 = vrot.slane %v1994, %v1998
        %v2000 = vlaneseq
        %v2001 = vshrl.u32 %v2000, 7
        %v2002 = vsub.s32 1, %v2001
        %v2003 = vrot.slane %v1994, %v2002
        %v2004 = vlaneseq
        %v2005 = vshrl.u32 %v2004, 7
        %v2006 = vsub.s32 2, %v2005
        %v2007 = vrot.slane %v1994, %v2006
        %v2008 = vlaneseq
        %v2009 = vshrl.u32 %v2008, 7
        %v2010 = vsub.s32 3, %v2009
        %v2011 = vrot.slane %v1994, %v2010
        %v2016 = vmul.f32 %v319, %v1999
        %v2017 = vmul.f32 %v319, %v2003
        %v2018 = vmul.f32 %v319, %v2007
        %v2019 = vmul.f32 %v319, %v2011
        %v2020 = vmul.f32 %v324, %v1999
        %v2021 = vmul.f32 %v324, %v2003
        %v2022 = vmul.f32 %v324, %v2007
        %v2023 = vmul.f32 %v324, %v2011
        %v2024 = vmul.f32 %v329, %v1999
        %v2025 = vmul.f32 %v329, %v2003
        %v2026 = vmul.f32 %v329, %v2007
        %v2027 = vmul.f32 %v329, %v2011
        %v2028 = vmul.f32 %v334, %v1999
        %v2029 = vmul.f32 %v334, %v2003
        %v2030 = vmul.f32 %v334, %v2007
        %v2031 = vmul.f32 %v334, %v2011
        %v2032 = vmul.f32 %v339, %v1999
        %v2033 = vmul.f32 %v339, %v2003
        %v2034 = vmul.f32 %v339, %v2007
        %v2035 = vmul.f32 %v339, %v2011
        %v2036 = vmul.f32 %v344, %v1999
        %v2037 = vmul.f32 %v344, %v2003
        %v2038 = vmul.f32 %v344, %v2007
        %v2039 = vmul.f32 %v344, %v2011
        %v2040 = vadd.f32 %v2016, %v394
        %v2041 = vadd.f32 %v2017, %v394
        %v2042 = vadd.f32 %v2018, %v394
        %v2043 = vadd.f32 %v2019, %v394
        %v2044 = vadd.f32 %v2020, %v399
        %v2045 = vadd.f32 %v2021, %v399
        %v2046 = vadd.f32 %v2022, %v399
        %v2047 = vadd.f32 %v2023, %v399
        %v2048 = vadd.f32 %v2024, %v404
        %v2049 = vadd.f32 %v2025, %v404
        %v2050 = vadd.f32 %v2026, %v404
        %v2051 = vadd.f32 %v2027, %v404
        %v2052 = vadd.f32 %v2028, %v409
        %v2053 = vadd.f32 %v2029, %v409
        %v2054 = vadd.f32 %v2030, %v409
        %v2055 = vadd.f32 %v2031, %v409
        %v2056 = vadd.f32 %v2032, %v414
        %v2057 = vadd.f32 %v2033, %v414
        %v2058 = vadd.f32 %v2034, %v414
        %v2059 = vadd.f32 %v2035, %v414
        %v2060 = vadd.f32 %v2036, %v419
        %v2061 = vadd.f32 %v2037, %v419
        %v2062 = vadd.f32 %v2038, %v419
        %v2063 = vadd.f32 %v2039, %v419
        %v2064 = vmax.f32 %v2040, 0.0
        %v2065 = vmax.f32 %v2041, 0.0
        %v2066 = vmax.f32 %v2042, 0.0
        %v2067 = vmax.f32 %v2043, 0.0
        %v2068 = vmax.f32 %v2044, 0.0
        %v2069 = vmax.f32 %v2045, 0.0
        %v2070 = vmax.f32 %v2046, 0.0
        %v2071 = vmax.f32 %v2047, 0.0
        %v2072 = vmax.f32 %v2048, 0.0
        %v2073 = vmax.f32 %v2049, 0.0
        %v2074 = vmax.f32 %v2050, 0.0
        %v2075 = vmax.f32 %v2051, 0.0
        %v2076 = vmax.f32 %v2052, 0.0
        %v2077 = vmax.f32 %v2053, 0.0
        %v2078 = vmax.f32 %v2054, 0.0
        %v2079 = vmax.f32 %v2055, 0.0
        %v2080 = vmax.f32 %v2056, 0.0
        %v2081 = vmax.f32 %v2057, 0.0
        %v2082 = vmax.f32 %v2058, 0.0
        %v2083 = vmax.f32 %v2059, 0.0
        %v2084 = vmax.f32 %v2060, 0.0
        %v2085 = vmax.f32 %v2061, 0.0
        %v2086 = vmax.f32 %v2062, 0.0
        %v2087 = vmax.f32 %v2063, 0.0
        %v2089 = vsel %vm509, %v2084, 0
        %v2092 = vsel %vm509, %v2085, 0
        %v2095 = vsel %vm509, %v2086, 0
        %v2098 = vsel %vm509, %v2087, 0
        %2100 = vmatprep.subr.mxu0 %v2065
        %2101 = vmatpush1.msra.mxu0 %v2064
        %2102 = vmatprep.subr.mxu0 %v2069
        %2103 = vmatpush1.msra.mxu0 %v2068
        %2104 = vmatprep.subr.mxu0 %v2073
        %2105 = vmatpush1.msra.mxu0 %v2072
        %2106 = vmatprep.subr.mxu0 %v2077
        %2107 = vmatpush1.msra.mxu0 %v2076
        %2108 = vmatprep.subr.mxu0 %v2081
        %2109 = vmatpush1.msra.mxu0 %v2080
        %2110 = vmatprep.subr.mxu0 %v2092
        %2111 = vmatpush1.msra.mxu0 %v2089
        %2112 = vmatprep.subr.mxu0 0.0
        %2113 = vmatpush1.msra.mxu0 0.0
        %2114 = vmatprep.subr.mxu0 0.0
        %2115 = vmatpush1.msra.mxu0 0.0
        %2116 = vmatprep.subr.mxu0 0.0
        %2117 = vmatpush1.msra.mxu0 0.0
        %2118 = vmatprep.subr.mxu0 0.0
        %2119 = vmatpush1.msra.mxu0 0.0
        %2120 = vmatprep.subr.mxu0 0.0
        %2121 = vmatpush1.msra.mxu0 0.0
        %2122 = vmatprep.subr.mxu0 0.0
        %2123 = vmatpush1.msra.mxu0 0.0
        %2124 = vmatprep.subr.mxu0 0.0
        %2125 = vmatpush1.msra.mxu0 0.0
        %2126 = vmatprep.subr.mxu0 0.0
        %2127 = vmatpush1.msra.mxu0 0.0
        %2128 = vmatprep.subr.mxu0 0.0
        %2129 = vmatpush1.msra.mxu0 0.0
        %2130 = vmatprep.subr.mxu0 0.0
        %2131 = vmatpush1.msra.mxu0 0.0
        %2132 = vmatprep.subr.mxu0 0.0
        %2133 = vmatpush1.msra.mxu0 0.0
        %2134 = vmatprep.subr.mxu0 0.0
        %2135 = vmatpush1.msra.mxu0 0.0
        %2136 = vmatprep.subr.mxu0 0.0
        %2137 = vmatpush1.msra.mxu0 0.0
        %2138 = vmatprep.subr.mxu0 0.0
        %2139 = vmatpush1.msra.mxu0 0.0
        %2140 = vmatprep.subr.mxu0 0.0
        %2141 = vmatpush1.msra.mxu0 0.0
        %2142 = vmatprep.subr.mxu0 0.0
        %2143 = vmatpush1.msra.mxu0 0.0
        %2144 = vmatprep.subr.mxu0 0.0
        %2145 = vmatpush1.msra.mxu0 0.0
        %2146 = vmatprep.subr.mxu0 0.0
        %2147 = vmatpush1.msra.mxu0 0.0
        %2148 = vmatprep.subr.mxu0 0.0
        %2149 = vmatpush1.msra.mxu0 0.0
        %2150 = vmatprep.subr.mxu0 0.0
        %2151 = vmatpush1.msra.mxu0 0.0
        %2152 = vmatprep.subr.mxu0 0.0
        %2153 = vmatpush1.msra.mxu0 0.0
        %2154 = vmatprep.subr.mxu0 0.0
        %2155 = vmatpush1.msra.mxu0 0.0
        %2156 = vmatprep.subr.mxu0 0.0
        %2157 = vmatpush1.msra.mxu0 0.0
        %2158 = vmatprep.subr.mxu0 0.0
        %2159 = vmatpush1.msra.mxu0 0.0
        %2160 = vmatprep.subr.mxu0 0.0
        %2161 = vmatpush1.msra.mxu0 0.0
        %2162 = vmatprep.subr.mxu0 0.0
        %2163 = vmatpush1.msra.mxu0 0.0
        %2164 = vmatprep.mubr.f32.mxu0 0.0
        %2165 = vmatmul.mubr.f32.gmra.mrb[0].mxu0 %v471
        %v2166 = vpop.f32.mrb[0].mxu0
        %v2167 = vadd.f32 0.0, %v2166
        %v2168 = vpop.f32.mrb[0].mxu0
        %v2169 = vadd.f32 0.0, %v2168
        %2170 = vmatprep.mubr.f32.mxu0 0.0
        %2171 = vmatmul.mubr.f32.gmra.mrb[0].mxu0 %v474
        %v2172 = vpop.f32.mrb[0].mxu0
        %v2173 = vadd.f32 0.0, %v2172
        %v2174 = vpop.f32.mrb[0].mxu0
        %v2175 = vadd.f32 0.0, %v2174
        %2176 = vmatprep.mubr.f32.mxu0 0.0
        %2177 = vmatmul.mubr.f32.gmra.mrb[0].mxu0 %v477
        %v2178 = vpop.f32.mrb[0].mxu0
        %v2179 = vadd.f32 0.0, %v2178
        %v2180 = vpop.f32.mrb[0].mxu0
        %v2181 = vadd.f32 0.0, %v2180
        %2182 = vmatprep.mubr.f32.mxu0 0.0
        %2183 = vmatmul.mubr.f32.gmra.mrb[0].mxu0 %v480
        %v2184 = vpop.f32.mrb[0].mxu0
        %v2185 = vadd.f32 0.0, %v2184
        %v2186 = vpop.f32.mrb[0].mxu0
        %v2187 = vadd.f32 0.0, %v2186
        %2188 = vmatprep.mubr.f32.mxu0 0.0
        %2189 = vmatmul.mubr.f32.gmra.mrb[0].mxu0 %v483
        %v2190 = vpop.f32.mrb[0].mxu0
        %v2191 = vadd.f32 0.0, %v2190
        %v2192 = vpop.f32.mrb[0].mxu0
        %v2193 = vadd.f32 0.0, %v2192
        %2194 = vmatprep.mubr.f32.mxu0 0.0
        %2195 = vmatmul.mubr.f32.gmra.mrb[0].mxu0 %v486
        %v2196 = vpop.f32.mrb[0].mxu0
        %v2197 = vadd.f32 0.0, %v2196
        %v2198 = vpop.f32.mrb[0].mxu0
        %v2199 = vadd.f32 0.0, %v2198
        %2200 = vmatprep.mubr.f32.mxu0 0.0
        %2201 = vmatmul.mubr.f32.gmra.mrb[0].mxu0 %v489
        %v2202 = vpop.f32.mrb[0].mxu0
        %v2203 = vadd.f32 0.0, %v2202
        %v2204 = vpop.f32.mrb[0].mxu0
        %v2205 = vadd.f32 0.0, %v2204
        %2206 = vmatprep.mubr.f32.mxu0 0.0
        %2207 = vmatmul.mubr.f32.gmra.mrb[0].mxu0 %v492
        %v2208 = vpop.f32.mrb[0].mxu0
        %v2209 = vadd.f32 0.0, %v2208
        %v2210 = vpop.f32.mrb[0].mxu0
        %v2211 = vadd.f32 0.0, %v2210
        %2212 = vmatprep.mubr.f32.mxu0 0.0
        %2213 = vmatmul.mubr.f32.gmra.mrb[0].mxu0 %v495
        %v2214 = vpop.f32.mrb[0].mxu0
        %v2215 = vadd.f32 0.0, %v2214
        %v2216 = vpop.f32.mrb[0].mxu0
        %v2217 = vadd.f32 0.0, %v2216
        %2218 = vmatprep.mubr.f32.mxu0 0.0
        %2219 = vmatmul.mubr.f32.gmra.mrb[0].mxu0 %v498
        %v2220 = vpop.f32.mrb[0].mxu0
        %v2221 = vadd.f32 0.0, %v2220
        %v2222 = vpop.f32.mrb[0].mxu0
        %v2223 = vadd.f32 0.0, %v2222
        %2224 = vmatprep.mubr.f32.mxu0 0.0
        %2225 = vmatmul.mubr.f32.gmra.mrb[0].mxu0 %v501
        %v2226 = vpop.f32.mrb[0].mxu0
        %v2227 = vadd.f32 0.0, %v2226
        %v2228 = vpop.f32.mrb[0].mxu0
        %v2229 = vadd.f32 0.0, %v2228
        %2230 = vmatprep.mubr.f32.mxu0 0.0
        %2231 = vmatmul.mubr.f32.gmra.mrb[0].mxu0 %v504
        %v2232 = vpop.f32.mrb[0].mxu0
        %v2233 = vadd.f32 0.0, %v2232
        %v2234 = vpop.f32.mrb[0].mxu0
        %v2235 = vadd.f32 0.0, %v2234
        %2236 = vmatprep.mubr.f32.mxu0 0.0
        %2237 = vmatmul.mubr.f32.gmra.mrb[0].mxu0 %v507
        %v2238 = vpop.f32.mrb[0].mxu0
        %v2239 = vadd.f32 0.0, %v2238
        %v2240 = vpop.f32.mrb[0].mxu0
        %v2241 = vadd.f32 0.0, %v2240
        %2242 = vdwg.mxu0
        %2243 = vmatprep.subr.mxu0 %v2067
        %2244 = vmatpush1.msra.mxu0 %v2066
        %2245 = vmatprep.subr.mxu0 %v2071
        %2246 = vmatpush1.msra.mxu0 %v2070
        %2247 = vmatprep.subr.mxu0 %v2075
        %2248 = vmatpush1.msra.mxu0 %v2074
        %2249 = vmatprep.subr.mxu0 %v2079
        %2250 = vmatpush1.msra.mxu0 %v2078
        %2251 = vmatprep.subr.mxu0 %v2083
        %2252 = vmatpush1.msra.mxu0 %v2082
        %2253 = vmatprep.subr.mxu0 %v2098
        %2254 = vmatpush1.msra.mxu0 %v2095
        %2255 = vmatprep.subr.mxu0 0.0
        %2256 = vmatpush1.msra.mxu0 0.0
        %2257 = vmatprep.subr.mxu0 0.0
        %2258 = vmatpush1.msra.mxu0 0.0
        %2259 = vmatprep.subr.mxu0 0.0
        %2260 = vmatpush1.msra.mxu0 0.0
        %2261 = vmatprep.subr.mxu0 0.0
        %2262 = vmatpush1.msra.mxu0 0.0
        %2263 = vmatprep.subr.mxu0 0.0
        %2264 = vmatpush1.msra.mxu0 0.0
        %2265 = vmatprep.subr.mxu0 0.0
        %2266 = vmatpush1.msra.mxu0 0.0
        %2267 = vmatprep.subr.mxu0 0.0
        %2268 = vmatpush1.msra.mxu0 0.0
        %2269 = vmatprep.subr.mxu0 0.0
        %2270 = vmatpush1.msra.mxu0 0.0
        %2271 = vmatprep.subr.mxu0 0.0
        %2272 = vmatpush1.msra.mxu0 0.0
        %2273 = vmatprep.subr.mxu0 0.0
        %2274 = vmatpush1.msra.mxu0 0.0
        %2275 = vmatprep.subr.mxu0 0.0
        %2276 = vmatpush1.msra.mxu0 0.0
        %2277 = vmatprep.subr.mxu0 0.0
        %2278 = vmatpush1.msra.mxu0 0.0
        %2279 = vmatprep.subr.mxu0 0.0
        %2280 = vmatpush1.msra.mxu0 0.0
        %2281 = vmatprep.subr.mxu0 0.0
        %2282 = vmatpush1.msra.mxu0 0.0
        %2283 = vmatprep.subr.mxu0 0.0
        %2284 = vmatpush1.msra.mxu0 0.0
        %2285 = vmatprep.subr.mxu0 0.0
        %2286 = vmatpush1.msra.mxu0 0.0
        %2287 = vmatprep.subr.mxu0 0.0
        %2288 = vmatpush1.msra.mxu0 0.0
        %2289 = vmatprep.subr.mxu0 0.0
        %2290 = vmatpush1.msra.mxu0 0.0
        %2291 = vmatprep.subr.mxu0 0.0
        %2292 = vmatpush1.msra.mxu0 0.0
        %2293 = vmatprep.subr.mxu0 0.0
        %2294 = vmatpush1.msra.mxu0 0.0
        %2295 = vmatprep.subr.mxu0 0.0
        %2296 = vmatpush1.msra.mxu0 0.0
        %2297 = vmatprep.subr.mxu0 0.0
        %2298 = vmatpush1.msra.mxu0 0.0
        %2299 = vmatprep.subr.mxu0 0.0
        %2300 = vmatpush1.msra.mxu0 0.0
        %2301 = vmatprep.subr.mxu0 0.0
        %2302 = vmatpush1.msra.mxu0 0.0
        %2303 = vmatprep.subr.mxu0 0.0
        %2304 = vmatpush1.msra.mxu0 0.0
        %2305 = vmatprep.subr.mxu0 0.0
        %2306 = vmatpush1.msra.mxu0 0.0
        %2307 = vmatprep.mubr.f32.mxu0 0.0
        %2308 = vmatmul.mubr.f32.gmra.mrb[0].mxu0 %v471
        %v2309 = vpop.f32.mrb[0].mxu0
        %v2310 = vadd.f32 0.0, %v2309
        %v2311 = vpop.f32.mrb[0].mxu0
        %v2312 = vadd.f32 0.0, %v2311
        %2313 = vmatprep.mubr.f32.mxu0 0.0
        %2314 = vmatmul.mubr.f32.gmra.mrb[0].mxu0 %v474
        %v2315 = vpop.f32.mrb[0].mxu0
        %v2316 = vadd.f32 0.0, %v2315
        %v2317 = vpop.f32.mrb[0].mxu0
        %v2318 = vadd.f32 0.0, %v2317
        %2319 = vmatprep.mubr.f32.mxu0 0.0
        %2320 = vmatmul.mubr.f32.gmra.mrb[0].mxu0 %v477
        %v2321 = vpop.f32.mrb[0].mxu0
        %v2322 = vadd.f32 0.0, %v2321
        %v2323 = vpop.f32.mrb[0].mxu0
        %v2324 = vadd.f32 0.0, %v2323
        %2325 = vmatprep.mubr.f32.mxu0 0.0
        %2326 = vmatmul.mubr.f32.gmra.mrb[0].mxu0 %v480
        %v2327 = vpop.f32.mrb[0].mxu0
        %v2328 = vadd.f32 0.0, %v2327
        %v2329 = vpop.f32.mrb[0].mxu0
        %v2330 = vadd.f32 0.0, %v2329
        %2331 = vmatprep.mubr.f32.mxu0 0.0
        %2332 = vmatmul.mubr.f32.gmra.mrb[0].mxu0 %v483
        %v2333 = vpop.f32.mrb[0].mxu0
        %v2334 = vadd.f32 0.0, %v2333
        %v2335 = vpop.f32.mrb[0].mxu0
        %v2336 = vadd.f32 0.0, %v2335
        %2337 = vmatprep.mubr.f32.mxu0 0.0
        %2338 = vmatmul.mubr.f32.gmra.mrb[0].mxu0 %v486
        %v2339 = vpop.f32.mrb[0].mxu0
        %v2340 = vadd.f32 0.0, %v2339
        %v2341 = vpop.f32.mrb[0].mxu0
        %v2342 = vadd.f32 0.0, %v2341
        %2343 = vmatprep.mubr.f32.mxu0 0.0
        %2344 = vmatmul.mubr.f32.gmra.mrb[0].mxu0 %v489
        %v2345 = vpop.f32.mrb[0].mxu0
        %v2346 = vadd.f32 0.0, %v2345
        %v2347 = vpop.f32.mrb[0].mxu0
        %v2348 = vadd.f32 0.0, %v2347
        %2349 = vmatprep.mubr.f32.mxu0 0.0
        %2350 = vmatmul.mubr.f32.gmra.mrb[0].mxu0 %v492
        %v2351 = vpop.f32.mrb[0].mxu0
        %v2352 = vadd.f32 0.0, %v2351
        %v2353 = vpop.f32.mrb[0].mxu0
        %v2354 = vadd.f32 0.0, %v2353
        %2355 = vmatprep.mubr.f32.mxu0 0.0
        %2356 = vmatmul.mubr.f32.gmra.mrb[0].mxu0 %v495
        %v2357 = vpop.f32.mrb[0].mxu0
        %v2358 = vadd.f32 0.0, %v2357
        %v2359 = vpop.f32.mrb[0].mxu0
        %v2360 = vadd.f32 0.0, %v2359
        %2361 = vmatprep.mubr.f32.mxu0 0.0
        %2362 = vmatmul.mubr.f32.gmra.mrb[0].mxu0 %v498
        %v2363 = vpop.f32.mrb[0].mxu0
        %v2364 = vadd.f32 0.0, %v2363
        %v2365 = vpop.f32.mrb[0].mxu0
        %v2366 = vadd.f32 0.0, %v2365
        %2367 = vmatprep.mubr.f32.mxu0 0.0
        %2368 = vmatmul.mubr.f32.gmra.mrb[0].mxu0 %v501
        %v2369 = vpop.f32.mrb[0].mxu0
        %v2370 = vadd.f32 0.0, %v2369
        %v2371 = vpop.f32.mrb[0].mxu0
        %v2372 = vadd.f32 0.0, %v2371
        %2373 = vmatprep.mubr.f32.mxu0 0.0
        %2374 = vmatmul.mubr.f32.gmra.mrb[0].mxu0 %v504
        %v2375 = vpop.f32.mrb[0].mxu0
        %v2376 = vadd.f32 0.0, %v2375
        %v2377 = vpop.f32.mrb[0].mxu0
        %v2378 = vadd.f32 0.0, %v2377
        %2379 = vmatprep.mubr.f32.mxu0 0.0
        %2380 = vmatmul.mubr.f32.gmra.mrb[0].mxu0 %v507
        %v2381 = vpop.f32.mrb[0].mxu0
        %v2382 = vadd.f32 0.0, %v2381
        %v2383 = vpop.f32.mrb[0].mxu0
        %v2384 = vadd.f32 0.0, %v2383
        %2385 = vdwg.mxu0
        %v2386 = vmax.f32 %v2167, 0.0
        %v2387 = vmax.f32 %v2169, 0.0
        %v2388 = vmax.f32 %v2310, 0.0
        %v2389 = vmax.f32 %v2312, 0.0
        %v2390 = vmax.f32 %v2173, 0.0
        %v2391 = vmax.f32 %v2175, 0.0
        %v2392 = vmax.f32 %v2316, 0.0
        %v2393 = vmax.f32 %v2318, 0.0
        %v2394 = vmax.f32 %v2179, 0.0
        %v2395 = vmax.f32 %v2181, 0.0
        %v2396 = vmax.f32 %v2322, 0.0
        %v2397 = vmax.f32 %v2324, 0.0
        %v2398 = vmax.f32 %v2185, 0.0
        %v2399 = vmax.f32 %v2187, 0.0
        %v2400 = vmax.f32 %v2328, 0.0
        %v2401 = vmax.f32 %v2330, 0.0
        %v2402 = vmax.f32 %v2191, 0.0
        %v2403 = vmax.f32 %v2193, 0.0
        %v2404 = vmax.f32 %v2334, 0.0
        %v2405 = vmax.f32 %v2336, 0.0
        %v2406 = vmax.f32 %v2197, 0.0
        %v2407 = vmax.f32 %v2199, 0.0
        %v2408 = vmax.f32 %v2340, 0.0
        %v2409 = vmax.f32 %v2342, 0.0
        %v2410 = vmax.f32 %v2203, 0.0
        %v2411 = vmax.f32 %v2205, 0.0
        %v2412 = vmax.f32 %v2346, 0.0
        %v2413 = vmax.f32 %v2348, 0.0
        %v2414 = vmax.f32 %v2209, 0.0
        %v2415 = vmax.f32 %v2211, 0.0
        %v2416 = vmax.f32 %v2352, 0.0
        %v2417 = vmax.f32 %v2354, 0.0
        %v2418 = vmax.f32 %v2215, 0.0
        %v2419 = vmax.f32 %v2217, 0.0
        %v2420 = vmax.f32 %v2358, 0.0
        %v2421 = vmax.f32 %v2360, 0.0
        %v2422 = vmax.f32 %v2221, 0.0
        %v2423 = vmax.f32 %v2223, 0.0
        %v2424 = vmax.f32 %v2364, 0.0
        %v2425 = vmax.f32 %v2366, 0.0
        %v2426 = vmax.f32 %v2227, 0.0
        %v2427 = vmax.f32 %v2229, 0.0
        %v2428 = vmax.f32 %v2370, 0.0
        %v2429 = vmax.f32 %v2372, 0.0
        %v2430 = vmax.f32 %v2233, 0.0
        %v2431 = vmax.f32 %v2235, 0.0
        %v2432 = vmax.f32 %v2376, 0.0
        %v2433 = vmax.f32 %v2378, 0.0
        %v2434 = vmax.f32 %v2239, 0.0
        %v2435 = vmax.f32 %v2241, 0.0
        %v2436 = vmax.f32 %v2382, 0.0
        %v2437 = vmax.f32 %v2384, 0.0
        %v2439 = vsel %vm876, %v2434, 0
        %v2442 = vsel %vm876, %v2435, 0
        %v2445 = vsel %vm876, %v2436, 0
        %v2448 = vsel %vm876, %v2437, 0
        %2450 = vmatprep.subr.mxu0 %v2387
        %2451 = vmatpush1.msra.mxu0 %v2386
        %2452 = vmatprep.subr.mxu0 %v2391
        %2453 = vmatpush1.msra.mxu0 %v2390
        %2454 = vmatprep.subr.mxu0 %v2395
        %2455 = vmatpush1.msra.mxu0 %v2394
        %2456 = vmatprep.subr.mxu0 %v2399
        %2457 = vmatpush1.msra.mxu0 %v2398
        %2458 = vmatprep.subr.mxu0 %v2403
        %2459 = vmatpush1.msra.mxu0 %v2402
        %2460 = vmatprep.subr.mxu0 %v2407
        %2461 = vmatpush1.msra.mxu0 %v2406
        %2462 = vmatprep.subr.mxu0 %v2411
        %2463 = vmatpush1.msra.mxu0 %v2410
        %2464 = vmatprep.subr.mxu0 %v2415
        %2465 = vmatpush1.msra.mxu0 %v2414
        %2466 = vmatprep.subr.mxu0 %v2419
        %2467 = vmatpush1.msra.mxu0 %v2418
        %2468 = vmatprep.subr.mxu0 %v2423
        %2469 = vmatpush1.msra.mxu0 %v2422
        %2470 = vmatprep.subr.mxu0 %v2427
        %2471 = vmatpush1.msra.mxu0 %v2426
        %2472 = vmatprep.subr.mxu0 %v2431
        %2473 = vmatpush1.msra.mxu0 %v2430
        %2474 = vmatprep.subr.mxu0 %v2442
        %2475 = vmatpush1.msra.mxu0 %v2439
        %2476 = vmatprep.subr.mxu0 0.0
        %2477 = vmatpush1.msra.mxu0 0.0
        %2478 = vmatprep.subr.mxu0 0.0
        %2479 = vmatpush1.msra.mxu0 0.0
        %2480 = vmatprep.subr.mxu0 0.0
        %2481 = vmatpush1.msra.mxu0 0.0
        %2482 = vmatprep.subr.mxu0 0.0
        %2483 = vmatpush1.msra.mxu0 0.0
        %2484 = vmatprep.subr.mxu0 0.0
        %2485 = vmatpush1.msra.mxu0 0.0
        %2486 = vmatprep.subr.mxu0 0.0
        %2487 = vmatpush1.msra.mxu0 0.0
        %2488 = vmatprep.subr.mxu0 0.0
        %2489 = vmatpush1.msra.mxu0 0.0
        %2490 = vmatprep.subr.mxu0 0.0
        %2491 = vmatpush1.msra.mxu0 0.0
        %2492 = vmatprep.subr.mxu0 0.0
        %2493 = vmatpush1.msra.mxu0 0.0
        %2494 = vmatprep.subr.mxu0 0.0
        %2495 = vmatpush1.msra.mxu0 0.0
        %2496 = vmatprep.subr.mxu0 0.0
        %2497 = vmatpush1.msra.mxu0 0.0
        %2498 = vmatprep.subr.mxu0 0.0
        %2499 = vmatpush1.msra.mxu0 0.0
        %2500 = vmatprep.subr.mxu0 0.0
        %2501 = vmatpush1.msra.mxu0 0.0
        %2502 = vmatprep.subr.mxu0 0.0
        %2503 = vmatpush1.msra.mxu0 0.0
        %2504 = vmatprep.subr.mxu0 0.0
        %2505 = vmatpush1.msra.mxu0 0.0
        %2506 = vmatprep.subr.mxu0 0.0
        %2507 = vmatpush1.msra.mxu0 0.0
        %2508 = vmatprep.subr.mxu0 0.0
        %2509 = vmatpush1.msra.mxu0 0.0
        %2510 = vmatprep.subr.mxu0 0.0
        %2511 = vmatpush1.msra.mxu0 0.0
        %2512 = vmatprep.subr.mxu0 0.0
        %2513 = vmatpush1.msra.mxu0 0.0
        %2514 = vmatprep.mubr.f32.mxu0 0.0
        %2515 = vmatmul.mubr.f32.gmra.mrb[0].mxu0 %v862
        %v2516 = vpop.f32.mrb[0].mxu0
        %v2517 = vadd.f32 0.0, %v2516
        %v2518 = vpop.f32.mrb[0].mxu0
        %v2519 = vadd.f32 0.0, %v2518
        %2520 = vmatprep.mubr.f32.mxu0 0.0
        %2521 = vmatmul.mubr.f32.gmra.mrb[0].mxu0 %v865
        %v2522 = vpop.f32.mrb[0].mxu0
        %v2523 = vadd.f32 0.0, %v2522
        %v2524 = vpop.f32.mrb[0].mxu0
        %v2525 = vadd.f32 0.0, %v2524
        %2526 = vmatprep.mubr.f32.mxu0 0.0
        %2527 = vmatmul.mubr.f32.gmra.mrb[0].mxu0 %v868
        %v2528 = vpop.f32.mrb[0].mxu0
        %v2529 = vadd.f32 0.0, %v2528
        %v2530 = vpop.f32.mrb[0].mxu0
        %v2531 = vadd.f32 0.0, %v2530
        %2532 = vmatprep.mubr.f32.mxu0 0.0
        %2533 = vmatmul.mubr.f32.gmra.mrb[0].mxu0 %v871
        %v2534 = vpop.f32.mrb[0].mxu0
        %v2535 = vadd.f32 0.0, %v2534
        %v2536 = vpop.f32.mrb[0].mxu0
        %v2537 = vadd.f32 0.0, %v2536
        %2538 = vmatprep.mubr.f32.mxu0 0.0
        %2539 = vmatmul.mubr.f32.gmra.mrb[0].mxu0 %v874
        %v2540 = vpop.f32.mrb[0].mxu0
        %v2541 = vadd.f32 0.0, %v2540
        %v2542 = vpop.f32.mrb[0].mxu0
        %v2543 = vadd.f32 0.0, %v2542
        %2544 = vdwg.mxu0
        %2545 = vmatprep.subr.mxu0 %v2389
        %2546 = vmatpush1.msra.mxu0 %v2388
        %2547 = vmatprep.subr.mxu0 %v2393
        %2548 = vmatpush1.msra.mxu0 %v2392
        %2549 = vmatprep.subr.mxu0 %v2397
        %2550 = vmatpush1.msra.mxu0 %v2396
        %2551 = vmatprep.subr.mxu0 %v2401
        %2552 = vmatpush1.msra.mxu0 %v2400
        %2553 = vmatprep.subr.mxu0 %v2405
        %2554 = vmatpush1.msra.mxu0 %v2404
        %2555 = vmatprep.subr.mxu0 %v2409
        %2556 = vmatpush1.msra.mxu0 %v2408
        %2557 = vmatprep.subr.mxu0 %v2413
        %2558 = vmatpush1.msra.mxu0 %v2412
        %2559 = vmatprep.subr.mxu0 %v2417
        %2560 = vmatpush1.msra.mxu0 %v2416
        %2561 = vmatprep.subr.mxu0 %v2421
        %2562 = vmatpush1.msra.mxu0 %v2420
        %2563 = vmatprep.subr.mxu0 %v2425
        %2564 = vmatpush1.msra.mxu0 %v2424
        %2565 = vmatprep.subr.mxu0 %v2429
        %2566 = vmatpush1.msra.mxu0 %v2428
        %2567 = vmatprep.subr.mxu0 %v2433
        %2568 = vmatpush1.msra.mxu0 %v2432
        %2569 = vmatprep.subr.mxu0 %v2448
        %2570 = vmatpush1.msra.mxu0 %v2445
        %2571 = vmatprep.subr.mxu0 0.0
        %2572 = vmatpush1.msra.mxu0 0.0
        %2573 = vmatprep.subr.mxu0 0.0
        %2574 = vmatpush1.msra.mxu0 0.0
        %2575 = vmatprep.subr.mxu0 0.0
        %2576 = vmatpush1.msra.mxu0 0.0
        %2577 = vmatprep.subr.mxu0 0.0
        %2578 = vmatpush1.msra.mxu0 0.0
        %2579 = vmatprep.subr.mxu0 0.0
        %2580 = vmatpush1.msra.mxu0 0.0
        %2581 = vmatprep.subr.mxu0 0.0
        %2582 = vmatpush1.msra.mxu0 0.0
        %2583 = vmatprep.subr.mxu0 0.0
        %2584 = vmatpush1.msra.mxu0 0.0
        %2585 = vmatprep.subr.mxu0 0.0
        %2586 = vmatpush1.msra.mxu0 0.0
        %2587 = vmatprep.subr.mxu0 0.0
        %2588 = vmatpush1.msra.mxu0 0.0
        %2589 = vmatprep.subr.mxu0 0.0
        %2590 = vmatpush1.msra.mxu0 0.0
        %2591 = vmatprep.subr.mxu0 0.0
        %2592 = vmatpush1.msra.mxu0 0.0
        %2593 = vmatprep.subr.mxu0 0.0
        %2594 = vmatpush1.msra.mxu0 0.0
        %2595 = vmatprep.subr.mxu0 0.0
        %2596 = vmatpush1.msra.mxu0 0.0
        %2597 = vmatprep.subr.mxu0 0.0
        %2598 = vmatpush1.msra.mxu0 0.0
        %2599 = vmatprep.subr.mxu0 0.0
        %2600 = vmatpush1.msra.mxu0 0.0
        %2601 = vmatprep.subr.mxu0 0.0
        %2602 = vmatpush1.msra.mxu0 0.0
        %2603 = vmatprep.subr.mxu0 0.0
        %2604 = vmatpush1.msra.mxu0 0.0
        %2605 = vmatprep.subr.mxu0 0.0
        %2606 = vmatpush1.msra.mxu0 0.0
        %2607 = vmatprep.subr.mxu0 0.0
        %2608 = vmatpush1.msra.mxu0 0.0
        %2609 = vmatprep.mubr.f32.mxu0 0.0
        %2610 = vmatmul.mubr.f32.gmra.mrb[0].mxu0 %v862
        %v2611 = vpop.f32.mrb[0].mxu0
        %v2612 = vadd.f32 0.0, %v2611
        %v2613 = vpop.f32.mrb[0].mxu0
        %v2614 = vadd.f32 0.0, %v2613
        %2615 = vmatprep.mubr.f32.mxu0 0.0
        %2616 = vmatmul.mubr.f32.gmra.mrb[0].mxu0 %v865
        %v2617 = vpop.f32.mrb[0].mxu0
        %v2618 = vadd.f32 0.0, %v2617
        %v2619 = vpop.f32.mrb[0].mxu0
        %v2620 = vadd.f32 0.0, %v2619
        %2621 = vmatprep.mubr.f32.mxu0 0.0
        %2622 = vmatmul.mubr.f32.gmra.mrb[0].mxu0 %v868
        %v2623 = vpop.f32.mrb[0].mxu0
        %v2624 = vadd.f32 0.0, %v2623
        %v2625 = vpop.f32.mrb[0].mxu0
        %v2626 = vadd.f32 0.0, %v2625
        %2627 = vmatprep.mubr.f32.mxu0 0.0
        %2628 = vmatmul.mubr.f32.gmra.mrb[0].mxu0 %v871
        %v2629 = vpop.f32.mrb[0].mxu0
        %v2630 = vadd.f32 0.0, %v2629
        %v2631 = vpop.f32.mrb[0].mxu0
        %v2632 = vadd.f32 0.0, %v2631
        %2633 = vmatprep.mubr.f32.mxu0 0.0
        %2634 = vmatmul.mubr.f32.gmra.mrb[0].mxu0 %v874
        %v2635 = vpop.f32.mrb[0].mxu0
        %v2636 = vadd.f32 0.0, %v2635
        %v2637 = vpop.f32.mrb[0].mxu0
        %v2638 = vadd.f32 0.0, %v2637
        %2639 = vdwg.mxu0
        %v2640 = vmax.f32 %v2517, 0.0
        %v2641 = vmax.f32 %v2519, 0.0
        %v2642 = vmax.f32 %v2612, 0.0
        %v2643 = vmax.f32 %v2614, 0.0
        %v2644 = vmax.f32 %v2523, 0.0
        %v2645 = vmax.f32 %v2525, 0.0
        %v2646 = vmax.f32 %v2618, 0.0
        %v2647 = vmax.f32 %v2620, 0.0
        %v2648 = vmax.f32 %v2529, 0.0
        %v2649 = vmax.f32 %v2531, 0.0
        %v2650 = vmax.f32 %v2624, 0.0
        %v2651 = vmax.f32 %v2626, 0.0
        %v2652 = vmax.f32 %v2535, 0.0
        %v2653 = vmax.f32 %v2537, 0.0
        %v2654 = vmax.f32 %v2630, 0.0
        %v2655 = vmax.f32 %v2632, 0.0
        %v2656 = vmax.f32 %v2541, 0.0
        %v2657 = vmax.f32 %v2543, 0.0
        %v2658 = vmax.f32 %v2636, 0.0
        %v2659 = vmax.f32 %v2638, 0.0
        %v2660 = vmul.f32 %v1102, %v2640
        %v2661 = vmul.f32 %v1102, %v2641
        %v2662 = vmul.f32 %v1102, %v2642
        %v2663 = vmul.f32 %v1102, %v2643
        %v2664 = vmul.f32 %v1107, %v2644
        %v2665 = vmul.f32 %v1107, %v2645
        %v2666 = vmul.f32 %v1107, %v2646
        %v2667 = vmul.f32 %v1107, %v2647
        %v2668 = vmul.f32 %v1112, %v2648
        %v2669 = vmul.f32 %v1112, %v2649
        %v2670 = vmul.f32 %v1112, %v2650
        %v2671 = vmul.f32 %v1112, %v2651
        %v2672 = vmul.f32 %v1117, %v2652
        %v2673 = vmul.f32 %v1117, %v2653
        %v2674 = vmul.f32 %v1117, %v2654
        %v2675 = vmul.f32 %v1117, %v2655
        %v2676 = vmul.f32 %v1122, %v2656
        %v2677 = vmul.f32 %v1122, %v2657
        %v2678 = vmul.f32 %v1122, %v2658
        %v2679 = vmul.f32 %v1122, %v2659
        %v2680 = vadd.f32 %v2660, %v2664
        %v2681 = vadd.f32 %v2680, %v2668
        %v2682 = vadd.f32 %v2681, %v2672
        %v2683 = vadd.f32 %v2682, %v2676
        %v2684 = vrot.slane %v2683, 4
        %v2685 = vadd.f32 %v2683, %v2684
        %v2686 = vrot.slane %v2685, 2
        %v2687 = vadd.f32 %v2685, %v2686
        %v2688 = vrot.slane %v2687, 1
        %v2689 = vadd.f32 %v2687, %v2688
        %v2690 = vadd.f32 %v2661, %v2665
        %v2691 = vadd.f32 %v2690, %v2669
        %v2692 = vadd.f32 %v2691, %v2673
        %v2693 = vadd.f32 %v2692, %v2677
        %v2694 = vrot.slane %v2693, 4
        %v2695 = vadd.f32 %v2693, %v2694
        %v2696 = vrot.slane %v2695, 2
        %v2697 = vadd.f32 %v2695, %v2696
        %v2698 = vrot.slane %v2697, 1
        %v2699 = vadd.f32 %v2697, %v2698
        %v2700 = vadd.f32 %v2662, %v2666
        %v2701 = vadd.f32 %v2700, %v2670
        %v2702 = vadd.f32 %v2701, %v2674
        %v2703 = vadd.f32 %v2702, %v2678
        %v2704 = vrot.slane %v2703, 4
        %v2705 = vadd.f32 %v2703, %v2704
        %v2706 = vrot.slane %v2705, 2
        %v2707 = vadd.f32 %v2705, %v2706
        %v2708 = vrot.slane %v2707, 1
        %v2709 = vadd.f32 %v2707, %v2708
        %v2710 = vadd.f32 %v2663, %v2667
        %v2711 = vadd.f32 %v2710, %v2671
        %v2712 = vadd.f32 %v2711, %v2675
        %v2713 = vadd.f32 %v2712, %v2679
        %v2714 = vrot.slane %v2713, 4
        %v2715 = vadd.f32 %v2713, %v2714
        %v2716 = vrot.slane %v2715, 2
        %v2717 = vadd.f32 %v2715, %v2716
        %v2718 = vrot.slane %v2717, 1
        %v2719 = vadd.f32 %v2717, %v2718
        %v2720 = vadd.f32 %v2689, %v1192
        %v2721 = vadd.f32 %v2699, %v1192
        %v2722 = vadd.f32 %v2709, %v1192
        %v2723 = vadd.f32 %v2719, %v1192
        %v2728 = vcombine.low %v2720, %v2721
        %v2729 = vcombine.low %v2722, %v2723
        %v2731 = vunpack.c.l.s4 1966171168
        %v2732 = vunpack.c.0.s8 %v2731
        %v2733 = vlaneseq
        %v2734 = vshrl.u32 %v2733, 7
        %v2735 = vsub.s32 %v2732, %v2734
        %v2736 = vrot.slane %v2728, %v2735
        %v2738 = vunpack.c.l.s4 1966171168
        %v2739 = vunpack.c.0.s8 %v2738
        %v2740 = vlaneseq
        %v2741 = vshrl.u32 %v2740, 7
        %v2742 = vsub.s32 %v2739, %v2741
        %v2743 = vrot.slane %v2729, %v2742
        %v2744 = vcombine.low %v2736, %v2743
        %v2746 = vunpack.c.l.s4 1966171168
        %v2747 = vunpack.c.0.s8 %v2746
        %v2748 = vlaneseq
        %v2749 = vshrl.u32 %v2748, 7
        %v2750 = vsub.s32 %v2747, %v2749
        %v2751 = vrot.slane %v2744, %v2750
        %s2753 = scalar_lea.vmem %s272, 8 [#allocation3]
        %2754 = vst.msk [vmem:[%s2753] sm:$0xf] %vm1229, %v2751
        %s2755 = scalar_lea.vmem %s276, 12
        %v2756 = vld [vmem:[%s2755] sm:$0xf]
        %v2758 = vlaneseq
        %v2759 = vshrl.u32 %v2758, 7
        %v2760 = vsub.s32 0, %v2759
        %v2761 = vrot.slane %v2756, %v2760
        %v2762 = vlaneseq
        %v2763 = vshrl.u32 %v2762, 7
        %v2764 = vsub.s32 1, %v2763
        %v2765 = vrot.slane %v2756, %v2764
        %v2766 = vlaneseq
        %v2767 = vshrl.u32 %v2766, 7
        %v2768 = vsub.s32 2, %v2767
        %v2769 = vrot.slane %v2756, %v2768
        %v2770 = vlaneseq
        %v2771 = vshrl.u32 %v2770, 7
        %v2772 = vsub.s32 3, %v2771
        %v2773 = vrot.slane %v2756, %v2772
        %v2778 = vmul.f32 %v319, %v2761
        %v2779 = vmul.f32 %v319, %v2765
        %v2780 = vmul.f32 %v319, %v2769
        %v2781 = vmul.f32 %v319, %v2773
        %v2782 = vmul.f32 %v324, %v2761
        %v2783 = vmul.f32 %v324, %v2765
        %v2784 = vmul.f32 %v324, %v2769
        %v2785 = vmul.f32 %v324, %v2773
        %v2786 = vmul.f32 %v329, %v2761
        %v2787 = vmul.f32 %v329, %v2765
        %v2788 = vmul.f32 %v329, %v2769
        %v2789 = vmul.f32 %v329, %v2773
        %v2790 = vmul.f32 %v334, %v2761
        %v2791 = vmul.f32 %v334, %v2765
        %v2792 = vmul.f32 %v334, %v2769
        %v2793 = vmul.f32 %v334, %v2773
        %v2794 = vmul.f32 %v339, %v2761
        %v2795 = vmul.f32 %v339, %v2765
        %v2796 = vmul.f32 %v339, %v2769
        %v2797 = vmul.f32 %v339, %v2773
        %v2798 = vmul.f32 %v344, %v2761
        %v2799 = vmul.f32 %v344, %v2765
        %v2800 = vmul.f32 %v344, %v2769
        %v2801 = vmul.f32 %v344, %v2773
        %v2802 = vadd.f32 %v2778, %v394
        %v2803 = vadd.f32 %v2779, %v394
        %v2804 = vadd.f32 %v2780, %v394
        %v2805 = vadd.f32 %v2781, %v394
        %v2806 = vadd.f32 %v2782, %v399
        %v2807 = vadd.f32 %v2783, %v399
        %v2808 = vadd.f32 %v2784, %v399
        %v2809 = vadd.f32 %v2785, %v399
        %v2810 = vadd.f32 %v2786, %v404
        %v2811 = vadd.f32 %v2787, %v404
        %v2812 = vadd.f32 %v2788, %v404
        %v2813 = vadd.f32 %v2789, %v404
        %v2814 = vadd.f32 %v2790, %v409
        %v2815 = vadd.f32 %v2791, %v409
        %v2816 = vadd.f32 %v2792, %v409
        %v2817 = vadd.f32 %v2793, %v409
        %v2818 = vadd.f32 %v2794, %v414
        %v2819 = vadd.f32 %v2795, %v414
        %v2820 = vadd.f32 %v2796, %v414
        %v2821 = vadd.f32 %v2797, %v414
        %v2822 = vadd.f32 %v2798, %v419
        %v2823 = vadd.f32 %v2799, %v419
        %v2824 = vadd.f32 %v2800, %v419
        %v2825 = vadd.f32 %v2801, %v419
        %v2826 = vmax.f32 %v2802, 0.0
        %v2827 = vmax.f32 %v2803, 0.0
        %v2828 = vmax.f32 %v2804, 0.0
        %v2829 = vmax.f32 %v2805, 0.0
        %v2830 = vmax.f32 %v2806, 0.0
        %v2831 = vmax.f32 %v2807, 0.0
        %v2832 = vmax.f32 %v2808, 0.0
        %v2833 = vmax.f32 %v2809, 0.0
        %v2834 = vmax.f32 %v2810, 0.0
        %v2835 = vmax.f32 %v2811, 0.0
        %v2836 = vmax.f32 %v2812, 0.0
        %v2837 = vmax.f32 %v2813, 0.0
        %v2838 = vmax.f32 %v2814, 0.0
        %v2839 = vmax.f32 %v2815, 0.0
        %v2840 = vmax.f32 %v2816, 0.0
        %v2841 = vmax.f32 %v2817, 0.0
        %v2842 = vmax.f32 %v2818, 0.0
        %v2843 = vmax.f32 %v2819, 0.0
        %v2844 = vmax.f32 %v2820, 0.0
        %v2845 = vmax.f32 %v2821, 0.0
        %v2846 = vmax.f32 %v2822, 0.0
        %v2847 = vmax.f32 %v2823, 0.0
        %v2848 = vmax.f32 %v2824, 0.0
        %v2849 = vmax.f32 %v2825, 0.0
        %v2851 = vsel %vm509, %v2846, 0
        %v2854 = vsel %vm509, %v2847, 0
        %v2857 = vsel %vm509, %v2848, 0
        %v2860 = vsel %vm509, %v2849, 0
        %2862 = vmatprep.subr.mxu0 %v2827
        %2863 = vmatpush1.msra.mxu0 %v2826
        %2864 = vmatprep.subr.mxu0 %v2831
        %2865 = vmatpush1.msra.mxu0 %v2830
        %2866 = vmatprep.subr.mxu0 %v2835
        %2867 = vmatpush1.msra.mxu0 %v2834
        %2868 = vmatprep.subr.mxu0 %v2839
        %2869 = vmatpush1.msra.mxu0 %v2838
        %2870 = vmatprep.subr.mxu0 %v2843
        %2871 = vmatpush1.msra.mxu0 %v2842
        %2872 = vmatprep.subr.mxu0 %v2854
        %2873 = vmatpush1.msra.mxu0 %v2851
        %2874 = vmatprep.subr.mxu0 0.0
        %2875 = vmatpush1.msra.mxu0 0.0
        %2876 = vmatprep.subr.mxu0 0.0
        %2877 = vmatpush1.msra.mxu0 0.0
        %2878 = vmatprep.subr.mxu0 0.0
        %2879 = vmatpush1.msra.mxu0 0.0
        %2880 = vmatprep.subr.mxu0 0.0
        %2881 = vmatpush1.msra.mxu0 0.0
        %2882 = vmatprep.subr.mxu0 0.0
        %2883 = vmatpush1.msra.mxu0 0.0
        %2884 = vmatprep.subr.mxu0 0.0
        %2885 = vmatpush1.msra.mxu0 0.0
        %2886 = vmatprep.subr.mxu0 0.0
        %2887 = vmatpush1.msra.mxu0 0.0
        %2888 = vmatprep.subr.mxu0 0.0
        %2889 = vmatpush1.msra.mxu0 0.0
        %2890 = vmatprep.subr.mxu0 0.0
        %2891 = vmatpush1.msra.mxu0 0.0
        %2892 = vmatprep.subr.mxu0 0.0
        %2893 = vmatpush1.msra.mxu0 0.0
        %2894 = vmatprep.subr.mxu0 0.0
        %2895 = vmatpush1.msra.mxu0 0.0
        %2896 = vmatprep.subr.mxu0 0.0
        %2897 = vmatpush1.msra.mxu0 0.0
        %2898 = vmatprep.subr.mxu0 0.0
        %2899 = vmatpush1.msra.mxu0 0.0
        %2900 = vmatprep.subr.mxu0 0.0
        %2901 = vmatpush1.msra.mxu0 0.0
        %2902 = vmatprep.subr.mxu0 0.0
        %2903 = vmatpush1.msra.mxu0 0.0
        %2904 = vmatprep.subr.mxu0 0.0
        %2905 = vmatpush1.msra.mxu0 0.0
        %2906 = vmatprep.subr.mxu0 0.0
        %2907 = vmatpush1.msra.mxu0 0.0
        %2908 = vmatprep.subr.mxu0 0.0
        %2909 = vmatpush1.msra.mxu0 0.0
        %2910 = vmatprep.subr.mxu0 0.0
        %2911 = vmatpush1.msra.mxu0 0.0
        %2912 = vmatprep.subr.mxu0 0.0
        %2913 = vmatpush1.msra.mxu0 0.0
        %2914 = vmatprep.subr.mxu0 0.0
        %2915 = vmatpush1.msra.mxu0 0.0
        %2916 = vmatprep.subr.mxu0 0.0
        %2917 = vmatpush1.msra.mxu0 0.0
        %2918 = vmatprep.subr.mxu0 0.0
        %2919 = vmatpush1.msra.mxu0 0.0
        %2920 = vmatprep.subr.mxu0 0.0
        %2921 = vmatpush1.msra.mxu0 0.0
        %2922 = vmatprep.subr.mxu0 0.0
        %2923 = vmatpush1.msra.mxu0 0.0
        %2924 = vmatprep.subr.mxu0 0.0
        %2925 = vmatpush1.msra.mxu0 0.0
        %2926 = vmatprep.mubr.f32.mxu0 0.0
        %2927 = vmatmul.mubr.f32.gmra.mrb[0].mxu0 %v471
        %v2928 = vpop.f32.mrb[0].mxu0
        %v2929 = vadd.f32 0.0, %v2928
        %v2930 = vpop.f32.mrb[0].mxu0
        %v2931 = vadd.f32 0.0, %v2930
        %2932 = vmatprep.mubr.f32.mxu0 0.0
        %2933 = vmatmul.mubr.f32.gmra.mrb[0].mxu0 %v474
        %v2934 = vpop.f32.mrb[0].mxu0
        %v2935 = vadd.f32 0.0, %v2934
        %v2936 = vpop.f32.mrb[0].mxu0
        %v2937 = vadd.f32 0.0, %v2936
        %2938 = vmatprep.mubr.f32.mxu0 0.0
        %2939 = vmatmul.mubr.f32.gmra.mrb[0].mxu0 %v477
        %v2940 = vpop.f32.mrb[0].mxu0
        %v2941 = vadd.f32 0.0, %v2940
        %v2942 = vpop.f32.mrb[0].mxu0
        %v2943 = vadd.f32 0.0, %v2942
        %2944 = vmatprep.mubr.f32.mxu0 0.0
        %2945 = vmatmul.mubr.f32.gmra.mrb[0].mxu0 %v480
        %v2946 = vpop.f32.mrb[0].mxu0
        %v2947 = vadd.f32 0.0, %v2946
        %v2948 = vpop.f32.mrb[0].mxu0
        %v2949 = vadd.f32 0.0, %v2948
        %2950 = vmatprep.mubr.f32.mxu0 0.0
        %2951 = vmatmul.mubr.f32.gmra.mrb[0].mxu0 %v483
        %v2952 = vpop.f32.mrb[0].mxu0
        %v2953 = vadd.f32 0.0, %v2952
        %v2954 = vpop.f32.mrb[0].mxu0
        %v2955 = vadd.f32 0.0, %v2954
        %2956 = vmatprep.mubr.f32.mxu0 0.0
        %2957 = vmatmul.mubr.f32.gmra.mrb[0].mxu0 %v486
        %v2958 = vpop.f32.mrb[0].mxu0
        %v2959 = vadd.f32 0.0, %v2958
        %v2960 = vpop.f32.mrb[0].mxu0
        %v2961 = vadd.f32 0.0, %v2960
        %2962 = vmatprep.mubr.f32.mxu0 0.0
        %2963 = vmatmul.mubr.f32.gmra.mrb[0].mxu0 %v489
        %v2964 = vpop.f32.mrb[0].mxu0
        %v2965 = vadd.f32 0.0, %v2964
        %v2966 = vpop.f32.mrb[0].mxu0
        %v2967 = vadd.f32 0.0, %v2966
        %2968 = vmatprep.mubr.f32.mxu0 0.0
        %2969 = vmatmul.mubr.f32.gmra.mrb[0].mxu0 %v492
        %v2970 = vpop.f32.mrb[0].mxu0
        %v2971 = vadd.f32 0.0, %v2970
        %v2972 = vpop.f32.mrb[0].mxu0
        %v2973 = vadd.f32 0.0, %v2972
        %2974 = vmatprep.mubr.f32.mxu0 0.0
        %2975 = vmatmul.mubr.f32.gmra.mrb[0].mxu0 %v495
        %v2976 = vpop.f32.mrb[0].mxu0
        %v2977 = vadd.f32 0.0, %v2976
        %v2978 = vpop.f32.mrb[0].mxu0
        %v2979 = vadd.f32 0.0, %v2978
        %2980 = vmatprep.mubr.f32.mxu0 0.0
        %2981 = vmatmul.mubr.f32.gmra.mrb[0].mxu0 %v498
        %v2982 = vpop.f32.mrb[0].mxu0
        %v2983 = vadd.f32 0.0, %v2982
        %v2984 = vpop.f32.mrb[0].mxu0
        %v2985 = vadd.f32 0.0, %v2984
        %2986 = vmatprep.mubr.f32.mxu0 0.0
        %2987 = vmatmul.mubr.f32.gmra.mrb[0].mxu0 %v501
        %v2988 = vpop.f32.mrb[0].mxu0
        %v2989 = vadd.f32 0.0, %v2988
        %v2990 = vpop.f32.mrb[0].mxu0
        %v2991 = vadd.f32 0.0, %v2990
        %2992 = vmatprep.mubr.f32.mxu0 0.0
        %2993 = vmatmul.mubr.f32.gmra.mrb[0].mxu0 %v504
        %v2994 = vpop.f32.mrb[0].mxu0
        %v2995 = vadd.f32 0.0, %v2994
        %v2996 = vpop.f32.mrb[0].mxu0
        %v2997 = vadd.f32 0.0, %v2996
        %2998 = vmatprep.mubr.f32.mxu0 0.0
        %2999 = vmatmul.mubr.f32.gmra.mrb[0].mxu0 %v507
        %v3000 = vpop.f32.mrb[0].mxu0
        %v3001 = vadd.f32 0.0, %v3000
        %v3002 = vpop.f32.mrb[0].mxu0
        %v3003 = vadd.f32 0.0, %v3002
        %3004 = vdwg.mxu0
        %3005 = vmatprep.subr.mxu0 %v2829
        %3006 = vmatpush1.msra.mxu0 %v2828
        %3007 = vmatprep.subr.mxu0 %v2833
        %3008 = vmatpush1.msra.mxu0 %v2832
        %3009 = vmatprep.subr.mxu0 %v2837
        %3010 = vmatpush1.msra.mxu0 %v2836
        %3011 = vmatprep.subr.mxu0 %v2841
        %3012 = vmatpush1.msra.mxu0 %v2840
        %3013 = vmatprep.subr.mxu0 %v2845
        %3014 = vmatpush1.msra.mxu0 %v2844
        %3015 = vmatprep.subr.mxu0 %v2860
        %3016 = vmatpush1.msra.mxu0 %v2857
        %3017 = vmatprep.subr.mxu0 0.0
        %3018 = vmatpush1.msra.mxu0 0.0
        %3019 = vmatprep.subr.mxu0 0.0
        %3020 = vmatpush1.msra.mxu0 0.0
        %3021 = vmatprep.subr.mxu0 0.0
        %3022 = vmatpush1.msra.mxu0 0.0
        %3023 = vmatprep.subr.mxu0 0.0
        %3024 = vmatpush1.msra.mxu0 0.0
        %3025 = vmatprep.subr.mxu0 0.0
        %3026 = vmatpush1.msra.mxu0 0.0
        %3027 = vmatprep.subr.mxu0 0.0
        %3028 = vmatpush1.msra.mxu0 0.0
        %3029 = vmatprep.subr.mxu0 0.0
        %3030 = vmatpush1.msra.mxu0 0.0
        %3031 = vmatprep.subr.mxu0 0.0
        %3032 = vmatpush1.msra.mxu0 0.0
        %3033 = vmatprep.subr.mxu0 0.0
        %3034 = vmatpush1.msra.mxu0 0.0
        %3035 = vmatprep.subr.mxu0 0.0
        %3036 = vmatpush1.msra.mxu0 0.0
        %3037 = vmatprep.subr.mxu0 0.0
        %3038 = vmatpush1.msra.mxu0 0.0
        %3039 = vmatprep.subr.mxu0 0.0
        %3040 = vmatpush1.msra.mxu0 0.0
        %3041 = vmatprep.subr.mxu0 0.0
        %3042 = vmatpush1.msra.mxu0 0.0
        %3043 = vmatprep.subr.mxu0 0.0
        %3044 = vmatpush1.msra.mxu0 0.0
        %3045 = vmatprep.subr.mxu0 0.0
        %3046 = vmatpush1.msra.mxu0 0.0
        %3047 = vmatprep.subr.mxu0 0.0
        %3048 = vmatpush1.msra.mxu0 0.0
        %3049 = vmatprep.subr.mxu0 0.0
        %3050 = vmatpush1.msra.mxu0 0.0
        %3051 = vmatprep.subr.mxu0 0.0
        %3052 = vmatpush1.msra.mxu0 0.0
        %3053 = vmatprep.subr.mxu0 0.0
        %3054 = vmatpush1.msra.mxu0 0.0
        %3055 = vmatprep.subr.mxu0 0.0
        %3056 = vmatpush1.msra.mxu0 0.0
        %3057 = vmatprep.subr.mxu0 0.0
        %3058 = vmatpush1.msra.mxu0 0.0
        %3059 = vmatprep.subr.mxu0 0.0
        %3060 = vmatpush1.msra.mxu0 0.0
        %3061 = vmatprep.subr.mxu0 0.0
        %3062 = vmatpush1.msra.mxu0 0.0
        %3063 = vmatprep.subr.mxu0 0.0
        %3064 = vmatpush1.msra.mxu0 0.0
        %3065 = vmatprep.subr.mxu0 0.0
        %3066 = vmatpush1.msra.mxu0 0.0
        %3067 = vmatprep.subr.mxu0 0.0
        %3068 = vmatpush1.msra.mxu0 0.0
        %3069 = vmatprep.mubr.f32.mxu0 0.0
        %3070 = vmatmul.mubr.f32.gmra.mrb[0].mxu0 %v471
        %v3071 = vpop.f32.mrb[0].mxu0
        %v3072 = vadd.f32 0.0, %v3071
        %v3073 = vpop.f32.mrb[0].mxu0
        %v3074 = vadd.f32 0.0, %v3073
        %3075 = vmatprep.mubr.f32.mxu0 0.0
        %3076 = vmatmul.mubr.f32.gmra.mrb[0].mxu0 %v474
        %v3077 = vpop.f32.mrb[0].mxu0
        %v3078 = vadd.f32 0.0, %v3077
        %v3079 = vpop.f32.mrb[0].mxu0
        %v3080 = vadd.f32 0.0, %v3079
        %3081 = vmatprep.mubr.f32.mxu0 0.0
        %3082 = vmatmul.mubr.f32.gmra.mrb[0].mxu0 %v477
        %v3083 = vpop.f32.mrb[0].mxu0
        %v3084 = vadd.f32 0.0, %v3083
        %v3085 = vpop.f32.mrb[0].mxu0
        %v3086 = vadd.f32 0.0, %v3085
        %3087 = vmatprep.mubr.f32.mxu0 0.0
        %3088 = vmatmul.mubr.f32.gmra.mrb[0].mxu0 %v480
        %v3089 = vpop.f32.mrb[0].mxu0
        %v3090 = vadd.f32 0.0, %v3089
        %v3091 = vpop.f32.mrb[0].mxu0
        %v3092 = vadd.f32 0.0, %v3091
        %3093 = vmatprep.mubr.f32.mxu0 0.0
        %3094 = vmatmul.mubr.f32.gmra.mrb[0].mxu0 %v483
        %v3095 = vpop.f32.mrb[0].mxu0
        %v3096 = vadd.f32 0.0, %v3095
        %v3097 = vpop.f32.mrb[0].mxu0
        %v3098 = vadd.f32 0.0, %v3097
        %3099 = vmatprep.mubr.f32.mxu0 0.0
        %3100 = vmatmul.mubr.f32.gmra.mrb[0].mxu0 %v486
        %v3101 = vpop.f32.mrb[0].mxu0
        %v3102 = vadd.f32 0.0, %v3101
        %v3103 = vpop.f32.mrb[0].mxu0
        %v3104 = vadd.f32 0.0, %v3103
        %3105 = vmatprep.mubr.f32.mxu0 0.0
        %3106 = vmatmul.mubr.f32.gmra.mrb[0].mxu0 %v489
        %v3107 = vpop.f32.mrb[0].mxu0
        %v3108 = vadd.f32 0.0, %v3107
        %v3109 = vpop.f32.mrb[0].mxu0
        %v3110 = vadd.f32 0.0, %v3109
        %3111 = vmatprep.mubr.f32.mxu0 0.0
        %3112 = vmatmul.mubr.f32.gmra.mrb[0].mxu0 %v492
        %v3113 = vpop.f32.mrb[0].mxu0
        %v3114 = vadd.f32 0.0, %v3113
        %v3115 = vpop.f32.mrb[0].mxu0
        %v3116 = vadd.f32 0.0, %v3115
        %3117 = vmatprep.mubr.f32.mxu0 0.0
        %3118 = vmatmul.mubr.f32.gmra.mrb[0].mxu0 %v495
        %v3119 = vpop.f32.mrb[0].mxu0
        %v3120 = vadd.f32 0.0, %v3119
        %v3121 = vpop.f32.mrb[0].mxu0
        %v3122 = vadd.f32 0.0, %v3121
        %3123 = vmatprep.mubr.f32.mxu0 0.0
        %3124 = vmatmul.mubr.f32.gmra.mrb[0].mxu0 %v498
        %v3125 = vpop.f32.mrb[0].mxu0
        %v3126 = vadd.f32 0.0, %v3125
        %v3127 = vpop.f32.mrb[0].mxu0
        %v3128 = vadd.f32 0.0, %v3127
        %3129 = vmatprep.mubr.f32.mxu0 0.0
        %3130 = vmatmul.mubr.f32.gmra.mrb[0].mxu0 %v501
        %v3131 = vpop.f32.mrb[0].mxu0
        %v3132 = vadd.f32 0.0, %v3131
        %v3133 = vpop.f32.mrb[0].mxu0
        %v3134 = vadd.f32 0.0, %v3133
        %3135 = vmatprep.mubr.f32.mxu0 0.0
        %3136 = vmatmul.mubr.f32.gmra.mrb[0].mxu0 %v504
        %v3137 = vpop.f32.mrb[0].mxu0
        %v3138 = vadd.f32 0.0, %v3137
        %v3139 = vpop.f32.mrb[0].mxu0
        %v3140 = vadd.f32 0.0, %v3139
        %3141 = vmatprep.mubr.f32.mxu0 0.0
        %3142 = vmatmul.mubr.f32.gmra.mrb[0].mxu0 %v507
        %v3143 = vpop.f32.mrb[0].mxu0
        %v3144 = vadd.f32 0.0, %v3143
        %v3145 = vpop.f32.mrb[0].mxu0
        %v3146 = vadd.f32 0.0, %v3145
        %3147 = vdwg.mxu0
        %v3148 = vmax.f32 %v2929, 0.0
        %v3149 = vmax.f32 %v2931, 0.0
        %v3150 = vmax.f32 %v3072, 0.0
        %v3151 = vmax.f32 %v3074, 0.0
        %v3152 = vmax.f32 %v2935, 0.0
        %v3153 = vmax.f32 %v2937, 0.0
        %v3154 = vmax.f32 %v3078, 0.0
        %v3155 = vmax.f32 %v3080, 0.0
        %v3156 = vmax.f32 %v2941, 0.0
        %v3157 = vmax.f32 %v2943, 0.0
        %v3158 = vmax.f32 %v3084, 0.0
        %v3159 = vmax.f32 %v3086, 0.0
        %v3160 = vmax.f32 %v2947, 0.0
        %v3161 = vmax.f32 %v2949, 0.0
        %v3162 = vmax.f32 %v3090, 0.0
        %v3163 = vmax.f32 %v3092, 0.0
        %v3164 = vmax.f32 %v2953, 0.0
        %v3165 = vmax.f32 %v2955, 0.0
        %v3166 = vmax.f32 %v3096, 0.0
        %v3167 = vmax.f32 %v3098, 0.0
        %v3168 = vmax.f32 %v2959, 0.0
        %v3169 = vmax.f32 %v2961, 0.0
        %v3170 = vmax.f32 %v3102, 0.0
        %v3171 = vmax.f32 %v3104, 0.0
        %v3172 = vmax.f32 %v2965, 0.0
        %v3173 = vmax.f32 %v2967, 0.0
        %v3174 = vmax.f32 %v3108, 0.0
        %v3175 = vmax.f32 %v3110, 0.0
        %v3176 = vmax.f32 %v2971, 0.0
        %v3177 = vmax.f32 %v2973, 0.0
        %v3178 = vmax.f32 %v3114, 0.0
        %v3179 = vmax.f32 %v3116, 0.0
        %v3180 = vmax.f32 %v2977, 0.0
        %v3181 = vmax.f32 %v2979, 0.0
        %v3182 = vmax.f32 %v3120, 0.0
        %v3183 = vmax.f32 %v3122, 0.0
        %v3184 = vmax.f32 %v2983, 0.0
        %v3185 = vmax.f32 %v2985, 0.0
        %v3186 = vmax.f32 %v3126, 0.0
        %v3187 = vmax.f32 %v3128, 0.0
        %v3188 = vmax.f32 %v2989, 0.0
        %v3189 = vmax.f32 %v2991, 0.0
        %v3190 = vmax.f32 %v3132, 0.0
        %v3191 = vmax.f32 %v3134, 0.0
        %v3192 = vmax.f32 %v2995, 0.0
        %v3193 = vmax.f32 %v2997, 0.0
        %v3194 = vmax.f32 %v3138, 0.0
        %v3195 = vmax.f32 %v3140, 0.0
        %v3196 = vmax.f32 %v3001, 0.0
        %v3197 = vmax.f32 %v3003, 0.0
        %v3198 = vmax.f32 %v3144, 0.0
        %v3199 = vmax.f32 %v3146, 0.0
        %v3201 = vsel %vm876, %v3196, 0
        %v3204 = vsel %vm876, %v3197, 0
        %v3207 = vsel %vm876, %v3198, 0
        %v3210 = vsel %vm876, %v3199, 0
        %3212 = vmatprep.subr.mxu0 %v3149
        %3213 = vmatpush1.msra.mxu0 %v3148
        %3214 = vmatprep.subr.mxu0 %v3153
        %3215 = vmatpush1.msra.mxu0 %v3152
        %3216 = vmatprep.subr.mxu0 %v3157
        %3217 = vmatpush1.msra.mxu0 %v3156
        %3218 = vmatprep.subr.mxu0 %v3161
        %3219 = vmatpush1.msra.mxu0 %v3160
        %3220 = vmatprep.subr.mxu0 %v3165
        %3221 = vmatpush1.msra.mxu0 %v3164
        %3222 = vmatprep.subr.mxu0 %v3169
        %3223 = vmatpush1.msra.mxu0 %v3168
        %3224 = vmatprep.subr.mxu0 %v3173
        %3225 = vmatpush1.msra.mxu0 %v3172
        %3226 = vmatprep.subr.mxu0 %v3177
        %3227 = vmatpush1.msra.mxu0 %v3176
        %3228 = vmatprep.subr.mxu0 %v3181
        %3229 = vmatpush1.msra.mxu0 %v3180
        %3230 = vmatprep.subr.mxu0 %v3185
        %3231 = vmatpush1.msra.mxu0 %v3184
        %3232 = vmatprep.subr.mxu0 %v3189
        %3233 = vmatpush1.msra.mxu0 %v3188
        %3234 = vmatprep.subr.mxu0 %v3193
        %3235 = vmatpush1.msra.mxu0 %v3192
        %3236 = vmatprep.subr.mxu0 %v3204
        %3237 = vmatpush1.msra.mxu0 %v3201
        %3238 = vmatprep.subr.mxu0 0.0
        %3239 = vmatpush1.msra.mxu0 0.0
        %3240 = vmatprep.subr.mxu0 0.0
        %3241 = vmatpush1.msra.mxu0 0.0
        %3242 = vmatprep.subr.mxu0 0.0
        %3243 = vmatpush1.msra.mxu0 0.0
        %3244 = vmatprep.subr.mxu0 0.0
        %3245 = vmatpush1.msra.mxu0 0.0
        %3246 = vmatprep.subr.mxu0 0.0
        %3247 = vmatpush1.msra.mxu0 0.0
        %3248 = vmatprep.subr.mxu0 0.0
        %3249 = vmatpush1.msra.mxu0 0.0
        %3250 = vmatprep.subr.mxu0 0.0
        %3251 = vmatpush1.msra.mxu0 0.0
        %3252 = vmatprep.subr.mxu0 0.0
        %3253 = vmatpush1.msra.mxu0 0.0
        %3254 = vmatprep.subr.mxu0 0.0
        %3255 = vmatpush1.msra.mxu0 0.0
        %3256 = vmatprep.subr.mxu0 0.0
        %3257 = vmatpush1.msra.mxu0 0.0
        %3258 = vmatprep.subr.mxu0 0.0
        %3259 = vmatpush1.msra.mxu0 0.0
        %3260 = vmatprep.subr.mxu0 0.0
        %3261 = vmatpush1.msra.mxu0 0.0
        %3262 = vmatprep.subr.mxu0 0.0
        %3263 = vmatpush1.msra.mxu0 0.0
        %3264 = vmatprep.subr.mxu0 0.0
        %3265 = vmatpush1.msra.mxu0 0.0
        %3266 = vmatprep.subr.mxu0 0.0
        %3267 = vmatpush1.msra.mxu0 0.0
        %3268 = vmatprep.subr.mxu0 0.0
        %3269 = vmatpush1.msra.mxu0 0.0
        %3270 = vmatprep.subr.mxu0 0.0
        %3271 = vmatpush1.msra.mxu0 0.0
        %3272 = vmatprep.subr.mxu0 0.0
        %3273 = vmatpush1.msra.mxu0 0.0
        %3274 = vmatprep.subr.mxu0 0.0
        %3275 = vmatpush1.msra.mxu0 0.0
        %3276 = vmatprep.mubr.f32.mxu0 0.0
        %3277 = vmatmul.mubr.f32.gmra.mrb[0].mxu0 %v862
        %v3278 = vpop.f32.mrb[0].mxu0
        %v3279 = vadd.f32 0.0, %v3278
        %v3280 = vpop.f32.mrb[0].mxu0
        %v3281 = vadd.f32 0.0, %v3280
        %3282 = vmatprep.mubr.f32.mxu0 0.0
        %3283 = vmatmul.mubr.f32.gmra.mrb[0].mxu0 %v865
        %v3284 = vpop.f32.mrb[0].mxu0
        %v3285 = vadd.f32 0.0, %v3284
        %v3286 = vpop.f32.mrb[0].mxu0
        %v3287 = vadd.f32 0.0, %v3286
        %3288 = vmatprep.mubr.f32.mxu0 0.0
        %3289 = vmatmul.mubr.f32.gmra.mrb[0].mxu0 %v868
        %v3290 = vpop.f32.mrb[0].mxu0
        %v3291 = vadd.f32 0.0, %v3290
        %v3292 = vpop.f32.mrb[0].mxu0
        %v3293 = vadd.f32 0.0, %v3292
        %3294 = vmatprep.mubr.f32.mxu0 0.0
        %3295 = vmatmul.mubr.f32.gmra.mrb[0].mxu0 %v871
        %v3296 = vpop.f32.mrb[0].mxu0
        %v3297 = vadd.f32 0.0, %v3296
        %v3298 = vpop.f32.mrb[0].mxu0
        %v3299 = vadd.f32 0.0, %v3298
        %3300 = vmatprep.mubr.f32.mxu0 0.0
        %3301 = vmatmul.mubr.f32.gmra.mrb[0].mxu0 %v874
        %v3302 = vpop.f32.mrb[0].mxu0
        %v3303 = vadd.f32 0.0, %v3302
        %v3304 = vpop.f32.mrb[0].mxu0
        %v3305 = vadd.f32 0.0, %v3304
        %3306 = vdwg.mxu0
        %3307 = vmatprep.subr.mxu0 %v3151
        %3308 = vmatpush1.msra.mxu0 %v3150
        %3309 = vmatprep.subr.mxu0 %v3155
        %3310 = vmatpush1.msra.mxu0 %v3154
        %3311 = vmatprep.subr.mxu0 %v3159
        %3312 = vmatpush1.msra.mxu0 %v3158
        %3313 = vmatprep.subr.mxu0 %v3163
        %3314 = vmatpush1.msra.mxu0 %v3162
        %3315 = vmatprep.subr.mxu0 %v3167
        %3316 = vmatpush1.msra.mxu0 %v3166
        %3317 = vmatprep.subr.mxu0 %v3171
        %3318 = vmatpush1.msra.mxu0 %v3170
        %3319 = vmatprep.subr.mxu0 %v3175
        %3320 = vmatpush1.msra.mxu0 %v3174
        %3321 = vmatprep.subr.mxu0 %v3179
        %3322 = vmatpush1.msra.mxu0 %v3178
        %3323 = vmatprep.subr.mxu0 %v3183
        %3324 = vmatpush1.msra.mxu0 %v3182
        %3325 = vmatprep.subr.mxu0 %v3187
        %3326 = vmatpush1.msra.mxu0 %v3186
        %3327 = vmatprep.subr.mxu0 %v3191
        %3328 = vmatpush1.msra.mxu0 %v3190
        %3329 = vmatprep.subr.mxu0 %v3195
        %3330 = vmatpush1.msra.mxu0 %v3194
        %3331 = vmatprep.subr.mxu0 %v3210
        %3332 = vmatpush1.msra.mxu0 %v3207
        %3333 = vmatprep.subr.mxu0 0.0
        %3334 = vmatpush1.msra.mxu0 0.0
        %3335 = vmatprep.subr.mxu0 0.0
        %3336 = vmatpush1.msra.mxu0 0.0
        %3337 = vmatprep.subr.mxu0 0.0
        %3338 = vmatpush1.msra.mxu0 0.0
        %3339 = vmatprep.subr.mxu0 0.0
        %3340 = vmatpush1.msra.mxu0 0.0
        %3341 = vmatprep.subr.mxu0 0.0
        %3342 = vmatpush1.msra.mxu0 0.0
        %3343 = vmatprep.subr.mxu0 0.0
        %3344 = vmatpush1.msra.mxu0 0.0
        %3345 = vmatprep.subr.mxu0 0.0
        %3346 = vmatpush1.msra.mxu0 0.0
        %3347 = vmatprep.subr.mxu0 0.0
        %3348 = vmatpush1.msra.mxu0 0.0
        %3349 = vmatprep.subr.mxu0 0.0
        %3350 = vmatpush1.msra.mxu0 0.0
        %3351 = vmatprep.subr.mxu0 0.0
        %3352 = vmatpush1.msra.mxu0 0.0
        %3353 = vmatprep.subr.mxu0 0.0
        %3354 = vmatpush1.msra.mxu0 0.0
        %3355 = vmatprep.subr.mxu0 0.0
        %3356 = vmatpush1.msra.mxu0 0.0
        %3357 = vmatprep.subr.mxu0 0.0
        %3358 = vmatpush1.msra.mxu0 0.0
        %3359 = vmatprep.subr.mxu0 0.0
        %3360 = vmatpush1.msra.mxu0 0.0
        %3361 = vmatprep.subr.mxu0 0.0
        %3362 = vmatpush1.msra.mxu0 0.0
        %3363 = vmatprep.subr.mxu0 0.0
        %3364 = vmatpush1.msra.mxu0 0.0
        %3365 = vmatprep.subr.mxu0 0.0
        %3366 = vmatpush1.msra.mxu0 0.0
        %3367 = vmatprep.subr.mxu0 0.0
        %3368 = vmatpush1.msra.mxu0 0.0
        %3369 = vmatprep.subr.mxu0 0.0
        %3370 = vmatpush1.msra.mxu0 0.0
        %3371 = vmatprep.mubr.f32.mxu0 0.0
        %3372 = vmatmul.mubr.f32.gmra.mrb[0].mxu0 %v862
        %v3373 = vpop.f32.mrb[0].mxu0
        %v3374 = vadd.f32 0.0, %v3373
        %v3375 = vpop.f32.mrb[0].mxu0
        %v3376 = vadd.f32 0.0, %v3375
        %3377 = vmatprep.mubr.f32.mxu0 0.0
        %3378 = vmatmul.mubr.f32.gmra.mrb[0].mxu0 %v865
        %v3379 = vpop.f32.mrb[0].mxu0
        %v3380 = vadd.f32 0.0, %v3379
        %v3381 = vpop.f32.mrb[0].mxu0
        %v3382 = vadd.f32 0.0, %v3381
        %3383 = vmatprep.mubr.f32.mxu0 0.0
        %3384 = vmatmul.mubr.f32.gmra.mrb[0].mxu0 %v868
        %v3385 = vpop.f32.mrb[0].mxu0
        %v3386 = vadd.f32 0.0, %v3385
        %v3387 = vpop.f32.mrb[0].mxu0
        %v3388 = vadd.f32 0.0, %v3387
        %3389 = vmatprep.mubr.f32.mxu0 0.0
        %3390 = vmatmul.mubr.f32.gmra.mrb[0].mxu0 %v871
        %v3391 = vpop.f32.mrb[0].mxu0
        %v3392 = vadd.f32 0.0, %v3391
        %v3393 = vpop.f32.mrb[0].mxu0
        %v3394 = vadd.f32 0.0, %v3393
        %3395 = vmatprep.mubr.f32.mxu0 0.0
        %3396 = vmatmul.mubr.f32.gmra.mrb[0].mxu0 %v874
        %v3397 = vpop.f32.mrb[0].mxu0
        %v3398 = vadd.f32 0.0, %v3397
        %v3399 = vpop.f32.mrb[0].mxu0
        %v3400 = vadd.f32 0.0, %v3399
        %3401 = vdwg.mxu0
        %v3402 = vmax.f32 %v3279, 0.0
        %v3403 = vmax.f32 %v3281, 0.0
        %v3404 = vmax.f32 %v3374, 0.0
        %v3405 = vmax.f32 %v3376, 0.0
        %v3406 = vmax.f32 %v3285, 0.0
        %v3407 = vmax.f32 %v3287, 0.0
        %v3408 = vmax.f32 %v3380, 0.0
        %v3409 = vmax.f32 %v3382, 0.0
        %v3410 = vmax.f32 %v3291, 0.0
        %v3411 = vmax.f32 %v3293, 0.0
        %v3412 = vmax.f32 %v3386, 0.0
        %v3413 = vmax.f32 %v3388, 0.0
        %v3414 = vmax.f32 %v3297, 0.0
        %v3415 = vmax.f32 %v3299, 0.0
        %v3416 = vmax.f32 %v3392, 0.0
        %v3417 = vmax.f32 %v3394, 0.0
        %v3418 = vmax.f32 %v3303, 0.0
        %v3419 = vmax.f32 %v3305, 0.0
        %v3420 = vmax.f32 %v3398, 0.0
        %v3421 = vmax.f32 %v3400, 0.0
        %v3422 = vmul.f32 %v1102, %v3402
        %v3423 = vmul.f32 %v1102, %v3403
        %v3424 = vmul.f32 %v1102, %v3404
        %v3425 = vmul.f32 %v1102, %v3405
        %v3426 = vmul.f32 %v1107, %v3406
        %v3427 = vmul.f32 %v1107, %v3407
        %v3428 = vmul.f32 %v1107, %v3408
        %v3429 = vmul.f32 %v1107, %v3409
        %v3430 = vmul.f32 %v1112, %v3410
        %v3431 = vmul.f32 %v1112, %v3411
        %v3432 = vmul.f32 %v1112, %v3412
        %v3433 = vmul.f32 %v1112, %v3413
        %v3434 = vmul.f32 %v1117, %v3414
        %v3435 = vmul.f32 %v1117, %v3415
        %v3436 = vmul.f32 %v1117, %v3416
        %v3437 = vmul.f32 %v1117, %v3417
        %v3438 = vmul.f32 %v1122, %v3418
        %v3439 = vmul.f32 %v1122, %v3419
        %v3440 = vmul.f32 %v1122, %v3420
        %v3441 = vmul.f32 %v1122, %v3421
        %v3442 = vadd.f32 %v3422, %v3426
        %v3443 = vadd.f32 %v3442, %v3430
        %v3444 = vadd.f32 %v3443, %v3434
        %v3445 = vadd.f32 %v3444, %v3438
        %v3446 = vrot.slane %v3445, 4
        %v3447 = vadd.f32 %v3445, %v3446
        %v3448 = vrot.slane %v3447, 2
        %v3449 = vadd.f32 %v3447, %v3448
        %v3450 = vrot.slane %v3449, 1
        %v3451 = vadd.f32 %v3449, %v3450
        %v3452 = vadd.f32 %v3423, %v3427
        %v3453 = vadd.f32 %v3452, %v3431
        %v3454 = vadd.f32 %v3453, %v3435
        %v3455 = vadd.f32 %v3454, %v3439
        %v3456 = vrot.slane %v3455, 4
        %v3457 = vadd.f32 %v3455, %v3456
        %v3458 = vrot.slane %v3457, 2
        %v3459 = vadd.f32 %v3457, %v3458
        %v3460 = vrot.slane %v3459, 1
        %v3461 = vadd.f32 %v3459, %v3460
        %v3462 = vadd.f32 %v3424, %v3428
        %v3463 = vadd.f32 %v3462, %v3432
        %v3464 = vadd.f32 %v3463, %v3436
        %v3465 = vadd.f32 %v3464, %v3440
        %v3466 = vrot.slane %v3465, 4
        %v3467 = vadd.f32 %v3465, %v3466
        %v3468 = vrot.slane %v3467, 2
        %v3469 = vadd.f32 %v3467, %v3468
        %v3470 = vrot.slane %v3469, 1
        %v3471 = vadd.f32 %v3469, %v3470
        %v3472 = vadd.f32 %v3425, %v3429
        %v3473 = vadd.f32 %v3472, %v3433
        %v3474 = vadd.f32 %v3473, %v3437
        %v3475 = vadd.f32 %v3474, %v3441
        %v3476 = vrot.slane %v3475, 4
        %v3477 = vadd.f32 %v3475, %v3476
        %v3478 = vrot.slane %v3477, 2
        %v3479 = vadd.f32 %v3477, %v3478
        %v3480 = vrot.slane %v3479, 1
        %v3481 = vadd.f32 %v3479, %v3480
        %v3482 = vadd.f32 %v3451, %v1192
        %v3483 = vadd.f32 %v3461, %v1192
        %v3484 = vadd.f32 %v3471, %v1192
        %v3485 = vadd.f32 %v3481, %v1192
        %v3490 = vcombine.low %v3482, %v3483
        %v3491 = vcombine.low %v3484, %v3485
        %v3493 = vunpack.c.l.s4 1966171168
        %v3494 = vunpack.c.0.s8 %v3493
        %v3495 = vlaneseq
        %v3496 = vshrl.u32 %v3495, 7
        %v3497 = vsub.s32 %v3494, %v3496
        %v3498 = vrot.slane %v3490, %v3497
        %v3500 = vunpack.c.l.s4 1966171168
        %v3501 = vunpack.c.0.s8 %v3500
        %v3502 = vlaneseq
        %v3503 = vshrl.u32 %v3502, 7
        %v3504 = vsub.s32 %v3501, %v3503
        %v3505 = vrot.slane %v3491, %v3504
        %v3506 = vcombine.low %v3498, %v3505
        %v3508 = vunpack.c.l.s4 1966171168
        %v3509 = vunpack.c.0.s8 %v3508
        %v3510 = vlaneseq
        %v3511 = vshrl.u32 %v3510, 7
        %v3512 = vsub.s32 %v3509, %v3511
        %v3513 = vrot.slane %v3506, %v3512
        %s3515 = scalar_lea.vmem %s272, 12 [#allocation3]
        %3516 = vst.msk [vmem:[%s3515] sm:$0xf] %vm1229, %v3513
        %s3517 = scalar_lea.vmem %s276, 16
        %v3518 = vld [vmem:[%s3517] sm:$0xf]
        %v3520 = vlaneseq
        %v3521 = vshrl.u32 %v3520, 7
        %v3522 = vsub.s32 0, %v3521
        %v3523 = vrot.slane %v3518, %v3522
        %v3524 = vlaneseq
        %v3525 = vshrl.u32 %v3524, 7
        %v3526 = vsub.s32 1, %v3525
        %v3527 = vrot.slane %v3518, %v3526
        %v3528 = vlaneseq
        %v3529 = vshrl.u32 %v3528, 7
        %v3530 = vsub.s32 2, %v3529
        %v3531 = vrot.slane %v3518, %v3530
        %v3532 = vlaneseq
        %v3533 = vshrl.u32 %v3532, 7
        %v3534 = vsub.s32 3, %v3533
        %v3535 = vrot.slane %v3518, %v3534
        %v3540 = vmul.f32 %v319, %v3523
        %v3541 = vmul.f32 %v319, %v3527
        %v3542 = vmul.f32 %v319, %v3531
        %v3543 = vmul.f32 %v319, %v3535
        %v3544 = vmul.f32 %v324, %v3523
        %v3545 = vmul.f32 %v324, %v3527
        %v3546 = vmul.f32 %v324, %v3531
        %v3547 = vmul.f32 %v324, %v3535
        %v3548 = vmul.f32 %v329, %v3523
        %v3549 = vmul.f32 %v329, %v3527
        %v3550 = vmul.f32 %v329, %v3531
        %v3551 = vmul.f32 %v329, %v3535
        %v3552 = vmul.f32 %v334, %v3523
        %v3553 = vmul.f32 %v334, %v3527
        %v3554 = vmul.f32 %v334, %v3531
        %v3555 = vmul.f32 %v334, %v3535
        %v3556 = vmul.f32 %v339, %v3523
        %v3557 = vmul.f32 %v339, %v3527
        %v3558 = vmul.f32 %v339, %v3531
        %v3559 = vmul.f32 %v339, %v3535
        %v3560 = vmul.f32 %v344, %v3523
        %v3561 = vmul.f32 %v344, %v3527
        %v3562 = vmul.f32 %v344, %v3531
        %v3563 = vmul.f32 %v344, %v3535
        %v3564 = vadd.f32 %v3540, %v394
        %v3565 = vadd.f32 %v3541, %v394
        %v3566 = vadd.f32 %v3542, %v394
        %v3567 = vadd.f32 %v3543, %v394
        %v3568 = vadd.f32 %v3544, %v399
        %v3569 = vadd.f32 %v3545, %v399
        %v3570 = vadd.f32 %v3546, %v399
        %v3571 = vadd.f32 %v3547, %v399
        %v3572 = vadd.f32 %v3548, %v404
        %v3573 = vadd.f32 %v3549, %v404
        %v3574 = vadd.f32 %v3550, %v404
        %v3575 = vadd.f32 %v3551, %v404
        %v3576 = vadd.f32 %v3552, %v409
        %v3577 = vadd.f32 %v3553, %v409
        %v3578 = vadd.f32 %v3554, %v409
        %v3579 = vadd.f32 %v3555, %v409
        %v3580 = vadd.f32 %v3556, %v414
        %v3581 = vadd.f32 %v3557, %v414
        %v3582 = vadd.f32 %v3558, %v414
        %v3583 = vadd.f32 %v3559, %v414
        %v3584 = vadd.f32 %v3560, %v419
        %v3585 = vadd.f32 %v3561, %v419
        %v3586 = vadd.f32 %v3562, %v419
        %v3587 = vadd.f32 %v3563, %v419
        %v3588 = vmax.f32 %v3564, 0.0
        %v3589 = vmax.f32 %v3565, 0.0
        %v3590 = vmax.f32 %v3566, 0.0
        %v3591 = vmax.f32 %v3567, 0.0
        %v3592 = vmax.f32 %v3568, 0.0
        %v3593 = vmax.f32 %v3569, 0.0
        %v3594 = vmax.f32 %v3570, 0.0
        %v3595 = vmax.f32 %v3571, 0.0
        %v3596 = vmax.f32 %v3572, 0.0
        %v3597 = vmax.f32 %v3573, 0.0
        %v3598 = vmax.f32 %v3574, 0.0
        %v3599 = vmax.f32 %v3575, 0.0
        %v3600 = vmax.f32 %v3576, 0.0
        %v3601 = vmax.f32 %v3577, 0.0
        %v3602 = vmax.f32 %v3578, 0.0
        %v3603 = vmax.f32 %v3579, 0.0
        %v3604 = vmax.f32 %v3580, 0.0
        %v3605 = vmax.f32 %v3581, 0.0
        %v3606 = vmax.f32 %v3582, 0.0
        %v3607 = vmax.f32 %v3583, 0.0
        %v3608 = vmax.f32 %v3584, 0.0
        %v3609 = vmax.f32 %v3585, 0.0
        %v3610 = vmax.f32 %v3586, 0.0
        %v3611 = vmax.f32 %v3587, 0.0
        %v3613 = vsel %vm509, %v3608, 0
        %v3616 = vsel %vm509, %v3609, 0
        %v3619 = vsel %vm509, %v3610, 0
        %v3622 = vsel %vm509, %v3611, 0
        %3624 = vmatprep.subr.mxu0 %v3589
        %3625 = vmatpush1.msra.mxu0 %v3588
        %3626 = vmatprep.subr.mxu0 %v3593
        %3627 = vmatpush1.msra.mxu0 %v3592
        %3628 = vmatprep.subr.mxu0 %v3597
        %3629 = vmatpush1.msra.mxu0 %v3596
        %3630 = vmatprep.subr.mxu0 %v3601
        %3631 = vmatpush1.msra.mxu0 %v3600
        %3632 = vmatprep.subr.mxu0 %v3605
        %3633 = vmatpush1.msra.mxu0 %v3604
        %3634 = vmatprep.subr.mxu0 %v3616
        %3635 = vmatpush1.msra.mxu0 %v3613
        %3636 = vmatprep.subr.mxu0 0.0
        %3637 = vmatpush1.msra.mxu0 0.0
        %3638 = vmatprep.subr.mxu0 0.0
        %3639 = vmatpush1.msra.mxu0 0.0
        %3640 = vmatprep.subr.mxu0 0.0
        %3641 = vmatpush1.msra.mxu0 0.0
        %3642 = vmatprep.subr.mxu0 0.0
        %3643 = vmatpush1.msra.mxu0 0.0
        %3644 = vmatprep.subr.mxu0 0.0
        %3645 = vmatpush1.msra.mxu0 0.0
        %3646 = vmatprep.subr.mxu0 0.0
        %3647 = vmatpush1.msra.mxu0 0.0
        %3648 = vmatprep.subr.mxu0 0.0
        %3649 = vmatpush1.msra.mxu0 0.0
        %3650 = vmatprep.subr.mxu0 0.0
        %3651 = vmatpush1.msra.mxu0 0.0
        %3652 = vmatprep.subr.mxu0 0.0
        %3653 = vmatpush1.msra.mxu0 0.0
        %3654 = vmatprep.subr.mxu0 0.0
        %3655 = vmatpush1.msra.mxu0 0.0
        %3656 = vmatprep.subr.mxu0 0.0
        %3657 = vmatpush1.msra.mxu0 0.0
        %3658 = vmatprep.subr.mxu0 0.0
        %3659 = vmatpush1.msra.mxu0 0.0
        %3660 = vmatprep.subr.mxu0 0.0
        %3661 = vmatpush1.msra.mxu0 0.0
        %3662 = vmatprep.subr.mxu0 0.0
        %3663 = vmatpush1.msra.mxu0 0.0
        %3664 = vmatprep.subr.mxu0 0.0
        %3665 = vmatpush1.msra.mxu0 0.0
        %3666 = vmatprep.subr.mxu0 0.0
        %3667 = vmatpush1.msra.mxu0 0.0
        %3668 = vmatprep.subr.mxu0 0.0
        %3669 = vmatpush1.msra.mxu0 0.0
        %3670 = vmatprep.subr.mxu0 0.0
        %3671 = vmatpush1.msra.mxu0 0.0
        %3672 = vmatprep.subr.mxu0 0.0
        %3673 = vmatpush1.msra.mxu0 0.0
        %3674 = vmatprep.subr.mxu0 0.0
        %3675 = vmatpush1.msra.mxu0 0.0
        %3676 = vmatprep.subr.mxu0 0.0
        %3677 = vmatpush1.msra.mxu0 0.0
        %3678 = vmatprep.subr.mxu0 0.0
        %3679 = vmatpush1.msra.mxu0 0.0
        %3680 = vmatprep.subr.mxu0 0.0
        %3681 = vmatpush1.msra.mxu0 0.0
        %3682 = vmatprep.subr.mxu0 0.0
        %3683 = vmatpush1.msra.mxu0 0.0
        %3684 = vmatprep.subr.mxu0 0.0
        %3685 = vmatpush1.msra.mxu0 0.0
        %3686 = vmatprep.subr.mxu0 0.0
        %3687 = vmatpush1.msra.mxu0 0.0
        %3688 = vmatprep.mubr.f32.mxu0 0.0
        %3689 = vmatmul.mubr.f32.gmra.mrb[0].mxu0 %v471
        %v3690 = vpop.f32.mrb[0].mxu0
        %v3691 = vadd.f32 0.0, %v3690
        %v3692 = vpop.f32.mrb[0].mxu0
        %v3693 = vadd.f32 0.0, %v3692
        %3694 = vmatprep.mubr.f32.mxu0 0.0
        %3695 = vmatmul.mubr.f32.gmra.mrb[0].mxu0 %v474
        %v3696 = vpop.f32.mrb[0].mxu0
        %v3697 = vadd.f32 0.0, %v3696
        %v3698 = vpop.f32.mrb[0].mxu0
        %v3699 = vadd.f32 0.0, %v3698
        %3700 = vmatprep.mubr.f32.mxu0 0.0
        %3701 = vmatmul.mubr.f32.gmra.mrb[0].mxu0 %v477
        %v3702 = vpop.f32.mrb[0].mxu0
        %v3703 = vadd.f32 0.0, %v3702
        %v3704 = vpop.f32.mrb[0].mxu0
        %v3705 = vadd.f32 0.0, %v3704
        %3706 = vmatprep.mubr.f32.mxu0 0.0
        %3707 = vmatmul.mubr.f32.gmra.mrb[0].mxu0 %v480
        %v3708 = vpop.f32.mrb[0].mxu0
        %v3709 = vadd.f32 0.0, %v3708
        %v3710 = vpop.f32.mrb[0].mxu0
        %v3711 = vadd.f32 0.0, %v3710
        %3712 = vmatprep.mubr.f32.mxu0 0.0
        %3713 = vmatmul.mubr.f32.gmra.mrb[0].mxu0 %v483
        %v3714 = vpop.f32.mrb[0].mxu0
        %v3715 = vadd.f32 0.0, %v3714
        %v3716 = vpop.f32.mrb[0].mxu0
        %v3717 = vadd.f32 0.0, %v3716
        %3718 = vmatprep.mubr.f32.mxu0 0.0
        %3719 = vmatmul.mubr.f32.gmra.mrb[0].mxu0 %v486
        %v3720 = vpop.f32.mrb[0].mxu0
        %v3721 = vadd.f32 0.0, %v3720
        %v3722 = vpop.f32.mrb[0].mxu0
        %v3723 = vadd.f32 0.0, %v3722
        %3724 = vmatprep.mubr.f32.mxu0 0.0
        %3725 = vmatmul.mubr.f32.gmra.mrb[0].mxu0 %v489
        %v3726 = vpop.f32.mrb[0].mxu0
        %v3727 = vadd.f32 0.0, %v3726
        %v3728 = vpop.f32.mrb[0].mxu0
        %v3729 = vadd.f32 0.0, %v3728
        %3730 = vmatprep.mubr.f32.mxu0 0.0
        %3731 = vmatmul.mubr.f32.gmra.mrb[0].mxu0 %v492
        %v3732 = vpop.f32.mrb[0].mxu0
        %v3733 = vadd.f32 0.0, %v3732
        %v3734 = vpop.f32.mrb[0].mxu0
        %v3735 = vadd.f32 0.0, %v3734
        %3736 = vmatprep.mubr.f32.mxu0 0.0
        %3737 = vmatmul.mubr.f32.gmra.mrb[0].mxu0 %v495
        %v3738 = vpop.f32.mrb[0].mxu0
        %v3739 = vadd.f32 0.0, %v3738
        %v3740 = vpop.f32.mrb[0].mxu0
        %v3741 = vadd.f32 0.0, %v3740
        %3742 = vmatprep.mubr.f32.mxu0 0.0
        %3743 = vmatmul.mubr.f32.gmra.mrb[0].mxu0 %v498
        %v3744 = vpop.f32.mrb[0].mxu0
        %v3745 = vadd.f32 0.0, %v3744
        %v3746 = vpop.f32.mrb[0].mxu0
        %v3747 = vadd.f32 0.0, %v3746
        %3748 = vmatprep.mubr.f32.mxu0 0.0
        %3749 = vmatmul.mubr.f32.gmra.mrb[0].mxu0 %v501
        %v3750 = vpop.f32.mrb[0].mxu0
        %v3751 = vadd.f32 0.0, %v3750
        %v3752 = vpop.f32.mrb[0].mxu0
        %v3753 = vadd.f32 0.0, %v3752
        %3754 = vmatprep.mubr.f32.mxu0 0.0
        %3755 = vmatmul.mubr.f32.gmra.mrb[0].mxu0 %v504
        %v3756 = vpop.f32.mrb[0].mxu0
        %v3757 = vadd.f32 0.0, %v3756
        %v3758 = vpop.f32.mrb[0].mxu0
        %v3759 = vadd.f32 0.0, %v3758
        %3760 = vmatprep.mubr.f32.mxu0 0.0
        %3761 = vmatmul.mubr.f32.gmra.mrb[0].mxu0 %v507
        %v3762 = vpop.f32.mrb[0].mxu0
        %v3763 = vadd.f32 0.0, %v3762
        %v3764 = vpop.f32.mrb[0].mxu0
        %v3765 = vadd.f32 0.0, %v3764
        %3766 = vdwg.mxu0
        %3767 = vmatprep.subr.mxu0 %v3591
        %3768 = vmatpush1.msra.mxu0 %v3590
        %3769 = vmatprep.subr.mxu0 %v3595
        %3770 = vmatpush1.msra.mxu0 %v3594
        %3771 = vmatprep.subr.mxu0 %v3599
        %3772 = vmatpush1.msra.mxu0 %v3598
        %3773 = vmatprep.subr.mxu0 %v3603
        %3774 = vmatpush1.msra.mxu0 %v3602
        %3775 = vmatprep.subr.mxu0 %v3607
        %3776 = vmatpush1.msra.mxu0 %v3606
        %3777 = vmatprep.subr.mxu0 %v3622
        %3778 = vmatpush1.msra.mxu0 %v3619
        %3779 = vmatprep.subr.mxu0 0.0
        %3780 = vmatpush1.msra.mxu0 0.0
        %3781 = vmatprep.subr.mxu0 0.0
        %3782 = vmatpush1.msra.mxu0 0.0
        %3783 = vmatprep.subr.mxu0 0.0
        %3784 = vmatpush1.msra.mxu0 0.0
        %3785 = vmatprep.subr.mxu0 0.0
        %3786 = vmatpush1.msra.mxu0 0.0
        %3787 = vmatprep.subr.mxu0 0.0
        %3788 = vmatpush1.msra.mxu0 0.0
        %3789 = vmatprep.subr.mxu0 0.0
        %3790 = vmatpush1.msra.mxu0 0.0
        %3791 = vmatprep.subr.mxu0 0.0
        %3792 = vmatpush1.msra.mxu0 0.0
        %3793 = vmatprep.subr.mxu0 0.0
        %3794 = vmatpush1.msra.mxu0 0.0
        %3795 = vmatprep.subr.mxu0 0.0
        %3796 = vmatpush1.msra.mxu0 0.0
        %3797 = vmatprep.subr.mxu0 0.0
        %3798 = vmatpush1.msra.mxu0 0.0
        %3799 = vmatprep.subr.mxu0 0.0
        %3800 = vmatpush1.msra.mxu0 0.0
        %3801 = vmatprep.subr.mxu0 0.0
        %3802 = vmatpush1.msra.mxu0 0.0
        %3803 = vmatprep.subr.mxu0 0.0
        %3804 = vmatpush1.msra.mxu0 0.0
        %3805 = vmatprep.subr.mxu0 0.0
        %3806 = vmatpush1.msra.mxu0 0.0
        %3807 = vmatprep.subr.mxu0 0.0
        %3808 = vmatpush1.msra.mxu0 0.0
        %3809 = vmatprep.subr.mxu0 0.0
        %3810 = vmatpush1.msra.mxu0 0.0
        %3811 = vmatprep.subr.mxu0 0.0
        %3812 = vmatpush1.msra.mxu0 0.0
        %3813 = vmatprep.subr.mxu0 0.0
        %3814 = vmatpush1.msra.mxu0 0.0
        %3815 = vmatprep.subr.mxu0 0.0
        %3816 = vmatpush1.msra.mxu0 0.0
        %3817 = vmatprep.subr.mxu0 0.0
        %3818 = vmatpush1.msra.mxu0 0.0
        %3819 = vmatprep.subr.mxu0 0.0
        %3820 = vmatpush1.msra.mxu0 0.0
        %3821 = vmatprep.subr.mxu0 0.0
        %3822 = vmatpush1.msra.mxu0 0.0
        %3823 = vmatprep.subr.mxu0 0.0
        %3824 = vmatpush1.msra.mxu0 0.0
        %3825 = vmatprep.subr.mxu0 0.0
        %3826 = vmatpush1.msra.mxu0 0.0
        %3827 = vmatprep.subr.mxu0 0.0
        %3828 = vmatpush1.msra.mxu0 0.0
        %3829 = vmatprep.subr.mxu0 0.0
        %3830 = vmatpush1.msra.mxu0 0.0
        %3831 = vmatprep.mubr.f32.mxu0 0.0
        %3832 = vmatmul.mubr.f32.gmra.mrb[0].mxu0 %v471
        %v3833 = vpop.f32.mrb[0].mxu0
        %v3834 = vadd.f32 0.0, %v3833
        %v3835 = vpop.f32.mrb[0].mxu0
        %v3836 = vadd.f32 0.0, %v3835
        %3837 = vmatprep.mubr.f32.mxu0 0.0
        %3838 = vmatmul.mubr.f32.gmra.mrb[0].mxu0 %v474
        %v3839 = vpop.f32.mrb[0].mxu0
        %v3840 = vadd.f32 0.0, %v3839
        %v3841 = vpop.f32.mrb[0].mxu0
        %v3842 = vadd.f32 0.0, %v3841
        %3843 = vmatprep.mubr.f32.mxu0 0.0
        %3844 = vmatmul.mubr.f32.gmra.mrb[0].mxu0 %v477
        %v3845 = vpop.f32.mrb[0].mxu0
        %v3846 = vadd.f32 0.0, %v3845
        %v3847 = vpop.f32.mrb[0].mxu0
        %v3848 = vadd.f32 0.0, %v3847
        %3849 = vmatprep.mubr.f32.mxu0 0.0
        %3850 = vmatmul.mubr.f32.gmra.mrb[0].mxu0 %v480
        %v3851 = vpop.f32.mrb[0].mxu0
        %v3852 = vadd.f32 0.0, %v3851
        %v3853 = vpop.f32.mrb[0].mxu0
        %v3854 = vadd.f32 0.0, %v3853
        %3855 = vmatprep.mubr.f32.mxu0 0.0
        %3856 = vmatmul.mubr.f32.gmra.mrb[0].mxu0 %v483
        %v3857 = vpop.f32.mrb[0].mxu0
        %v3858 = vadd.f32 0.0, %v3857
        %v3859 = vpop.f32.mrb[0].mxu0
        %v3860 = vadd.f32 0.0, %v3859
        %3861 = vmatprep.mubr.f32.mxu0 0.0
        %3862 = vmatmul.mubr.f32.gmra.mrb[0].mxu0 %v486
        %v3863 = vpop.f32.mrb[0].mxu0
        %v3864 = vadd.f32 0.0, %v3863
        %v3865 = vpop.f32.mrb[0].mxu0
        %v3866 = vadd.f32 0.0, %v3865
        %3867 = vmatprep.mubr.f32.mxu0 0.0
        %3868 = vmatmul.mubr.f32.gmra.mrb[0].mxu0 %v489
        %v3869 = vpop.f32.mrb[0].mxu0
        %v3870 = vadd.f32 0.0, %v3869
        %v3871 = vpop.f32.mrb[0].mxu0
        %v3872 = vadd.f32 0.0, %v3871
        %3873 = vmatprep.mubr.f32.mxu0 0.0
        %3874 = vmatmul.mubr.f32.gmra.mrb[0].mxu0 %v492
        %v3875 = vpop.f32.mrb[0].mxu0
        %v3876 = vadd.f32 0.0, %v3875
        %v3877 = vpop.f32.mrb[0].mxu0
        %v3878 = vadd.f32 0.0, %v3877
        %3879 = vmatprep.mubr.f32.mxu0 0.0
        %3880 = vmatmul.mubr.f32.gmra.mrb[0].mxu0 %v495
        %v3881 = vpop.f32.mrb[0].mxu0
        %v3882 = vadd.f32 0.0, %v3881
        %v3883 = vpop.f32.mrb[0].mxu0
        %v3884 = vadd.f32 0.0, %v3883
        %3885 = vmatprep.mubr.f32.mxu0 0.0
        %3886 = vmatmul.mubr.f32.gmra.mrb[0].mxu0 %v498
        %v3887 = vpop.f32.mrb[0].mxu0
        %v3888 = vadd.f32 0.0, %v3887
        %v3889 = vpop.f32.mrb[0].mxu0
        %v3890 = vadd.f32 0.0, %v3889
        %3891 = vmatprep.mubr.f32.mxu0 0.0
        %3892 = vmatmul.mubr.f32.gmra.mrb[0].mxu0 %v501
        %v3893 = vpop.f32.mrb[0].mxu0
        %v3894 = vadd.f32 0.0, %v3893
        %v3895 = vpop.f32.mrb[0].mxu0
        %v3896 = vadd.f32 0.0, %v3895
        %3897 = vmatprep.mubr.f32.mxu0 0.0
        %3898 = vmatmul.mubr.f32.gmra.mrb[0].mxu0 %v504
        %v3899 = vpop.f32.mrb[0].mxu0
        %v3900 = vadd.f32 0.0, %v3899
        %v3901 = vpop.f32.mrb[0].mxu0
        %v3902 = vadd.f32 0.0, %v3901
        %3903 = vmatprep.mubr.f32.mxu0 0.0
        %3904 = vmatmul.mubr.f32.gmra.mrb[0].mxu0 %v507
        %v3905 = vpop.f32.mrb[0].mxu0
        %v3906 = vadd.f32 0.0, %v3905
        %v3907 = vpop.f32.mrb[0].mxu0
        %v3908 = vadd.f32 0.0, %v3907
        %3909 = vdwg.mxu0
        %v3910 = vmax.f32 %v3691, 0.0
        %v3911 = vmax.f32 %v3693, 0.0
        %v3912 = vmax.f32 %v3834, 0.0
        %v3913 = vmax.f32 %v3836, 0.0
        %v3914 = vmax.f32 %v3697, 0.0
        %v3915 = vmax.f32 %v3699, 0.0
        %v3916 = vmax.f32 %v3840, 0.0
        %v3917 = vmax.f32 %v3842, 0.0
        %v3918 = vmax.f32 %v3703, 0.0
        %v3919 = vmax.f32 %v3705, 0.0
        %v3920 = vmax.f32 %v3846, 0.0
        %v3921 = vmax.f32 %v3848, 0.0
        %v3922 = vmax.f32 %v3709, 0.0
        %v3923 = vmax.f32 %v3711, 0.0
        %v3924 = vmax.f32 %v3852, 0.0
        %v3925 = vmax.f32 %v3854, 0.0
        %v3926 = vmax.f32 %v3715, 0.0
        %v3927 = vmax.f32 %v3717, 0.0
        %v3928 = vmax.f32 %v3858, 0.0
        %v3929 = vmax.f32 %v3860, 0.0
        %v3930 = vmax.f32 %v3721, 0.0
        %v3931 = vmax.f32 %v3723, 0.0
        %v3932 = vmax.f32 %v3864, 0.0
        %v3933 = vmax.f32 %v3866, 0.0
        %v3934 = vmax.f32 %v3727, 0.0
        %v3935 = vmax.f32 %v3729, 0.0
        %v3936 = vmax.f32 %v3870, 0.0
        %v3937 = vmax.f32 %v3872, 0.0
        %v3938 = vmax.f32 %v3733, 0.0
        %v3939 = vmax.f32 %v3735, 0.0
        %v3940 = vmax.f32 %v3876, 0.0
        %v3941 = vmax.f32 %v3878, 0.0
        %v3942 = vmax.f32 %v3739, 0.0
        %v3943 = vmax.f32 %v3741, 0.0
        %v3944 = vmax.f32 %v3882, 0.0
        %v3945 = vmax.f32 %v3884, 0.0
        %v3946 = vmax.f32 %v3745, 0.0
        %v3947 = vmax.f32 %v3747, 0.0
        %v3948 = vmax.f32 %v3888, 0.0
        %v3949 = vmax.f32 %v3890, 0.0
        %v3950 = vmax.f32 %v3751, 0.0
        %v3951 = vmax.f32 %v3753, 0.0
        %v3952 = vmax.f32 %v3894, 0.0
        %v3953 = vmax.f32 %v3896, 0.0
        %v3954 = vmax.f32 %v3757, 0.0
        %v3955 = vmax.f32 %v3759, 0.0
        %v3956 = vmax.f32 %v3900, 0.0
        %v3957 = vmax.f32 %v3902, 0.0
        %v3958 = vmax.f32 %v3763, 0.0
        %v3959 = vmax.f32 %v3765, 0.0
        %v3960 = vmax.f32 %v3906, 0.0
        %v3961 = vmax.f32 %v3908, 0.0
        %v3963 = vsel %vm876, %v3958, 0
        %v3966 = vsel %vm876, %v3959, 0
        %v3969 = vsel %vm876, %v3960, 0
        %v3972 = vsel %vm876, %v3961, 0
        %3974 = vmatprep.subr.mxu0 %v3911
        %3975 = vmatpush1.msra.mxu0 %v3910
        %3976 = vmatprep.subr.mxu0 %v3915
        %3977 = vmatpush1.msra.mxu0 %v3914
        %3978 = vmatprep.subr.mxu0 %v3919
        %3979 = vmatpush1.msra.mxu0 %v3918
        %3980 = vmatprep.subr.mxu0 %v3923
        %3981 = vmatpush1.msra.mxu0 %v3922
        %3982 = vmatprep.subr.mxu0 %v3927
        %3983 = vmatpush1.msra.mxu0 %v3926
        %3984 = vmatprep.subr.mxu0 %v3931
        %3985 = vmatpush1.msra.mxu0 %v3930
        %3986 = vmatprep.subr.mxu0 %v3935
        %3987 = vmatpush1.msra.mxu0 %v3934
        %3988 = vmatprep.subr.mxu0 %v3939
        %3989 = vmatpush1.msra.mxu0 %v3938
        %3990 = vmatprep.subr.mxu0 %v3943
        %3991 = vmatpush1.msra.mxu0 %v3942
        %3992 = vmatprep.subr.mxu0 %v3947
        %3993 = vmatpush1.msra.mxu0 %v3946
        %3994 = vmatprep.subr.mxu0 %v3951
        %3995 = vmatpush1.msra.mxu0 %v3950
        %3996 = vmatprep.subr.mxu0 %v3955
        %3997 = vmatpush1.msra.mxu0 %v3954
        %3998 = vmatprep.subr.mxu0 %v3966
        %3999 = vmatpush1.msra.mxu0 %v3963
        %4000 = vmatprep.subr.mxu0 0.0
        %4001 = vmatpush1.msra.mxu0 0.0
        %4002 = vmatprep.subr.mxu0 0.0
        %4003 = vmatpush1.msra.mxu0 0.0
        %4004 = vmatprep.subr.mxu0 0.0
        %4005 = vmatpush1.msra.mxu0 0.0
        %4006 = vmatprep.subr.mxu0 0.0
        %4007 = vmatpush1.msra.mxu0 0.0
        %4008 = vmatprep.subr.mxu0 0.0
        %4009 = vmatpush1.msra.mxu0 0.0
        %4010 = vmatprep.subr.mxu0 0.0
        %4011 = vmatpush1.msra.mxu0 0.0
        %4012 = vmatprep.subr.mxu0 0.0
        %4013 = vmatpush1.msra.mxu0 0.0
        %4014 = vmatprep.subr.mxu0 0.0
        %4015 = vmatpush1.msra.mxu0 0.0
        %4016 = vmatprep.subr.mxu0 0.0
        %4017 = vmatpush1.msra.mxu0 0.0
        %4018 = vmatprep.subr.mxu0 0.0
        %4019 = vmatpush1.msra.mxu0 0.0
        %4020 = vmatprep.subr.mxu0 0.0
        %4021 = vmatpush1.msra.mxu0 0.0
        %4022 = vmatprep.subr.mxu0 0.0
        %4023 = vmatpush1.msra.mxu0 0.0
        %4024 = vmatprep.subr.mxu0 0.0
        %4025 = vmatpush1.msra.mxu0 0.0
        %4026 = vmatprep.subr.mxu0 0.0
        %4027 = vmatpush1.msra.mxu0 0.0
        %4028 = vmatprep.subr.mxu0 0.0
        %4029 = vmatpush1.msra.mxu0 0.0
        %4030 = vmatprep.subr.mxu0 0.0
        %4031 = vmatpush1.msra.mxu0 0.0
        %4032 = vmatprep.subr.mxu0 0.0
        %4033 = vmatpush1.msra.mxu0 0.0
        %4034 = vmatprep.subr.mxu0 0.0
        %4035 = vmatpush1.msra.mxu0 0.0
        %4036 = vmatprep.subr.mxu0 0.0
        %4037 = vmatpush1.msra.mxu0 0.0
        %4038 = vmatprep.mubr.f32.mxu0 0.0
        %4039 = vmatmul.mubr.f32.gmra.mrb[0].mxu0 %v862
        %v4040 = vpop.f32.mrb[0].mxu0
        %v4041 = vadd.f32 0.0, %v4040
        %v4042 = vpop.f32.mrb[0].mxu0
        %v4043 = vadd.f32 0.0, %v4042
        %4044 = vmatprep.mubr.f32.mxu0 0.0
        %4045 = vmatmul.mubr.f32.gmra.mrb[0].mxu0 %v865
        %v4046 = vpop.f32.mrb[0].mxu0
        %v4047 = vadd.f32 0.0, %v4046
        %v4048 = vpop.f32.mrb[0].mxu0
        %v4049 = vadd.f32 0.0, %v4048
        %4050 = vmatprep.mubr.f32.mxu0 0.0
        %4051 = vmatmul.mubr.f32.gmra.mrb[0].mxu0 %v868
        %v4052 = vpop.f32.mrb[0].mxu0
        %v4053 = vadd.f32 0.0, %v4052
        %v4054 = vpop.f32.mrb[0].mxu0
        %v4055 = vadd.f32 0.0, %v4054
        %4056 = vmatprep.mubr.f32.mxu0 0.0
        %4057 = vmatmul.mubr.f32.gmra.mrb[0].mxu0 %v871
        %v4058 = vpop.f32.mrb[0].mxu0
        %v4059 = vadd.f32 0.0, %v4058
        %v4060 = vpop.f32.mrb[0].mxu0
        %v4061 = vadd.f32 0.0, %v4060
        %4062 = vmatprep.mubr.f32.mxu0 0.0
        %4063 = vmatmul.mubr.f32.gmra.mrb[0].mxu0 %v874
        %v4064 = vpop.f32.mrb[0].mxu0
        %v4065 = vadd.f32 0.0, %v4064
        %v4066 = vpop.f32.mrb[0].mxu0
        %v4067 = vadd.f32 0.0, %v4066
        %4068 = vdwg.mxu0
        %4069 = vmatprep.subr.mxu0 %v3913
        %4070 = vmatpush1.msra.mxu0 %v3912
        %4071 = vmatprep.subr.mxu0 %v3917
        %4072 = vmatpush1.msra.mxu0 %v3916
        %4073 = vmatprep.subr.mxu0 %v3921
        %4074 = vmatpush1.msra.mxu0 %v3920
        %4075 = vmatprep.subr.mxu0 %v3925
        %4076 = vmatpush1.msra.mxu0 %v3924
        %4077 = vmatprep.subr.mxu0 %v3929
        %4078 = vmatpush1.msra.mxu0 %v3928
        %4079 = vmatprep.subr.mxu0 %v3933
        %4080 = vmatpush1.msra.mxu0 %v3932
        %4081 = vmatprep.subr.mxu0 %v3937
        %4082 = vmatpush1.msra.mxu0 %v3936
        %4083 = vmatprep.subr.mxu0 %v3941
        %4084 = vmatpush1.msra.mxu0 %v3940
        %4085 = vmatprep.subr.mxu0 %v3945
        %4086 = vmatpush1.msra.mxu0 %v3944
        %4087 = vmatprep.subr.mxu0 %v3949
        %4088 = vmatpush1.msra.mxu0 %v3948
        %4089 = vmatprep.subr.mxu0 %v3953
        %4090 = vmatpush1.msra.mxu0 %v3952
        %4091 = vmatprep.subr.mxu0 %v3957
        %4092 = vmatpush1.msra.mxu0 %v3956
        %4093 = vmatprep.subr.mxu0 %v3972
        %4094 = vmatpush1.msra.mxu0 %v3969
        %4095 = vmatprep.subr.mxu0 0.0
        %4096 = vmatpush1.msra.mxu0 0.0
        %4097 = vmatprep.subr.mxu0 0.0
        %4098 = vmatpush1.msra.mxu0 0.0
        %4099 = vmatprep.subr.mxu0 0.0
        %4100 = vmatpush1.msra.mxu0 0.0
        %4101 = vmatprep.subr.mxu0 0.0
        %4102 = vmatpush1.msra.mxu0 0.0
        %4103 = vmatprep.subr.mxu0 0.0
        %4104 = vmatpush1.msra.mxu0 0.0
        %4105 = vmatprep.subr.mxu0 0.0
        %4106 = vmatpush1.msra.mxu0 0.0
        %4107 = vmatprep.subr.mxu0 0.0
        %4108 = vmatpush1.msra.mxu0 0.0
        %4109 = vmatprep.subr.mxu0 0.0
        %4110 = vmatpush1.msra.mxu0 0.0
        %4111 = vmatprep.subr.mxu0 0.0
        %4112 = vmatpush1.msra.mxu0 0.0
        %4113 = vmatprep.subr.mxu0 0.0
        %4114 = vmatpush1.msra.mxu0 0.0
        %4115 = vmatprep.subr.mxu0 0.0
        %4116 = vmatpush1.msra.mxu0 0.0
        %4117 = vmatprep.subr.mxu0 0.0
        %4118 = vmatpush1.msra.mxu0 0.0
        %4119 = vmatprep.subr.mxu0 0.0
        %4120 = vmatpush1.msra.mxu0 0.0
        %4121 = vmatprep.subr.mxu0 0.0
        %4122 = vmatpush1.msra.mxu0 0.0
        %4123 = vmatprep.subr.mxu0 0.0
        %4124 = vmatpush1.msra.mxu0 0.0
        %4125 = vmatprep.subr.mxu0 0.0
        %4126 = vmatpush1.msra.mxu0 0.0
        %4127 = vmatprep.subr.mxu0 0.0
        %4128 = vmatpush1.msra.mxu0 0.0
        %4129 = vmatprep.subr.mxu0 0.0
        %4130 = vmatpush1.msra.mxu0 0.0
        %4131 = vmatprep.subr.mxu0 0.0
        %4132 = vmatpush1.msra.mxu0 0.0
        %4133 = vmatprep.mubr.f32.mxu0 0.0
        %4134 = vmatmul.mubr.f32.gmra.mrb[0].mxu0 %v862
        %v4135 = vpop.f32.mrb[0].mxu0
        %v4136 = vadd.f32 0.0, %v4135
        %v4137 = vpop.f32.mrb[0].mxu0
        %v4138 = vadd.f32 0.0, %v4137
        %4139 = vmatprep.mubr.f32.mxu0 0.0
        %4140 = vmatmul.mubr.f32.gmra.mrb[0].mxu0 %v865
        %v4141 = vpop.f32.mrb[0].mxu0
        %v4142 = vadd.f32 0.0, %v4141
        %v4143 = vpop.f32.mrb[0].mxu0
        %v4144 = vadd.f32 0.0, %v4143
        %4145 = vmatprep.mubr.f32.mxu0 0.0
        %4146 = vmatmul.mubr.f32.gmra.mrb[0].mxu0 %v868
        %v4147 = vpop.f32.mrb[0].mxu0
        %v4148 = vadd.f32 0.0, %v4147
        %v4149 = vpop.f32.mrb[0].mxu0
        %v4150 = vadd.f32 0.0, %v4149
        %4151 = vmatprep.mubr.f32.mxu0 0.0
        %4152 = vmatmul.mubr.f32.gmra.mrb[0].mxu0 %v871
        %v4153 = vpop.f32.mrb[0].mxu0
        %v4154 = vadd.f32 0.0, %v4153
        %v4155 = vpop.f32.mrb[0].mxu0
        %v4156 = vadd.f32 0.0, %v4155
        %4157 = vmatprep.mubr.f32.mxu0 0.0
        %4158 = vmatmul.mubr.f32.gmra.mrb[0].mxu0 %v874
        %v4159 = vpop.f32.mrb[0].mxu0
        %v4160 = vadd.f32 0.0, %v4159
        %v4161 = vpop.f32.mrb[0].mxu0
        %v4162 = vadd.f32 0.0, %v4161
        %4163 = vdwg.mxu0
        %v4164 = vmax.f32 %v4041, 0.0
        %v4165 = vmax.f32 %v4043, 0.0
        %v4166 = vmax.f32 %v4136, 0.0
        %v4167 = vmax.f32 %v4138, 0.0
        %v4168 = vmax.f32 %v4047, 0.0
        %v4169 = vmax.f32 %v4049, 0.0
        %v4170 = vmax.f32 %v4142, 0.0
        %v4171 = vmax.f32 %v4144, 0.0
        %v4172 = vmax.f32 %v4053, 0.0
        %v4173 = vmax.f32 %v4055, 0.0
        %v4174 = vmax.f32 %v4148, 0.0
        %v4175 = vmax.f32 %v4150, 0.0
        %v4176 = vmax.f32 %v4059, 0.0
        %v4177 = vmax.f32 %v4061, 0.0
        %v4178 = vmax.f32 %v4154, 0.0
        %v4179 = vmax.f32 %v4156, 0.0
        %v4180 = vmax.f32 %v4065, 0.0
        %v4181 = vmax.f32 %v4067, 0.0
        %v4182 = vmax.f32 %v4160, 0.0
        %v4183 = vmax.f32 %v4162, 0.0
        %v4184 = vmul.f32 %v1102, %v4164
        %v4185 = vmul.f32 %v1102, %v4165
        %v4186 = vmul.f32 %v1102, %v4166
        %v4187 = vmul.f32 %v1102, %v4167
        %v4188 = vmul.f32 %v1107, %v4168
        %v4189 = vmul.f32 %v1107, %v4169
        %v4190 = vmul.f32 %v1107, %v4170
        %v4191 = vmul.f32 %v1107, %v4171
        %v4192 = vmul.f32 %v1112, %v4172
        %v4193 = vmul.f32 %v1112, %v4173
        %v4194 = vmul.f32 %v1112, %v4174
        %v4195 = vmul.f32 %v1112, %v4175
        %v4196 = vmul.f32 %v1117, %v4176
        %v4197 = vmul.f32 %v1117, %v4177
        %v4198 = vmul.f32 %v1117, %v4178
        %v4199 = vmul.f32 %v1117, %v4179
        %v4200 = vmul.f32 %v1122, %v4180
        %v4201 = vmul.f32 %v1122, %v4181
        %v4202 = vmul.f32 %v1122, %v4182
        %v4203 = vmul.f32 %v1122, %v4183
        %v4204 = vadd.f32 %v4184, %v4188
        %v4205 = vadd.f32 %v4204, %v4192
        %v4206 = vadd.f32 %v4205, %v4196
        %v4207 = vadd.f32 %v4206, %v4200
        %v4208 = vrot.slane %v4207, 4
        %v4209 = vadd.f32 %v4207, %v4208
        %v4210 = vrot.slane %v4209, 2
        %v4211 = vadd.f32 %v4209, %v4210
        %v4212 = vrot.slane %v4211, 1
        %v4213 = vadd.f32 %v4211, %v4212
        %v4214 = vadd.f32 %v4185, %v4189
        %v4215 = vadd.f32 %v4214, %v4193
        %v4216 = vadd.f32 %v4215, %v4197
        %v4217 = vadd.f32 %v4216, %v4201
        %v4218 = vrot.slane %v4217, 4
        %v4219 = vadd.f32 %v4217, %v4218
        %v4220 = vrot.slane %v4219, 2
        %v4221 = vadd.f32 %v4219, %v4220
        %v4222 = vrot.slane %v4221, 1
        %v4223 = vadd.f32 %v4221, %v4222
        %v4224 = vadd.f32 %v4186, %v4190
        %v4225 = vadd.f32 %v4224, %v4194
        %v4226 = vadd.f32 %v4225, %v4198
        %v4227 = vadd.f32 %v4226, %v4202
        %v4228 = vrot.slane %v4227, 4
        %v4229 = vadd.f32 %v4227, %v4228
        %v4230 = vrot.slane %v4229, 2
        %v4231 = vadd.f32 %v4229, %v4230
        %v4232 = vrot.slane %v4231, 1
        %v4233 = vadd.f32 %v4231, %v4232
        %v4234 = vadd.f32 %v4187, %v4191
        %v4235 = vadd.f32 %v4234, %v4195
        %v4236 = vadd.f32 %v4235, %v4199
        %v4237 = vadd.f32 %v4236, %v4203
        %v4238 = vrot.slane %v4237, 4
        %v4239 = vadd.f32 %v4237, %v4238
        %v4240 = vrot.slane %v4239, 2
        %v4241 = vadd.f32 %v4239, %v4240
        %v4242 = vrot.slane %v4241, 1
        %v4243 = vadd.f32 %v4241, %v4242
        %v4244 = vadd.f32 %v4213, %v1192
        %v4245 = vadd.f32 %v4223, %v1192
        %v4246 = vadd.f32 %v4233, %v1192
        %v4247 = vadd.f32 %v4243, %v1192
        %v4252 = vcombine.low %v4244, %v4245
        %v4253 = vcombine.low %v4246, %v4247
        %v4255 = vunpack.c.l.s4 1966171168
        %v4256 = vunpack.c.0.s8 %v4255
        %v4257 = vlaneseq
        %v4258 = vshrl.u32 %v4257, 7
        %v4259 = vsub.s32 %v4256, %v4258
        %v4260 = vrot.slane %v4252, %v4259
        %v4262 = vunpack.c.l.s4 1966171168
        %v4263 = vunpack.c.0.s8 %v4262
        %v4264 = vlaneseq
        %v4265 = vshrl.u32 %v4264, 7
        %v4266 = vsub.s32 %v4263, %v4265
        %v4267 = vrot.slane %v4253, %v4266
        %v4268 = vcombine.low %v4260, %v4267
        %v4270 = vunpack.c.l.s4 1966171168
        %v4271 = vunpack.c.0.s8 %v4270
        %v4272 = vlaneseq
        %v4273 = vshrl.u32 %v4272, 7
        %v4274 = vsub.s32 %v4271, %v4273
        %v4275 = vrot.slane %v4268, %v4274
        %s4277 = scalar_lea.vmem %s272, 16 [#allocation3]
        %4278 = vst.msk [vmem:[%s4277] sm:$0xf] %vm1229, %v4275
        %s4279 = scalar_lea.vmem %s276, 20
        %v4280 = vld [vmem:[%s4279] sm:$0xf]
        %v4282 = vlaneseq
        %v4283 = vshrl.u32 %v4282, 7
        %v4284 = vsub.s32 0, %v4283
        %v4285 = vrot.slane %v4280, %v4284
        %v4286 = vlaneseq
        %v4287 = vshrl.u32 %v4286, 7
        %v4288 = vsub.s32 1, %v4287
        %v4289 = vrot.slane %v4280, %v4288
        %v4290 = vlaneseq
        %v4291 = vshrl.u32 %v4290, 7
        %v4292 = vsub.s32 2, %v4291
        %v4293 = vrot.slane %v4280, %v4292
        %v4294 = vlaneseq
        %v4295 = vshrl.u32 %v4294, 7
        %v4296 = vsub.s32 3, %v4295
        %v4297 = vrot.slane %v4280, %v4296
        %v4302 = vmul.f32 %v319, %v4285
        %v4303 = vmul.f32 %v319, %v4289
        %v4304 = vmul.f32 %v319, %v4293
        %v4305 = vmul.f32 %v319, %v4297
        %v4306 = vmul.f32 %v324, %v4285
        %v4307 = vmul.f32 %v324, %v4289
        %v4308 = vmul.f32 %v324, %v4293
        %v4309 = vmul.f32 %v324, %v4297
        %v4310 = vmul.f32 %v329, %v4285
        %v4311 = vmul.f32 %v329, %v4289
        %v4312 = vmul.f32 %v329, %v4293
        %v4313 = vmul.f32 %v329, %v4297
        %v4314 = vmul.f32 %v334, %v4285
        %v4315 = vmul.f32 %v334, %v4289
        %v4316 = vmul.f32 %v334, %v4293
        %v4317 = vmul.f32 %v334, %v4297
        %v4318 = vmul.f32 %v339, %v4285
        %v4319 = vmul.f32 %v339, %v4289
        %v4320 = vmul.f32 %v339, %v4293
        %v4321 = vmul.f32 %v339, %v4297
        %v4322 = vmul.f32 %v344, %v4285
        %v4323 = vmul.f32 %v344, %v4289
        %v4324 = vmul.f32 %v344, %v4293
        %v4325 = vmul.f32 %v344, %v4297
        %v4326 = vadd.f32 %v4302, %v394
        %v4327 = vadd.f32 %v4303, %v394
        %v4328 = vadd.f32 %v4304, %v394
        %v4329 = vadd.f32 %v4305, %v394
        %v4330 = vadd.f32 %v4306, %v399
        %v4331 = vadd.f32 %v4307, %v399
        %v4332 = vadd.f32 %v4308, %v399
        %v4333 = vadd.f32 %v4309, %v399
        %v4334 = vadd.f32 %v4310, %v404
        %v4335 = vadd.f32 %v4311, %v404
        %v4336 = vadd.f32 %v4312, %v404
        %v4337 = vadd.f32 %v4313, %v404
        %v4338 = vadd.f32 %v4314, %v409
        %v4339 = vadd.f32 %v4315, %v409
        %v4340 = vadd.f32 %v4316, %v409
        %v4341 = vadd.f32 %v4317, %v409
        %v4342 = vadd.f32 %v4318, %v414
        %v4343 = vadd.f32 %v4319, %v414
        %v4344 = vadd.f32 %v4320, %v414
        %v4345 = vadd.f32 %v4321, %v414
        %v4346 = vadd.f32 %v4322, %v419
        %v4347 = vadd.f32 %v4323, %v419
        %v4348 = vadd.f32 %v4324, %v419
        %v4349 = vadd.f32 %v4325, %v419
        %v4350 = vmax.f32 %v4326, 0.0
        %v4351 = vmax.f32 %v4327, 0.0
        %v4352 = vmax.f32 %v4328, 0.0
        %v4353 = vmax.f32 %v4329, 0.0
        %v4354 = vmax.f32 %v4330, 0.0
        %v4355 = vmax.f32 %v4331, 0.0
        %v4356 = vmax.f32 %v4332, 0.0
        %v4357 = vmax.f32 %v4333, 0.0
        %v4358 = vmax.f32 %v4334, 0.0
        %v4359 = vmax.f32 %v4335, 0.0
        %v4360 = vmax.f32 %v4336, 0.0
        %v4361 = vmax.f32 %v4337, 0.0
        %v4362 = vmax.f32 %v4338, 0.0
        %v4363 = vmax.f32 %v4339, 0.0
        %v4364 = vmax.f32 %v4340, 0.0
        %v4365 = vmax.f32 %v4341, 0.0
        %v4366 = vmax.f32 %v4342, 0.0
        %v4367 = vmax.f32 %v4343, 0.0
        %v4368 = vmax.f32 %v4344, 0.0
        %v4369 = vmax.f32 %v4345, 0.0
        %v4370 = vmax.f32 %v4346, 0.0
        %v4371 = vmax.f32 %v4347, 0.0
        %v4372 = vmax.f32 %v4348, 0.0
        %v4373 = vmax.f32 %v4349, 0.0
        %v4375 = vsel %vm509, %v4370, 0
        %v4378 = vsel %vm509, %v4371, 0
        %v4381 = vsel %vm509, %v4372, 0
        %v4384 = vsel %vm509, %v4373, 0
        %4386 = vmatprep.subr.mxu0 %v4351
        %4387 = vmatpush1.msra.mxu0 %v4350
        %4388 = vmatprep.subr.mxu0 %v4355
        %4389 = vmatpush1.msra.mxu0 %v4354
        %4390 = vmatprep.subr.mxu0 %v4359
        %4391 = vmatpush1.msra.mxu0 %v4358
        %4392 = vmatprep.subr.mxu0 %v4363
        %4393 = vmatpush1.msra.mxu0 %v4362
        %4394 = vmatprep.subr.mxu0 %v4367
        %4395 = vmatpush1.msra.mxu0 %v4366
        %4396 = vmatprep.subr.mxu0 %v4378
        %4397 = vmatpush1.msra.mxu0 %v4375
        %4398 = vmatprep.subr.mxu0 0.0
        %4399 = vmatpush1.msra.mxu0 0.0
        %4400 = vmatprep.subr.mxu0 0.0
        %4401 = vmatpush1.msra.mxu0 0.0
        %4402 = vmatprep.subr.mxu0 0.0
        %4403 = vmatpush1.msra.mxu0 0.0
        %4404 = vmatprep.subr.mxu0 0.0
        %4405 = vmatpush1.msra.mxu0 0.0
        %4406 = vmatprep.subr.mxu0 0.0
        %4407 = vmatpush1.msra.mxu0 0.0
        %4408 = vmatprep.subr.mxu0 0.0
        %4409 = vmatpush1.msra.mxu0 0.0
        %4410 = vmatprep.subr.mxu0 0.0
        %4411 = vmatpush1.msra.mxu0 0.0
        %4412 = vmatprep.subr.mxu0 0.0
        %4413 = vmatpush1.msra.mxu0 0.0
        %4414 = vmatprep.subr.mxu0 0.0
        %4415 = vmatpush1.msra.mxu0 0.0
        %4416 = vmatprep.subr.mxu0 0.0
        %4417 = vmatpush1.msra.mxu0 0.0
        %4418 = vmatprep.subr.mxu0 0.0
        %4419 = vmatpush1.msra.mxu0 0.0
        %4420 = vmatprep.subr.mxu0 0.0
        %4421 = vmatpush1.msra.mxu0 0.0
        %4422 = vmatprep.subr.mxu0 0.0
        %4423 = vmatpush1.msra.mxu0 0.0
        %4424 = vmatprep.subr.mxu0 0.0
        %4425 = vmatpush1.msra.mxu0 0.0
        %4426 = vmatprep.subr.mxu0 0.0
        %4427 = vmatpush1.msra.mxu0 0.0
        %4428 = vmatprep.subr.mxu0 0.0
        %4429 = vmatpush1.msra.mxu0 0.0
        %4430 = vmatprep.subr.mxu0 0.0
        %4431 = vmatpush1.msra.mxu0 0.0
        %4432 = vmatprep.subr.mxu0 0.0
        %4433 = vmatpush1.msra.mxu0 0.0
        %4434 = vmatprep.subr.mxu0 0.0
        %4435 = vmatpush1.msra.mxu0 0.0
        %4436 = vmatprep.subr.mxu0 0.0
        %4437 = vmatpush1.msra.mxu0 0.0
        %4438 = vmatprep.subr.mxu0 0.0
        %4439 = vmatpush1.msra.mxu0 0.0
        %4440 = vmatprep.subr.mxu0 0.0
        %4441 = vmatpush1.msra.mxu0 0.0
        %4442 = vmatprep.subr.mxu0 0.0
        %4443 = vmatpush1.msra.mxu0 0.0
        %4444 = vmatprep.subr.mxu0 0.0
        %4445 = vmatpush1.msra.mxu0 0.0
        %4446 = vmatprep.subr.mxu0 0.0
        %4447 = vmatpush1.msra.mxu0 0.0
        %4448 = vmatprep.subr.mxu0 0.0
        %4449 = vmatpush1.msra.mxu0 0.0
        %4450 = vmatprep.mubr.f32.mxu0 0.0
        %4451 = vmatmul.mubr.f32.gmra.mrb[0].mxu0 %v471
        %v4452 = vpop.f32.mrb[0].mxu0
        %v4453 = vadd.f32 0.0, %v4452
        %v4454 = vpop.f32.mrb[0].mxu0
        %v4455 = vadd.f32 0.0, %v4454
        %4456 = vmatprep.mubr.f32.mxu0 0.0
        %4457 = vmatmul.mubr.f32.gmra.mrb[0].mxu0 %v474
        %v4458 = vpop.f32.mrb[0].mxu0
        %v4459 = vadd.f32 0.0, %v4458
        %v4460 = vpop.f32.mrb[0].mxu0
        %v4461 = vadd.f32 0.0, %v4460
        %4462 = vmatprep.mubr.f32.mxu0 0.0
        %4463 = vmatmul.mubr.f32.gmra.mrb[0].mxu0 %v477
        %v4464 = vpop.f32.mrb[0].mxu0
        %v4465 = vadd.f32 0.0, %v4464
        %v4466 = vpop.f32.mrb[0].mxu0
        %v4467 = vadd.f32 0.0, %v4466
        %4468 = vmatprep.mubr.f32.mxu0 0.0
        %4469 = vmatmul.mubr.f32.gmra.mrb[0].mxu0 %v480
        %v4470 = vpop.f32.mrb[0].mxu0
        %v4471 = vadd.f32 0.0, %v4470
        %v4472 = vpop.f32.mrb[0].mxu0
        %v4473 = vadd.f32 0.0, %v4472
        %4474 = vmatprep.mubr.f32.mxu0 0.0
        %4475 = vmatmul.mubr.f32.gmra.mrb[0].mxu0 %v483
        %v4476 = vpop.f32.mrb[0].mxu0
        %v4477 = vadd.f32 0.0, %v4476
        %v4478 = vpop.f32.mrb[0].mxu0
        %v4479 = vadd.f32 0.0, %v4478
        %4480 = vmatprep.mubr.f32.mxu0 0.0
        %4481 = vmatmul.mubr.f32.gmra.mrb[0].mxu0 %v486
        %v4482 = vpop.f32.mrb[0].mxu0
        %v4483 = vadd.f32 0.0, %v4482
        %v4484 = vpop.f32.mrb[0].mxu0
        %v4485 = vadd.f32 0.0, %v4484
        %4486 = vmatprep.mubr.f32.mxu0 0.0
        %4487 = vmatmul.mubr.f32.gmra.mrb[0].mxu0 %v489
        %v4488 = vpop.f32.mrb[0].mxu0
        %v4489 = vadd.f32 0.0, %v4488
        %v4490 = vpop.f32.mrb[0].mxu0
        %v4491 = vadd.f32 0.0, %v4490
        %4492 = vmatprep.mubr.f32.mxu0 0.0
        %4493 = vmatmul.mubr.f32.gmra.mrb[0].mxu0 %v492
        %v4494 = vpop.f32.mrb[0].mxu0
        %v4495 = vadd.f32 0.0, %v4494
        %v4496 = vpop.f32.mrb[0].mxu0
        %v4497 = vadd.f32 0.0, %v4496
        %4498 = vmatprep.mubr.f32.mxu0 0.0
        %4499 = vmatmul.mubr.f32.gmra.mrb[0].mxu0 %v495
        %v4500 = vpop.f32.mrb[0].mxu0
        %v4501 = vadd.f32 0.0, %v4500
        %v4502 = vpop.f32.mrb[0].mxu0
        %v4503 = vadd.f32 0.0, %v4502
        %4504 = vmatprep.mubr.f32.mxu0 0.0
        %4505 = vmatmul.mubr.f32.gmra.mrb[0].mxu0 %v498
        %v4506 = vpop.f32.mrb[0].mxu0
        %v4507 = vadd.f32 0.0, %v4506
        %v4508 = vpop.f32.mrb[0].mxu0
        %v4509 = vadd.f32 0.0, %v4508
        %4510 = vmatprep.mubr.f32.mxu0 0.0
        %4511 = vmatmul.mubr.f32.gmra.mrb[0].mxu0 %v501
        %v4512 = vpop.f32.mrb[0].mxu0
        %v4513 = vadd.f32 0.0, %v4512
        %v4514 = vpop.f32.mrb[0].mxu0
        %v4515 = vadd.f32 0.0, %v4514
        %4516 = vmatprep.mubr.f32.mxu0 0.0
        %4517 = vmatmul.mubr.f32.gmra.mrb[0].mxu0 %v504
        %v4518 = vpop.f32.mrb[0].mxu0
        %v4519 = vadd.f32 0.0, %v4518
        %v4520 = vpop.f32.mrb[0].mxu0
        %v4521 = vadd.f32 0.0, %v4520
        %4522 = vmatprep.mubr.f32.mxu0 0.0
        %4523 = vmatmul.mubr.f32.gmra.mrb[0].mxu0 %v507
        %v4524 = vpop.f32.mrb[0].mxu0
        %v4525 = vadd.f32 0.0, %v4524
        %v4526 = vpop.f32.mrb[0].mxu0
        %v4527 = vadd.f32 0.0, %v4526
        %4528 = vdwg.mxu0
        %4529 = vmatprep.subr.mxu0 %v4353
        %4530 = vmatpush1.msra.mxu0 %v4352
        %4531 = vmatprep.subr.mxu0 %v4357
        %4532 = vmatpush1.msra.mxu0 %v4356
        %4533 = vmatprep.subr.mxu0 %v4361
        %4534 = vmatpush1.msra.mxu0 %v4360
        %4535 = vmatprep.subr.mxu0 %v4365
        %4536 = vmatpush1.msra.mxu0 %v4364
        %4537 = vmatprep.subr.mxu0 %v4369
        %4538 = vmatpush1.msra.mxu0 %v4368
        %4539 = vmatprep.subr.mxu0 %v4384
        %4540 = vmatpush1.msra.mxu0 %v4381
        %4541 = vmatprep.subr.mxu0 0.0
        %4542 = vmatpush1.msra.mxu0 0.0
        %4543 = vmatprep.subr.mxu0 0.0
        %4544 = vmatpush1.msra.mxu0 0.0
        %4545 = vmatprep.subr.mxu0 0.0
        %4546 = vmatpush1.msra.mxu0 0.0
        %4547 = vmatprep.subr.mxu0 0.0
        %4548 = vmatpush1.msra.mxu0 0.0
        %4549 = vmatprep.subr.mxu0 0.0
        %4550 = vmatpush1.msra.mxu0 0.0
        %4551 = vmatprep.subr.mxu0 0.0
        %4552 = vmatpush1.msra.mxu0 0.0
        %4553 = vmatprep.subr.mxu0 0.0
        %4554 = vmatpush1.msra.mxu0 0.0
        %4555 = vmatprep.subr.mxu0 0.0
        %4556 = vmatpush1.msra.mxu0 0.0
        %4557 = vmatprep.subr.mxu0 0.0
        %4558 = vmatpush1.msra.mxu0 0.0
        %4559 = vmatprep.subr.mxu0 0.0
        %4560 = vmatpush1.msra.mxu0 0.0
        %4561 = vmatprep.subr.mxu0 0.0
        %4562 = vmatpush1.msra.mxu0 0.0
        %4563 = vmatprep.subr.mxu0 0.0
        %4564 = vmatpush1.msra.mxu0 0.0
        %4565 = vmatprep.subr.mxu0 0.0
        %4566 = vmatpush1.msra.mxu0 0.0
        %4567 = vmatprep.subr.mxu0 0.0
        %4568 = vmatpush1.msra.mxu0 0.0
        %4569 = vmatprep.subr.mxu0 0.0
        %4570 = vmatpush1.msra.mxu0 0.0
        %4571 = vmatprep.subr.mxu0 0.0
        %4572 = vmatpush1.msra.mxu0 0.0
        %4573 = vmatprep.subr.mxu0 0.0
        %4574 = vmatpush1.msra.mxu0 0.0
        %4575 = vmatprep.subr.mxu0 0.0
        %4576 = vmatpush1.msra.mxu0 0.0
        %4577 = vmatprep.subr.mxu0 0.0
        %4578 = vmatpush1.msra.mxu0 0.0
        %4579 = vmatprep.subr.mxu0 0.0
        %4580 = vmatpush1.msra.mxu0 0.0
        %4581 = vmatprep.subr.mxu0 0.0
        %4582 = vmatpush1.msra.mxu0 0.0
        %4583 = vmatprep.subr.mxu0 0.0
        %4584 = vmatpush1.msra.mxu0 0.0
        %4585 = vmatprep.subr.mxu0 0.0
        %4586 = vmatpush1.msra.mxu0 0.0
        %4587 = vmatprep.subr.mxu0 0.0
        %4588 = vmatpush1.msra.mxu0 0.0
        %4589 = vmatprep.subr.mxu0 0.0
        %4590 = vmatpush1.msra.mxu0 0.0
        %4591 = vmatprep.subr.mxu0 0.0
        %4592 = vmatpush1.msra.mxu0 0.0
        %4593 = vmatprep.mubr.f32.mxu0 0.0
        %4594 = vmatmul.mubr.f32.gmra.mrb[0].mxu0 %v471
        %v4595 = vpop.f32.mrb[0].mxu0
        %v4596 = vadd.f32 0.0, %v4595
        %v4597 = vpop.f32.mrb[0].mxu0
        %v4598 = vadd.f32 0.0, %v4597
        %4599 = vmatprep.mubr.f32.mxu0 0.0
        %4600 = vmatmul.mubr.f32.gmra.mrb[0].mxu0 %v474
        %v4601 = vpop.f32.mrb[0].mxu0
        %v4602 = vadd.f32 0.0, %v4601
        %v4603 = vpop.f32.mrb[0].mxu0
        %v4604 = vadd.f32 0.0, %v4603
        %4605 = vmatprep.mubr.f32.mxu0 0.0
        %4606 = vmatmul.mubr.f32.gmra.mrb[0].mxu0 %v477
        %v4607 = vpop.f32.mrb[0].mxu0
        %v4608 = vadd.f32 0.0, %v4607
        %v4609 = vpop.f32.mrb[0].mxu0
        %v4610 = vadd.f32 0.0, %v4609
        %4611 = vmatprep.mubr.f32.mxu0 0.0
        %4612 = vmatmul.mubr.f32.gmra.mrb[0].mxu0 %v480
        %v4613 = vpop.f32.mrb[0].mxu0
        %v4614 = vadd.f32 0.0, %v4613
        %v4615 = vpop.f32.mrb[0].mxu0
        %v4616 = vadd.f32 0.0, %v4615
        %4617 = vmatprep.mubr.f32.mxu0 0.0
        %4618 = vmatmul.mubr.f32.gmra.mrb[0].mxu0 %v483
        %v4619 = vpop.f32.mrb[0].mxu0
        %v4620 = vadd.f32 0.0, %v4619
        %v4621 = vpop.f32.mrb[0].mxu0
        %v4622 = vadd.f32 0.0, %v4621
        %4623 = vmatprep.mubr.f32.mxu0 0.0
        %4624 = vmatmul.mubr.f32.gmra.mrb[0].mxu0 %v486
        %v4625 = vpop.f32.mrb[0].mxu0
        %v4626 = vadd.f32 0.0, %v4625
        %v4627 = vpop.f32.mrb[0].mxu0
        %v4628 = vadd.f32 0.0, %v4627
        %4629 = vmatprep.mubr.f32.mxu0 0.0
        %4630 = vmatmul.mubr.f32.gmra.mrb[0].mxu0 %v489
        %v4631 = vpop.f32.mrb[0].mxu0
        %v4632 = vadd.f32 0.0, %v4631
        %v4633 = vpop.f32.mrb[0].mxu0
        %v4634 = vadd.f32 0.0, %v4633
        %4635 = vmatprep.mubr.f32.mxu0 0.0
        %4636 = vmatmul.mubr.f32.gmra.mrb[0].mxu0 %v492
        %v4637 = vpop.f32.mrb[0].mxu0
        %v4638 = vadd.f32 0.0, %v4637
        %v4639 = vpop.f32.mrb[0].mxu0
        %v4640 = vadd.f32 0.0, %v4639
        %4641 = vmatprep.mubr.f32.mxu0 0.0
        %4642 = vmatmul.mubr.f32.gmra.mrb[0].mxu0 %v495
        %v4643 = vpop.f32.mrb[0].mxu0
        %v4644 = vadd.f32 0.0, %v4643
        %v4645 = vpop.f32.mrb[0].mxu0
        %v4646 = vadd.f32 0.0, %v4645
        %4647 = vmatprep.mubr.f32.mxu0 0.0
        %4648 = vmatmul.mubr.f32.gmra.mrb[0].mxu0 %v498
        %v4649 = vpop.f32.mrb[0].mxu0
        %v4650 = vadd.f32 0.0, %v4649
        %v4651 = vpop.f32.mrb[0].mxu0
        %v4652 = vadd.f32 0.0, %v4651
        %4653 = vmatprep.mubr.f32.mxu0 0.0
        %4654 = vmatmul.mubr.f32.gmra.mrb[0].mxu0 %v501
        %v4655 = vpop.f32.mrb[0].mxu0
        %v4656 = vadd.f32 0.0, %v4655
        %v4657 = vpop.f32.mrb[0].mxu0
        %v4658 = vadd.f32 0.0, %v4657
        %4659 = vmatprep.mubr.f32.mxu0 0.0
        %4660 = vmatmul.mubr.f32.gmra.mrb[0].mxu0 %v504
        %v4661 = vpop.f32.mrb[0].mxu0
        %v4662 = vadd.f32 0.0, %v4661
        %v4663 = vpop.f32.mrb[0].mxu0
        %v4664 = vadd.f32 0.0, %v4663
        %4665 = vmatprep.mubr.f32.mxu0 0.0
        %4666 = vmatmul.mubr.f32.gmra.mrb[0].mxu0 %v507
        %v4667 = vpop.f32.mrb[0].mxu0
        %v4668 = vadd.f32 0.0, %v4667
        %v4669 = vpop.f32.mrb[0].mxu0
        %v4670 = vadd.f32 0.0, %v4669
        %4671 = vdwg.mxu0
        %v4672 = vmax.f32 %v4453, 0.0
        %v4673 = vmax.f32 %v4455, 0.0
        %v4674 = vmax.f32 %v4596, 0.0
        %v4675 = vmax.f32 %v4598, 0.0
        %v4676 = vmax.f32 %v4459, 0.0
        %v4677 = vmax.f32 %v4461, 0.0
        %v4678 = vmax.f32 %v4602, 0.0
        %v4679 = vmax.f32 %v4604, 0.0
        %v4680 = vmax.f32 %v4465, 0.0
        %v4681 = vmax.f32 %v4467, 0.0
        %v4682 = vmax.f32 %v4608, 0.0
        %v4683 = vmax.f32 %v4610, 0.0
        %v4684 = vmax.f32 %v4471, 0.0
        %v4685 = vmax.f32 %v4473, 0.0
        %v4686 = vmax.f32 %v4614, 0.0
        %v4687 = vmax.f32 %v4616, 0.0
        %v4688 = vmax.f32 %v4477, 0.0
        %v4689 = vmax.f32 %v4479, 0.0
        %v4690 = vmax.f32 %v4620, 0.0
        %v4691 = vmax.f32 %v4622, 0.0
        %v4692 = vmax.f32 %v4483, 0.0
        %v4693 = vmax.f32 %v4485, 0.0
        %v4694 = vmax.f32 %v4626, 0.0
        %v4695 = vmax.f32 %v4628, 0.0
        %v4696 = vmax.f32 %v4489, 0.0
        %v4697 = vmax.f32 %v4491, 0.0
        %v4698 = vmax.f32 %v4632, 0.0
        %v4699 = vmax.f32 %v4634, 0.0
        %v4700 = vmax.f32 %v4495, 0.0
        %v4701 = vmax.f32 %v4497, 0.0
        %v4702 = vmax.f32 %v4638, 0.0
        %v4703 = vmax.f32 %v4640, 0.0
        %v4704 = vmax.f32 %v4501, 0.0
        %v4705 = vmax.f32 %v4503, 0.0
        %v4706 = vmax.f32 %v4644, 0.0
        %v4707 = vmax.f32 %v4646, 0.0
        %v4708 = vmax.f32 %v4507, 0.0
        %v4709 = vmax.f32 %v4509, 0.0
        %v4710 = vmax.f32 %v4650, 0.0
        %v4711 = vmax.f32 %v4652, 0.0
        %v4712 = vmax.f32 %v4513, 0.0
        %v4713 = vmax.f32 %v4515, 0.0
        %v4714 = vmax.f32 %v4656, 0.0
        %v4715 = vmax.f32 %v4658, 0.0
        %v4716 = vmax.f32 %v4519, 0.0
        %v4717 = vmax.f32 %v4521, 0.0
        %v4718 = vmax.f32 %v4662, 0.0
        %v4719 = vmax.f32 %v4664, 0.0
        %v4720 = vmax.f32 %v4525, 0.0
        %v4721 = vmax.f32 %v4527, 0.0
        %v4722 = vmax.f32 %v4668, 0.0
        %v4723 = vmax.f32 %v4670, 0.0
        %v4725 = vsel %vm876, %v4720, 0
        %v4728 = vsel %vm876, %v4721, 0
        %v4731 = vsel %vm876, %v4722, 0
        %v4734 = vsel %vm876, %v4723, 0
        %4736 = vmatprep.subr.mxu0 %v4673
        %4737 = vmatpush1.msra.mxu0 %v4672
        %4738 = vmatprep.subr.mxu0 %v4677
        %4739 = vmatpush1.msra.mxu0 %v4676
        %4740 = vmatprep.subr.mxu0 %v4681
        %4741 = vmatpush1.msra.mxu0 %v4680
        %4742 = vmatprep.subr.mxu0 %v4685
        %4743 = vmatpush1.msra.mxu0 %v4684
        %4744 = vmatprep.subr.mxu0 %v4689
        %4745 = vmatpush1.msra.mxu0 %v4688
        %4746 = vmatprep.subr.mxu0 %v4693
        %4747 = vmatpush1.msra.mxu0 %v4692
        %4748 = vmatprep.subr.mxu0 %v4697
        %4749 = vmatpush1.msra.mxu0 %v4696
        %4750 = vmatprep.subr.mxu0 %v4701
        %4751 = vmatpush1.msra.mxu0 %v4700
        %4752 = vmatprep.subr.mxu0 %v4705
        %4753 = vmatpush1.msra.mxu0 %v4704
        %4754 = vmatprep.subr.mxu0 %v4709
        %4755 = vmatpush1.msra.mxu0 %v4708
        %4756 = vmatprep.subr.mxu0 %v4713
        %4757 = vmatpush1.msra.mxu0 %v4712
        %4758 = vmatprep.subr.mxu0 %v4717
        %4759 = vmatpush1.msra.mxu0 %v4716
        %4760 = vmatprep.subr.mxu0 %v4728
        %4761 = vmatpush1.msra.mxu0 %v4725
        %4762 = vmatprep.subr.mxu0 0.0
        %4763 = vmatpush1.msra.mxu0 0.0
        %4764 = vmatprep.subr.mxu0 0.0
        %4765 = vmatpush1.msra.mxu0 0.0
        %4766 = vmatprep.subr.mxu0 0.0
        %4767 = vmatpush1.msra.mxu0 0.0
        %4768 = vmatprep.subr.mxu0 0.0
        %4769 = vmatpush1.msra.mxu0 0.0
        %4770 = vmatprep.subr.mxu0 0.0
        %4771 = vmatpush1.msra.mxu0 0.0
        %4772 = vmatprep.subr.mxu0 0.0
        %4773 = vmatpush1.msra.mxu0 0.0
        %4774 = vmatprep.subr.mxu0 0.0
        %4775 = vmatpush1.msra.mxu0 0.0
        %4776 = vmatprep.subr.mxu0 0.0
        %4777 = vmatpush1.msra.mxu0 0.0
        %4778 = vmatprep.subr.mxu0 0.0
        %4779 = vmatpush1.msra.mxu0 0.0
        %4780 = vmatprep.subr.mxu0 0.0
        %4781 = vmatpush1.msra.mxu0 0.0
        %4782 = vmatprep.subr.mxu0 0.0
        %4783 = vmatpush1.msra.mxu0 0.0
        %4784 = vmatprep.subr.mxu0 0.0
        %4785 = vmatpush1.msra.mxu0 0.0
        %4786 = vmatprep.subr.mxu0 0.0
        %4787 = vmatpush1.msra.mxu0 0.0
        %4788 = vmatprep.subr.mxu0 0.0
        %4789 = vmatpush1.msra.mxu0 0.0
        %4790 = vmatprep.subr.mxu0 0.0
        %4791 = vmatpush1.msra.mxu0 0.0
        %4792 = vmatprep.subr.mxu0 0.0
        %4793 = vmatpush1.msra.mxu0 0.0
        %4794 = vmatprep.subr.mxu0 0.0
        %4795 = vmatpush1.msra.mxu0 0.0
        %4796 = vmatprep.subr.mxu0 0.0
        %4797 = vmatpush1.msra.mxu0 0.0
        %4798 = vmatprep.subr.mxu0 0.0
        %4799 = vmatpush1.msra.mxu0 0.0
        %4800 = vmatprep.mubr.f32.mxu0 0.0
        %4801 = vmatmul.mubr.f32.gmra.mrb[0].mxu0 %v862
        %v4802 = vpop.f32.mrb[0].mxu0
        %v4803 = vadd.f32 0.0, %v4802
        %v4804 = vpop.f32.mrb[0].mxu0
        %v4805 = vadd.f32 0.0, %v4804
        %4806 = vmatprep.mubr.f32.mxu0 0.0
        %4807 = vmatmul.mubr.f32.gmra.mrb[0].mxu0 %v865
        %v4808 = vpop.f32.mrb[0].mxu0
        %v4809 = vadd.f32 0.0, %v4808
        %v4810 = vpop.f32.mrb[0].mxu0
        %v4811 = vadd.f32 0.0, %v4810
        %4812 = vmatprep.mubr.f32.mxu0 0.0
        %4813 = vmatmul.mubr.f32.gmra.mrb[0].mxu0 %v868
        %v4814 = vpop.f32.mrb[0].mxu0
        %v4815 = vadd.f32 0.0, %v4814
        %v4816 = vpop.f32.mrb[0].mxu0
        %v4817 = vadd.f32 0.0, %v4816
        %4818 = vmatprep.mubr.f32.mxu0 0.0
        %4819 = vmatmul.mubr.f32.gmra.mrb[0].mxu0 %v871
        %v4820 = vpop.f32.mrb[0].mxu0
        %v4821 = vadd.f32 0.0, %v4820
        %v4822 = vpop.f32.mrb[0].mxu0
        %v4823 = vadd.f32 0.0, %v4822
        %4824 = vmatprep.mubr.f32.mxu0 0.0
        %4825 = vmatmul.mubr.f32.gmra.mrb[0].mxu0 %v874
        %v4826 = vpop.f32.mrb[0].mxu0
        %v4827 = vadd.f32 0.0, %v4826
        %v4828 = vpop.f32.mrb[0].mxu0
        %v4829 = vadd.f32 0.0, %v4828
        %4830 = vdwg.mxu0
        %4831 = vmatprep.subr.mxu0 %v4675
        %4832 = vmatpush1.msra.mxu0 %v4674
        %4833 = vmatprep.subr.mxu0 %v4679
        %4834 = vmatpush1.msra.mxu0 %v4678
        %4835 = vmatprep.subr.mxu0 %v4683
        %4836 = vmatpush1.msra.mxu0 %v4682
        %4837 = vmatprep.subr.mxu0 %v4687
        %4838 = vmatpush1.msra.mxu0 %v4686
        %4839 = vmatprep.subr.mxu0 %v4691
        %4840 = vmatpush1.msra.mxu0 %v4690
        %4841 = vmatprep.subr.mxu0 %v4695
        %4842 = vmatpush1.msra.mxu0 %v4694
        %4843 = vmatprep.subr.mxu0 %v4699
        %4844 = vmatpush1.msra.mxu0 %v4698
        %4845 = vmatprep.subr.mxu0 %v4703
        %4846 = vmatpush1.msra.mxu0 %v4702
        %4847 = vmatprep.subr.mxu0 %v4707
        %4848 = vmatpush1.msra.mxu0 %v4706
        %4849 = vmatprep.subr.mxu0 %v4711
        %4850 = vmatpush1.msra.mxu0 %v4710
        %4851 = vmatprep.subr.mxu0 %v4715
        %4852 = vmatpush1.msra.mxu0 %v4714
        %4853 = vmatprep.subr.mxu0 %v4719
        %4854 = vmatpush1.msra.mxu0 %v4718
        %4855 = vmatprep.subr.mxu0 %v4734
        %4856 = vmatpush1.msra.mxu0 %v4731
        %4857 = vmatprep.subr.mxu0 0.0
        %4858 = vmatpush1.msra.mxu0 0.0
        %4859 = vmatprep.subr.mxu0 0.0
        %4860 = vmatpush1.msra.mxu0 0.0
        %4861 = vmatprep.subr.mxu0 0.0
        %4862 = vmatpush1.msra.mxu0 0.0
        %4863 = vmatprep.subr.mxu0 0.0
        %4864 = vmatpush1.msra.mxu0 0.0
        %4865 = vmatprep.subr.mxu0 0.0
        %4866 = vmatpush1.msra.mxu0 0.0
        %4867 = vmatprep.subr.mxu0 0.0
        %4868 = vmatpush1.msra.mxu0 0.0
        %4869 = vmatprep.subr.mxu0 0.0
        %4870 = vmatpush1.msra.mxu0 0.0
        %4871 = vmatprep.subr.mxu0 0.0
        %4872 = vmatpush1.msra.mxu0 0.0
        %4873 = vmatprep.subr.mxu0 0.0
        %4874 = vmatpush1.msra.mxu0 0.0
        %4875 = vmatprep.subr.mxu0 0.0
        %4876 = vmatpush1.msra.mxu0 0.0
        %4877 = vmatprep.subr.mxu0 0.0
        %4878 = vmatpush1.msra.mxu0 0.0
        %4879 = vmatprep.subr.mxu0 0.0
        %4880 = vmatpush1.msra.mxu0 0.0
        %4881 = vmatprep.subr.mxu0 0.0
        %4882 = vmatpush1.msra.mxu0 0.0
        %4883 = vmatprep.subr.mxu0 0.0
        %4884 = vmatpush1.msra.mxu0 0.0
        %4885 = vmatprep.subr.mxu0 0.0
        %4886 = vmatpush1.msra.mxu0 0.0
        %4887 = vmatprep.subr.mxu0 0.0
        %4888 = vmatpush1.msra.mxu0 0.0
        %4889 = vmatprep.subr.mxu0 0.0
        %4890 = vmatpush1.msra.mxu0 0.0
        %4891 = vmatprep.subr.mxu0 0.0
        %4892 = vmatpush1.msra.mxu0 0.0
        %4893 = vmatprep.subr.mxu0 0.0
        %4894 = vmatpush1.msra.mxu0 0.0
        %4895 = vmatprep.mubr.f32.mxu0 0.0
        %4896 = vmatmul.mubr.f32.gmra.mrb[0].mxu0 %v862
        %v4897 = vpop.f32.mrb[0].mxu0
        %v4898 = vadd.f32 0.0, %v4897
        %v4899 = vpop.f32.mrb[0].mxu0
        %v4900 = vadd.f32 0.0, %v4899
        %4901 = vmatprep.mubr.f32.mxu0 0.0
        %4902 = vmatmul.mubr.f32.gmra.mrb[0].mxu0 %v865
        %v4903 = vpop.f32.mrb[0].mxu0
        %v4904 = vadd.f32 0.0, %v4903
        %v4905 = vpop.f32.mrb[0].mxu0
        %v4906 = vadd.f32 0.0, %v4905
        %4907 = vmatprep.mubr.f32.mxu0 0.0
        %4908 = vmatmul.mubr.f32.gmra.mrb[0].mxu0 %v868
        %v4909 = vpop.f32.mrb[0].mxu0
        %v4910 = vadd.f32 0.0, %v4909
        %v4911 = vpop.f32.mrb[0].mxu0
        %v4912 = vadd.f32 0.0, %v4911
        %4913 = vmatprep.mubr.f32.mxu0 0.0
        %4914 = vmatmul.mubr.f32.gmra.mrb[0].mxu0 %v871
        %v4915 = vpop.f32.mrb[0].mxu0
        %v4916 = vadd.f32 0.0, %v4915
        %v4917 = vpop.f32.mrb[0].mxu0
        %v4918 = vadd.f32 0.0, %v4917
        %4919 = vmatprep.mubr.f32.mxu0 0.0
        %4920 = vmatmul.mubr.f32.gmra.mrb[0].mxu0 %v874
        %v4921 = vpop.f32.mrb[0].mxu0
        %v4922 = vadd.f32 0.0, %v4921
        %v4923 = vpop.f32.mrb[0].mxu0
        %v4924 = vadd.f32 0.0, %v4923
        %4925 = vdwg.mxu0
        %v4926 = vmax.f32 %v4803, 0.0
        %v4927 = vmax.f32 %v4805, 0.0
        %v4928 = vmax.f32 %v4898, 0.0
        %v4929 = vmax.f32 %v4900, 0.0
        %v4930 = vmax.f32 %v4809, 0.0
        %v4931 = vmax.f32 %v4811, 0.0
        %v4932 = vmax.f32 %v4904, 0.0
        %v4933 = vmax.f32 %v4906, 0.0
        %v4934 = vmax.f32 %v4815, 0.0
        %v4935 = vmax.f32 %v4817, 0.0
        %v4936 = vmax.f32 %v4910, 0.0
        %v4937 = vmax.f32 %v4912, 0.0
        %v4938 = vmax.f32 %v4821, 0.0
        %v4939 = vmax.f32 %v4823, 0.0
        %v4940 = vmax.f32 %v4916, 0.0
        %v4941 = vmax.f32 %v4918, 0.0
        %v4942 = vmax.f32 %v4827, 0.0
        %v4943 = vmax.f32 %v4829, 0.0
        %v4944 = vmax.f32 %v4922, 0.0
        %v4945 = vmax.f32 %v4924, 0.0
        %v4946 = vmul.f32 %v1102, %v4926
        %v4947 = vmul.f32 %v1102, %v4927
        %v4948 = vmul.f32 %v1102, %v4928
        %v4949 = vmul.f32 %v1102, %v4929
        %v4950 = vmul.f32 %v1107, %v4930
        %v4951 = vmul.f32 %v1107, %v4931
        %v4952 = vmul.f32 %v1107, %v4932
        %v4953 = vmul.f32 %v1107, %v4933
        %v4954 = vmul.f32 %v1112, %v4934
        %v4955 = vmul.f32 %v1112, %v4935
        %v4956 = vmul.f32 %v1112, %v4936
        %v4957 = vmul.f32 %v1112, %v4937
        %v4958 = vmul.f32 %v1117, %v4938
        %v4959 = vmul.f32 %v1117, %v4939
        %v4960 = vmul.f32 %v1117, %v4940
        %v4961 = vmul.f32 %v1117, %v4941
        %v4962 = vmul.f32 %v1122, %v4942
        %v4963 = vmul.f32 %v1122, %v4943
        %v4964 = vmul.f32 %v1122, %v4944
        %v4965 = vmul.f32 %v1122, %v4945
        %v4966 = vadd.f32 %v4946, %v4950
        %v4967 = vadd.f32 %v4966, %v4954
        %v4968 = vadd.f32 %v4967, %v4958
        %v4969 = vadd.f32 %v4968, %v4962
        %v4970 = vrot.slane %v4969, 4
        %v4971 = vadd.f32 %v4969, %v4970
        %v4972 = vrot.slane %v4971, 2
        %v4973 = vadd.f32 %v4971, %v4972
        %v4974 = vrot.slane %v4973, 1
        %v4975 = vadd.f32 %v4973, %v4974
        %v4976 = vadd.f32 %v4947, %v4951
        %v4977 = vadd.f32 %v4976, %v4955
        %v4978 = vadd.f32 %v4977, %v4959
        %v4979 = vadd.f32 %v4978, %v4963
        %v4980 = vrot.slane %v4979, 4
        %v4981 = vadd.f32 %v4979, %v4980
        %v4982 = vrot.slane %v4981, 2
        %v4983 = vadd.f32 %v4981, %v4982
        %v4984 = vrot.slane %v4983, 1
        %v4985 = vadd.f32 %v4983, %v4984
        %v4986 = vadd.f32 %v4948, %v4952
        %v4987 = vadd.f32 %v4986, %v4956
        %v4988 = vadd.f32 %v4987, %v4960
        %v4989 = vadd.f32 %v4988, %v4964
        %v4990 = vrot.slane %v4989, 4
        %v4991 = vadd.f32 %v4989, %v4990
        %v4992 = vrot.slane %v4991, 2
        %v4993 = vadd.f32 %v4991, %v4992
        %v4994 = vrot.slane %v4993, 1
        %v4995 = vadd.f32 %v4993, %v4994
        %v4996 = vadd.f32 %v4949, %v4953
        %v4997 = vadd.f32 %v4996, %v4957
        %v4998 = vadd.f32 %v4997, %v4961
        %v4999 = vadd.f32 %v4998, %v4965
        %v5000 = vrot.slane %v4999, 4
        %v5001 = vadd.f32 %v4999, %v5000
        %v5002 = vrot.slane %v5001, 2
        %v5003 = vadd.f32 %v5001, %v5002
        %v5004 = vrot.slane %v5003, 1
        %v5005 = vadd.f32 %v5003, %v5004
        %v5006 = vadd.f32 %v4975, %v1192
        %v5007 = vadd.f32 %v4985, %v1192
        %v5008 = vadd.f32 %v4995, %v1192
        %v5009 = vadd.f32 %v5005, %v1192
        %v5014 = vcombine.low %v5006, %v5007
        %v5015 = vcombine.low %v5008, %v5009
        %v5017 = vunpack.c.l.s4 1966171168
        %v5018 = vunpack.c.0.s8 %v5017
        %v5019 = vlaneseq
        %v5020 = vshrl.u32 %v5019, 7
        %v5021 = vsub.s32 %v5018, %v5020
        %v5022 = vrot.slane %v5014, %v5021
        %v5024 = vunpack.c.l.s4 1966171168
        %v5025 = vunpack.c.0.s8 %v5024
        %v5026 = vlaneseq
        %v5027 = vshrl.u32 %v5026, 7
        %v5028 = vsub.s32 %v5025, %v5027
        %v5029 = vrot.slane %v5015, %v5028
        %v5030 = vcombine.low %v5022, %v5029
        %v5032 = vunpack.c.l.s4 1966171168
        %v5033 = vunpack.c.0.s8 %v5032
        %v5034 = vlaneseq
        %v5035 = vshrl.u32 %v5034, 7
        %v5036 = vsub.s32 %v5033, %v5035
        %v5037 = vrot.slane %v5030, %v5036
        %s5039 = scalar_lea.vmem %s272, 20 [#allocation3]
        %5040 = vst.msk [vmem:[%s5039] sm:$0xf] %vm1229, %v5037
        %s5041 = scalar_lea.vmem %s276, 24
        %v5042 = vld [vmem:[%s5041] sm:$0xf]
        %v5044 = vlaneseq
        %v5045 = vshrl.u32 %v5044, 7
        %v5046 = vsub.s32 0, %v5045
        %v5047 = vrot.slane %v5042, %v5046
        %v5048 = vlaneseq
        %v5049 = vshrl.u32 %v5048, 7
        %v5050 = vsub.s32 1, %v5049
        %v5051 = vrot.slane %v5042, %v5050
        %v5052 = vlaneseq
        %v5053 = vshrl.u32 %v5052, 7
        %v5054 = vsub.s32 2, %v5053
        %v5055 = vrot.slane %v5042, %v5054
        %v5056 = vlaneseq
        %v5057 = vshrl.u32 %v5056, 7
        %v5058 = vsub.s32 3, %v5057
        %v5059 = vrot.slane %v5042, %v5058
        %v5064 = vmul.f32 %v319, %v5047
        %v5065 = vmul.f32 %v319, %v5051
        %v5066 = vmul.f32 %v319, %v5055
        %v5067 = vmul.f32 %v319, %v5059
        %v5068 = vmul.f32 %v324, %v5047
        %v5069 = vmul.f32 %v324, %v5051
        %v5070 = vmul.f32 %v324, %v5055
        %v5071 = vmul.f32 %v324, %v5059
        %v5072 = vmul.f32 %v329, %v5047
        %v5073 = vmul.f32 %v329, %v5051
        %v5074 = vmul.f32 %v329, %v5055
        %v5075 = vmul.f32 %v329, %v5059
        %v5076 = vmul.f32 %v334, %v5047
        %v5077 = vmul.f32 %v334, %v5051
        %v5078 = vmul.f32 %v334, %v5055
        %v5079 = vmul.f32 %v334, %v5059
        %v5080 = vmul.f32 %v339, %v5047
        %v5081 = vmul.f32 %v339, %v5051
        %v5082 = vmul.f32 %v339, %v5055
        %v5083 = vmul.f32 %v339, %v5059
        %v5084 = vmul.f32 %v344, %v5047
        %v5085 = vmul.f32 %v344, %v5051
        %v5086 = vmul.f32 %v344, %v5055
        %v5087 = vmul.f32 %v344, %v5059
        %v5088 = vadd.f32 %v5064, %v394
        %v5089 = vadd.f32 %v5065, %v394
        %v5090 = vadd.f32 %v5066, %v394
        %v5091 = vadd.f32 %v5067, %v394
        %v5092 = vadd.f32 %v5068, %v399
        %v5093 = vadd.f32 %v5069, %v399
        %v5094 = vadd.f32 %v5070, %v399
        %v5095 = vadd.f32 %v5071, %v399
        %v5096 = vadd.f32 %v5072, %v404
        %v5097 = vadd.f32 %v5073, %v404
        %v5098 = vadd.f32 %v5074, %v404
        %v5099 = vadd.f32 %v5075, %v404
        %v5100 = vadd.f32 %v5076, %v409
        %v5101 = vadd.f32 %v5077, %v409
        %v5102 = vadd.f32 %v5078, %v409
        %v5103 = vadd.f32 %v5079, %v409
        %v5104 = vadd.f32 %v5080, %v414
        %v5105 = vadd.f32 %v5081, %v414
        %v5106 = vadd.f32 %v5082, %v414
        %v5107 = vadd.f32 %v5083, %v414
        %v5108 = vadd.f32 %v5084, %v419
        %v5109 = vadd.f32 %v5085, %v419
        %v5110 = vadd.f32 %v5086, %v419
        %v5111 = vadd.f32 %v5087, %v419
        %v5112 = vmax.f32 %v5088, 0.0
        %v5113 = vmax.f32 %v5089, 0.0
        %v5114 = vmax.f32 %v5090, 0.0
        %v5115 = vmax.f32 %v5091, 0.0
        %v5116 = vmax.f32 %v5092, 0.0
        %v5117 = vmax.f32 %v5093, 0.0
        %v5118 = vmax.f32 %v5094, 0.0
        %v5119 = vmax.f32 %v5095, 0.0
        %v5120 = vmax.f32 %v5096, 0.0
        %v5121 = vmax.f32 %v5097, 0.0
        %v5122 = vmax.f32 %v5098, 0.0
        %v5123 = vmax.f32 %v5099, 0.0
        %v5124 = vmax.f32 %v5100, 0.0
        %v5125 = vmax.f32 %v5101, 0.0
        %v5126 = vmax.f32 %v5102, 0.0
        %v5127 = vmax.f32 %v5103, 0.0
        %v5128 = vmax.f32 %v5104, 0.0
        %v5129 = vmax.f32 %v5105, 0.0
        %v5130 = vmax.f32 %v5106, 0.0
        %v5131 = vmax.f32 %v5107, 0.0
        %v5132 = vmax.f32 %v5108, 0.0
        %v5133 = vmax.f32 %v5109, 0.0
        %v5134 = vmax.f32 %v5110, 0.0
        %v5135 = vmax.f32 %v5111, 0.0
        %v5137 = vsel %vm509, %v5132, 0
        %v5140 = vsel %vm509, %v5133, 0
        %v5143 = vsel %vm509, %v5134, 0
        %v5146 = vsel %vm509, %v5135, 0
        %5148 = vmatprep.subr.mxu0 %v5113
        %5149 = vmatpush1.msra.mxu0 %v5112
        %5150 = vmatprep.subr.mxu0 %v5117
        %5151 = vmatpush1.msra.mxu0 %v5116
        %5152 = vmatprep.subr.mxu0 %v5121
        %5153 = vmatpush1.msra.mxu0 %v5120
        %5154 = vmatprep.subr.mxu0 %v5125
        %5155 = vmatpush1.msra.mxu0 %v5124
        %5156 = vmatprep.subr.mxu0 %v5129
        %5157 = vmatpush1.msra.mxu0 %v5128
        %5158 = vmatprep.subr.mxu0 %v5140
        %5159 = vmatpush1.msra.mxu0 %v5137
        %5160 = vmatprep.subr.mxu0 0.0
        %5161 = vmatpush1.msra.mxu0 0.0
        %5162 = vmatprep.subr.mxu0 0.0
        %5163 = vmatpush1.msra.mxu0 0.0
        %5164 = vmatprep.subr.mxu0 0.0
        %5165 = vmatpush1.msra.mxu0 0.0
        %5166 = vmatprep.subr.mxu0 0.0
        %5167 = vmatpush1.msra.mxu0 0.0
        %5168 = vmatprep.subr.mxu0 0.0
        %5169 = vmatpush1.msra.mxu0 0.0
        %5170 = vmatprep.subr.mxu0 0.0
        %5171 = vmatpush1.msra.mxu0 0.0
        %5172 = vmatprep.subr.mxu0 0.0
        %5173 = vmatpush1.msra.mxu0 0.0
        %5174 = vmatprep.subr.mxu0 0.0
        %5175 = vmatpush1.msra.mxu0 0.0
        %5176 = vmatprep.subr.mxu0 0.0
        %5177 = vmatpush1.msra.mxu0 0.0
        %5178 = vmatprep.subr.mxu0 0.0
        %5179 = vmatpush1.msra.mxu0 0.0
        %5180 = vmatprep.subr.mxu0 0.0
        %5181 = vmatpush1.msra.mxu0 0.0
        %5182 = vmatprep.subr.mxu0 0.0
        %5183 = vmatpush1.msra.mxu0 0.0
        %5184 = vmatprep.subr.mxu0 0.0
        %5185 = vmatpush1.msra.mxu0 0.0
        %5186 = vmatprep.subr.mxu0 0.0
        %5187 = vmatpush1.msra.mxu0 0.0
        %5188 = vmatprep.subr.mxu0 0.0
        %5189 = vmatpush1.msra.mxu0 0.0
        %5190 = vmatprep.subr.mxu0 0.0
        %5191 = vmatpush1.msra.mxu0 0.0
        %5192 = vmatprep.subr.mxu0 0.0
        %5193 = vmatpush1.msra.mxu0 0.0
        %5194 = vmatprep.subr.mxu0 0.0
        %5195 = vmatpush1.msra.mxu0 0.0
        %5196 = vmatprep.subr.mxu0 0.0
        %5197 = vmatpush1.msra.mxu0 0.0
        %5198 = vmatprep.subr.mxu0 0.0
        %5199 = vmatpush1.msra.mxu0 0.0
        %5200 = vmatprep.subr.mxu0 0.0
        %5201 = vmatpush1.msra.mxu0 0.0
        %5202 = vmatprep.subr.mxu0 0.0
        %5203 = vmatpush1.msra.mxu0 0.0
        %5204 = vmatprep.subr.mxu0 0.0
        %5205 = vmatpush1.msra.mxu0 0.0
        %5206 = vmatprep.subr.mxu0 0.0
        %5207 = vmatpush1.msra.mxu0 0.0
        %5208 = vmatprep.subr.mxu0 0.0
        %5209 = vmatpush1.msra.mxu0 0.0
        %5210 = vmatprep.subr.mxu0 0.0
        %5211 = vmatpush1.msra.mxu0 0.0
        %5212 = vmatprep.mubr.f32.mxu0 0.0
        %5213 = vmatmul.mubr.f32.gmra.mrb[0].mxu0 %v471
        %v5214 = vpop.f32.mrb[0].mxu0
        %v5215 = vadd.f32 0.0, %v5214
        %v5216 = vpop.f32.mrb[0].mxu0
        %v5217 = vadd.f32 0.0, %v5216
        %5218 = vmatprep.mubr.f32.mxu0 0.0
        %5219 = vmatmul.mubr.f32.gmra.mrb[0].mxu0 %v474
        %v5220 = vpop.f32.mrb[0].mxu0
        %v5221 = vadd.f32 0.0, %v5220
        %v5222 = vpop.f32.mrb[0].mxu0
        %v5223 = vadd.f32 0.0, %v5222
        %5224 = vmatprep.mubr.f32.mxu0 0.0
        %5225 = vmatmul.mubr.f32.gmra.mrb[0].mxu0 %v477
        %v5226 = vpop.f32.mrb[0].mxu0
        %v5227 = vadd.f32 0.0, %v5226
        %v5228 = vpop.f32.mrb[0].mxu0
        %v5229 = vadd.f32 0.0, %v5228
        %5230 = vmatprep.mubr.f32.mxu0 0.0
        %5231 = vmatmul.mubr.f32.gmra.mrb[0].mxu0 %v480
        %v5232 = vpop.f32.mrb[0].mxu0
        %v5233 = vadd.f32 0.0, %v5232
        %v5234 = vpop.f32.mrb[0].mxu0
        %v5235 = vadd.f32 0.0, %v5234
        %5236 = vmatprep.mubr.f32.mxu0 0.0
        %5237 = vmatmul.mubr.f32.gmra.mrb[0].mxu0 %v483
        %v5238 = vpop.f32.mrb[0].mxu0
        %v5239 = vadd.f32 0.0, %v5238
        %v5240 = vpop.f32.mrb[0].mxu0
        %v5241 = vadd.f32 0.0, %v5240
        %5242 = vmatprep.mubr.f32.mxu0 0.0
        %5243 = vmatmul.mubr.f32.gmra.mrb[0].mxu0 %v486
        %v5244 = vpop.f32.mrb[0].mxu0
        %v5245 = vadd.f32 0.0, %v5244
        %v5246 = vpop.f32.mrb[0].mxu0
        %v5247 = vadd.f32 0.0, %v5246
        %5248 = vmatprep.mubr.f32.mxu0 0.0
        %5249 = vmatmul.mubr.f32.gmra.mrb[0].mxu0 %v489
        %v5250 = vpop.f32.mrb[0].mxu0
        %v5251 = vadd.f32 0.0, %v5250
        %v5252 = vpop.f32.mrb[0].mxu0
        %v5253 = vadd.f32 0.0, %v5252
        %5254 = vmatprep.mubr.f32.mxu0 0.0
        %5255 = vmatmul.mubr.f32.gmra.mrb[0].mxu0 %v492
        %v5256 = vpop.f32.mrb[0].mxu0
        %v5257 = vadd.f32 0.0, %v5256
        %v5258 = vpop.f32.mrb[0].mxu0
        %v5259 = vadd.f32 0.0, %v5258
        %5260 = vmatprep.mubr.f32.mxu0 0.0
        %5261 = vmatmul.mubr.f32.gmra.mrb[0].mxu0 %v495
        %v5262 = vpop.f32.mrb[0].mxu0
        %v5263 = vadd.f32 0.0, %v5262
        %v5264 = vpop.f32.mrb[0].mxu0
        %v5265 = vadd.f32 0.0, %v5264
        %5266 = vmatprep.mubr.f32.mxu0 0.0
        %5267 = vmatmul.mubr.f32.gmra.mrb[0].mxu0 %v498
        %v5268 = vpop.f32.mrb[0].mxu0
        %v5269 = vadd.f32 0.0, %v5268
        %v5270 = vpop.f32.mrb[0].mxu0
        %v5271 = vadd.f32 0.0, %v5270
        %5272 = vmatprep.mubr.f32.mxu0 0.0
        %5273 = vmatmul.mubr.f32.gmra.mrb[0].mxu0 %v501
        %v5274 = vpop.f32.mrb[0].mxu0
        %v5275 = vadd.f32 0.0, %v5274
        %v5276 = vpop.f32.mrb[0].mxu0
        %v5277 = vadd.f32 0.0, %v5276
        %5278 = vmatprep.mubr.f32.mxu0 0.0
        %5279 = vmatmul.mubr.f32.gmra.mrb[0].mxu0 %v504
        %v5280 = vpop.f32.mrb[0].mxu0
        %v5281 = vadd.f32 0.0, %v5280
        %v5282 = vpop.f32.mrb[0].mxu0
        %v5283 = vadd.f32 0.0, %v5282
        %5284 = vmatprep.mubr.f32.mxu0 0.0
        %5285 = vmatmul.mubr.f32.gmra.mrb[0].mxu0 %v507
        %v5286 = vpop.f32.mrb[0].mxu0
        %v5287 = vadd.f32 0.0, %v5286
        %v5288 = vpop.f32.mrb[0].mxu0
        %v5289 = vadd.f32 0.0, %v5288
        %5290 = vdwg.mxu0
        %5291 = vmatprep.subr.mxu0 %v5115
        %5292 = vmatpush1.msra.mxu0 %v5114
        %5293 = vmatprep.subr.mxu0 %v5119
        %5294 = vmatpush1.msra.mxu0 %v5118
        %5295 = vmatprep.subr.mxu0 %v5123
        %5296 = vmatpush1.msra.mxu0 %v5122
        %5297 = vmatprep.subr.mxu0 %v5127
        %5298 = vmatpush1.msra.mxu0 %v5126
        %5299 = vmatprep.subr.mxu0 %v5131
        %5300 = vmatpush1.msra.mxu0 %v5130
        %5301 = vmatprep.subr.mxu0 %v5146
        %5302 = vmatpush1.msra.mxu0 %v5143
        %5303 = vmatprep.subr.mxu0 0.0
        %5304 = vmatpush1.msra.mxu0 0.0
        %5305 = vmatprep.subr.mxu0 0.0
        %5306 = vmatpush1.msra.mxu0 0.0
        %5307 = vmatprep.subr.mxu0 0.0
        %5308 = vmatpush1.msra.mxu0 0.0
        %5309 = vmatprep.subr.mxu0 0.0
        %5310 = vmatpush1.msra.mxu0 0.0
        %5311 = vmatprep.subr.mxu0 0.0
        %5312 = vmatpush1.msra.mxu0 0.0
        %5313 = vmatprep.subr.mxu0 0.0
        %5314 = vmatpush1.msra.mxu0 0.0
        %5315 = vmatprep.subr.mxu0 0.0
        %5316 = vmatpush1.msra.mxu0 0.0
        %5317 = vmatprep.subr.mxu0 0.0
        %5318 = vmatpush1.msra.mxu0 0.0
        %5319 = vmatprep.subr.mxu0 0.0
        %5320 = vmatpush1.msra.mxu0 0.0
        %5321 = vmatprep.subr.mxu0 0.0
        %5322 = vmatpush1.msra.mxu0 0.0
        %5323 = vmatprep.subr.mxu0 0.0
        %5324 = vmatpush1.msra.mxu0 0.0
        %5325 = vmatprep.subr.mxu0 0.0
        %5326 = vmatpush1.msra.mxu0 0.0
        %5327 = vmatprep.subr.mxu0 0.0
        %5328 = vmatpush1.msra.mxu0 0.0
        %5329 = vmatprep.subr.mxu0 0.0
        %5330 = vmatpush1.msra.mxu0 0.0
        %5331 = vmatprep.subr.mxu0 0.0
        %5332 = vmatpush1.msra.mxu0 0.0
        %5333 = vmatprep.subr.mxu0 0.0
        %5334 = vmatpush1.msra.mxu0 0.0
        %5335 = vmatprep.subr.mxu0 0.0
        %5336 = vmatpush1.msra.mxu0 0.0
        %5337 = vmatprep.subr.mxu0 0.0
        %5338 = vmatpush1.msra.mxu0 0.0
        %5339 = vmatprep.subr.mxu0 0.0
        %5340 = vmatpush1.msra.mxu0 0.0
        %5341 = vmatprep.subr.mxu0 0.0
        %5342 = vmatpush1.msra.mxu0 0.0
        %5343 = vmatprep.subr.mxu0 0.0
        %5344 = vmatpush1.msra.mxu0 0.0
        %5345 = vmatprep.subr.mxu0 0.0
        %5346 = vmatpush1.msra.mxu0 0.0
        %5347 = vmatprep.subr.mxu0 0.0
        %5348 = vmatpush1.msra.mxu0 0.0
        %5349 = vmatprep.subr.mxu0 0.0
        %5350 = vmatpush1.msra.mxu0 0.0
        %5351 = vmatprep.subr.mxu0 0.0
        %5352 = vmatpush1.msra.mxu0 0.0
        %5353 = vmatprep.subr.mxu0 0.0
        %5354 = vmatpush1.msra.mxu0 0.0
        %5355 = vmatprep.mubr.f32.mxu0 0.0
        %5356 = vmatmul.mubr.f32.gmra.mrb[0].mxu0 %v471
        %v5357 = vpop.f32.mrb[0].mxu0
        %v5358 = vadd.f32 0.0, %v5357
        %v5359 = vpop.f32.mrb[0].mxu0
        %v5360 = vadd.f32 0.0, %v5359
        %5361 = vmatprep.mubr.f32.mxu0 0.0
        %5362 = vmatmul.mubr.f32.gmra.mrb[0].mxu0 %v474
        %v5363 = vpop.f32.mrb[0].mxu0
        %v5364 = vadd.f32 0.0, %v5363
        %v5365 = vpop.f32.mrb[0].mxu0
        %v5366 = vadd.f32 0.0, %v5365
        %5367 = vmatprep.mubr.f32.mxu0 0.0
        %5368 = vmatmul.mubr.f32.gmra.mrb[0].mxu0 %v477
        %v5369 = vpop.f32.mrb[0].mxu0
        %v5370 = vadd.f32 0.0, %v5369
        %v5371 = vpop.f32.mrb[0].mxu0
        %v5372 = vadd.f32 0.0, %v5371
        %5373 = vmatprep.mubr.f32.mxu0 0.0
        %5374 = vmatmul.mubr.f32.gmra.mrb[0].mxu0 %v480
        %v5375 = vpop.f32.mrb[0].mxu0
        %v5376 = vadd.f32 0.0, %v5375
        %v5377 = vpop.f32.mrb[0].mxu0
        %v5378 = vadd.f32 0.0, %v5377
        %5379 = vmatprep.mubr.f32.mxu0 0.0
        %5380 = vmatmul.mubr.f32.gmra.mrb[0].mxu0 %v483
        %v5381 = vpop.f32.mrb[0].mxu0
        %v5382 = vadd.f32 0.0, %v5381
        %v5383 = vpop.f32.mrb[0].mxu0
        %v5384 = vadd.f32 0.0, %v5383
        %5385 = vmatprep.mubr.f32.mxu0 0.0
        %5386 = vmatmul.mubr.f32.gmra.mrb[0].mxu0 %v486
        %v5387 = vpop.f32.mrb[0].mxu0
        %v5388 = vadd.f32 0.0, %v5387
        %v5389 = vpop.f32.mrb[0].mxu0
        %v5390 = vadd.f32 0.0, %v5389
        %5391 = vmatprep.mubr.f32.mxu0 0.0
        %5392 = vmatmul.mubr.f32.gmra.mrb[0].mxu0 %v489
        %v5393 = vpop.f32.mrb[0].mxu0
        %v5394 = vadd.f32 0.0, %v5393
        %v5395 = vpop.f32.mrb[0].mxu0
        %v5396 = vadd.f32 0.0, %v5395
        %5397 = vmatprep.mubr.f32.mxu0 0.0
        %5398 = vmatmul.mubr.f32.gmra.mrb[0].mxu0 %v492
        %v5399 = vpop.f32.mrb[0].mxu0
        %v5400 = vadd.f32 0.0, %v5399
        %v5401 = vpop.f32.mrb[0].mxu0
        %v5402 = vadd.f32 0.0, %v5401
        %5403 = vmatprep.mubr.f32.mxu0 0.0
        %5404 = vmatmul.mubr.f32.gmra.mrb[0].mxu0 %v495
        %v5405 = vpop.f32.mrb[0].mxu0
        %v5406 = vadd.f32 0.0, %v5405
        %v5407 = vpop.f32.mrb[0].mxu0
        %v5408 = vadd.f32 0.0, %v5407
        %5409 = vmatprep.mubr.f32.mxu0 0.0
        %5410 = vmatmul.mubr.f32.gmra.mrb[0].mxu0 %v498
        %v5411 = vpop.f32.mrb[0].mxu0
        %v5412 = vadd.f32 0.0, %v5411
        %v5413 = vpop.f32.mrb[0].mxu0
        %v5414 = vadd.f32 0.0, %v5413
        %5415 = vmatprep.mubr.f32.mxu0 0.0
        %5416 = vmatmul.mubr.f32.gmra.mrb[0].mxu0 %v501
        %v5417 = vpop.f32.mrb[0].mxu0
        %v5418 = vadd.f32 0.0, %v5417
        %v5419 = vpop.f32.mrb[0].mxu0
        %v5420 = vadd.f32 0.0, %v5419
        %5421 = vmatprep.mubr.f32.mxu0 0.0
        %5422 = vmatmul.mubr.f32.gmra.mrb[0].mxu0 %v504
        %v5423 = vpop.f32.mrb[0].mxu0
        %v5424 = vadd.f32 0.0, %v5423
        %v5425 = vpop.f32.mrb[0].mxu0
        %v5426 = vadd.f32 0.0, %v5425
        %5427 = vmatprep.mubr.f32.mxu0 0.0
        %5428 = vmatmul.mubr.f32.gmra.mrb[0].mxu0 %v507
        %v5429 = vpop.f32.mrb[0].mxu0
        %v5430 = vadd.f32 0.0, %v5429
        %v5431 = vpop.f32.mrb[0].mxu0
        %v5432 = vadd.f32 0.0, %v5431
        %5433 = vdwg.mxu0
        %v5434 = vmax.f32 %v5215, 0.0
        %v5435 = vmax.f32 %v5217, 0.0
        %v5436 = vmax.f32 %v5358, 0.0
        %v5437 = vmax.f32 %v5360, 0.0
        %v5438 = vmax.f32 %v5221, 0.0
        %v5439 = vmax.f32 %v5223, 0.0
        %v5440 = vmax.f32 %v5364, 0.0
        %v5441 = vmax.f32 %v5366, 0.0
        %v5442 = vmax.f32 %v5227, 0.0
        %v5443 = vmax.f32 %v5229, 0.0
        %v5444 = vmax.f32 %v5370, 0.0
        %v5445 = vmax.f32 %v5372, 0.0
        %v5446 = vmax.f32 %v5233, 0.0
        %v5447 = vmax.f32 %v5235, 0.0
        %v5448 = vmax.f32 %v5376, 0.0
        %v5449 = vmax.f32 %v5378, 0.0
        %v5450 = vmax.f32 %v5239, 0.0
        %v5451 = vmax.f32 %v5241, 0.0
        %v5452 = vmax.f32 %v5382, 0.0
        %v5453 = vmax.f32 %v5384, 0.0
        %v5454 = vmax.f32 %v5245, 0.0
        %v5455 = vmax.f32 %v5247, 0.0
        %v5456 = vmax.f32 %v5388, 0.0
        %v5457 = vmax.f32 %v5390, 0.0
        %v5458 = vmax.f32 %v5251, 0.0
        %v5459 = vmax.f32 %v5253, 0.0
        %v5460 = vmax.f32 %v5394, 0.0
        %v5461 = vmax.f32 %v5396, 0.0
        %v5462 = vmax.f32 %v5257, 0.0
        %v5463 = vmax.f32 %v5259, 0.0
        %v5464 = vmax.f32 %v5400, 0.0
        %v5465 = vmax.f32 %v5402, 0.0
        %v5466 = vmax.f32 %v5263, 0.0
        %v5467 = vmax.f32 %v5265, 0.0
        %v5468 = vmax.f32 %v5406, 0.0
        %v5469 = vmax.f32 %v5408, 0.0
        %v5470 = vmax.f32 %v5269, 0.0
        %v5471 = vmax.f32 %v5271, 0.0
        %v5472 = vmax.f32 %v5412, 0.0
        %v5473 = vmax.f32 %v5414, 0.0
        %v5474 = vmax.f32 %v5275, 0.0
        %v5475 = vmax.f32 %v5277, 0.0
        %v5476 = vmax.f32 %v5418, 0.0
        %v5477 = vmax.f32 %v5420, 0.0
        %v5478 = vmax.f32 %v5281, 0.0
        %v5479 = vmax.f32 %v5283, 0.0
        %v5480 = vmax.f32 %v5424, 0.0
        %v5481 = vmax.f32 %v5426, 0.0
        %v5482 = vmax.f32 %v5287, 0.0
        %v5483 = vmax.f32 %v5289, 0.0
        %v5484 = vmax.f32 %v5430, 0.0
        %v5485 = vmax.f32 %v5432, 0.0
        %v5487 = vsel %vm876, %v5482, 0
        %v5490 = vsel %vm876, %v5483, 0
        %v5493 = vsel %vm876, %v5484, 0
        %v5496 = vsel %vm876, %v5485, 0
        %5498 = vmatprep.subr.mxu0 %v5435
        %5499 = vmatpush1.msra.mxu0 %v5434
        %5500 = vmatprep.subr.mxu0 %v5439
        %5501 = vmatpush1.msra.mxu0 %v5438
        %5502 = vmatprep.subr.mxu0 %v5443
        %5503 = vmatpush1.msra.mxu0 %v5442
        %5504 = vmatprep.subr.mxu0 %v5447
        %5505 = vmatpush1.msra.mxu0 %v5446
        %5506 = vmatprep.subr.mxu0 %v5451
        %5507 = vmatpush1.msra.mxu0 %v5450
        %5508 = vmatprep.subr.mxu0 %v5455
        %5509 = vmatpush1.msra.mxu0 %v5454
        %5510 = vmatprep.subr.mxu0 %v5459
        %5511 = vmatpush1.msra.mxu0 %v5458
        %5512 = vmatprep.subr.mxu0 %v5463
        %5513 = vmatpush1.msra.mxu0 %v5462
        %5514 = vmatprep.subr.mxu0 %v5467
        %5515 = vmatpush1.msra.mxu0 %v5466
        %5516 = vmatprep.subr.mxu0 %v5471
        %5517 = vmatpush1.msra.mxu0 %v5470
        %5518 = vmatprep.subr.mxu0 %v5475
        %5519 = vmatpush1.msra.mxu0 %v5474
        %5520 = vmatprep.subr.mxu0 %v5479
        %5521 = vmatpush1.msra.mxu0 %v5478
        %5522 = vmatprep.subr.mxu0 %v5490
        %5523 = vmatpush1.msra.mxu0 %v5487
        %5524 = vmatprep.subr.mxu0 0.0
        %5525 = vmatpush1.msra.mxu0 0.0
        %5526 = vmatprep.subr.mxu0 0.0
        %5527 = vmatpush1.msra.mxu0 0.0
        %5528 = vmatprep.subr.mxu0 0.0
        %5529 = vmatpush1.msra.mxu0 0.0
        %5530 = vmatprep.subr.mxu0 0.0
        %5531 = vmatpush1.msra.mxu0 0.0
        %5532 = vmatprep.subr.mxu0 0.0
        %5533 = vmatpush1.msra.mxu0 0.0
        %5534 = vmatprep.subr.mxu0 0.0
        %5535 = vmatpush1.msra.mxu0 0.0
        %5536 = vmatprep.subr.mxu0 0.0
        %5537 = vmatpush1.msra.mxu0 0.0
        %5538 = vmatprep.subr.mxu0 0.0
        %5539 = vmatpush1.msra.mxu0 0.0
        %5540 = vmatprep.subr.mxu0 0.0
        %5541 = vmatpush1.msra.mxu0 0.0
        %5542 = vmatprep.subr.mxu0 0.0
        %5543 = vmatpush1.msra.mxu0 0.0
        %5544 = vmatprep.subr.mxu0 0.0
        %5545 = vmatpush1.msra.mxu0 0.0
        %5546 = vmatprep.subr.mxu0 0.0
        %5547 = vmatpush1.msra.mxu0 0.0
        %5548 = vmatprep.subr.mxu0 0.0
        %5549 = vmatpush1.msra.mxu0 0.0
        %5550 = vmatprep.subr.mxu0 0.0
        %5551 = vmatpush1.msra.mxu0 0.0
        %5552 = vmatprep.subr.mxu0 0.0
        %5553 = vmatpush1.msra.mxu0 0.0
        %5554 = vmatprep.subr.mxu0 0.0
        %5555 = vmatpush1.msra.mxu0 0.0
        %5556 = vmatprep.subr.mxu0 0.0
        %5557 = vmatpush1.msra.mxu0 0.0
        %5558 = vmatprep.subr.mxu0 0.0
        %5559 = vmatpush1.msra.mxu0 0.0
        %5560 = vmatprep.subr.mxu0 0.0
        %5561 = vmatpush1.msra.mxu0 0.0
        %5562 = vmatprep.mubr.f32.mxu0 0.0
        %5563 = vmatmul.mubr.f32.gmra.mrb[0].mxu0 %v862
        %v5564 = vpop.f32.mrb[0].mxu0
        %v5565 = vadd.f32 0.0, %v5564
        %v5566 = vpop.f32.mrb[0].mxu0
        %v5567 = vadd.f32 0.0, %v5566
        %5568 = vmatprep.mubr.f32.mxu0 0.0
        %5569 = vmatmul.mubr.f32.gmra.mrb[0].mxu0 %v865
        %v5570 = vpop.f32.mrb[0].mxu0
        %v5571 = vadd.f32 0.0, %v5570
        %v5572 = vpop.f32.mrb[0].mxu0
        %v5573 = vadd.f32 0.0, %v5572
        %5574 = vmatprep.mubr.f32.mxu0 0.0
        %5575 = vmatmul.mubr.f32.gmra.mrb[0].mxu0 %v868
        %v5576 = vpop.f32.mrb[0].mxu0
        %v5577 = vadd.f32 0.0, %v5576
        %v5578 = vpop.f32.mrb[0].mxu0
        %v5579 = vadd.f32 0.0, %v5578
        %5580 = vmatprep.mubr.f32.mxu0 0.0
        %5581 = vmatmul.mubr.f32.gmra.mrb[0].mxu0 %v871
        %v5582 = vpop.f32.mrb[0].mxu0
        %v5583 = vadd.f32 0.0, %v5582
        %v5584 = vpop.f32.mrb[0].mxu0
        %v5585 = vadd.f32 0.0, %v5584
        %5586 = vmatprep.mubr.f32.mxu0 0.0
        %5587 = vmatmul.mubr.f32.gmra.mrb[0].mxu0 %v874
        %v5588 = vpop.f32.mrb[0].mxu0
        %v5589 = vadd.f32 0.0, %v5588
        %v5590 = vpop.f32.mrb[0].mxu0
        %v5591 = vadd.f32 0.0, %v5590
        %5592 = vdwg.mxu0
        %5593 = vmatprep.subr.mxu0 %v5437
        %5594 = vmatpush1.msra.mxu0 %v5436
        %5595 = vmatprep.subr.mxu0 %v5441
        %5596 = vmatpush1.msra.mxu0 %v5440
        %5597 = vmatprep.subr.mxu0 %v5445
        %5598 = vmatpush1.msra.mxu0 %v5444
        %5599 = vmatprep.subr.mxu0 %v5449
        %5600 = vmatpush1.msra.mxu0 %v5448
        %5601 = vmatprep.subr.mxu0 %v5453
        %5602 = vmatpush1.msra.mxu0 %v5452
        %5603 = vmatprep.subr.mxu0 %v5457
        %5604 = vmatpush1.msra.mxu0 %v5456
        %5605 = vmatprep.subr.mxu0 %v5461
        %5606 = vmatpush1.msra.mxu0 %v5460
        %5607 = vmatprep.subr.mxu0 %v5465
        %5608 = vmatpush1.msra.mxu0 %v5464
        %5609 = vmatprep.subr.mxu0 %v5469
        %5610 = vmatpush1.msra.mxu0 %v5468
        %5611 = vmatprep.subr.mxu0 %v5473
        %5612 = vmatpush1.msra.mxu0 %v5472
        %5613 = vmatprep.subr.mxu0 %v5477
        %5614 = vmatpush1.msra.mxu0 %v5476
        %5615 = vmatprep.subr.mxu0 %v5481
        %5616 = vmatpush1.msra.mxu0 %v5480
        %5617 = vmatprep.subr.mxu0 %v5496
        %5618 = vmatpush1.msra.mxu0 %v5493
        %5619 = vmatprep.subr.mxu0 0.0
        %5620 = vmatpush1.msra.mxu0 0.0
        %5621 = vmatprep.subr.mxu0 0.0
        %5622 = vmatpush1.msra.mxu0 0.0
        %5623 = vmatprep.subr.mxu0 0.0
        %5624 = vmatpush1.msra.mxu0 0.0
        %5625 = vmatprep.subr.mxu0 0.0
        %5626 = vmatpush1.msra.mxu0 0.0
        %5627 = vmatprep.subr.mxu0 0.0
        %5628 = vmatpush1.msra.mxu0 0.0
        %5629 = vmatprep.subr.mxu0 0.0
        %5630 = vmatpush1.msra.mxu0 0.0
        %5631 = vmatprep.subr.mxu0 0.0
        %5632 = vmatpush1.msra.mxu0 0.0
        %5633 = vmatprep.subr.mxu0 0.0
        %5634 = vmatpush1.msra.mxu0 0.0
        %5635 = vmatprep.subr.mxu0 0.0
        %5636 = vmatpush1.msra.mxu0 0.0
        %5637 = vmatprep.subr.mxu0 0.0
        %5638 = vmatpush1.msra.mxu0 0.0
        %5639 = vmatprep.subr.mxu0 0.0
        %5640 = vmatpush1.msra.mxu0 0.0
        %5641 = vmatprep.subr.mxu0 0.0
        %5642 = vmatpush1.msra.mxu0 0.0
        %5643 = vmatprep.subr.mxu0 0.0
        %5644 = vmatpush1.msra.mxu0 0.0
        %5645 = vmatprep.subr.mxu0 0.0
        %5646 = vmatpush1.msra.mxu0 0.0
        %5647 = vmatprep.subr.mxu0 0.0
        %5648 = vmatpush1.msra.mxu0 0.0
        %5649 = vmatprep.subr.mxu0 0.0
        %5650 = vmatpush1.msra.mxu0 0.0
        %5651 = vmatprep.subr.mxu0 0.0
        %5652 = vmatpush1.msra.mxu0 0.0
        %5653 = vmatprep.subr.mxu0 0.0
        %5654 = vmatpush1.msra.mxu0 0.0
        %5655 = vmatprep.subr.mxu0 0.0
        %5656 = vmatpush1.msra.mxu0 0.0
        %5657 = vmatprep.mubr.f32.mxu0 0.0
        %5658 = vmatmul.mubr.f32.gmra.mrb[0].mxu0 %v862
        %v5659 = vpop.f32.mrb[0].mxu0
        %v5660 = vadd.f32 0.0, %v5659
        %v5661 = vpop.f32.mrb[0].mxu0
        %v5662 = vadd.f32 0.0, %v5661
        %5663 = vmatprep.mubr.f32.mxu0 0.0
        %5664 = vmatmul.mubr.f32.gmra.mrb[0].mxu0 %v865
        %v5665 = vpop.f32.mrb[0].mxu0
        %v5666 = vadd.f32 0.0, %v5665
        %v5667 = vpop.f32.mrb[0].mxu0
        %v5668 = vadd.f32 0.0, %v5667
        %5669 = vmatprep.mubr.f32.mxu0 0.0
        %5670 = vmatmul.mubr.f32.gmra.mrb[0].mxu0 %v868
        %v5671 = vpop.f32.mrb[0].mxu0
        %v5672 = vadd.f32 0.0, %v5671
        %v5673 = vpop.f32.mrb[0].mxu0
        %v5674 = vadd.f32 0.0, %v5673
        %5675 = vmatprep.mubr.f32.mxu0 0.0
        %5676 = vmatmul.mubr.f32.gmra.mrb[0].mxu0 %v871
        %v5677 = vpop.f32.mrb[0].mxu0
        %v5678 = vadd.f32 0.0, %v5677
        %v5679 = vpop.f32.mrb[0].mxu0
        %v5680 = vadd.f32 0.0, %v5679
        %5681 = vmatprep.mubr.f32.mxu0 0.0
        %5682 = vmatmul.mubr.f32.gmra.mrb[0].mxu0 %v874
        %v5683 = vpop.f32.mrb[0].mxu0
        %v5684 = vadd.f32 0.0, %v5683
        %v5685 = vpop.f32.mrb[0].mxu0
        %v5686 = vadd.f32 0.0, %v5685
        %5687 = vdwg.mxu0
        %v5688 = vmax.f32 %v5565, 0.0
        %v5689 = vmax.f32 %v5567, 0.0
        %v5690 = vmax.f32 %v5660, 0.0
        %v5691 = vmax.f32 %v5662, 0.0
        %v5692 = vmax.f32 %v5571, 0.0
        %v5693 = vmax.f32 %v5573, 0.0
        %v5694 = vmax.f32 %v5666, 0.0
        %v5695 = vmax.f32 %v5668, 0.0
        %v5696 = vmax.f32 %v5577, 0.0
        %v5697 = vmax.f32 %v5579, 0.0
        %v5698 = vmax.f32 %v5672, 0.0
        %v5699 = vmax.f32 %v5674, 0.0
        %v5700 = vmax.f32 %v5583, 0.0
        %v5701 = vmax.f32 %v5585, 0.0
        %v5702 = vmax.f32 %v5678, 0.0
        %v5703 = vmax.f32 %v5680, 0.0
        %v5704 = vmax.f32 %v5589, 0.0
        %v5705 = vmax.f32 %v5591, 0.0
        %v5706 = vmax.f32 %v5684, 0.0
        %v5707 = vmax.f32 %v5686, 0.0
        %v5708 = vmul.f32 %v1102, %v5688
        %v5709 = vmul.f32 %v1102, %v5689
        %v5710 = vmul.f32 %v1102, %v5690
        %v5711 = vmul.f32 %v1102, %v5691
        %v5712 = vmul.f32 %v1107, %v5692
        %v5713 = vmul.f32 %v1107, %v5693
        %v5714 = vmul.f32 %v1107, %v5694
        %v5715 = vmul.f32 %v1107, %v5695
        %v5716 = vmul.f32 %v1112, %v5696
        %v5717 = vmul.f32 %v1112, %v5697
        %v5718 = vmul.f32 %v1112, %v5698
        %v5719 = vmul.f32 %v1112, %v5699
        %v5720 = vmul.f32 %v1117, %v5700
        %v5721 = vmul.f32 %v1117, %v5701
        %v5722 = vmul.f32 %v1117, %v5702
        %v5723 = vmul.f32 %v1117, %v5703
        %v5724 = vmul.f32 %v1122, %v5704
        %v5725 = vmul.f32 %v1122, %v5705
        %v5726 = vmul.f32 %v1122, %v5706
        %v5727 = vmul.f32 %v1122, %v5707
        %v5728 = vadd.f32 %v5708, %v5712
        %v5729 = vadd.f32 %v5728, %v5716
        %v5730 = vadd.f32 %v5729, %v5720
        %v5731 = vadd.f32 %v5730, %v5724
        %v5732 = vrot.slane %v5731, 4
        %v5733 = vadd.f32 %v5731, %v5732
        %v5734 = vrot.slane %v5733, 2
        %v5735 = vadd.f32 %v5733, %v5734
        %v5736 = vrot.slane %v5735, 1
        %v5737 = vadd.f32 %v5735, %v5736
        %v5738 = vadd.f32 %v5709, %v5713
        %v5739 = vadd.f32 %v5738, %v5717
        %v5740 = vadd.f32 %v5739, %v5721
        %v5741 = vadd.f32 %v5740, %v5725
        %v5742 = vrot.slane %v5741, 4
        %v5743 = vadd.f32 %v5741, %v5742
        %v5744 = vrot.slane %v5743, 2
        %v5745 = vadd.f32 %v5743, %v5744
        %v5746 = vrot.slane %v5745, 1
        %v5747 = vadd.f32 %v5745, %v5746
        %v5748 = vadd.f32 %v5710, %v5714
        %v5749 = vadd.f32 %v5748, %v5718
        %v5750 = vadd.f32 %v5749, %v5722
        %v5751 = vadd.f32 %v5750, %v5726
        %v5752 = vrot.slane %v5751, 4
        %v5753 = vadd.f32 %v5751, %v5752
        %v5754 = vrot.slane %v5753, 2
        %v5755 = vadd.f32 %v5753, %v5754
        %v5756 = vrot.slane %v5755, 1
        %v5757 = vadd.f32 %v5755, %v5756
        %v5758 = vadd.f32 %v5711, %v5715
        %v5759 = vadd.f32 %v5758, %v5719
        %v5760 = vadd.f32 %v5759, %v5723
        %v5761 = vadd.f32 %v5760, %v5727
        %v5762 = vrot.slane %v5761, 4
        %v5763 = vadd.f32 %v5761, %v5762
        %v5764 = vrot.slane %v5763, 2
        %v5765 = vadd.f32 %v5763, %v5764
        %v5766 = vrot.slane %v5765, 1
        %v5767 = vadd.f32 %v5765, %v5766
        %v5768 = vadd.f32 %v5737, %v1192
        %v5769 = vadd.f32 %v5747, %v1192
        %v5770 = vadd.f32 %v5757, %v1192
        %v5771 = vadd.f32 %v5767, %v1192
        %v5776 = vcombine.low %v5768, %v5769
        %v5777 = vcombine.low %v5770, %v5771
        %v5779 = vunpack.c.l.s4 1966171168
        %v5780 = vunpack.c.0.s8 %v5779
        %v5781 = vlaneseq
        %v5782 = vshrl.u32 %v5781, 7
        %v5783 = vsub.s32 %v5780, %v5782
        %v5784 = vrot.slane %v5776, %v5783
        %v5786 = vunpack.c.l.s4 1966171168
        %v5787 = vunpack.c.0.s8 %v5786
        %v5788 = vlaneseq
        %v5789 = vshrl.u32 %v5788, 7
        %v5790 = vsub.s32 %v5787, %v5789
        %v5791 = vrot.slane %v5777, %v5790
        %v5792 = vcombine.low %v5784, %v5791
        %v5794 = vunpack.c.l.s4 1966171168
        %v5795 = vunpack.c.0.s8 %v5794
        %v5796 = vlaneseq
        %v5797 = vshrl.u32 %v5796, 7
        %v5798 = vsub.s32 %v5795, %v5797
        %v5799 = vrot.slane %v5792, %v5798
        %s5801 = scalar_lea.vmem %s272, 24 [#allocation3]
        %5802 = vst.msk [vmem:[%s5801] sm:$0xf] %vm1229, %v5799
        %s5803 = scalar_lea.vmem %s276, 28
        %v5804 = vld [vmem:[%s5803] sm:$0xf]
        %v5806 = vlaneseq
        %v5807 = vshrl.u32 %v5806, 7
        %v5808 = vsub.s32 0, %v5807
        %v5809 = vrot.slane %v5804, %v5808
        %v5810 = vlaneseq
        %v5811 = vshrl.u32 %v5810, 7
        %v5812 = vsub.s32 1, %v5811
        %v5813 = vrot.slane %v5804, %v5812
        %v5814 = vlaneseq
        %v5815 = vshrl.u32 %v5814, 7
        %v5816 = vsub.s32 2, %v5815
        %v5817 = vrot.slane %v5804, %v5816
        %v5818 = vlaneseq
        %v5819 = vshrl.u32 %v5818, 7
        %v5820 = vsub.s32 3, %v5819
        %v5821 = vrot.slane %v5804, %v5820
        %v5826 = vmul.f32 %v319, %v5809
        %v5827 = vmul.f32 %v319, %v5813
        %v5828 = vmul.f32 %v319, %v5817
        %v5829 = vmul.f32 %v319, %v5821
        %v5830 = vmul.f32 %v324, %v5809
        %v5831 = vmul.f32 %v324, %v5813
        %v5832 = vmul.f32 %v324, %v5817
        %v5833 = vmul.f32 %v324, %v5821
        %v5834 = vmul.f32 %v329, %v5809
        %v5835 = vmul.f32 %v329, %v5813
        %v5836 = vmul.f32 %v329, %v5817
        %v5837 = vmul.f32 %v329, %v5821
        %v5838 = vmul.f32 %v334, %v5809
        %v5839 = vmul.f32 %v334, %v5813
        %v5840 = vmul.f32 %v334, %v5817
        %v5841 = vmul.f32 %v334, %v5821
        %v5842 = vmul.f32 %v339, %v5809
        %v5843 = vmul.f32 %v339, %v5813
        %v5844 = vmul.f32 %v339, %v5817
        %v5845 = vmul.f32 %v339, %v5821
        %v5846 = vmul.f32 %v344, %v5809
        %v5847 = vmul.f32 %v344, %v5813
        %v5848 = vmul.f32 %v344, %v5817
        %v5849 = vmul.f32 %v344, %v5821
        %v5850 = vadd.f32 %v5826, %v394
        %v5851 = vadd.f32 %v5827, %v394
        %v5852 = vadd.f32 %v5828, %v394
        %v5853 = vadd.f32 %v5829, %v394
        %v5854 = vadd.f32 %v5830, %v399
        %v5855 = vadd.f32 %v5831, %v399
        %v5856 = vadd.f32 %v5832, %v399
        %v5857 = vadd.f32 %v5833, %v399
        %v5858 = vadd.f32 %v5834, %v404
        %v5859 = vadd.f32 %v5835, %v404
        %v5860 = vadd.f32 %v5836, %v404
        %v5861 = vadd.f32 %v5837, %v404
        %v5862 = vadd.f32 %v5838, %v409
        %v5863 = vadd.f32 %v5839, %v409
        %v5864 = vadd.f32 %v5840, %v409
        %v5865 = vadd.f32 %v5841, %v409
        %v5866 = vadd.f32 %v5842, %v414
        %v5867 = vadd.f32 %v5843, %v414
        %v5868 = vadd.f32 %v5844, %v414
        %v5869 = vadd.f32 %v5845, %v414
        %v5870 = vadd.f32 %v5846, %v419
        %v5871 = vadd.f32 %v5847, %v419
        %v5872 = vadd.f32 %v5848, %v419
        %v5873 = vadd.f32 %v5849, %v419
        %v5874 = vmax.f32 %v5850, 0.0
        %v5875 = vmax.f32 %v5851, 0.0
        %v5876 = vmax.f32 %v5852, 0.0
        %v5877 = vmax.f32 %v5853, 0.0
        %v5878 = vmax.f32 %v5854, 0.0
        %v5879 = vmax.f32 %v5855, 0.0
        %v5880 = vmax.f32 %v5856, 0.0
        %v5881 = vmax.f32 %v5857, 0.0
        %v5882 = vmax.f32 %v5858, 0.0
        %v5883 = vmax.f32 %v5859, 0.0
        %v5884 = vmax.f32 %v5860, 0.0
        %v5885 = vmax.f32 %v5861, 0.0
        %v5886 = vmax.f32 %v5862, 0.0
        %v5887 = vmax.f32 %v5863, 0.0
        %v5888 = vmax.f32 %v5864, 0.0
        %v5889 = vmax.f32 %v5865, 0.0
        %v5890 = vmax.f32 %v5866, 0.0
        %v5891 = vmax.f32 %v5867, 0.0
        %v5892 = vmax.f32 %v5868, 0.0
        %v5893 = vmax.f32 %v5869, 0.0
        %v5894 = vmax.f32 %v5870, 0.0
        %v5895 = vmax.f32 %v5871, 0.0
        %v5896 = vmax.f32 %v5872, 0.0
        %v5897 = vmax.f32 %v5873, 0.0
        %v5899 = vsel %vm509, %v5894, 0
        %v5902 = vsel %vm509, %v5895, 0
        %v5905 = vsel %vm509, %v5896, 0
        %v5908 = vsel %vm509, %v5897, 0
        %5910 = vmatprep.subr.mxu0 %v5875
        %5911 = vmatpush1.msra.mxu0 %v5874
        %5912 = vmatprep.subr.mxu0 %v5879
        %5913 = vmatpush1.msra.mxu0 %v5878
        %5914 = vmatprep.subr.mxu0 %v5883
        %5915 = vmatpush1.msra.mxu0 %v5882
        %5916 = vmatprep.subr.mxu0 %v5887
        %5917 = vmatpush1.msra.mxu0 %v5886
        %5918 = vmatprep.subr.mxu0 %v5891
        %5919 = vmatpush1.msra.mxu0 %v5890
        %5920 = vmatprep.subr.mxu0 %v5902
        %5921 = vmatpush1.msra.mxu0 %v5899
        %5922 = vmatprep.subr.mxu0 0.0
        %5923 = vmatpush1.msra.mxu0 0.0
        %5924 = vmatprep.subr.mxu0 0.0
        %5925 = vmatpush1.msra.mxu0 0.0
        %5926 = vmatprep.subr.mxu0 0.0
        %5927 = vmatpush1.msra.mxu0 0.0
        %5928 = vmatprep.subr.mxu0 0.0
        %5929 = vmatpush1.msra.mxu0 0.0
        %5930 = vmatprep.subr.mxu0 0.0
        %5931 = vmatpush1.msra.mxu0 0.0
        %5932 = vmatprep.subr.mxu0 0.0
        %5933 = vmatpush1.msra.mxu0 0.0
        %5934 = vmatprep.subr.mxu0 0.0
        %5935 = vmatpush1.msra.mxu0 0.0
        %5936 = vmatprep.subr.mxu0 0.0
        %5937 = vmatpush1.msra.mxu0 0.0
        %5938 = vmatprep.subr.mxu0 0.0
        %5939 = vmatpush1.msra.mxu0 0.0
        %5940 = vmatprep.subr.mxu0 0.0
        %5941 = vmatpush1.msra.mxu0 0.0
        %5942 = vmatprep.subr.mxu0 0.0
        %5943 = vmatpush1.msra.mxu0 0.0
        %5944 = vmatprep.subr.mxu0 0.0
        %5945 = vmatpush1.msra.mxu0 0.0
        %5946 = vmatprep.subr.mxu0 0.0
        %5947 = vmatpush1.msra.mxu0 0.0
        %5948 = vmatprep.subr.mxu0 0.0
        %5949 = vmatpush1.msra.mxu0 0.0
        %5950 = vmatprep.subr.mxu0 0.0
        %5951 = vmatpush1.msra.mxu0 0.0
        %5952 = vmatprep.subr.mxu0 0.0
        %5953 = vmatpush1.msra.mxu0 0.0
        %5954 = vmatprep.subr.mxu0 0.0
        %5955 = vmatpush1.msra.mxu0 0.0
        %5956 = vmatprep.subr.mxu0 0.0
        %5957 = vmatpush1.msra.mxu0 0.0
        %5958 = vmatprep.subr.mxu0 0.0
        %5959 = vmatpush1.msra.mxu0 0.0
        %5960 = vmatprep.subr.mxu0 0.0
        %5961 = vmatpush1.msra.mxu0 0.0
        %5962 = vmatprep.subr.mxu0 0.0
        %5963 = vmatpush1.msra.mxu0 0.0
        %5964 = vmatprep.subr.mxu0 0.0
        %5965 = vmatpush1.msra.mxu0 0.0
        %5966 = vmatprep.subr.mxu0 0.0
        %5967 = vmatpush1.msra.mxu0 0.0
        %5968 = vmatprep.subr.mxu0 0.0
        %5969 = vmatpush1.msra.mxu0 0.0
        %5970 = vmatprep.subr.mxu0 0.0
        %5971 = vmatpush1.msra.mxu0 0.0
        %5972 = vmatprep.subr.mxu0 0.0
        %5973 = vmatpush1.msra.mxu0 0.0
        %5974 = vmatprep.mubr.f32.mxu0 0.0
        %5975 = vmatmul.mubr.f32.gmra.mrb[0].mxu0 %v471
        %v5976 = vpop.f32.mrb[0].mxu0
        %v5977 = vadd.f32 0.0, %v5976
        %v5978 = vpop.f32.mrb[0].mxu0
        %v5979 = vadd.f32 0.0, %v5978
        %5980 = vmatprep.mubr.f32.mxu0 0.0
        %5981 = vmatmul.mubr.f32.gmra.mrb[0].mxu0 %v474
        %v5982 = vpop.f32.mrb[0].mxu0
        %v5983 = vadd.f32 0.0, %v5982
        %v5984 = vpop.f32.mrb[0].mxu0
        %v5985 = vadd.f32 0.0, %v5984
        %5986 = vmatprep.mubr.f32.mxu0 0.0
        %5987 = vmatmul.mubr.f32.gmra.mrb[0].mxu0 %v477
        %v5988 = vpop.f32.mrb[0].mxu0
        %v5989 = vadd.f32 0.0, %v5988
        %v5990 = vpop.f32.mrb[0].mxu0
        %v5991 = vadd.f32 0.0, %v5990
        %5992 = vmatprep.mubr.f32.mxu0 0.0
        %5993 = vmatmul.mubr.f32.gmra.mrb[0].mxu0 %v480
        %v5994 = vpop.f32.mrb[0].mxu0
        %v5995 = vadd.f32 0.0, %v5994
        %v5996 = vpop.f32.mrb[0].mxu0
        %v5997 = vadd.f32 0.0, %v5996
        %5998 = vmatprep.mubr.f32.mxu0 0.0
        %5999 = vmatmul.mubr.f32.gmra.mrb[0].mxu0 %v483
        %v6000 = vpop.f32.mrb[0].mxu0
        %v6001 = vadd.f32 0.0, %v6000
        %v6002 = vpop.f32.mrb[0].mxu0
        %v6003 = vadd.f32 0.0, %v6002
        %6004 = vmatprep.mubr.f32.mxu0 0.0
        %6005 = vmatmul.mubr.f32.gmra.mrb[0].mxu0 %v486
        %v6006 = vpop.f32.mrb[0].mxu0
        %v6007 = vadd.f32 0.0, %v6006
        %v6008 = vpop.f32.mrb[0].mxu0
        %v6009 = vadd.f32 0.0, %v6008
        %6010 = vmatprep.mubr.f32.mxu0 0.0
        %6011 = vmatmul.mubr.f32.gmra.mrb[0].mxu0 %v489
        %v6012 = vpop.f32.mrb[0].mxu0
        %v6013 = vadd.f32 0.0, %v6012
        %v6014 = vpop.f32.mrb[0].mxu0
        %v6015 = vadd.f32 0.0, %v6014
        %6016 = vmatprep.mubr.f32.mxu0 0.0
        %6017 = vmatmul.mubr.f32.gmra.mrb[0].mxu0 %v492
        %v6018 = vpop.f32.mrb[0].mxu0
        %v6019 = vadd.f32 0.0, %v6018
        %v6020 = vpop.f32.mrb[0].mxu0
        %v6021 = vadd.f32 0.0, %v6020
        %6022 = vmatprep.mubr.f32.mxu0 0.0
        %6023 = vmatmul.mubr.f32.gmra.mrb[0].mxu0 %v495
        %v6024 = vpop.f32.mrb[0].mxu0
        %v6025 = vadd.f32 0.0, %v6024
        %v6026 = vpop.f32.mrb[0].mxu0
        %v6027 = vadd.f32 0.0, %v6026
        %6028 = vmatprep.mubr.f32.mxu0 0.0
        %6029 = vmatmul.mubr.f32.gmra.mrb[0].mxu0 %v498
        %v6030 = vpop.f32.mrb[0].mxu0
        %v6031 = vadd.f32 0.0, %v6030
        %v6032 = vpop.f32.mrb[0].mxu0
        %v6033 = vadd.f32 0.0, %v6032
        %6034 = vmatprep.mubr.f32.mxu0 0.0
        %6035 = vmatmul.mubr.f32.gmra.mrb[0].mxu0 %v501
        %v6036 = vpop.f32.mrb[0].mxu0
        %v6037 = vadd.f32 0.0, %v6036
        %v6038 = vpop.f32.mrb[0].mxu0
        %v6039 = vadd.f32 0.0, %v6038
        %6040 = vmatprep.mubr.f32.mxu0 0.0
        %6041 = vmatmul.mubr.f32.gmra.mrb[0].mxu0 %v504
        %v6042 = vpop.f32.mrb[0].mxu0
        %v6043 = vadd.f32 0.0, %v6042
        %v6044 = vpop.f32.mrb[0].mxu0
        %v6045 = vadd.f32 0.0, %v6044
        %6046 = vmatprep.mubr.f32.mxu0 0.0
        %6047 = vmatmul.mubr.f32.gmra.mrb[0].mxu0 %v507
        %v6048 = vpop.f32.mrb[0].mxu0
        %v6049 = vadd.f32 0.0, %v6048
        %v6050 = vpop.f32.mrb[0].mxu0
        %v6051 = vadd.f32 0.0, %v6050
        %6052 = vdwg.mxu0
        %6053 = vmatprep.subr.mxu0 %v5877
        %6054 = vmatpush1.msra.mxu0 %v5876
        %6055 = vmatprep.subr.mxu0 %v5881
        %6056 = vmatpush1.msra.mxu0 %v5880
        %6057 = vmatprep.subr.mxu0 %v5885
        %6058 = vmatpush1.msra.mxu0 %v5884
        %6059 = vmatprep.subr.mxu0 %v5889
        %6060 = vmatpush1.msra.mxu0 %v5888
        %6061 = vmatprep.subr.mxu0 %v5893
        %6062 = vmatpush1.msra.mxu0 %v5892
        %6063 = vmatprep.subr.mxu0 %v5908
        %6064 = vmatpush1.msra.mxu0 %v5905
        %6065 = vmatprep.subr.mxu0 0.0
        %6066 = vmatpush1.msra.mxu0 0.0
        %6067 = vmatprep.subr.mxu0 0.0
        %6068 = vmatpush1.msra.mxu0 0.0
        %6069 = vmatprep.subr.mxu0 0.0
        %6070 = vmatpush1.msra.mxu0 0.0
        %6071 = vmatprep.subr.mxu0 0.0
        %6072 = vmatpush1.msra.mxu0 0.0
        %6073 = vmatprep.subr.mxu0 0.0
        %6074 = vmatpush1.msra.mxu0 0.0
        %6075 = vmatprep.subr.mxu0 0.0
        %6076 = vmatpush1.msra.mxu0 0.0
        %6077 = vmatprep.subr.mxu0 0.0
        %6078 = vmatpush1.msra.mxu0 0.0
        %6079 = vmatprep.subr.mxu0 0.0
        %6080 = vmatpush1.msra.mxu0 0.0
        %6081 = vmatprep.subr.mxu0 0.0
        %6082 = vmatpush1.msra.mxu0 0.0
        %6083 = vmatprep.subr.mxu0 0.0
        %6084 = vmatpush1.msra.mxu0 0.0
        %6085 = vmatprep.subr.mxu0 0.0
        %6086 = vmatpush1.msra.mxu0 0.0
        %6087 = vmatprep.subr.mxu0 0.0
        %6088 = vmatpush1.msra.mxu0 0.0
        %6089 = vmatprep.subr.mxu0 0.0
        %6090 = vmatpush1.msra.mxu0 0.0
        %6091 = vmatprep.subr.mxu0 0.0
        %6092 = vmatpush1.msra.mxu0 0.0
        %6093 = vmatprep.subr.mxu0 0.0
        %6094 = vmatpush1.msra.mxu0 0.0
        %6095 = vmatprep.subr.mxu0 0.0
        %6096 = vmatpush1.msra.mxu0 0.0
        %6097 = vmatprep.subr.mxu0 0.0
        %6098 = vmatpush1.msra.mxu0 0.0
        %6099 = vmatprep.subr.mxu0 0.0
        %6100 = vmatpush1.msra.mxu0 0.0
        %6101 = vmatprep.subr.mxu0 0.0
        %6102 = vmatpush1.msra.mxu0 0.0
        %6103 = vmatprep.subr.mxu0 0.0
        %6104 = vmatpush1.msra.mxu0 0.0
        %6105 = vmatprep.subr.mxu0 0.0
        %6106 = vmatpush1.msra.mxu0 0.0
        %6107 = vmatprep.subr.mxu0 0.0
        %6108 = vmatpush1.msra.mxu0 0.0
        %6109 = vmatprep.subr.mxu0 0.0
        %6110 = vmatpush1.msra.mxu0 0.0
        %6111 = vmatprep.subr.mxu0 0.0
        %6112 = vmatpush1.msra.mxu0 0.0
        %6113 = vmatprep.subr.mxu0 0.0
        %6114 = vmatpush1.msra.mxu0 0.0
        %6115 = vmatprep.subr.mxu0 0.0
        %6116 = vmatpush1.msra.mxu0 0.0
        %6117 = vmatprep.mubr.f32.mxu0 0.0
        %6118 = vmatmul.mubr.f32.gmra.mrb[0].mxu0 %v471
        %v6119 = vpop.f32.mrb[0].mxu0
        %v6120 = vadd.f32 0.0, %v6119
        %v6121 = vpop.f32.mrb[0].mxu0
        %v6122 = vadd.f32 0.0, %v6121
        %6123 = vmatprep.mubr.f32.mxu0 0.0
        %6124 = vmatmul.mubr.f32.gmra.mrb[0].mxu0 %v474
        %v6125 = vpop.f32.mrb[0].mxu0
        %v6126 = vadd.f32 0.0, %v6125
        %v6127 = vpop.f32.mrb[0].mxu0
        %v6128 = vadd.f32 0.0, %v6127
        %6129 = vmatprep.mubr.f32.mxu0 0.0
        %6130 = vmatmul.mubr.f32.gmra.mrb[0].mxu0 %v477
        %v6131 = vpop.f32.mrb[0].mxu0
        %v6132 = vadd.f32 0.0, %v6131
        %v6133 = vpop.f32.mrb[0].mxu0
        %v6134 = vadd.f32 0.0, %v6133
        %6135 = vmatprep.mubr.f32.mxu0 0.0
        %6136 = vmatmul.mubr.f32.gmra.mrb[0].mxu0 %v480
        %v6137 = vpop.f32.mrb[0].mxu0
        %v6138 = vadd.f32 0.0, %v6137
        %v6139 = vpop.f32.mrb[0].mxu0
        %v6140 = vadd.f32 0.0, %v6139
        %6141 = vmatprep.mubr.f32.mxu0 0.0
        %6142 = vmatmul.mubr.f32.gmra.mrb[0].mxu0 %v483
        %v6143 = vpop.f32.mrb[0].mxu0
        %v6144 = vadd.f32 0.0, %v6143
        %v6145 = vpop.f32.mrb[0].mxu0
        %v6146 = vadd.f32 0.0, %v6145
        %6147 = vmatprep.mubr.f32.mxu0 0.0
        %6148 = vmatmul.mubr.f32.gmra.mrb[0].mxu0 %v486
        %v6149 = vpop.f32.mrb[0].mxu0
        %v6150 = vadd.f32 0.0, %v6149
        %v6151 = vpop.f32.mrb[0].mxu0
        %v6152 = vadd.f32 0.0, %v6151
        %6153 = vmatprep.mubr.f32.mxu0 0.0
        %6154 = vmatmul.mubr.f32.gmra.mrb[0].mxu0 %v489
        %v6155 = vpop.f32.mrb[0].mxu0
        %v6156 = vadd.f32 0.0, %v6155
        %v6157 = vpop.f32.mrb[0].mxu0
        %v6158 = vadd.f32 0.0, %v6157
        %6159 = vmatprep.mubr.f32.mxu0 0.0
        %6160 = vmatmul.mubr.f32.gmra.mrb[0].mxu0 %v492
        %v6161 = vpop.f32.mrb[0].mxu0
        %v6162 = vadd.f32 0.0, %v6161
        %v6163 = vpop.f32.mrb[0].mxu0
        %v6164 = vadd.f32 0.0, %v6163
        %6165 = vmatprep.mubr.f32.mxu0 0.0
        %6166 = vmatmul.mubr.f32.gmra.mrb[0].mxu0 %v495
        %v6167 = vpop.f32.mrb[0].mxu0
        %v6168 = vadd.f32 0.0, %v6167
        %v6169 = vpop.f32.mrb[0].mxu0
        %v6170 = vadd.f32 0.0, %v6169
        %6171 = vmatprep.mubr.f32.mxu0 0.0
        %6172 = vmatmul.mubr.f32.gmra.mrb[0].mxu0 %v498
        %v6173 = vpop.f32.mrb[0].mxu0
        %v6174 = vadd.f32 0.0, %v6173
        %v6175 = vpop.f32.mrb[0].mxu0
        %v6176 = vadd.f32 0.0, %v6175
        %6177 = vmatprep.mubr.f32.mxu0 0.0
        %6178 = vmatmul.mubr.f32.gmra.mrb[0].mxu0 %v501
        %v6179 = vpop.f32.mrb[0].mxu0
        %v6180 = vadd.f32 0.0, %v6179
        %v6181 = vpop.f32.mrb[0].mxu0
        %v6182 = vadd.f32 0.0, %v6181
        %6183 = vmatprep.mubr.f32.mxu0 0.0
        %6184 = vmatmul.mubr.f32.gmra.mrb[0].mxu0 %v504
        %v6185 = vpop.f32.mrb[0].mxu0
        %v6186 = vadd.f32 0.0, %v6185
        %v6187 = vpop.f32.mrb[0].mxu0
        %v6188 = vadd.f32 0.0, %v6187
        %6189 = vmatprep.mubr.f32.mxu0 0.0
        %6190 = vmatmul.mubr.f32.gmra.mrb[0].mxu0 %v507
        %v6191 = vpop.f32.mrb[0].mxu0
        %v6192 = vadd.f32 0.0, %v6191
        %v6193 = vpop.f32.mrb[0].mxu0
        %v6194 = vadd.f32 0.0, %v6193
        %6195 = vdwg.mxu0
        %v6196 = vmax.f32 %v5977, 0.0
        %v6197 = vmax.f32 %v5979, 0.0
        %v6198 = vmax.f32 %v6120, 0.0
        %v6199 = vmax.f32 %v6122, 0.0
        %v6200 = vmax.f32 %v5983, 0.0
        %v6201 = vmax.f32 %v5985, 0.0
        %v6202 = vmax.f32 %v6126, 0.0
        %v6203 = vmax.f32 %v6128, 0.0
        %v6204 = vmax.f32 %v5989, 0.0
        %v6205 = vmax.f32 %v5991, 0.0
        %v6206 = vmax.f32 %v6132, 0.0
        %v6207 = vmax.f32 %v6134, 0.0
        %v6208 = vmax.f32 %v5995, 0.0
        %v6209 = vmax.f32 %v5997, 0.0
        %v6210 = vmax.f32 %v6138, 0.0
        %v6211 = vmax.f32 %v6140, 0.0
        %v6212 = vmax.f32 %v6001, 0.0
        %v6213 = vmax.f32 %v6003, 0.0
        %v6214 = vmax.f32 %v6144, 0.0
        %v6215 = vmax.f32 %v6146, 0.0
        %v6216 = vmax.f32 %v6007, 0.0
        %v6217 = vmax.f32 %v6009, 0.0
        %v6218 = vmax.f32 %v6150, 0.0
        %v6219 = vmax.f32 %v6152, 0.0
        %v6220 = vmax.f32 %v6013, 0.0
        %v6221 = vmax.f32 %v6015, 0.0
        %v6222 = vmax.f32 %v6156, 0.0
        %v6223 = vmax.f32 %v6158, 0.0
        %v6224 = vmax.f32 %v6019, 0.0
        %v6225 = vmax.f32 %v6021, 0.0
        %v6226 = vmax.f32 %v6162, 0.0
        %v6227 = vmax.f32 %v6164, 0.0
        %v6228 = vmax.f32 %v6025, 0.0
        %v6229 = vmax.f32 %v6027, 0.0
        %v6230 = vmax.f32 %v6168, 0.0
        %v6231 = vmax.f32 %v6170, 0.0
        %v6232 = vmax.f32 %v6031, 0.0
        %v6233 = vmax.f32 %v6033, 0.0
        %v6234 = vmax.f32 %v6174, 0.0
        %v6235 = vmax.f32 %v6176, 0.0
        %v6236 = vmax.f32 %v6037, 0.0
        %v6237 = vmax.f32 %v6039, 0.0
        %v6238 = vmax.f32 %v6180, 0.0
        %v6239 = vmax.f32 %v6182, 0.0
        %v6240 = vmax.f32 %v6043, 0.0
        %v6241 = vmax.f32 %v6045, 0.0
        %v6242 = vmax.f32 %v6186, 0.0
        %v6243 = vmax.f32 %v6188, 0.0
        %v6244 = vmax.f32 %v6049, 0.0
        %v6245 = vmax.f32 %v6051, 0.0
        %v6246 = vmax.f32 %v6192, 0.0
        %v6247 = vmax.f32 %v6194, 0.0
        %v6249 = vsel %vm876, %v6244, 0
        %v6252 = vsel %vm876, %v6245, 0
        %v6255 = vsel %vm876, %v6246, 0
        %v6258 = vsel %vm876, %v6247, 0
        %6260 = vmatprep.subr.mxu0 %v6197
        %6261 = vmatpush1.msra.mxu0 %v6196
        %6262 = vmatprep.subr.mxu0 %v6201
        %6263 = vmatpush1.msra.mxu0 %v6200
        %6264 = vmatprep.subr.mxu0 %v6205
        %6265 = vmatpush1.msra.mxu0 %v6204
        %6266 = vmatprep.subr.mxu0 %v6209
        %6267 = vmatpush1.msra.mxu0 %v6208
        %6268 = vmatprep.subr.mxu0 %v6213
        %6269 = vmatpush1.msra.mxu0 %v6212
        %6270 = vmatprep.subr.mxu0 %v6217
        %6271 = vmatpush1.msra.mxu0 %v6216
        %6272 = vmatprep.subr.mxu0 %v6221
        %6273 = vmatpush1.msra.mxu0 %v6220
        %6274 = vmatprep.subr.mxu0 %v6225
        %6275 = vmatpush1.msra.mxu0 %v6224
        %6276 = vmatprep.subr.mxu0 %v6229
        %6277 = vmatpush1.msra.mxu0 %v6228
        %6278 = vmatprep.subr.mxu0 %v6233
        %6279 = vmatpush1.msra.mxu0 %v6232
        %6280 = vmatprep.subr.mxu0 %v6237
        %6281 = vmatpush1.msra.mxu0 %v6236
        %6282 = vmatprep.subr.mxu0 %v6241
        %6283 = vmatpush1.msra.mxu0 %v6240
        %6284 = vmatprep.subr.mxu0 %v6252
        %6285 = vmatpush1.msra.mxu0 %v6249
        %6286 = vmatprep.subr.mxu0 0.0
        %6287 = vmatpush1.msra.mxu0 0.0
        %6288 = vmatprep.subr.mxu0 0.0
        %6289 = vmatpush1.msra.mxu0 0.0
        %6290 = vmatprep.subr.mxu0 0.0
        %6291 = vmatpush1.msra.mxu0 0.0
        %6292 = vmatprep.subr.mxu0 0.0
        %6293 = vmatpush1.msra.mxu0 0.0
        %6294 = vmatprep.subr.mxu0 0.0
        %6295 = vmatpush1.msra.mxu0 0.0
        %6296 = vmatprep.subr.mxu0 0.0
        %6297 = vmatpush1.msra.mxu0 0.0
        %6298 = vmatprep.subr.mxu0 0.0
        %6299 = vmatpush1.msra.mxu0 0.0
        %6300 = vmatprep.subr.mxu0 0.0
        %6301 = vmatpush1.msra.mxu0 0.0
        %6302 = vmatprep.subr.mxu0 0.0
        %6303 = vmatpush1.msra.mxu0 0.0
        %6304 = vmatprep.subr.mxu0 0.0
        %6305 = vmatpush1.msra.mxu0 0.0
        %6306 = vmatprep.subr.mxu0 0.0
        %6307 = vmatpush1.msra.mxu0 0.0
        %6308 = vmatprep.subr.mxu0 0.0
        %6309 = vmatpush1.msra.mxu0 0.0
        %6310 = vmatprep.subr.mxu0 0.0
        %6311 = vmatpush1.msra.mxu0 0.0
        %6312 = vmatprep.subr.mxu0 0.0
        %6313 = vmatpush1.msra.mxu0 0.0
        %6314 = vmatprep.subr.mxu0 0.0
        %6315 = vmatpush1.msra.mxu0 0.0
        %6316 = vmatprep.subr.mxu0 0.0
        %6317 = vmatpush1.msra.mxu0 0.0
        %6318 = vmatprep.subr.mxu0 0.0
        %6319 = vmatpush1.msra.mxu0 0.0
        %6320 = vmatprep.subr.mxu0 0.0
        %6321 = vmatpush1.msra.mxu0 0.0
        %6322 = vmatprep.subr.mxu0 0.0
        %6323 = vmatpush1.msra.mxu0 0.0
        %6324 = vmatprep.mubr.f32.mxu0 0.0
        %6325 = vmatmul.mubr.f32.gmra.mrb[0].mxu0 %v862
        %v6326 = vpop.f32.mrb[0].mxu0
        %v6327 = vadd.f32 0.0, %v6326
        %v6328 = vpop.f32.mrb[0].mxu0
        %v6329 = vadd.f32 0.0, %v6328
        %6330 = vmatprep.mubr.f32.mxu0 0.0
        %6331 = vmatmul.mubr.f32.gmra.mrb[0].mxu0 %v865
        %v6332 = vpop.f32.mrb[0].mxu0
        %v6333 = vadd.f32 0.0, %v6332
        %v6334 = vpop.f32.mrb[0].mxu0
        %v6335 = vadd.f32 0.0, %v6334
        %6336 = vmatprep.mubr.f32.mxu0 0.0
        %6337 = vmatmul.mubr.f32.gmra.mrb[0].mxu0 %v868
        %v6338 = vpop.f32.mrb[0].mxu0
        %v6339 = vadd.f32 0.0, %v6338
        %v6340 = vpop.f32.mrb[0].mxu0
        %v6341 = vadd.f32 0.0, %v6340
        %6342 = vmatprep.mubr.f32.mxu0 0.0
        %6343 = vmatmul.mubr.f32.gmra.mrb[0].mxu0 %v871
        %v6344 = vpop.f32.mrb[0].mxu0
        %v6345 = vadd.f32 0.0, %v6344
        %v6346 = vpop.f32.mrb[0].mxu0
        %v6347 = vadd.f32 0.0, %v6346
        %6348 = vmatprep.mubr.f32.mxu0 0.0
        %6349 = vmatmul.mubr.f32.gmra.mrb[0].mxu0 %v874
        %v6350 = vpop.f32.mrb[0].mxu0
        %v6351 = vadd.f32 0.0, %v6350
        %v6352 = vpop.f32.mrb[0].mxu0
        %v6353 = vadd.f32 0.0, %v6352
        %6354 = vdwg.mxu0
        %6355 = vmatprep.subr.mxu0 %v6199
        %6356 = vmatpush1.msra.mxu0 %v6198
        %6357 = vmatprep.subr.mxu0 %v6203
        %6358 = vmatpush1.msra.mxu0 %v6202
        %6359 = vmatprep.subr.mxu0 %v6207
        %6360 = vmatpush1.msra.mxu0 %v6206
        %6361 = vmatprep.subr.mxu0 %v6211
        %6362 = vmatpush1.msra.mxu0 %v6210
        %6363 = vmatprep.subr.mxu0 %v6215
        %6364 = vmatpush1.msra.mxu0 %v6214
        %6365 = vmatprep.subr.mxu0 %v6219
        %6366 = vmatpush1.msra.mxu0 %v6218
        %6367 = vmatprep.subr.mxu0 %v6223
        %6368 = vmatpush1.msra.mxu0 %v6222
        %6369 = vmatprep.subr.mxu0 %v6227
        %6370 = vmatpush1.msra.mxu0 %v6226
        %6371 = vmatprep.subr.mxu0 %v6231
        %6372 = vmatpush1.msra.mxu0 %v6230
        %6373 = vmatprep.subr.mxu0 %v6235
        %6374 = vmatpush1.msra.mxu0 %v6234
        %6375 = vmatprep.subr.mxu0 %v6239
        %6376 = vmatpush1.msra.mxu0 %v6238
        %6377 = vmatprep.subr.mxu0 %v6243
        %6378 = vmatpush1.msra.mxu0 %v6242
        %6379 = vmatprep.subr.mxu0 %v6258
        %6380 = vmatpush1.msra.mxu0 %v6255
        %6381 = vmatprep.subr.mxu0 0.0
        %6382 = vmatpush1.msra.mxu0 0.0
        %6383 = vmatprep.subr.mxu0 0.0
        %6384 = vmatpush1.msra.mxu0 0.0
        %6385 = vmatprep.subr.mxu0 0.0
        %6386 = vmatpush1.msra.mxu0 0.0
        %6387 = vmatprep.subr.mxu0 0.0
        %6388 = vmatpush1.msra.mxu0 0.0
        %6389 = vmatprep.subr.mxu0 0.0
        %6390 = vmatpush1.msra.mxu0 0.0
        %6391 = vmatprep.subr.mxu0 0.0
        %6392 = vmatpush1.msra.mxu0 0.0
        %6393 = vmatprep.subr.mxu0 0.0
        %6394 = vmatpush1.msra.mxu0 0.0
        %6395 = vmatprep.subr.mxu0 0.0
        %6396 = vmatpush1.msra.mxu0 0.0
        %6397 = vmatprep.subr.mxu0 0.0
        %6398 = vmatpush1.msra.mxu0 0.0
        %6399 = vmatprep.subr.mxu0 0.0
        %6400 = vmatpush1.msra.mxu0 0.0
        %6401 = vmatprep.subr.mxu0 0.0
        %6402 = vmatpush1.msra.mxu0 0.0
        %6403 = vmatprep.subr.mxu0 0.0
        %6404 = vmatpush1.msra.mxu0 0.0
        %6405 = vmatprep.subr.mxu0 0.0
        %6406 = vmatpush1.msra.mxu0 0.0
        %6407 = vmatprep.subr.mxu0 0.0
        %6408 = vmatpush1.msra.mxu0 0.0
        %6409 = vmatprep.subr.mxu0 0.0
        %6410 = vmatpush1.msra.mxu0 0.0
        %6411 = vmatprep.subr.mxu0 0.0
        %6412 = vmatpush1.msra.mxu0 0.0
        %6413 = vmatprep.subr.mxu0 0.0
        %6414 = vmatpush1.msra.mxu0 0.0
        %6415 = vmatprep.subr.mxu0 0.0
        %6416 = vmatpush1.msra.mxu0 0.0
        %6417 = vmatprep.subr.mxu0 0.0
        %6418 = vmatpush1.msra.mxu0 0.0
        %6419 = vmatprep.mubr.f32.mxu0 0.0
        %6420 = vmatmul.mubr.f32.gmra.mrb[0].mxu0 %v862
        %v6421 = vpop.f32.mrb[0].mxu0
        %v6422 = vadd.f32 0.0, %v6421
        %v6423 = vpop.f32.mrb[0].mxu0
        %v6424 = vadd.f32 0.0, %v6423
        %6425 = vmatprep.mubr.f32.mxu0 0.0
        %6426 = vmatmul.mubr.f32.gmra.mrb[0].mxu0 %v865
        %v6427 = vpop.f32.mrb[0].mxu0
        %v6428 = vadd.f32 0.0, %v6427
        %v6429 = vpop.f32.mrb[0].mxu0
        %v6430 = vadd.f32 0.0, %v6429
        %6431 = vmatprep.mubr.f32.mxu0 0.0
        %6432 = vmatmul.mubr.f32.gmra.mrb[0].mxu0 %v868
        %v6433 = vpop.f32.mrb[0].mxu0
        %v6434 = vadd.f32 0.0, %v6433
        %v6435 = vpop.f32.mrb[0].mxu0
        %v6436 = vadd.f32 0.0, %v6435
        %6437 = vmatprep.mubr.f32.mxu0 0.0
        %6438 = vmatmul.mubr.f32.gmra.mrb[0].mxu0 %v871
        %v6439 = vpop.f32.mrb[0].mxu0
        %v6440 = vadd.f32 0.0, %v6439
        %v6441 = vpop.f32.mrb[0].mxu0
        %v6442 = vadd.f32 0.0, %v6441
        %6443 = vmatprep.mubr.f32.mxu0 0.0
        %6444 = vmatmul.mubr.f32.gmra.mrb[0].mxu0 %v874
        %v6445 = vpop.f32.mrb[0].mxu0
        %v6446 = vadd.f32 0.0, %v6445
        %v6447 = vpop.f32.mrb[0].mxu0
        %v6448 = vadd.f32 0.0, %v6447
        %6449 = vdwg.mxu0
        %v6450 = vmax.f32 %v6327, 0.0
        %v6451 = vmax.f32 %v6329, 0.0
        %v6452 = vmax.f32 %v6422, 0.0
        %v6453 = vmax.f32 %v6424, 0.0
        %v6454 = vmax.f32 %v6333, 0.0
        %v6455 = vmax.f32 %v6335, 0.0
        %v6456 = vmax.f32 %v6428, 0.0
        %v6457 = vmax.f32 %v6430, 0.0
        %v6458 = vmax.f32 %v6339, 0.0
        %v6459 = vmax.f32 %v6341, 0.0
        %v6460 = vmax.f32 %v6434, 0.0
        %v6461 = vmax.f32 %v6436, 0.0
        %v6462 = vmax.f32 %v6345, 0.0
        %v6463 = vmax.f32 %v6347, 0.0
        %v6464 = vmax.f32 %v6440, 0.0
        %v6465 = vmax.f32 %v6442, 0.0
        %v6466 = vmax.f32 %v6351, 0.0
        %v6467 = vmax.f32 %v6353, 0.0
        %v6468 = vmax.f32 %v6446, 0.0
        %v6469 = vmax.f32 %v6448, 0.0
        %v6470 = vmul.f32 %v1102, %v6450
        %v6471 = vmul.f32 %v1102, %v6451
        %v6472 = vmul.f32 %v1102, %v6452
        %v6473 = vmul.f32 %v1102, %v6453
        %v6474 = vmul.f32 %v1107, %v6454
        %v6475 = vmul.f32 %v1107, %v6455
        %v6476 = vmul.f32 %v1107, %v6456
        %v6477 = vmul.f32 %v1107, %v6457
        %v6478 = vmul.f32 %v1112, %v6458
        %v6479 = vmul.f32 %v1112, %v6459
        %v6480 = vmul.f32 %v1112, %v6460
        %v6481 = vmul.f32 %v1112, %v6461
        %v6482 = vmul.f32 %v1117, %v6462
        %v6483 = vmul.f32 %v1117, %v6463
        %v6484 = vmul.f32 %v1117, %v6464
        %v6485 = vmul.f32 %v1117, %v6465
        %v6486 = vmul.f32 %v1122, %v6466
        %v6487 = vmul.f32 %v1122, %v6467
        %v6488 = vmul.f32 %v1122, %v6468
        %v6489 = vmul.f32 %v1122, %v6469
        %v6490 = vadd.f32 %v6470, %v6474
        %v6491 = vadd.f32 %v6490, %v6478
        %v6492 = vadd.f32 %v6491, %v6482
        %v6493 = vadd.f32 %v6492, %v6486
        %v6494 = vrot.slane %v6493, 4
        %v6495 = vadd.f32 %v6493, %v6494
        %v6496 = vrot.slane %v6495, 2
        %v6497 = vadd.f32 %v6495, %v6496
        %v6498 = vrot.slane %v6497, 1
        %v6499 = vadd.f32 %v6497, %v6498
        %v6500 = vadd.f32 %v6471, %v6475
        %v6501 = vadd.f32 %v6500, %v6479
        %v6502 = vadd.f32 %v6501, %v6483
        %v6503 = vadd.f32 %v6502, %v6487
        %v6504 = vrot.slane %v6503, 4
        %v6505 = vadd.f32 %v6503, %v6504
        %v6506 = vrot.slane %v6505, 2
        %v6507 = vadd.f32 %v6505, %v6506
        %v6508 = vrot.slane %v6507, 1
        %v6509 = vadd.f32 %v6507, %v6508
        %v6510 = vadd.f32 %v6472, %v6476
        %v6511 = vadd.f32 %v6510, %v6480
        %v6512 = vadd.f32 %v6511, %v6484
        %v6513 = vadd.f32 %v6512, %v6488
        %v6514 = vrot.slane %v6513, 4
        %v6515 = vadd.f32 %v6513, %v6514
        %v6516 = vrot.slane %v6515, 2
        %v6517 = vadd.f32 %v6515, %v6516
        %v6518 = vrot.slane %v6517, 1
        %v6519 = vadd.f32 %v6517, %v6518
        %v6520 = vadd.f32 %v6473, %v6477
        %v6521 = vadd.f32 %v6520, %v6481
        %v6522 = vadd.f32 %v6521, %v6485
        %v6523 = vadd.f32 %v6522, %v6489
        %v6524 = vrot.slane %v6523, 4
        %v6525 = vadd.f32 %v6523, %v6524
        %v6526 = vrot.slane %v6525, 2
        %v6527 = vadd.f32 %v6525, %v6526
        %v6528 = vrot.slane %v6527, 1
        %v6529 = vadd.f32 %v6527, %v6528
        %v6530 = vadd.f32 %v6499, %v1192
        %v6531 = vadd.f32 %v6509, %v1192
        %v6532 = vadd.f32 %v6519, %v1192
        %v6533 = vadd.f32 %v6529, %v1192
        %v6538 = vcombine.low %v6530, %v6531
        %v6539 = vcombine.low %v6532, %v6533
        %v6541 = vunpack.c.l.s4 1966171168
        %v6542 = vunpack.c.0.s8 %v6541
        %v6543 = vlaneseq
        %v6544 = vshrl.u32 %v6543, 7
        %v6545 = vsub.s32 %v6542, %v6544
        %v6546 = vrot.slane %v6538, %v6545
        %v6548 = vunpack.c.l.s4 1966171168
        %v6549 = vunpack.c.0.s8 %v6548
        %v6550 = vlaneseq
        %v6551 = vshrl.u32 %v6550, 7
        %v6552 = vsub.s32 %v6549, %v6551
        %v6553 = vrot.slane %v6539, %v6552
        %v6554 = vcombine.low %v6546, %v6553
        %v6556 = vunpack.c.l.s4 1966171168
        %v6557 = vunpack.c.0.s8 %v6556
        %v6558 = vlaneseq
        %v6559 = vshrl.u32 %v6558, 7
        %v6560 = vsub.s32 %v6557, %v6559
        %v6561 = vrot.slane %v6554, %v6560
        %s6563 = scalar_lea.vmem %s272, 28 [#allocation3]
        %6564 = vst.msk [vmem:[%s6563] sm:$0xf] %vm1229, %v6561
        %s6565 = sand.u32 %s183, 1
        %s6566 = scalar_lea.sflag [#allocation4], %s6565
        %s6567 = sand.u32 %s183, 1
        %s6568 = smul.addr %s6567, 32
        %s6569 = scalar_lea.vmem [#allocation3], %s6568
        // Predicated region
        $region49: #{tpu_custom_call.1} parent=47 // pred_check
          %p6570 = pneg %p193
        $region50: #{tpu_custom_call.1} parent=47 // pred_check_branch
          %6572 = sbr.rel (%p6570) target = $region52
        $region51: #{tpu_custom_call.1} parent=47 // pred_region
          %s6573 = smul.u32 32, %s23
          %s6575 = ssub.s32 512, 512
          %6576 = vsyncadd %s6566, %s6575
          %s6577 = smul.addr %s6573, 16
          %s6578 = scalar_lea.hbm %s7, %s6577
          %s6580 = sshll.u32 %s6569, 4
          %s6581 = int_to_ptr.vmem [resolvable:$true] %s6580
          %6583 = dma.vmem_to_hbm [thread:$0]  %s6581, 512, %s6578, %s6566
        $region52: #{tpu_custom_call.1} parent=47 // pred_fallthru
          _
      $region48: #{tpu_custom_call.1} parent=5 // pred_fallthru
        _
      %p6584 = scmp.le.s32.totalorder 2, %s18
      // Predicated region
      $region53: #{tpu_custom_call.1} parent=5 // pred_check
        %p6585 = pneg %p6584
      $region54: #{tpu_custom_call.1} parent=5 // pred_check_branch
        %6587 = sbr.rel (%p6585) target = $region56
      $region55: #{tpu_custom_call.1} parent=5 // pred_region
        %s6588 = ssub.s32 %s18, 2
        // Predicated region
        $region57: #{tpu_custom_call.1} parent=55 // pred_check
          %p6589 = pneg %p199
        $region58: #{tpu_custom_call.1} parent=55 // pred_check_branch
          %6591 = sbr.rel (%p6589) target = $region60
        $region59: #{tpu_custom_call.1} parent=55 // pred_region
          %s6592 = sand.u32 %s184, 1
          %s6593 = scalar_lea.sflag [#allocation4], %s6592
          %s6594 = sand.u32 %s184, 1
          %s6595 = smul.addr %s6594, 32
          %s6596 = scalar_lea.vmem [#allocation3], %s6595
          %6597 = dma.done %s6593, 512
        $region60: #{tpu_custom_call.1} parent=55 // pred_fallthru
          _
      $region56: #{tpu_custom_call.1} parent=5 // pred_fallthru
        _
    $region6: #{tpu_custom_call.1} parent=1 // loop_footer
      %s22 = sadd.s32 1, %s18
    $region7: #{tpu_custom_call.1} parent=1 // loop_footer_branch
      %17 = sbr.rel target = $region3
    $region8: #{tpu_custom_call.1} parent=1 // loop_exit
      _
    %6598 = vsyncpa [#allocation4], 1
    %s6599 = scalar_lea.sflag [#allocation4], 1
    %6600 = vsyncpa %s6599, 1

</llo_original>
